<compile_context>
chip_gen: v5e
topology: v5e:2x2
jax: 0.10.0
libtpu: 0.0.40
codegen_flags: <defaults>
</compile_context>

<pallas_src>
import functools

import numpy as np
import jax
import jax.numpy as jnp
from jax import lax
from jax.experimental import pallas as pl
from jax.experimental.pallas import tpu as pltpu

VMEM = pl.BlockSpec(memory_space=pltpu.MemorySpace.VMEM)  # whole-array VMEM block
LN_EPS = 1e-5


# ---------------------------------------------------------------------------
# kernel 1: feature projection + positional encoding (fused)
# ---------------------------------------------------------------------------

def _proj_pe_kernel(x_ref, w_ref, b_ref, pe_ref, o_ref):
    B, S, F = x_ref.shape
    D = w_ref.shape[1]
    h = jnp.dot(x_ref[...].reshape(B * S, F), w_ref[...],
                preferred_element_type=jnp.float32) + b_ref[...]
    o_ref[...] = (h.reshape(B, S, D) + pe_ref[...]).astype(o_ref.dtype)


def project_and_encode(x, w, b, pe):
    B, S, _ = x.shape
    D = w.shape[1]
    return pl.pallas_call(
        _proj_pe_kernel,
        out_shape=jax.ShapeDtypeStruct((B, S, D), jnp.float32),
        in_specs=[VMEM] * 4,
        out_specs=VMEM,
    )(x, w, b, pe)


# ---------------------------------------------------------------------------
# kernel 2: fully fused transformer encoder layer (post-norm, relu, batch_first)
# ---------------------------------------------------------------------------

def _layernorm(x, g, b, eps=LN_EPS):
    mu = jnp.mean(x, axis=-1, keepdims=True)
    xc = x - mu
    var = jnp.mean(xc * xc, axis=-1, keepdims=True)
    return xc * lax.rsqrt(var + eps) * g + b


def _encoder_layer_kernel(nhead, x_ref,
                          qkv_w_ref, qkv_b_ref, out_w_ref, out_b_ref,
                          ln1_g_ref, ln1_b_ref,
                          ff1_w_ref, ff1_b_ref, ff2_w_ref, ff2_b_ref,
                          ln2_g_ref, ln2_b_ref, o_ref):
    B, S, D = x_ref.shape
    Dh = D // nhead
    scale = 1.0 / float(np.sqrt(Dh))

    x2 = x_ref[...].reshape(B * S, D)

    # ---- multi-head self-attention (head split/merge kept inside the kernel) ----
    qkv = jnp.dot(x2, qkv_w_ref[...],
                  preferred_element_type=jnp.float32) + qkv_b_ref[...]
    q = qkv[:, 0 * D:1 * D].reshape(B, S, D)
    k = qkv[:, 1 * D:2 * D].reshape(B, S, D)
    v = qkv[:, 2 * D:3 * D].reshape(B, S, D)

    heads = []
    for h in range(nhead):                      # nhead is a static Python int
        sl = slice(h * Dh, (h + 1) * Dh)
        qh, kh, vh = q[:, :, sl], k[:, :, sl], v[:, :, sl]
        s = jnp.einsum("bqd,bkd->bqk", qh, kh,
                       preferred_element_type=jnp.float32) * scale
        s = s - jnp.max(s, axis=-1, keepdims=True)
        p = jnp.exp(s)
        p = p * pl.reciprocal(jnp.sum(p, axis=-1, keepdims=True), approx=True)
        heads.append(jnp.einsum("bqk,bkd->bqd", p, vh,
                                preferred_element_type=jnp.float32))
    attn = jnp.concatenate(heads, axis=-1).reshape(B * S, D)
    attn = jnp.dot(attn, out_w_ref[...],
                   preferred_element_type=jnp.float32) + out_b_ref[...]

    # ---- residual + layernorm 1 ----
    x2 = _layernorm(x2 + attn, ln1_g_ref[...], ln1_b_ref[...])

    # ---- feed-forward (relu) ----
    ff = jnp.maximum(jnp.dot(x2, ff1_w_ref[...],
                             preferred_element_type=jnp.float32) + ff1_b_ref[...], 0.0)
    ff = jnp.dot(ff, ff2_w_ref[...],
                 preferred_element_type=jnp.float32) + ff2_b_ref[...]

    # ---- residual + layernorm 2 ----
    x2 = _layernorm(x2 + ff, ln2_g_ref[...], ln2_b_ref[...])
    o_ref[...] = x2.reshape(B, S, D).astype(o_ref.dtype)


def encoder_layer(x, p, nhead):
    B, S, D = x.shape
    return pl.pallas_call(
        functools.partial(_encoder_layer_kernel, nhead),
        out_shape=jax.ShapeDtypeStruct((B, S, D), jnp.float32),
        in_specs=[VMEM] * 13,
        out_specs=VMEM,
    )(x, p["in_proj_w"], p["in_proj_b"], p["out_w"], p["out_b"],
      p["ln1_g"], p["ln1_b"], p["ff1_w"], p["ff1_b"],
      p["ff2_w"], p["ff2_b"], p["ln2_g"], p["ln2_b"])


# ---------------------------------------------------------------------------
# kernel 3: bidirectional LSTM layer (full-sequence output), grid over direction
# ---------------------------------------------------------------------------

def _bilstm_seq_kernel(seq_len, x_ref, wih_ref, whh_ref, b_ref, out_ref,
                       h_scr, c_scr, xp_scr):
    # grid axis 0: direction (0 = forward, 1 = backward); "parallel" -> megacore
    d = pl.program_id(0)
    S, B, In = x_ref.shape
    H = h_scr.shape[-1]

    # Hoisted input projection for ALL timesteps: one (S*B,In)x(In,4H) matmul.
    xw = jnp.dot(x_ref[...].reshape(seq_len * B, In), wih_ref[...],
                 preferred_element_type=jnp.float32) + b_ref[...]
    xp_scr[...] = xw.reshape(seq_len, B, 4 * H)

    h_scr[...] = jnp.zeros_like(h_scr)
    c_scr[...] = jnp.zeros_like(c_scr)

    def step(t, carry):
        idx = jnp.where(d == 0, t, seq_len - 1 - t)
        # single fused-gate hidden matmul per step: (B,H) x (H,4H)
        gates = xp_scr[idx] + jnp.dot(h_scr[...], whh_ref[...],
                                      preferred_element_type=jnp.float32)
        i_g = jax.nn.sigmoid(gates[:, 0 * H:1 * H])
        f_g = jax.nn.sigmoid(gates[:, 1 * H:2 * H])
        g_g = jnp.tanh(gates[:, 2 * H:3 * H])
        o_g = jax.nn.sigmoid(gates[:, 3 * H:4 * H])
        c = f_g * c_scr[...] + i_g * g_g
        h_new = o_g * jnp.tanh(c)
        c_scr[...] = c
        h_scr[...] = h_new
        out_ref[idx] = h_new.astype(out_ref.dtype)
        return carry

    lax.fori_loop(0, seq_len, step, 0)


def bilstm_layer_seq(x_tm, wih, whh, b):
    """x_tm: (S,B,In). wih: (2,In,4H), whh: (2,H,4H), b: (2,1,4H).
    Returns time-major (S, B, 2H) with [forward, backward] concat per step."""
    S, B, In = x_tm.shape
    H = whh.shape[1]
    out = pl.pallas_call(
        functools.partial(_bilstm_seq_kernel, S),
        out_shape=jax.ShapeDtypeStruct((2, S, B, H), jnp.float32),
        grid=(2,),
        in_specs=[
            pl.BlockSpec((S, B, In), lambda d: (0, 0, 0)),
            pl.BlockSpec((None, In, 4 * H), lambda d: (d, 0, 0)),
            pl.BlockSpec((None, H, 4 * H), lambda d: (d, 0, 0)),
            pl.BlockSpec((None, 1, 4 * H), lambda d: (d, 0, 0)),
        ],
        out_specs=pl.BlockSpec((None, S, B, H), lambda d: (d, 0, 0, 0)),
        scratch_shapes=[pltpu.VMEM((B, H), jnp.float32),
                        pltpu.VMEM((B, H), jnp.float32),
                        pltpu.VMEM((S, B, 4 * H), jnp.float32)],
        compiler_params=pltpu.CompilerParams(
            dimension_semantics=("parallel",)),
    )(x_tm, wih, whh, b)
    # PyTorch bidirectional concat order along the hidden dim: [fwd, bwd]
    return jnp.concatenate([out[0], out[1]], axis=-1)


# ---------------------------------------------------------------------------
# kernel 4: top bidirectional LSTM layer (only last step needed) + classifier
# ---------------------------------------------------------------------------

def _top_lstm_cls_kernel(seq_len, x_ref, wih_ref, whh_ref, b_ref,
                         w1_ref, b1_ref, w2_ref, b2_ref, o_ref,
                         h_scr, c_scr, xp_scr):
    S, B, In = x_ref.shape
    H = whh_ref.shape[1]

    # ---- forward direction: full recurrence, input projection hoisted ----
    xw = jnp.dot(x_ref[...].reshape(seq_len * B, In), wih_ref[0],
                 preferred_element_type=jnp.float32) + b_ref[0]
    xp_scr[...] = xw.reshape(seq_len, B, 4 * H)
    h_scr[...] = jnp.zeros_like(h_scr)
    c_scr[...] = jnp.zeros_like(c_scr)

    def step(t, carry):
        gates = xp_scr[t] + jnp.dot(h_scr[...], whh_ref[0],
                                    preferred_element_type=jnp.float32)
        i_g = jax.nn.sigmoid(gates[:, 0 * H:1 * H])
        f_g = jax.nn.sigmoid(gates[:, 1 * H:2 * H])
        g_g = jnp.tanh(gates[:, 2 * H:3 * H])
        o_g = jax.nn.sigmoid(gates[:, 3 * H:4 * H])
        c = f_g * c_scr[...] + i_g * g_g
        c_scr[...] = c
        h_scr[...] = o_g * jnp.tanh(c)
        return carry

    lax.fori_loop(0, seq_len, step, 0)
    h_fwd = h_scr[...]                                      # (B, H)

    # ---- backward direction: only its value at t = S-1 is consumed, which is
    # exactly ONE recurrence step from the zero state (h0 = c0 = 0). ----
    gates_b = jnp.dot(x_ref[seq_len - 1], wih_ref[1],
                      preferred_element_type=jnp.float32) + b_ref[1]
    i_b = jax.nn.sigmoid(gates_b[:, 0 * H:1 * H])
    g_b = jnp.tanh(gates_b[:, 2 * H:3 * H])
    o_b = jax.nn.sigmoid(gates_b[:, 3 * H:4 * H])
    h_bwd = o_b * jnp.tanh(i_b * g_b)                       # (B, H)

    last = jnp.concatenate([h_fwd, h_bwd], axis=-1)         # (B, 2H)

    # ---- fused classifier: Linear -> ReLU -> (Dropout=identity) -> Linear ----
    cls = jnp.maximum(jnp.dot(last, w1_ref[...],
                              preferred_element_type=jnp.float32) + b1_ref[...], 0.0)
    o_ref[...] = (jnp.dot(cls, w2_ref[...],
                          preferred_element_type=jnp.float32)
                  + b2_ref[...]).astype(o_ref.dtype)


def top_bilstm_and_classify(x_tm, wih, whh, b, w1, b1, w2, b2):
    S, B, _ = x_tm.shape
    H = whh.shape[1]
    n_cls = w2.shape[1]
    return pl.pallas_call(
        functools.partial(_top_lstm_cls_kernel, S),
        out_shape=jax.ShapeDtypeStruct((B, n_cls), jnp.float32),
        in_specs=[VMEM] * 8,
        out_specs=VMEM,
        scratch_shapes=[pltpu.VMEM((B, H), jnp.float32),
                        pltpu.VMEM((B, H), jnp.float32),
                        pltpu.VMEM((S, B, 4 * H), jnp.float32)],
    )(x_tm, wih, whh, b, w1, b1, w2, b2)


# ---------------------------------------------------------------------------
# model forward
# ---------------------------------------------------------------------------

def crypto_stst_forward(x, params, nhead):
    B, S, _ = x.shape

    h = project_and_encode(x, params["proj_w"], params["proj_b"],
                           params["pe"][:, :S, :])
    for p in params["encoder_layers"]:
        h = encoder_layer(h, p, nhead)

    # LSTM stack runs time-major internally: (B, S, D) -> (S, B, D)
    h_tm = jnp.transpose(h, (1, 0, 2))
    l0 = params["lstm_layers"][0]
    h_tm = bilstm_layer_seq(h_tm, l0["wih"], l0["whh"], l0["b"])  # (S, B, 2H)
    l1 = params["lstm_layers"][1]
    out = top_bilstm_and_classify(h_tm, l1["wih"], l1["whh"], l1["b"],
                                  params["cls_w1"], params["cls_b1"],
                                  params["cls_w2"], params["cls_b2"])
    return out                                                     # (B, 3)


# ---------------------------------------------------------------------------
# parameter creation
# ---------------------------------------------------------------------------

def make_positional_encoding(max_len, d_model):
    position = np.arange(max_len)[:, None].astype(np.float32)
    div_term = np.exp(np.arange(0, d_model, 2).astype(np.float32)
                      * (-np.log(10000.0) / d_model))
    pe = np.zeros((1, max_len, d_model), np.float32)
    pe[0, :, 0::2] = np.sin(position * div_term)
    pe[0, :, 1::2] = np.cos(position * div_term)
    return jnp.asarray(pe)


def init_params(key, feature_dim, d_model, nhead, num_layers, dim_ff, max_len):
    keys = iter(jax.random.split(key, 512))

    def rand(shape, fan_in):
        return jax.random.normal(next(keys), shape, jnp.float32) / np.sqrt(float(fan_in))

    params = {
        "pe": make_positional_encoding(max_len, d_model),
        "proj_w": rand((feature_dim, d_model), feature_dim),
        "proj_b": jnp.zeros((1, d_model), jnp.float32),
        "encoder_layers": [],
        "lstm_layers": [],
        "cls_w1": rand((2 * d_model, d_model), 2 * d_model),
        "cls_b1": jnp.zeros((1, d_model), jnp.float32),
        "cls_w2": rand((d_model, 3), d_model),
        "cls_b2": jnp.zeros((1, 3), jnp.float32),
    }
    for _ in range(num_layers):
        params["encoder_layers"].append({
            "in_proj_w": rand((d_model, 3 * d_model), d_model),
            "in_proj_b": jnp.zeros((1, 3 * d_model), jnp.float32),
            "out_w": rand((d_model, d_model), d_model),
            "out_b": jnp.zeros((1, d_model), jnp.float32),
            "ln1_g": jnp.ones((1, d_model), jnp.float32),
            "ln1_b": jnp.zeros((1, d_model), jnp.float32),
            "ff1_w": rand((d_model, dim_ff), d_model),
            "ff1_b": jnp.zeros((1, dim_ff), jnp.float32),
            "ff2_w": rand((dim_ff, d_model), dim_ff),
            "ff2_b": jnp.zeros((1, d_model), jnp.float32),
            "ln2_g": jnp.ones((1, d_model), jnp.float32),
            "ln2_b": jnp.zeros((1, d_model), jnp.float32),
        })
    # LSTM weights gate-fused along the last axis (gate order i,f,g,o).
    # Importing PyTorch weights: wih[d] = weight_ih_l{L}(_reverse).T  (In,4H),
    # whh[d] = weight_hh.T, b[d] = (bias_ih + bias_hh)[None, :].
    for in_sz in (d_model, 2 * d_model):      # layer 0 and layer 1 input sizes
        params["lstm_layers"].append({
            "wih": rand((2, in_sz, 4 * d_model), in_sz),
            "whh": rand((2, d_model, 4 * d_model), d_model),
            "b": jnp.zeros((2, 1, 4 * d_model), jnp.float32),
        })
    return params


if __name__ == "__main__":
    # Small shapes consistent with the module defaults:
    # feature_dim=24, d_model=64, nhead=4, num_layers=4, dim_feedforward=256.
    B, S = 2, 16
    feature_dim, d_model, nhead = 24, 64, 4
    num_layers, dim_ff = 4, 256

    key = jax.random.PRNGKey(0)
    k_x, k_p = jax.random.split(key)
    x = jax.random.normal(k_x, (B, S, feature_dim), jnp.float32)
    params = init_params(k_p, feature_dim, d_model, nhead, num_layers, dim_ff,
                         max_len=128)

    # TODO(synk): dropout layers are identity (eval-mode); training-mode dropout
    # would need a PRNG-driven mask kernel.
    fwd = jax.jit(functools.partial(crypto_stst_forward, nhead=nhead))
    out = jax.block_until_ready(fwd(x, params))
    assert out.shape == (B, 3) and out.dtype == jnp.float32
    print("KERNEL_OK")
</pallas_src>

<mosaic_0001>
module attributes {stable_mosaic.version = 11 : i64} {
  func.func @_proj_pe_kernel(%arg0: memref<2x16x24xf32, #tpu.memory_space<vmem>>, %arg1: memref<24x64xf32, #tpu.memory_space<vmem>>, %arg2: memref<1x64xf32, #tpu.memory_space<vmem>>, %arg3: memref<1x16x64xf32, #tpu.memory_space<vmem>>, %arg4: memref<2x16x64xf32, #tpu.memory_space<vmem>>) attributes {dimension_semantics = [], scalar_prefetch = 0 : i64, scratch_operands = 0 : i64, tpu.core_type = #tpu.core_type<tc>} {
    %c0 = arith.constant 0 : index
    %c0_0 = arith.constant 0 : index
    %c0_1 = arith.constant 0 : index
    %0 = vector.load %arg0[%c0, %c0_0, %c0_1] : memref<2x16x24xf32, #tpu.memory_space<vmem>>, vector<2x16x24xf32>
    %1 = vector.shape_cast %0 : vector<2x16x24xf32> to vector<32x24xf32>
    %c0_2 = arith.constant 0 : index
    %c0_3 = arith.constant 0 : index
    %2 = vector.load %arg1[%c0_2, %c0_3] : memref<24x64xf32, #tpu.memory_space<vmem>>, vector<24x64xf32>
    %cst = arith.constant dense<0.000000e+00> : vector<32x64xf32>
    %3 = tpu.matmul %1, %2, %cst {dimension_numbers = #tpu.dot_dimension_numbers<[1], [0], [0], [1], [0, 0, 1, 1], [], []>} : vector<32x24xf32>, vector<24x64xf32>, vector<32x64xf32> -> vector<32x64xf32>
    %c0_4 = arith.constant 0 : index
    %c0_5 = arith.constant 0 : index
    %4 = vector.load %arg2[%c0_4, %c0_5] : memref<1x64xf32, #tpu.memory_space<vmem>>, vector<1x64xf32>
    %5 = vector.broadcast %4 : vector<1x64xf32> to vector<32x64xf32>
    %6 = arith.addf %3, %5 : vector<32x64xf32>
    %7 = vector.shape_cast %6 : vector<32x64xf32> to vector<2x16x64xf32>
    %c0_6 = arith.constant 0 : index
    %c0_7 = arith.constant 0 : index
    %c0_8 = arith.constant 0 : index
    %8 = vector.load %arg3[%c0_6, %c0_7, %c0_8] : memref<1x16x64xf32, #tpu.memory_space<vmem>>, vector<1x16x64xf32>
    %9 = vector.broadcast %8 : vector<1x16x64xf32> to vector<2x16x64xf32>
    %10 = arith.addf %7, %9 : vector<2x16x64xf32>
    %c0_9 = arith.constant 0 : index
    %c0_10 = arith.constant 0 : index
    %c0_11 = arith.constant 0 : index
    %11 = vector.load %arg4[%c0_9, %c0_10, %c0_11] : memref<2x16x64xf32, #tpu.memory_space<vmem>>, vector<2x16x64xf32>
    tpu.vector_store %arg4[%c0_9, %c0_10, %c0_11], %10 {strides = array<i32>} : memref<2x16x64xf32, #tpu.memory_space<vmem>>, vector<2x16x64xf32>,
    return
  }
}

module attributes {stable_mosaic.version = 11 : i64} {
  func.func @_encoder_layer_kernel(%arg0: memref<2x16x64xf32, #tpu.memory_space<vmem>>, %arg1: memref<64x192xf32, #tpu.memory_space<vmem>>, %arg2: memref<1x192xf32, #tpu.memory_space<vmem>>, %arg3: memref<64x64xf32, #tpu.memory_space<vmem>>, %arg4: memref<1x64xf32, #tpu.memory_space<vmem>>, %arg5: memref<1x64xf32, #tpu.memory_space<vmem>>, %arg6: memref<1x64xf32, #tpu.memory_space<vmem>>, %arg7: memref<64x256xf32, #tpu.memory_space<vmem>>, %arg8: memref<1x256xf32, #tpu.memory_space<vmem>>, %arg9: memref<256x64xf32, #tpu.memory_space<vmem>>, %arg10: memref<1x64xf32, #tpu.memory_space<vmem>>, %arg11: memref<1x64xf32, #tpu.memory_space<vmem>>, %arg12: memref<1x64xf32, #tpu.memory_space<vmem>>, %arg13: memref<2x16x64xf32, #tpu.memory_space<vmem>>) attributes {dimension_semantics = [], scalar_prefetch = 0 : i64, scratch_operands = 0 : i64, tpu.core_type = #tpu.core_type<tc>} {
    %c0 = arith.constant 0 : index
    %c0_0 = arith.constant 0 : index
    %c0_1 = arith.constant 0 : index
    %0 = vector.load %arg0[%c0, %c0_0, %c0_1] : memref<2x16x64xf32, #tpu.memory_space<vmem>>, vector<2x16x64xf32>
    %1 = vector.shape_cast %0 : vector<2x16x64xf32> to vector<32x64xf32>
    %c0_2 = arith.constant 0 : index
    %c0_3 = arith.constant 0 : index
    %2 = vector.load %arg1[%c0_2, %c0_3] : memref<64x192xf32, #tpu.memory_space<vmem>>, vector<64x192xf32>
    %cst = arith.constant dense<0.000000e+00> : vector<32x192xf32>
    %3 = tpu.matmul %1, %2, %cst {dimension_numbers = #tpu.dot_dimension_numbers<[1], [0], [0], [1], [0, 0, 1, 1], [], []>} : vector<32x64xf32>, vector<64x192xf32>, vector<32x192xf32> -> vector<32x192xf32>
    %c0_4 = arith.constant 0 : index
    %c0_5 = arith.constant 0 : index
    %4 = vector.load %arg2[%c0_4, %c0_5] : memref<1x192xf32, #tpu.memory_space<vmem>>, vector<1x192xf32>
    %5 = vector.broadcast %4 : vector<1x192xf32> to vector<32x192xf32>
    %6 = arith.addf %3, %5 : vector<32x192xf32>
    %7 = vector.extract_strided_slice %6 {offsets = [0, 0], sizes = [32, 64], strides = [1, 1]} : vector<32x192xf32> to vector<32x64xf32>
    %8 = vector.shape_cast %7 : vector<32x64xf32> to vector<2x16x64xf32>
    %9 = vector.extract_strided_slice %6 {offsets = [0, 64], sizes = [32, 64], strides = [1, 1]} : vector<32x192xf32> to vector<32x64xf32>
    %10 = vector.shape_cast %9 : vector<32x64xf32> to vector<2x16x64xf32>
    %11 = vector.extract_strided_slice %6 {offsets = [0, 128], sizes = [32, 64], strides = [1, 1]} : vector<32x192xf32> to vector<32x64xf32>
    %12 = vector.shape_cast %11 : vector<32x64xf32> to vector<2x16x64xf32>
    %13 = vector.extract_strided_slice %8 {offsets = [0, 0, 0], sizes = [2, 16, 16], strides = [1, 1, 1]} : vector<2x16x64xf32> to vector<2x16x16xf32>
    %14 = vector.extract_strided_slice %10 {offsets = [0, 0, 0], sizes = [2, 16, 16], strides = [1, 1, 1]} : vector<2x16x64xf32> to vector<2x16x16xf32>
    %15 = vector.extract_strided_slice %12 {offsets = [0, 0, 0], sizes = [2, 16, 16], strides = [1, 1, 1]} : vector<2x16x64xf32> to vector<2x16x16xf32>
    "tpu.trace_start"() <{level = 10 : i32, message = "bqd,bkd->bqk"}> : () -> ()
    %cst_6 = arith.constant dense<0.000000e+00> : vector<2x16x16xf32>
    %16 = tpu.matmul %13, %14, %cst_6 {dimension_numbers = #tpu.dot_dimension_numbers<[2], [2], [1], [1], [0, 0, 0, 1, 1, 1], [0], [0]>} : vector<2x16x16xf32>, vector<2x16x16xf32>, vector<2x16x16xf32> -> vector<2x16x16xf32>
    "tpu.trace_stop"() : () -> ()
    %cst_7 = arith.constant 2.500000e-01 : f32
    %17 = vector.broadcast %cst_7 : f32 to vector<2x16x16xf32>
    %18 = arith.mulf %16, %17 : vector<2x16x16xf32>
    %cst_8 = arith.constant dense<0xFF800000> : vector<2x16xf32>
    %19 = vector.multi_reduction <maximumf>, %18, %cst_8 [2] : vector<2x16x16xf32> to vector<2x16xf32>
    %20 = vector.shape_cast %19 : vector<2x16xf32> to vector<2x16x1xf32>
    %21 = vector.broadcast %20 : vector<2x16x1xf32> to vector<2x16x16xf32>
    %22 = arith.subf %18, %21 : vector<2x16x16xf32>
    %23 = math.exp %22 : vector<2x16x16xf32>
    %cst_9 = arith.constant dense<0.000000e+00> : vector<2x16xf32>
    %24 = vector.multi_reduction <add>, %23, %cst_9 [2] : vector<2x16x16xf32> to vector<2x16xf32>
    %25 = vector.shape_cast %24 : vector<2x16xf32> to vector<2x16x1xf32>
    %26 = tpu.reciprocal %25 {approx = true} : vector<2x16x1xf32> -> vector<2x16x1xf32>
    %27 = vector.broadcast %26 : vector<2x16x1xf32> to vector<2x16x16xf32>
    %28 = arith.mulf %23, %27 : vector<2x16x16xf32>
    "tpu.trace_start"() <{level = 10 : i32, message = "bqk,bkd->bqd"}> : () -> ()
    %cst_10 = arith.constant dense<0.000000e+00> : vector<2x16x16xf32>
    %29 = tpu.matmul %28, %15, %cst_10 {dimension_numbers = #tpu.dot_dimension_numbers<[2], [1], [1], [2], [0, 0, 0, 1, 1, 2], [0], [0]>} : vector<2x16x16xf32>, vector<2x16x16xf32>, vector<2x16x16xf32> -> vector<2x16x16xf32>
    "tpu.trace_stop"() : () -> ()
    %30 = vector.extract_strided_slice %8 {offsets = [0, 0, 16], sizes = [2, 16, 16], strides = [1, 1, 1]} : vector<2x16x64xf32> to vector<2x16x16xf32>
    %31 = vector.extract_strided_slice %10 {offsets = [0, 0, 16], sizes = [2, 16, 16], strides = [1, 1, 1]} : vector<2x16x64xf32> to vector<2x16x16xf32>
    %32 = vector.extract_strided_slice %12 {offsets = [0, 0, 16], sizes = [2, 16, 16], strides = [1, 1, 1]} : vector<2x16x64xf32> to vector<2x16x16xf32>
    "tpu.trace_start"() <{level = 10 : i32, message = "bqd,bkd->bqk"}> : () -> ()
    %cst_11 = arith.constant dense<0.000000e+00> : vector<2x16x16xf32>
    %33 = tpu.matmul %30, %31, %cst_11 {dimension_numbers = #tpu.dot_dimension_numbers<[2], [2], [1], [1], [0, 0, 0, 1, 1, 1], [0], [0]>} : vector<2x16x16xf32>, vector<2x16x16xf32>, vector<2x16x16xf32> -> vector<2x16x16xf32>
    "tpu.trace_stop"() : () -> ()
    %cst_12 = arith.constant 2.500000e-01 : f32
    %34 = vector.broadcast %cst_12 : f32 to vector<2x16x16xf32>
    %35 = arith.mulf %33, %34 : vector<2x16x16xf32>
    %cst_13 = arith.constant dense<0xFF800000> : vector<2x16xf32>
    %36 = vector.multi_reduction <maximumf>, %35, %cst_13 [2] : vector<2x16x16xf32> to vector<2x16xf32>
    %37 = vector.shape_cast %36 : vector<2x16xf32> to vector<2x16x1xf32>
    %38 = vector.broadcast %37 : vector<2x16x1xf32> to vector<2x16x16xf32>
    %39 = arith.subf %35, %38 : vector<2x16x16xf32>
    %40 = math.exp %39 : vector<2x16x16xf32>
    %cst_14 = arith.constant dense<0.000000e+00> : vector<2x16xf32>
    %41 = vector.multi_reduction <add>, %40, %cst_14 [2] : vector<2x16x16xf32> to vector<2x16xf32>
    %42 = vector.shape_cast %41 : vector<2x16xf32> to vector<2x16x1xf32>
    %43 = tpu.reciprocal %42 {approx = true} : vector<2x16x1xf32> -> vector<2x16x1xf32>
    %44 = vector.broadcast %43 : vector<2x16x1xf32> to vector<2x16x16xf32>
    %45 = arith.mulf %40, %44 : vector<2x16x16xf32>
    "tpu.trace_start"() <{level = 10 : i32, message = "bqk,bkd->bqd"}> : () -> ()
    %cst_15 = arith.constant dense<0.000000e+00> : vector<2x16x16xf32>
    %46 = tpu.matmul %45, %32, %cst_15 {dimension_numbers = #tpu.dot_dimension_numbers<[2], [1], [1], [2], [0, 0, 0, 1, 1, 2], [0], [0]>} : vector<2x16x16xf32>, vector<2x16x16xf32>, vector<2x16x16xf32> -> vector<2x16x16xf32>
    "tpu.trace_stop"() : () -> ()
    %47 = vector.extract_strided_slice %8 {offsets = [0, 0, 32], sizes = [2, 16, 16], strides = [1, 1, 1]} : vector<2x16x64xf32> to vector<2x16x16xf32>
    %48 = vector.extract_strided_slice %10 {offsets = [0, 0, 32], sizes = [2, 16, 16], strides = [1, 1, 1]} : vector<2x16x64xf32> to vector<2x16x16xf32>
    %49 = vector.extract_strided_slice %12 {offsets = [0, 0, 32], sizes = [2, 16, 16], strides = [1, 1, 1]} : vector<2x16x64xf32> to vector<2x16x16xf32>
    "tpu.trace_start"() <{level = 10 : i32, message = "bqd,bkd->bqk"}> : () -> ()
    %cst_16 = arith.constant dense<0.000000e+00> : vector<2x16x16xf32>
    %50 = tpu.matmul %47, %48, %cst_16 {dimension_numbers = #tpu.dot_dimension_numbers<[2], [2], [1], [1], [0, 0, 0, 1, 1, 1], [0], [0]>} : vector<2x16x16xf32>, vector<2x16x16xf32>, vector<2x16x16xf32> -> vector<2x16x16xf32>
    "tpu.trace_stop"() : () -> ()
    %cst_17 = arith.constant 2.500000e-01 : f32
    %51 = vector.broadcast %cst_17 : f32 to vector<2x16x16xf32>
    %52 = arith.mulf %50, %51 : vector<2x16x16xf32>
    %cst_18 = arith.constant dense<0xFF800000> : vector<2x16xf32>
    %53 = vector.multi_reduction <maximumf>, %52, %cst_18 [2] : vector<2x16x16xf32> to vector<2x16xf32>
    %54 = vector.shape_cast %53 : vector<2x16xf32> to vector<2x16x1xf32>
    %55 = vector.broadcast %54 : vector<2x16x1xf32> to vector<2x16x16xf32>
    %56 = arith.subf %52, %55 : vector<2x16x16xf32>
    %57 = math.exp %56 : vector<2x16x16xf32>
    %cst_19 = arith.constant dense<0.000000e+00> : vector<2x16xf32>
    %58 = vector.multi_reduction <add>, %57, %cst_19 [2] : vector<2x16x16xf32> to vector<2x16xf32>
    %59 = vector.shape_cast %58 : vector<2x16xf32> to vector<2x16x1xf32>
    %60 = tpu.reciprocal %59 {approx = true} : vector<2x16x1xf32> -> vector<2x16x1xf32>
    %61 = vector.broadcast %60 : vector<2x16x1xf32> to vector<2x16x16xf32>
    %62 = arith.mulf %57, %61 : vector<2x16x16xf32>
    "tpu.trace_start"() <{level = 10 : i32, message = "bqk,bkd->bqd"}> : () -> ()
    %cst_20 = arith.constant dense<0.000000e+00> : vector<2x16x16xf32>
    %63 = tpu.matmul %62, %49, %cst_20 {dimension_numbers = #tpu.dot_dimension_numbers<[2], [1], [1], [2], [0, 0, 0, 1, 1, 2], [0], [0]>} : vector<2x16x16xf32>, vector<2x16x16xf32>, vector<2x16x16xf32> -> vector<2x16x16xf32>
    "tpu.trace_stop"() : () -> ()
    %64 = vector.extract_strided_slice %8 {offsets = [0, 0, 48], sizes = [2, 16, 16], strides = [1, 1, 1]} : vector<2x16x64xf32> to vector<2x16x16xf32>
    %65 = vector.extract_strided_slice %10 {offsets = [0, 0, 48], sizes = [2, 16, 16], strides = [1, 1, 1]} : vector<2x16x64xf32> to vector<2x16x16xf32>
    %66 = vector.extract_strided_slice %12 {offsets = [0, 0, 48], sizes = [2, 16, 16], strides = [1, 1, 1]} : vector<2x16x64xf32> to vector<2x16x16xf32>
    "tpu.trace_start"() <{level = 10 : i32, message = "bqd,bkd->bqk"}> : () -> ()
    %cst_21 = arith.constant dense<0.000000e+00> : vector<2x16x16xf32>
    %67 = tpu.matmul %64, %65, %cst_21 {dimension_numbers = #tpu.dot_dimension_numbers<[2], [2], [1], [1], [0, 0, 0, 1, 1, 1], [0], [0]>} : vector<2x16x16xf32>, vector<2x16x16xf32>, vector<2x16x16xf32> -> vector<2x16x16xf32>
    "tpu.trace_stop"() : () -> ()
    %cst_22 = arith.constant 2.500000e-01 : f32
    %68 = vector.broadcast %cst_22 : f32 to vector<2x16x16xf32>
    %69 = arith.mulf %67, %68 : vector<2x16x16xf32>
    %cst_23 = arith.constant dense<0xFF800000> : vector<2x16xf32>
    %70 = vector.multi_reduction <maximumf>, %69, %cst_23 [2] : vector<2x16x16xf32> to vector<2x16xf32>
    %71 = vector.shape_cast %70 : vector<2x16xf32> to vector<2x16x1xf32>
    %72 = vector.broadcast %71 : vector<2x16x1xf32> to vector<2x16x16xf32>
    %73 = arith.subf %69, %72 : vector<2x16x16xf32>
    %74 = math.exp %73 : vector<2x16x16xf32>
    %cst_24 = arith.constant dense<0.000000e+00> : vector<2x16xf32>
    %75 = vector.multi_reduction <add>, %74, %cst_24 [2] : vector<2x16x16xf32> to vector<2x16xf32>
    %76 = vector.shape_cast %75 : vector<2x16xf32> to vector<2x16x1xf32>
    %77 = tpu.reciprocal %76 {approx = true} : vector<2x16x1xf32> -> vector<2x16x1xf32>
    %78 = vector.broadcast %77 : vector<2x16x1xf32> to vector<2x16x16xf32>
    %79 = arith.mulf %74, %78 : vector<2x16x16xf32>
    "tpu.trace_start"() <{level = 10 : i32, message = "bqk,bkd->bqd"}> : () -> ()
    %cst_25 = arith.constant dense<0.000000e+00> : vector<2x16x16xf32>
    %80 = tpu.matmul %79, %66, %cst_25 {dimension_numbers = #tpu.dot_dimension_numbers<[2], [1], [1], [2], [0, 0, 0, 1, 1, 2], [0], [0]>} : vector<2x16x16xf32>, vector<2x16x16xf32>, vector<2x16x16xf32> -> vector<2x16x16xf32>
    "tpu.trace_stop"() : () -> ()
    %81 = tpu.concatenate %29, %46, %63, %80 in 2 : vector<2x16x16xf32>, vector<2x16x16xf32>, vector<2x16x16xf32>, vector<2x16x16xf32> -> vector<2x16x64xf32>
    %82 = vector.shape_cast %81 : vector<2x16x64xf32> to vector<32x64xf32>
    %c0_26 = arith.constant 0 : index
    %c0_27 = arith.constant 0 : index
    %83 = vector.load %arg3[%c0_26, %c0_27] : memref<64x64xf32, #tpu.memory_space<vmem>>, vector<64x64xf32>
    %cst_28 = arith.constant dense<0.000000e+00> : vector<32x64xf32>
    %84 = tpu.matmul %82, %83, %cst_28 {dimension_numbers = #tpu.dot_dimension_numbers<[1], [0], [0], [1], [0, 0, 1, 1], [], []>} : vector<32x64xf32>, vector<64x64xf32>, vector<32x64xf32> -> vector<32x64xf32>
    %c0_29 = arith.constant 0 : index
    %c0_30 = arith.constant 0 : index
    %85 = vector.load %arg4[%c0_29, %c0_30] : memref<1x64xf32, #tpu.memory_space<vmem>>, vector<1x64xf32>
    %86 = vector.broadcast %85 : vector<1x64xf32> to vector<32x64xf32>
    %87 = arith.addf %84, %86 : vector<32x64xf32>
    %88 = arith.addf %1, %87 : vector<32x64xf32>
    %c0_31 = arith.constant 0 : index
    %c0_32 = arith.constant 0 : index
    %89 = vector.load %arg5[%c0_31, %c0_32] : memref<1x64xf32, #tpu.memory_space<vmem>>, vector<1x64xf32>
    %c0_33 = arith.constant 0 : index
    %c0_34 = arith.constant 0 : index
    %90 = vector.load %arg6[%c0_33, %c0_34] : memref<1x64xf32, #tpu.memory_space<vmem>>, vector<1x64xf32>
    %cst_35 = arith.constant dense<0.000000e+00> : vector<32xf32>
    %91 = vector.multi_reduction <add>, %88, %cst_35 [1] : vector<32x64xf32> to vector<32xf32>
    %92 = vector.shape_cast %91 : vector<32xf32> to vector<32x1xf32>
    %cst_36 = arith.constant 6.400000e+01 : f32
    %93 = vector.broadcast %cst_36 : f32 to vector<32x1xf32>
    %94 = arith.divf %92, %93 : vector<32x1xf32>
    %95 = vector.broadcast %94 : vector<32x1xf32> to vector<32x64xf32>
    %96 = arith.subf %88, %95 : vector<32x64xf32>
    %97 = arith.mulf %96, %96 : vector<32x64xf32>
    %cst_37 = arith.constant dense<0.000000e+00> : vector<32xf32>
    %98 = vector.multi_reduction <add>, %97, %cst_37 [1] : vector<32x64xf32> to vector<32xf32>
    %99 = vector.shape_cast %98 : vector<32xf32> to vector<32x1xf32>
    %cst_38 = arith.constant 6.400000e+01 : f32
    %100 = vector.broadcast %cst_38 : f32 to vector<32x1xf32>
    %101 = arith.divf %99, %100 : vector<32x1xf32>
    %cst_39 = arith.constant 9.99999974E-6 : f32
    %102 = vector.broadcast %cst_39 : f32 to vector<32x1xf32>
    %103 = arith.addf %101, %102 : vector<32x1xf32>
    %104 = math.rsqrt %103 : vector<32x1xf32>
    %105 = vector.broadcast %104 : vector<32x1xf32> to vector<32x64xf32>
    %106 = arith.mulf %96, %105 : vector<32x64xf32>
    %107 = vector.broadcast %89 : vector<1x64xf32> to vector<32x64xf32>
    %108 = arith.mulf %106, %107 : vector<32x64xf32>
    %109 = vector.broadcast %90 : vector<1x64xf32> to vector<32x64xf32>
    %110 = arith.addf %108, %109 : vector<32x64xf32>
    %c0_40 = arith.constant 0 : index
    %c0_41 = arith.constant 0 : index
    %111 = vector.load %arg7[%c0_40, %c0_41] : memref<64x256xf32, #tpu.memory_space<vmem>>, vector<64x256xf32>
    %cst_42 = arith.constant dense<0.000000e+00> : vector<32x256xf32>
    %112 = tpu.matmul %110, %111, %cst_42 {dimension_numbers = #tpu.dot_dimension_numbers<[1], [0], [0], [1], [0, 0, 1, 1], [], []>} : vector<32x64xf32>, vector<64x256xf32>, vector<32x256xf32> -> vector<32x256xf32>
    %c0_43 = arith.constant 0 : index
    %c0_44 = arith.constant 0 : index
    %113 = vector.load %arg8[%c0_43, %c0_44] : memref<1x256xf32, #tpu.memory_space<vmem>>, vector<1x256xf32>
    %114 = vector.broadcast %113 : vector<1x256xf32> to vector<32x256xf32>
    %115 = arith.addf %112, %114 : vector<32x256xf32>
    %cst_45 = arith.constant 0.000000e+00 : f32
    %116 = vector.broadcast %cst_45 : f32 to vector<32x256xf32>
    %117 = arith.maximumf %115, %116 : vector<32x256xf32>
    %c0_46 = arith.constant 0 : index
    %c0_47 = arith.constant 0 : index
    %118 = vector.load %arg9[%c0_46, %c0_47] : memref<256x64xf32, #tpu.memory_space<vmem>>, vector<256x64xf32>
    %cst_48 = arith.constant dense<0.000000e+00> : vector<32x64xf32>
    %119 = tpu.matmul %117, %118, %cst_48 {dimension_numbers = #tpu.dot_dimension_numbers<[1], [0], [0], [1], [0, 0, 1, 1], [], []>} : vector<32x256xf32>, vector<256x64xf32>, vector<32x64xf32> -> vector<32x64xf32>
    %c0_49 = arith.constant 0 : index
    %c0_50 = arith.constant 0 : index
    %120 = vector.load %arg10[%c0_49, %c0_50] : memref<1x64xf32, #tpu.memory_space<vmem>>, vector<1x64xf32>
    %121 = vector.broadcast %120 : vector<1x64xf32> to vector<32x64xf32>
    %122 = arith.addf %119, %121 : vector<32x64xf32>
    %123 = arith.addf %110, %122 : vector<32x64xf32>
    %c0_51 = arith.constant 0 : index
    %c0_52 = arith.constant 0 : index
    %124 = vector.load %arg11[%c0_51, %c0_52] : memref<1x64xf32, #tpu.memory_space<vmem>>, vector<1x64xf32>
    %c0_53 = arith.constant 0 : index
    %c0_54 = arith.constant 0 : index
    %125 = vector.load %arg12[%c0_53, %c0_54] : memref<1x64xf32, #tpu.memory_space<vmem>>, vector<1x64xf32>
    %cst_55 = arith.constant dense<0.000000e+00> : vector<32xf32>
    %126 = vector.multi_reduction <add>, %123, %cst_55 [1] : vector<32x64xf32> to vector<32xf32>
    %127 = vector.shape_cast %126 : vector<32xf32> to vector<32x1xf32>
    %cst_56 = arith.constant 6.400000e+01 : f32
    %128 = vector.broadcast %cst_56 : f32 to vector<32x1xf32>
    %129 = arith.divf %127, %128 : vector<32x1xf32>
    %130 = vector.broadcast %129 : vector<32x1xf32> to vector<32x64xf32>
    %131 = arith.subf %123, %130 : vector<32x64xf32>
    %132 = arith.mulf %131, %131 : vector<32x64xf32>
    %cst_57 = arith.constant dense<0.000000e+00> : vector<32xf32>
    %133 = vector.multi_reduction <add>, %132, %cst_57 [1] : vector<32x64xf32> to vector<32xf32>
    %134 = vector.shape_cast %133 : vector<32xf32> to vector<32x1xf32>
    %cst_58 = arith.constant 6.400000e+01 : f32
    %135 = vector.broadcast %cst_58 : f32 to vector<32x1xf32>
    %136 = arith.divf %134, %135 : vector<32x1xf32>
    %cst_59 = arith.constant 9.99999974E-6 : f32
    %137 = vector.broadcast %cst_59 : f32 to vector<32x1xf32>
    %138 = arith.addf %136, %137 : vector<32x1xf32>
    %139 = math.rsqrt %138 : vector<32x1xf32>
    %140 = vector.broadcast %139 : vector<32x1xf32> to vector<32x64xf32>
    %141 = arith.mulf %131, %140 : vector<32x64xf32>
    %142 = vector.broadcast %124 : vector<1x64xf32> to vector<32x64xf32>
    %143 = arith.mulf %141, %142 : vector<32x64xf32>
    %144 = vector.broadcast %125 : vector<1x64xf32> to vector<32x64xf32>
    %145 = arith.addf %143, %144 : vector<32x64xf32>
    %146 = vector.shape_cast %145 : vector<32x64xf32> to vector<2x16x64xf32>
    %c0_60 = arith.constant 0 : index
    %c0_61 = arith.constant 0 : index
    %c0_62 = arith.constant 0 : index
    %147 = vector.load %arg13[%c0_60, %c0_61, %c0_62] : memref<2x16x64xf32, #tpu.memory_space<vmem>>, vector<2x16x64xf32>
    tpu.vector_store %arg13[%c0_60, %c0_61, %c0_62], %146 {strides = array<i32>} : memref<2x16x64xf32, #tpu.memory_space<vmem>>, vector<2x16x64xf32>,
    return
  }
}

module attributes {stable_mosaic.version = 11 : i64} {
  func.func @_encoder_layer_kernel(%arg0: memref<2x16x64xf32, #tpu.memory_space<vmem>>, %arg1: memref<64x192xf32, #tpu.memory_space<vmem>>, %arg2: memref<1x192xf32, #tpu.memory_space<vmem>>, %arg3: memref<64x64xf32, #tpu.memory_space<vmem>>, %arg4: memref<1x64xf32, #tpu.memory_space<vmem>>, %arg5: memref<1x64xf32, #tpu.memory_space<vmem>>, %arg6: memref<1x64xf32, #tpu.memory_space<vmem>>, %arg7: memref<64x256xf32, #tpu.memory_space<vmem>>, %arg8: memref<1x256xf32, #tpu.memory_space<vmem>>, %arg9: memref<256x64xf32, #tpu.memory_space<vmem>>, %arg10: memref<1x64xf32, #tpu.memory_space<vmem>>, %arg11: memref<1x64xf32, #tpu.memory_space<vmem>>, %arg12: memref<1x64xf32, #tpu.memory_space<vmem>>, %arg13: memref<2x16x64xf32, #tpu.memory_space<vmem>>) attributes {dimension_semantics = [], scalar_prefetch = 0 : i64, scratch_operands = 0 : i64, tpu.core_type = #tpu.core_type<tc>} {
    %c0 = arith.constant 0 : index
    %c0_0 = arith.constant 0 : index
    %c0_1 = arith.constant 0 : index
    %0 = vector.load %arg0[%c0, %c0_0, %c0_1] : memref<2x16x64xf32, #tpu.memory_space<vmem>>, vector<2x16x64xf32>
    %1 = vector.shape_cast %0 : vector<2x16x64xf32> to vector<32x64xf32>
    %c0_2 = arith.constant 0 : index
    %c0_3 = arith.constant 0 : index
    %2 = vector.load %arg1[%c0_2, %c0_3] : memref<64x192xf32, #tpu.memory_space<vmem>>, vector<64x192xf32>
    %cst = arith.constant dense<0.000000e+00> : vector<32x192xf32>
    %3 = tpu.matmul %1, %2, %cst {dimension_numbers = #tpu.dot_dimension_numbers<[1], [0], [0], [1], [0, 0, 1, 1], [], []>} : vector<32x64xf32>, vector<64x192xf32>, vector<32x192xf32> -> vector<32x192xf32>
    %c0_4 = arith.constant 0 : index
    %c0_5 = arith.constant 0 : index
    %4 = vector.load %arg2[%c0_4, %c0_5] : memref<1x192xf32, #tpu.memory_space<vmem>>, vector<1x192xf32>
    %5 = vector.broadcast %4 : vector<1x192xf32> to vector<32x192xf32>
    %6 = arith.addf %3, %5 : vector<32x192xf32>
    %7 = vector.extract_strided_slice %6 {offsets = [0, 0], sizes = [32, 64], strides = [1, 1]} : vector<32x192xf32> to vector<32x64xf32>
    %8 = vector.shape_cast %7 : vector<32x64xf32> to vector<2x16x64xf32>
    %9 = vector.extract_strided_slice %6 {offsets = [0, 64], sizes = [32, 64], strides = [1, 1]} : vector<32x192xf32> to vector<32x64xf32>
    %10 = vector.shape_cast %9 : vector<32x64xf32> to vector<2x16x64xf32>
    %11 = vector.extract_strided_slice %6 {offsets = [0, 128], sizes = [32, 64], strides = [1, 1]} : vector<32x192xf32> to vector<32x64xf32>
    %12 = vector.shape_cast %11 : vector<32x64xf32> to vector<2x16x64xf32>
    %13 = vector.extract_strided_slice %8 {offsets = [0, 0, 0], sizes = [2, 16, 16], strides = [1, 1, 1]} : vector<2x16x64xf32> to vector<2x16x16xf32>
    %14 = vector.extract_strided_slice %10 {offsets = [0, 0, 0], sizes = [2, 16, 16], strides = [1, 1, 1]} : vector<2x16x64xf32> to vector<2x16x16xf32>
    %15 = vector.extract_strided_slice %12 {offsets = [0, 0, 0], sizes = [2, 16, 16], strides = [1, 1, 1]} : vector<2x16x64xf32> to vector<2x16x16xf32>
    "tpu.trace_start"() <{level = 10 : i32, message = "bqd,bkd->bqk"}> : () -> ()
    %cst_6 = arith.constant dense<0.000000e+00> : vector<2x16x16xf32>
    %16 = tpu.matmul %13, %14, %cst_6 {dimension_numbers = #tpu.dot_dimension_numbers<[2], [2], [1], [1], [0, 0, 0, 1, 1, 1], [0], [0]>} : vector<2x16x16xf32>, vector<2x16x16xf32>, vector<2x16x16xf32> -> vector<2x16x16xf32>
    "tpu.trace_stop"() : () -> ()
    %cst_7 = arith.constant 2.500000e-01 : f32
    %17 = vector.broadcast %cst_7 : f32 to vector<2x16x16xf32>
    %18 = arith.mulf %16, %17 : vector<2x16x16xf32>
    %cst_8 = arith.constant dense<0xFF800000> : vector<2x16xf32>
    %19 = vector.multi_reduction <maximumf>, %18, %cst_8 [2] : vector<2x16x16xf32> to vector<2x16xf32>
    %20 = vector.shape_cast %19 : vector<2x16xf32> to vector<2x16x1xf32>
    %21 = vector.broadcast %20 : vector<2x16x1xf32> to vector<2x16x16xf32>
    %22 = arith.subf %18, %21 : vector<2x16x16xf32>
    %23 = math.exp %22 : vector<2x16x16xf32>
    %cst_9 = arith.constant dense<0.000000e+00> : vector<2x16xf32>
    %24 = vector.multi_reduction <add>, %23, %cst_9 [2] : vector<2x16x16xf32> to vector<2x16xf32>
    %25 = vector.shape_cast %24 : vector<2x16xf32> to vector<2x16x1xf32>
    %26 = tpu.reciprocal %25 {approx = true} : vector<2x16x1xf32> -> vector<2x16x1xf32>
    %27 = vector.broadcast %26 : vector<2x16x1xf32> to vector<2x16x16xf32>
    %28 = arith.mulf %23, %27 : vector<2x16x16xf32>
    "tpu.trace_start"() <{level = 10 : i32, message = "bqk,bkd->bqd"}> : () -> ()
    %cst_10 = arith.constant dense<0.000000e+00> : vector<2x16x16xf32>
    %29 = tpu.matmul %28, %15, %cst_10 {dimension_numbers = #tpu.dot_dimension_numbers<[2], [1], [1], [2], [0, 0, 0, 1, 1, 2], [0], [0]>} : vector<2x16x16xf32>, vector<2x16x16xf32>, vector<2x16x16xf32> -> vector<2x16x16xf32>
    "tpu.trace_stop"() : () -> ()
    %30 = vector.extract_strided_slice %8 {offsets = [0, 0, 16], sizes = [2, 16, 16], strides = [1, 1, 1]} : vector<2x16x64xf32> to vector<2x16x16xf32>
    %31 = vector.extract_strided_slice %10 {offsets = [0, 0, 16], sizes = [2, 16, 16], strides = [1, 1, 1]} : vector<2x16x64xf32> to vector<2x16x16xf32>
    %32 = vector.extract_strided_slice %12 {offsets = [0, 0, 16], sizes = [2, 16, 16], strides = [1, 1, 1]} : vector<2x16x64xf32> to vector<2x16x16xf32>
    "tpu.trace_start"() <{level = 10 : i32, message = "bqd,bkd->bqk"}> : () -> ()
    %cst_11 = arith.constant dense<0.000000e+00> : vector<2x16x16xf32>
    %33 = tpu.matmul %30, %31, %cst_11 {dimension_numbers = #tpu.dot_dimension_numbers<[2], [2], [1], [1], [0, 0, 0, 1, 1, 1], [0], [0]>} : vector<2x16x16xf32>, vector<2x16x16xf32>, vector<2x16x16xf32> -> vector<2x16x16xf32>
    "tpu.trace_stop"() : () -> ()
    %cst_12 = arith.constant 2.500000e-01 : f32
    %34 = vector.broadcast %cst_12 : f32 to vector<2x16x16xf32>
    %35 = arith.mulf %33, %34 : vector<2x16x16xf32>
    %cst_13 = arith.constant dense<0xFF800000> : vector<2x16xf32>
    %36 = vector.multi_reduction <maximumf>, %35, %cst_13 [2] : vector<2x16x16xf32> to vector<2x16xf32>
    %37 = vector.shape_cast %36 : vector<2x16xf32> to vector<2x16x1xf32>
    %38 = vector.broadcast %37 : vector<2x16x1xf32> to vector<2x16x16xf32>
    %39 = arith.subf %35, %38 : vector<2x16x16xf32>
    %40 = math.exp %39 : vector<2x16x16xf32>
    %cst_14 = arith.constant dense<0.000000e+00> : vector<2x16xf32>
    %41 = vector.multi_reduction <add>, %40, %cst_14 [2] : vector<2x16x16xf32> to vector<2x16xf32>
    %42 = vector.shape_cast %41 : vector<2x16xf32> to vector<2x16x1xf32>
    %43 = tpu.reciprocal %42 {approx = true} : vector<2x16x1xf32> -> vector<2x16x1xf32>
    %44 = vector.broadcast %43 : vector<2x16x1xf32> to vector<2x16x16xf32>
    %45 = arith.mulf %40, %44 : vector<2x16x16xf32>
    "tpu.trace_start"() <{level = 10 : i32, message = "bqk,bkd->bqd"}> : () -> ()
    %cst_15 = arith.constant dense<0.000000e+00> : vector<2x16x16xf32>
    %46 = tpu.matmul %45, %32, %cst_15 {dimension_numbers = #tpu.dot_dimension_numbers<[2], [1], [1], [2], [0, 0, 0, 1, 1, 2], [0], [0]>} : vector<2x16x16xf32>, vector<2x16x16xf32>, vector<2x16x16xf32> -> vector<2x16x16xf32>
    "tpu.trace_stop"() : () -> ()
    %47 = vector.extract_strided_slice %8 {offsets = [0, 0, 32], sizes = [2, 16, 16], strides = [1, 1, 1]} : vector<2x16x64xf32> to vector<2x16x16xf32>
    %48 = vector.extract_strided_slice %10 {offsets = [0, 0, 32], sizes = [2, 16, 16], strides = [1, 1, 1]} : vector<2x16x64xf32> to vector<2x16x16xf32>
    %49 = vector.extract_strided_slice %12 {offsets = [0, 0, 32], sizes = [2, 16, 16], strides = [1, 1, 1]} : vector<2x16x64xf32> to vector<2x16x16xf32>
    "tpu.trace_start"() <{level = 10 : i32, message = "bqd,bkd->bqk"}> : () -> ()
    %cst_16 = arith.constant dense<0.000000e+00> : vector<2x16x16xf32>
    %50 = tpu.matmul %47, %48, %cst_16 {dimension_numbers = #tpu.dot_dimension_numbers<[2], [2], [1], [1], [0, 0, 0, 1, 1, 1], [0], [0]>} : vector<2x16x16xf32>, vector<2x16x16xf32>, vector<2x16x16xf32> -> vector<2x16x16xf32>
    "tpu.trace_stop"() : () -> ()
    %cst_17 = arith.constant 2.500000e-01 : f32
    %51 = vector.broadcast %cst_17 : f32 to vector<2x16x16xf32>
    %52 = arith.mulf %50, %51 : vector<2x16x16xf32>
    %cst_18 = arith.constant dense<0xFF800000> : vector<2x16xf32>
    %53 = vector.multi_reduction <maximumf>, %52, %cst_18 [2] : vector<2x16x16xf32> to vector<2x16xf32>
    %54 = vector.shape_cast %53 : vector<2x16xf32> to vector<2x16x1xf32>
    %55 = vector.broadcast %54 : vector<2x16x1xf32> to vector<2x16x16xf32>
    %56 = arith.subf %52, %55 : vector<2x16x16xf32>
    %57 = math.exp %56 : vector<2x16x16xf32>
    %cst_19 = arith.constant dense<0.000000e+00> : vector<2x16xf32>
    %58 = vector.multi_reduction <add>, %57, %cst_19 [2] : vector<2x16x16xf32> to vector<2x16xf32>
    %59 = vector.shape_cast %58 : vector<2x16xf32> to vector<2x16x1xf32>
    %60 = tpu.reciprocal %59 {approx = true} : vector<2x16x1xf32> -> vector<2x16x1xf32>
    %61 = vector.broadcast %60 : vector<2x16x1xf32> to vector<2x16x16xf32>
    %62 = arith.mulf %57, %61 : vector<2x16x16xf32>
    "tpu.trace_start"() <{level = 10 : i32, message = "bqk,bkd->bqd"}> : () -> ()
    %cst_20 = arith.constant dense<0.000000e+00> : vector<2x16x16xf32>
    %63 = tpu.matmul %62, %49, %cst_20 {dimension_numbers = #tpu.dot_dimension_numbers<[2], [1], [1], [2], [0, 0, 0, 1, 1, 2], [0], [0]>} : vector<2x16x16xf32>, vector<2x16x16xf32>, vector<2x16x16xf32> -> vector<2x16x16xf32>
    "tpu.trace_stop"() : () -> ()
    %64 = vector.extract_strided_slice %8 {offsets = [0, 0, 48], sizes = [2, 16, 16], strides = [1, 1, 1]} : vector<2x16x64xf32> to vector<2x16x16xf32>
    %65 = vector.extract_strided_slice %10 {offsets = [0, 0, 48], sizes = [2, 16, 16], strides = [1, 1, 1]} : vector<2x16x64xf32> to vector<2x16x16xf32>
    %66 = vector.extract_strided_slice %12 {offsets = [0, 0, 48], sizes = [2, 16, 16], strides = [1, 1, 1]} : vector<2x16x64xf32> to vector<2x16x16xf32>
    "tpu.trace_start"() <{level = 10 : i32, message = "bqd,bkd->bqk"}> : () -> ()
    %cst_21 = arith.constant dense<0.000000e+00> : vector<2x16x16xf32>
    %67 = tpu.matmul %64, %65, %cst_21 {dimension_numbers = #tpu.dot_dimension_numbers<[2], [2], [1], [1], [0, 0, 0, 1, 1, 1], [0], [0]>} : vector<2x16x16xf32>, vector<2x16x16xf32>, vector<2x16x16xf32> -> vector<2x16x16xf32>
    "tpu.trace_stop"() : () -> ()
    %cst_22 = arith.constant 2.500000e-01 : f32
    %68 = vector.broadcast %cst_22 : f32 to vector<2x16x16xf32>
    %69 = arith.mulf %67, %68 : vector<2x16x16xf32>
    %cst_23 = arith.constant dense<0xFF800000> : vector<2x16xf32>
    %70 = vector.multi_reduction <maximumf>, %69, %cst_23 [2] : vector<2x16x16xf32> to vector<2x16xf32>
    %71 = vector.shape_cast %70 : vector<2x16xf32> to vector<2x16x1xf32>
    %72 = vector.broadcast %71 : vector<2x16x1xf32> to vector<2x16x16xf32>
    %73 = arith.subf %69, %72 : vector<2x16x16xf32>
    %74 = math.exp %73 : vector<2x16x16xf32>
    %cst_24 = arith.constant dense<0.000000e+00> : vector<2x16xf32>
    %75 = vector.multi_reduction <add>, %74, %cst_24 [2] : vector<2x16x16xf32> to vector<2x16xf32>
    %76 = vector.shape_cast %75 : vector<2x16xf32> to vector<2x16x1xf32>
    %77 = tpu.reciprocal %76 {approx = true} : vector<2x16x1xf32> -> vector<2x16x1xf32>
    %78 = vector.broadcast %77 : vector<2x16x1xf32> to vector<2x16x16xf32>
    %79 = arith.mulf %74, %78 : vector<2x16x16xf32>
    "tpu.trace_start"() <{level = 10 : i32, message = "bqk,bkd->bqd"}> : () -> ()
    %cst_25 = arith.constant dense<0.000000e+00> : vector<2x16x16xf32>
    %80 = tpu.matmul %79, %66, %cst_25 {dimension_numbers = #tpu.dot_dimension_numbers<[2], [1], [1], [2], [0, 0, 0, 1, 1, 2], [0], [0]>} : vector<2x16x16xf32>, vector<2x16x16xf32>, vector<2x16x16xf32> -> vector<2x16x16xf32>
    "tpu.trace_stop"() : () -> ()
    %81 = tpu.concatenate %29, %46, %63, %80 in 2 : vector<2x16x16xf32>, vector<2x16x16xf32>, vector<2x16x16xf32>, vector<2x16x16xf32> -> vector<2x16x64xf32>
    %82 = vector.shape_cast %81 : vector<2x16x64xf32> to vector<32x64xf32>
    %c0_26 = arith.constant 0 : index
    %c0_27 = arith.constant 0 : index
    %83 = vector.load %arg3[%c0_26, %c0_27] : memref<64x64xf32, #tpu.memory_space<vmem>>, vector<64x64xf32>
    %cst_28 = arith.constant dense<0.000000e+00> : vector<32x64xf32>
    %84 = tpu.matmul %82, %83, %cst_28 {dimension_numbers = #tpu.dot_dimension_numbers<[1], [0], [0], [1], [0, 0, 1, 1], [], []>} : vector<32x64xf32>, vector<64x64xf32>, vector<32x64xf32> -> vector<32x64xf32>
    %c0_29 = arith.constant 0 : index
    %c0_30 = arith.constant 0 : index
    %85 = vector.load %arg4[%c0_29, %c0_30] : memref<1x64xf32, #tpu.memory_space<vmem>>, vector<1x64xf32>
    %86 = vector.broadcast %85 : vector<1x64xf32> to vector<32x64xf32>
    %87 = arith.addf %84, %86 : vector<32x64xf32>
    %88 = arith.addf %1, %87 : vector<32x64xf32>
    %c0_31 = arith.constant 0 : index
    %c0_32 = arith.constant 0 : index
    %89 = vector.load %arg5[%c0_31, %c0_32] : memref<1x64xf32, #tpu.memory_space<vmem>>, vector<1x64xf32>
    %c0_33 = arith.constant 0 : index
    %c0_34 = arith.constant 0 : index
    %90 = vector.load %arg6[%c0_33, %c0_34] : memref<1x64xf32, #tpu.memory_space<vmem>>, vector<1x64xf32>
    %cst_35 = arith.constant dense<0.000000e+00> : vector<32xf32>
    %91 = vector.multi_reduction <add>, %88, %cst_35 [1] : vector<32x64xf32> to vector<32xf32>
    %92 = vector.shape_cast %91 : vector<32xf32> to vector<32x1xf32>
    %cst_36 = arith.constant 6.400000e+01 : f32
    %93 = vector.broadcast %cst_36 : f32 to vector<32x1xf32>
    %94 = arith.divf %92, %93 : vector<32x1xf32>
    %95 = vector.broadcast %94 : vector<32x1xf32> to vector<32x64xf32>
    %96 = arith.subf %88, %95 : vector<32x64xf32>
    %97 = arith.mulf %96, %96 : vector<32x64xf32>
    %cst_37 = arith.constant dense<0.000000e+00> : vector<32xf32>
    %98 = vector.multi_reduction <add>, %97, %cst_37 [1] : vector<32x64xf32> to vector<32xf32>
    %99 = vector.shape_cast %98 : vector<32xf32> to vector<32x1xf32>
    %cst_38 = arith.constant 6.400000e+01 : f32
    %100 = vector.broadcast %cst_38 : f32 to vector<32x1xf32>
    %101 = arith.divf %99, %100 : vector<32x1xf32>
    %cst_39 = arith.constant 9.99999974E-6 : f32
    %102 = vector.broadcast %cst_39 : f32 to vector<32x1xf32>
    %103 = arith.addf %101, %102 : vector<32x1xf32>
    %104 = math.rsqrt %103 : vector<32x1xf32>
    %105 = vector.broadcast %104 : vector<32x1xf32> to vector<32x64xf32>
    %106 = arith.mulf %96, %105 : vector<32x64xf32>
    %107 = vector.broadcast %89 : vector<1x64xf32> to vector<32x64xf32>
    %108 = arith.mulf %106, %107 : vector<32x64xf32>
    %109 = vector.broadcast %90 : vector<1x64xf32> to vector<32x64xf32>
    %110 = arith.addf %108, %109 : vector<32x64xf32>
    %c0_40 = arith.constant 0 : index
    %c0_41 = arith.constant 0 : index
    %111 = vector.load %arg7[%c0_40, %c0_41] : memref<64x256xf32, #tpu.memory_space<vmem>>, vector<64x256xf32>
    %cst_42 = arith.constant dense<0.000000e+00> : vector<32x256xf32>
    %112 = tpu.matmul %110, %111, %cst_42 {dimension_numbers = #tpu.dot_dimension_numbers<[1], [0], [0], [1], [0, 0, 1, 1], [], []>} : vector<32x64xf32>, vector<64x256xf32>, vector<32x256xf32> -> vector<32x256xf32>
    %c0_43 = arith.constant 0 : index
    %c0_44 = arith.constant 0 : index
    %113 = vector.load %arg8[%c0_43, %c0_44] : memref<1x256xf32, #tpu.memory_space<vmem>>, vector<1x256xf32>
    %114 = vector.broadcast %113 : vector<1x256xf32> to vector<32x256xf32>
    %115 = arith.addf %112, %114 : vector<32x256xf32>
    %cst_45 = arith.constant 0.000000e+00 : f32
    %116 = vector.broadcast %cst_45 : f32 to vector<32x256xf32>
    %117 = arith.maximumf %115, %116 : vector<32x256xf32>
    %c0_46 = arith.constant 0 : index
    %c0_47 = arith.constant 0 : index
    %118 = vector.load %arg9[%c0_46, %c0_47] : memref<256x64xf32, #tpu.memory_space<vmem>>, vector<256x64xf32>
    %cst_48 = arith.constant dense<0.000000e+00> : vector<32x64xf32>
    %119 = tpu.matmul %117, %118, %cst_48 {dimension_numbers = #tpu.dot_dimension_numbers<[1], [0], [0], [1], [0, 0, 1, 1], [], []>} : vector<32x256xf32>, vector<256x64xf32>, vector<32x64xf32> -> vector<32x64xf32>
    %c0_49 = arith.constant 0 : index
    %c0_50 = arith.constant 0 : index
    %120 = vector.load %arg10[%c0_49, %c0_50] : memref<1x64xf32, #tpu.memory_space<vmem>>, vector<1x64xf32>
    %121 = vector.broadcast %120 : vector<1x64xf32> to vector<32x64xf32>
    %122 = arith.addf %119, %121 : vector<32x64xf32>
    %123 = arith.addf %110, %122 : vector<32x64xf32>
    %c0_51 = arith.constant 0 : index
    %c0_52 = arith.constant 0 : index
    %124 = vector.load %arg11[%c0_51, %c0_52] : memref<1x64xf32, #tpu.memory_space<vmem>>, vector<1x64xf32>
    %c0_53 = arith.constant 0 : index
    %c0_54 = arith.constant 0 : index
    %125 = vector.load %arg12[%c0_53, %c0_54] : memref<1x64xf32, #tpu.memory_space<vmem>>, vector<1x64xf32>
    %cst_55 = arith.constant dense<0.000000e+00> : vector<32xf32>
    %126 = vector.multi_reduction <add>, %123, %cst_55 [1] : vector<32x64xf32> to vector<32xf32>
    %127 = vector.shape_cast %126 : vector<32xf32> to vector<32x1xf32>
    %cst_56 = arith.constant 6.400000e+01 : f32
    %128 = vector.broadcast %cst_56 : f32 to vector<32x1xf32>
    %129 = arith.divf %127, %128 : vector<32x1xf32>
    %130 = vector.broadcast %129 : vector<32x1xf32> to vector<32x64xf32>
    %131 = arith.subf %123, %130 : vector<32x64xf32>
    %132 = arith.mulf %131, %131 : vector<32x64xf32>
    %cst_57 = arith.constant dense<0.000000e+00> : vector<32xf32>
    %133 = vector.multi_reduction <add>, %132, %cst_57 [1] : vector<32x64xf32> to vector<32xf32>
    %134 = vector.shape_cast %133 : vector<32xf32> to vector<32x1xf32>
    %cst_58 = arith.constant 6.400000e+01 : f32
    %135 = vector.broadcast %cst_58 : f32 to vector<32x1xf32>
    %136 = arith.divf %134, %135 : vector<32x1xf32>
    %cst_59 = arith.constant 9.99999974E-6 : f32
    %137 = vector.broadcast %cst_59 : f32 to vector<32x1xf32>
    %138 = arith.addf %136, %137 : vector<32x1xf32>
    %139 = math.rsqrt %138 : vector<32x1xf32>
    %140 = vector.broadcast %139 : vector<32x1xf32> to vector<32x64xf32>
    %141 = arith.mulf %131, %140 : vector<32x64xf32>
    %142 = vector.broadcast %124 : vector<1x64xf32> to vector<32x64xf32>
    %143 = arith.mulf %141, %142 : vector<32x64xf32>
    %144 = vector.broadcast %125 : vector<1x64xf32> to vector<32x64xf32>
    %145 = arith.addf %143, %144 : vector<32x64xf32>
    %146 = vector.shape_cast %145 : vector<32x64xf32> to vector<2x16x64xf32>
    %c0_60 = arith.constant 0 : index
    %c0_61 = arith.constant 0 : index
    %c0_62 = arith.constant 0 : index
    %147 = vector.load %arg13[%c0_60, %c0_61, %c0_62] : memref<2x16x64xf32, #tpu.memory_space<vmem>>, vector<2x16x64xf32>
    tpu.vector_store %arg13[%c0_60, %c0_61, %c0_62], %146 {strides = array<i32>} : memref<2x16x64xf32, #tpu.memory_space<vmem>>, vector<2x16x64xf32>,
    return
  }
}

module attributes {stable_mosaic.version = 11 : i64} {
  func.func @_encoder_layer_kernel(%arg0: memref<2x16x64xf32, #tpu.memory_space<vmem>>, %arg1: memref<64x192xf32, #tpu.memory_space<vmem>>, %arg2: memref<1x192xf32, #tpu.memory_space<vmem>>, %arg3: memref<64x64xf32, #tpu.memory_space<vmem>>, %arg4: memref<1x64xf32, #tpu.memory_space<vmem>>, %arg5: memref<1x64xf32, #tpu.memory_space<vmem>>, %arg6: memref<1x64xf32, #tpu.memory_space<vmem>>, %arg7: memref<64x256xf32, #tpu.memory_space<vmem>>, %arg8: memref<1x256xf32, #tpu.memory_space<vmem>>, %arg9: memref<256x64xf32, #tpu.memory_space<vmem>>, %arg10: memref<1x64xf32, #tpu.memory_space<vmem>>, %arg11: memref<1x64xf32, #tpu.memory_space<vmem>>, %arg12: memref<1x64xf32, #tpu.memory_space<vmem>>, %arg13: memref<2x16x64xf32, #tpu.memory_space<vmem>>) attributes {dimension_semantics = [], scalar_prefetch = 0 : i64, scratch_operands = 0 : i64, tpu.core_type = #tpu.core_type<tc>} {
    %c0 = arith.constant 0 : index
    %c0_0 = arith.constant 0 : index
    %c0_1 = arith.constant 0 : index
    %0 = vector.load %arg0[%c0, %c0_0, %c0_1] : memref<2x16x64xf32, #tpu.memory_space<vmem>>, vector<2x16x64xf32>
    %1 = vector.shape_cast %0 : vector<2x16x64xf32> to vector<32x64xf32>
    %c0_2 = arith.constant 0 : index
    %c0_3 = arith.constant 0 : index
    %2 = vector.load %arg1[%c0_2, %c0_3] : memref<64x192xf32, #tpu.memory_space<vmem>>, vector<64x192xf32>
    %cst = arith.constant dense<0.000000e+00> : vector<32x192xf32>
    %3 = tpu.matmul %1, %2, %cst {dimension_numbers = #tpu.dot_dimension_numbers<[1], [0], [0], [1], [0, 0, 1, 1], [], []>} : vector<32x64xf32>, vector<64x192xf32>, vector<32x192xf32> -> vector<32x192xf32>
    %c0_4 = arith.constant 0 : index
    %c0_5 = arith.constant 0 : index
    %4 = vector.load %arg2[%c0_4, %c0_5] : memref<1x192xf32, #tpu.memory_space<vmem>>, vector<1x192xf32>
    %5 = vector.broadcast %4 : vector<1x192xf32> to vector<32x192xf32>
    %6 = arith.addf %3, %5 : vector<32x192xf32>
    %7 = vector.extract_strided_slice %6 {offsets = [0, 0], sizes = [32, 64], strides = [1, 1]} : vector<32x192xf32> to vector<32x64xf32>
    %8 = vector.shape_cast %7 : vector<32x64xf32> to vector<2x16x64xf32>
    %9 = vector.extract_strided_slice %6 {offsets = [0, 64], sizes = [32, 64], strides = [1, 1]} : vector<32x192xf32> to vector<32x64xf32>
    %10 = vector.shape_cast %9 : vector<32x64xf32> to vector<2x16x64xf32>
    %11 = vector.extract_strided_slice %6 {offsets = [0, 128], sizes = [32, 64], strides = [1, 1]} : vector<32x192xf32> to vector<32x64xf32>
    %12 = vector.shape_cast %11 : vector<32x64xf32> to vector<2x16x64xf32>
    %13 = vector.extract_strided_slice %8 {offsets = [0, 0, 0], sizes = [2, 16, 16], strides = [1, 1, 1]} : vector<2x16x64xf32> to vector<2x16x16xf32>
    %14 = vector.extract_strided_slice %10 {offsets = [0, 0, 0], sizes = [2, 16, 16], strides = [1, 1, 1]} : vector<2x16x64xf32> to vector<2x16x16xf32>
    %15 = vector.extract_strided_slice %12 {offsets = [0, 0, 0], sizes = [2, 16, 16], strides = [1, 1, 1]} : vector<2x16x64xf32> to vector<2x16x16xf32>
    "tpu.trace_start"() <{level = 10 : i32, message = "bqd,bkd->bqk"}> : () -> ()
    %cst_6 = arith.constant dense<0.000000e+00> : vector<2x16x16xf32>
    %16 = tpu.matmul %13, %14, %cst_6 {dimension_numbers = #tpu.dot_dimension_numbers<[2], [2], [1], [1], [0, 0, 0, 1, 1, 1], [0], [0]>} : vector<2x16x16xf32>, vector<2x16x16xf32>, vector<2x16x16xf32> -> vector<2x16x16xf32>
    "tpu.trace_stop"() : () -> ()
    %cst_7 = arith.constant 2.500000e-01 : f32
    %17 = vector.broadcast %cst_7 : f32 to vector<2x16x16xf32>
    %18 = arith.mulf %16, %17 : vector<2x16x16xf32>
    %cst_8 = arith.constant dense<0xFF800000> : vector<2x16xf32>
    %19 = vector.multi_reduction <maximumf>, %18, %cst_8 [2] : vector<2x16x16xf32> to vector<2x16xf32>
    %20 = vector.shape_cast %19 : vector<2x16xf32> to vector<2x16x1xf32>
    %21 = vector.broadcast %20 : vector<2x16x1xf32> to vector<2x16x16xf32>
    %22 = arith.subf %18, %21 : vector<2x16x16xf32>
    %23 = math.exp %22 : vector<2x16x16xf32>
    %cst_9 = arith.constant dense<0.000000e+00> : vector<2x16xf32>
    %24 = vector.multi_reduction <add>, %23, %cst_9 [2] : vector<2x16x16xf32> to vector<2x16xf32>
    %25 = vector.shape_cast %24 : vector<2x16xf32> to vector<2x16x1xf32>
    %26 = tpu.reciprocal %25 {approx = true} : vector<2x16x1xf32> -> vector<2x16x1xf32>
    %27 = vector.broadcast %26 : vector<2x16x1xf32> to vector<2x16x16xf32>
    %28 = arith.mulf %23, %27 : vector<2x16x16xf32>
    "tpu.trace_start"() <{level = 10 : i32, message = "bqk,bkd->bqd"}> : () -> ()
    %cst_10 = arith.constant dense<0.000000e+00> : vector<2x16x16xf32>
    %29 = tpu.matmul %28, %15, %cst_10 {dimension_numbers = #tpu.dot_dimension_numbers<[2], [1], [1], [2], [0, 0, 0, 1, 1, 2], [0], [0]>} : vector<2x16x16xf32>, vector<2x16x16xf32>, vector<2x16x16xf32> -> vector<2x16x16xf32>
    "tpu.trace_stop"() : () -> ()
    %30 = vector.extract_strided_slice %8 {offsets = [0, 0, 16], sizes = [2, 16, 16], strides = [1, 1, 1]} : vector<2x16x64xf32> to vector<2x16x16xf32>
    %31 = vector.extract_strided_slice %10 {offsets = [0, 0, 16], sizes = [2, 16, 16], strides = [1, 1, 1]} : vector<2x16x64xf32> to vector<2x16x16xf32>
    %32 = vector.extract_strided_slice %12 {offsets = [0, 0, 16], sizes = [2, 16, 16], strides = [1, 1, 1]} : vector<2x16x64xf32> to vector<2x16x16xf32>
    "tpu.trace_start"() <{level = 10 : i32, message = "bqd,bkd->bqk"}> : () -> ()
    %cst_11 = arith.constant dense<0.000000e+00> : vector<2x16x16xf32>
    %33 = tpu.matmul %30, %31, %cst_11 {dimension_numbers = #tpu.dot_dimension_numbers<[2], [2], [1], [1], [0, 0, 0, 1, 1, 1], [0], [0]>} : vector<2x16x16xf32>, vector<2x16x16xf32>, vector<2x16x16xf32> -> vector<2x16x16xf32>
    "tpu.trace_stop"() : () -> ()
    %cst_12 = arith.constant 2.500000e-01 : f32
    %34 = vector.broadcast %cst_12 : f32 to vector<2x16x16xf32>
    %35 = arith.mulf %33, %34 : vector<2x16x16xf32>
    %cst_13 = arith.constant dense<0xFF800000> : vector<2x16xf32>
    %36 = vector.multi_reduction <maximumf>, %35, %cst_13 [2] : vector<2x16x16xf32> to vector<2x16xf32>
    %37 = vector.shape_cast %36 : vector<2x16xf32> to vector<2x16x1xf32>
    %38 = vector.broadcast %37 : vector<2x16x1xf32> to vector<2x16x16xf32>
    %39 = arith.subf %35, %38 : vector<2x16x16xf32>
    %40 = math.exp %39 : vector<2x16x16xf32>
    %cst_14 = arith.constant dense<0.000000e+00> : vector<2x16xf32>
    %41 = vector.multi_reduction <add>, %40, %cst_14 [2] : vector<2x16x16xf32> to vector<2x16xf32>
    %42 = vector.shape_cast %41 : vector<2x16xf32> to vector<2x16x1xf32>
    %43 = tpu.reciprocal %42 {approx = true} : vector<2x16x1xf32> -> vector<2x16x1xf32>
    %44 = vector.broadcast %43 : vector<2x16x1xf32> to vector<2x16x16xf32>
    %45 = arith.mulf %40, %44 : vector<2x16x16xf32>
    "tpu.trace_start"() <{level = 10 : i32, message = "bqk,bkd->bqd"}> : () -> ()
    %cst_15 = arith.constant dense<0.000000e+00> : vector<2x16x16xf32>
    %46 = tpu.matmul %45, %32, %cst_15 {dimension_numbers = #tpu.dot_dimension_numbers<[2], [1], [1], [2], [0, 0, 0, 1, 1, 2], [0], [0]>} : vector<2x16x16xf32>, vector<2x16x16xf32>, vector<2x16x16xf32> -> vector<2x16x16xf32>
    "tpu.trace_stop"() : () -> ()
    %47 = vector.extract_strided_slice %8 {offsets = [0, 0, 32], sizes = [2, 16, 16], strides = [1, 1, 1]} : vector<2x16x64xf32> to vector<2x16x16xf32>
    %48 = vector.extract_strided_slice %10 {offsets = [0, 0, 32], sizes = [2, 16, 16], strides = [1, 1, 1]} : vector<2x16x64xf32> to vector<2x16x16xf32>
    %49 = vector.extract_strided_slice %12 {offsets = [0, 0, 32], sizes = [2, 16, 16], strides = [1, 1, 1]} : vector<2x16x64xf32> to vector<2x16x16xf32>
    "tpu.trace_start"() <{level = 10 : i32, message = "bqd,bkd->bqk"}> : () -> ()
    %cst_16 = arith.constant dense<0.000000e+00> : vector<2x16x16xf32>
    %50 = tpu.matmul %47, %48, %cst_16 {dimension_numbers = #tpu.dot_dimension_numbers<[2], [2], [1], [1], [0, 0, 0, 1, 1, 1], [0], [0]>} : vector<2x16x16xf32>, vector<2x16x16xf32>, vector<2x16x16xf32> -> vector<2x16x16xf32>
    "tpu.trace_stop"() : () -> ()
    %cst_17 = arith.constant 2.500000e-01 : f32
    %51 = vector.broadcast %cst_17 : f32 to vector<2x16x16xf32>
    %52 = arith.mulf %50, %51 : vector<2x16x16xf32>
    %cst_18 = arith.constant dense<0xFF800000> : vector<2x16xf32>
    %53 = vector.multi_reduction <maximumf>, %52, %cst_18 [2] : vector<2x16x16xf32> to vector<2x16xf32>
    %54 = vector.shape_cast %53 : vector<2x16xf32> to vector<2x16x1xf32>
    %55 = vector.broadcast %54 : vector<2x16x1xf32> to vector<2x16x16xf32>
    %56 = arith.subf %52, %55 : vector<2x16x16xf32>
    %57 = math.exp %56 : vector<2x16x16xf32>
    %cst_19 = arith.constant dense<0.000000e+00> : vector<2x16xf32>
    %58 = vector.multi_reduction <add>, %57, %cst_19 [2] : vector<2x16x16xf32> to vector<2x16xf32>
    %59 = vector.shape_cast %58 : vector<2x16xf32> to vector<2x16x1xf32>
    %60 = tpu.reciprocal %59 {approx = true} : vector<2x16x1xf32> -> vector<2x16x1xf32>
    %61 = vector.broadcast %60 : vector<2x16x1xf32> to vector<2x16x16xf32>
    %62 = arith.mulf %57, %61 : vector<2x16x16xf32>
    "tpu.trace_start"() <{level = 10 : i32, message = "bqk,bkd->bqd"}> : () -> ()
    %cst_20 = arith.constant dense<0.000000e+00> : vector<2x16x16xf32>
    %63 = tpu.matmul %62, %49, %cst_20 {dimension_numbers = #tpu.dot_dimension_numbers<[2], [1], [1], [2], [0, 0, 0, 1, 1, 2], [0], [0]>} : vector<2x16x16xf32>, vector<2x16x16xf32>, vector<2x16x16xf32> -> vector<2x16x16xf32>
    "tpu.trace_stop"() : () -> ()
    %64 = vector.extract_strided_slice %8 {offsets = [0, 0, 48], sizes = [2, 16, 16], strides = [1, 1, 1]} : vector<2x16x64xf32> to vector<2x16x16xf32>
    %65 = vector.extract_strided_slice %10 {offsets = [0, 0, 48], sizes = [2, 16, 16], strides = [1, 1, 1]} : vector<2x16x64xf32> to vector<2x16x16xf32>
    %66 = vector.extract_strided_slice %12 {offsets = [0, 0, 48], sizes = [2, 16, 16], strides = [1, 1, 1]} : vector<2x16x64xf32> to vector<2x16x16xf32>
    "tpu.trace_start"() <{level = 10 : i32, message = "bqd,bkd->bqk"}> : () -> ()
    %cst_21 = arith.constant dense<0.000000e+00> : vector<2x16x16xf32>
    %67 = tpu.matmul %64, %65, %cst_21 {dimension_numbers = #tpu.dot_dimension_numbers<[2], [2], [1], [1], [0, 0, 0, 1, 1, 1], [0], [0]>} : vector<2x16x16xf32>, vector<2x16x16xf32>, vector<2x16x16xf32> -> vector<2x16x16xf32>
    "tpu.trace_stop"() : () -> ()
    %cst_22 = arith.constant 2.500000e-01 : f32
    %68 = vector.broadcast %cst_22 : f32 to vector<2x16x16xf32>
    %69 = arith.mulf %67, %68 : vector<2x16x16xf32>
    %cst_23 = arith.constant dense<0xFF800000> : vector<2x16xf32>
    %70 = vector.multi_reduction <maximumf>, %69, %cst_23 [2] : vector<2x16x16xf32> to vector<2x16xf32>
    %71 = vector.shape_cast %70 : vector<2x16xf32> to vector<2x16x1xf32>
    %72 = vector.broadcast %71 : vector<2x16x1xf32> to vector<2x16x16xf32>
    %73 = arith.subf %69, %72 : vector<2x16x16xf32>
    %74 = math.exp %73 : vector<2x16x16xf32>
    %cst_24 = arith.constant dense<0.000000e+00> : vector<2x16xf32>
    %75 = vector.multi_reduction <add>, %74, %cst_24 [2] : vector<2x16x16xf32> to vector<2x16xf32>
    %76 = vector.shape_cast %75 : vector<2x16xf32> to vector<2x16x1xf32>
    %77 = tpu.reciprocal %76 {approx = true} : vector<2x16x1xf32> -> vector<2x16x1xf32>
    %78 = vector.broadcast %77 : vector<2x16x1xf32> to vector<2x16x16xf32>
    %79 = arith.mulf %74, %78 : vector<2x16x16xf32>
    "tpu.trace_start"() <{level = 10 : i32, message = "bqk,bkd->bqd"}> : () -> ()
    %cst_25 = arith.constant dense<0.000000e+00> : vector<2x16x16xf32>
    %80 = tpu.matmul %79, %66, %cst_25 {dimension_numbers = #tpu.dot_dimension_numbers<[2], [1], [1], [2], [0, 0, 0, 1, 1, 2], [0], [0]>} : vector<2x16x16xf32>, vector<2x16x16xf32>, vector<2x16x16xf32> -> vector<2x16x16xf32>
    "tpu.trace_stop"() : () -> ()
    %81 = tpu.concatenate %29, %46, %63, %80 in 2 : vector<2x16x16xf32>, vector<2x16x16xf32>, vector<2x16x16xf32>, vector<2x16x16xf32> -> vector<2x16x64xf32>
    %82 = vector.shape_cast %81 : vector<2x16x64xf32> to vector<32x64xf32>
    %c0_26 = arith.constant 0 : index
    %c0_27 = arith.constant 0 : index
    %83 = vector.load %arg3[%c0_26, %c0_27] : memref<64x64xf32, #tpu.memory_space<vmem>>, vector<64x64xf32>
    %cst_28 = arith.constant dense<0.000000e+00> : vector<32x64xf32>
    %84 = tpu.matmul %82, %83, %cst_28 {dimension_numbers = #tpu.dot_dimension_numbers<[1], [0], [0], [1], [0, 0, 1, 1], [], []>} : vector<32x64xf32>, vector<64x64xf32>, vector<32x64xf32> -> vector<32x64xf32>
    %c0_29 = arith.constant 0 : index
    %c0_30 = arith.constant 0 : index
    %85 = vector.load %arg4[%c0_29, %c0_30] : memref<1x64xf32, #tpu.memory_space<vmem>>, vector<1x64xf32>
    %86 = vector.broadcast %85 : vector<1x64xf32> to vector<32x64xf32>
    %87 = arith.addf %84, %86 : vector<32x64xf32>
    %88 = arith.addf %1, %87 : vector<32x64xf32>
    %c0_31 = arith.constant 0 : index
    %c0_32 = arith.constant 0 : index
    %89 = vector.load %arg5[%c0_31, %c0_32] : memref<1x64xf32, #tpu.memory_space<vmem>>, vector<1x64xf32>
    %c0_33 = arith.constant 0 : index
    %c0_34 = arith.constant 0 : index
    %90 = vector.load %arg6[%c0_33, %c0_34] : memref<1x64xf32, #tpu.memory_space<vmem>>, vector<1x64xf32>
    %cst_35 = arith.constant dense<0.000000e+00> : vector<32xf32>
    %91 = vector.multi_reduction <add>, %88, %cst_35 [1] : vector<32x64xf32> to vector<32xf32>
    %92 = vector.shape_cast %91 : vector<32xf32> to vector<32x1xf32>
    %cst_36 = arith.constant 6.400000e+01 : f32
    %93 = vector.broadcast %cst_36 : f32 to vector<32x1xf32>
    %94 = arith.divf %92, %93 : vector<32x1xf32>
    %95 = vector.broadcast %94 : vector<32x1xf32> to vector<32x64xf32>
    %96 = arith.subf %88, %95 : vector<32x64xf32>
    %97 = arith.mulf %96, %96 : vector<32x64xf32>
    %cst_37 = arith.constant dense<0.000000e+00> : vector<32xf32>
    %98 = vector.multi_reduction <add>, %97, %cst_37 [1] : vector<32x64xf32> to vector<32xf32>
    %99 = vector.shape_cast %98 : vector<32xf32> to vector<32x1xf32>
    %cst_38 = arith.constant 6.400000e+01 : f32
    %100 = vector.broadcast %cst_38 : f32 to vector<32x1xf32>
    %101 = arith.divf %99, %100 : vector<32x1xf32>
    %cst_39 = arith.constant 9.99999974E-6 : f32
    %102 = vector.broadcast %cst_39 : f32 to vector<32x1xf32>
    %103 = arith.addf %101, %102 : vector<32x1xf32>
    %104 = math.rsqrt %103 : vector<32x1xf32>
    %105 = vector.broadcast %104 : vector<32x1xf32> to vector<32x64xf32>
    %106 = arith.mulf %96, %105 : vector<32x64xf32>
    %107 = vector.broadcast %89 : vector<1x64xf32> to vector<32x64xf32>
    %108 = arith.mulf %106, %107 : vector<32x64xf32>
    %109 = vector.broadcast %90 : vector<1x64xf32> to vector<32x64xf32>
    %110 = arith.addf %108, %109 : vector<32x64xf32>
    %c0_40 = arith.constant 0 : index
    %c0_41 = arith.constant 0 : index
    %111 = vector.load %arg7[%c0_40, %c0_41] : memref<64x256xf32, #tpu.memory_space<vmem>>, vector<64x256xf32>
    %cst_42 = arith.constant dense<0.000000e+00> : vector<32x256xf32>
    %112 = tpu.matmul %110, %111, %cst_42 {dimension_numbers = #tpu.dot_dimension_numbers<[1], [0], [0], [1], [0, 0, 1, 1], [], []>} : vector<32x64xf32>, vector<64x256xf32>, vector<32x256xf32> -> vector<32x256xf32>
    %c0_43 = arith.constant 0 : index
    %c0_44 = arith.constant 0 : index
    %113 = vector.load %arg8[%c0_43, %c0_44] : memref<1x256xf32, #tpu.memory_space<vmem>>, vector<1x256xf32>
    %114 = vector.broadcast %113 : vector<1x256xf32> to vector<32x256xf32>
    %115 = arith.addf %112, %114 : vector<32x256xf32>
    %cst_45 = arith.constant 0.000000e+00 : f32
    %116 = vector.broadcast %cst_45 : f32 to vector<32x256xf32>
    %117 = arith.maximumf %115, %116 : vector<32x256xf32>
    %c0_46 = arith.constant 0 : index
    %c0_47 = arith.constant 0 : index
    %118 = vector.load %arg9[%c0_46, %c0_47] : memref<256x64xf32, #tpu.memory_space<vmem>>, vector<256x64xf32>
    %cst_48 = arith.constant dense<0.000000e+00> : vector<32x64xf32>
    %119 = tpu.matmul %117, %118, %cst_48 {dimension_numbers = #tpu.dot_dimension_numbers<[1], [0], [0], [1], [0, 0, 1, 1], [], []>} : vector<32x256xf32>, vector<256x64xf32>, vector<32x64xf32> -> vector<32x64xf32>
    %c0_49 = arith.constant 0 : index
    %c0_50 = arith.constant 0 : index
    %120 = vector.load %arg10[%c0_49, %c0_50] : memref<1x64xf32, #tpu.memory_space<vmem>>, vector<1x64xf32>
    %121 = vector.broadcast %120 : vector<1x64xf32> to vector<32x64xf32>
    %122 = arith.addf %119, %121 : vector<32x64xf32>
    %123 = arith.addf %110, %122 : vector<32x64xf32>
    %c0_51 = arith.constant 0 : index
    %c0_52 = arith.constant 0 : index
    %124 = vector.load %arg11[%c0_51, %c0_52] : memref<1x64xf32, #tpu.memory_space<vmem>>, vector<1x64xf32>
    %c0_53 = arith.constant 0 : index
    %c0_54 = arith.constant 0 : index
    %125 = vector.load %arg12[%c0_53, %c0_54] : memref<1x64xf32, #tpu.memory_space<vmem>>, vector<1x64xf32>
    %cst_55 = arith.constant dense<0.000000e+00> : vector<32xf32>
    %126 = vector.multi_reduction <add>, %123, %cst_55 [1] : vector<32x64xf32> to vector<32xf32>
    %127 = vector.shape_cast %126 : vector<32xf32> to vector<32x1xf32>
    %cst_56 = arith.constant 6.400000e+01 : f32
    %128 = vector.broadcast %cst_56 : f32 to vector<32x1xf32>
    %129 = arith.divf %127, %128 : vector<32x1xf32>
    %130 = vector.broadcast %129 : vector<32x1xf32> to vector<32x64xf32>
    %131 = arith.subf %123, %130 : vector<32x64xf32>
    %132 = arith.mulf %131, %131 : vector<32x64xf32>
    %cst_57 = arith.constant dense<0.000000e+00> : vector<32xf32>
    %133 = vector.multi_reduction <add>, %132, %cst_57 [1] : vector<32x64xf32> to vector<32xf32>
    %134 = vector.shape_cast %133 : vector<32xf32> to vector<32x1xf32>
    %cst_58 = arith.constant 6.400000e+01 : f32
    %135 = vector.broadcast %cst_58 : f32 to vector<32x1xf32>
    %136 = arith.divf %134, %135 : vector<32x1xf32>
    %cst_59 = arith.constant 9.99999974E-6 : f32
    %137 = vector.broadcast %cst_59 : f32 to vector<32x1xf32>
    %138 = arith.addf %136, %137 : vector<32x1xf32>
    %139 = math.rsqrt %138 : vector<32x1xf32>
    %140 = vector.broadcast %139 : vector<32x1xf32> to vector<32x64xf32>
    %141 = arith.mulf %131, %140 : vector<32x64xf32>
    %142 = vector.broadcast %124 : vector<1x64xf32> to vector<32x64xf32>
    %143 = arith.mulf %141, %142 : vector<32x64xf32>
    %144 = vector.broadcast %125 : vector<1x64xf32> to vector<32x64xf32>
    %145 = arith.addf %143, %144 : vector<32x64xf32>
    %146 = vector.shape_cast %145 : vector<32x64xf32> to vector<2x16x64xf32>
    %c0_60 = arith.constant 0 : index
    %c0_61 = arith.constant 0 : index
    %c0_62 = arith.constant 0 : index
    %147 = vector.load %arg13[%c0_60, %c0_61, %c0_62] : memref<2x16x64xf32, #tpu.memory_space<vmem>>, vector<2x16x64xf32>
    tpu.vector_store %arg13[%c0_60, %c0_61, %c0_62], %146 {strides = array<i32>} : memref<2x16x64xf32, #tpu.memory_space<vmem>>, vector<2x16x64xf32>,
    return
  }
}

module attributes {stable_mosaic.version = 11 : i64} {
  func.func @_bilstm_seq_kernel(%arg0: i32, %arg1: memref<16x2x64xf32, #tpu.memory_space<vmem>>, %arg2: memref<1x64x256xf32, #tpu.memory_space<vmem>>, %arg3: memref<1x64x256xf32, #tpu.memory_space<vmem>>, %arg4: memref<1x1x256xf32, #tpu.memory_space<vmem>>, %arg5: memref<1x16x2x64xf32, #tpu.memory_space<vmem>>, %arg6: memref<2x64xf32, #tpu.memory_space<vmem>>, %arg7: memref<2x64xf32, #tpu.memory_space<vmem>>, %arg8: memref<16x2x256xf32, #tpu.memory_space<vmem>>) attributes {dimension_semantics = [#tpu.dimension_semantics<parallel>], iteration_bounds = array<i64: 2>, scalar_prefetch = 0 : i64, scratch_operands = 3 : i64, tpu.core_type = #tpu.core_type<tc>, window_params = [{pipeline_mode = #tpu.pipeline_mode<synchronous>, transform_indices = @transform_0, window_bounds = array<i64: 16, 2, 64>}, {transform_indices = @transform_1, window_bounds = array<i64: 1, 64, 256>}, {transform_indices = @transform_2, window_bounds = array<i64: 1, 64, 256>}, {transform_indices = @transform_3, window_bounds = array<i64: 1, 1, 256>}, {transform_indices = @transform_4, window_bounds = array<i64: 1, 16, 2, 64>}]} {
    %c0 = arith.constant 0 : index
    %c0_0 = arith.constant 0 : index
    %c0_1 = arith.constant 0 : index
    %0 = vector.load %arg1[%c0, %c0_0, %c0_1] : memref<16x2x64xf32, #tpu.memory_space<vmem>>, vector<16x2x64xf32>
    %1 = vector.shape_cast %0 : vector<16x2x64xf32> to vector<32x64xf32>
    %c0_2 = arith.constant 0 : index
    %c0_3 = arith.constant 0 : index
    %c0_4 = arith.constant 0 : index
    %2 = vector.load %arg2[%c0_2, %c0_3, %c0_4] : memref<1x64x256xf32, #tpu.memory_space<vmem>>, vector<1x64x256xf32>
    %3 = vector.shape_cast %2 : vector<1x64x256xf32> to vector<64x256xf32>
    %cst = arith.constant dense<0.000000e+00> : vector<32x256xf32>
    %4 = tpu.matmul %1, %3, %cst {dimension_numbers = #tpu.dot_dimension_numbers<[1], [0], [0], [1], [0, 0, 1, 1], [], []>} : vector<32x64xf32>, vector<64x256xf32>, vector<32x256xf32> -> vector<32x256xf32>
    %c0_5 = arith.constant 0 : index
    %c0_6 = arith.constant 0 : index
    %c0_7 = arith.constant 0 : index
    %5 = vector.load %arg4[%c0_5, %c0_6, %c0_7] : memref<1x1x256xf32, #tpu.memory_space<vmem>>, vector<1x1x256xf32>
    %6 = vector.shape_cast %5 : vector<1x1x256xf32> to vector<1x256xf32>
    %7 = vector.broadcast %6 : vector<1x256xf32> to vector<32x256xf32>
    %8 = arith.addf %4, %7 : vector<32x256xf32>
    %9 = vector.shape_cast %8 : vector<32x256xf32> to vector<16x2x256xf32>
    %c0_8 = arith.constant 0 : index
    %c0_9 = arith.constant 0 : index
    %c0_10 = arith.constant 0 : index
    %10 = vector.load %arg8[%c0_8, %c0_9, %c0_10] : memref<16x2x256xf32, #tpu.memory_space<vmem>>, vector<16x2x256xf32>
    tpu.vector_store %arg8[%c0_8, %c0_9, %c0_10], %9 {strides = array<i32>} : memref<16x2x256xf32, #tpu.memory_space<vmem>>, vector<16x2x256xf32>,
    %cst_11 = arith.constant 0.000000e+00 : f32
    %11 = vector.broadcast %cst_11 : f32 to vector<2x64xf32>
    %c0_12 = arith.constant 0 : index
    %c0_13 = arith.constant 0 : index
    %12 = vector.load %arg6[%c0_12, %c0_13] : memref<2x64xf32, #tpu.memory_space<vmem>>, vector<2x64xf32>
    tpu.vector_store %arg6[%c0_12, %c0_13], %11 {strides = array<i32>} : memref<2x64xf32, #tpu.memory_space<vmem>>, vector<2x64xf32>,
    %cst_14 = arith.constant 0.000000e+00 : f32
    %13 = vector.broadcast %cst_14 : f32 to vector<2x64xf32>
    %c0_15 = arith.constant 0 : index
    %c0_16 = arith.constant 0 : index
    %14 = vector.load %arg7[%c0_15, %c0_16] : memref<2x64xf32, #tpu.memory_space<vmem>>, vector<2x64xf32>
    tpu.vector_store %arg7[%c0_15, %c0_16], %13 {strides = array<i32>} : memref<2x64xf32, #tpu.memory_space<vmem>>, vector<2x64xf32>,
    %c0_i32 = arith.constant 0 : i32
    %c16_i32 = arith.constant 16 : i32
    %15 = arith.addi %c0_i32, %c16_i32 : i32
    %c1_i32 = arith.constant 1 : i32
    scf.for %arg9 = %c0_i32 to %15 step %c1_i32  : i32 {
      %c0_i32_18 = arith.constant 0 : i32
      %16 = arith.cmpi eq, %arg0, %c0_i32_18 : i32
      %c15_i32 = arith.constant 15 : i32
      %17 = arith.subi %c15_i32, %arg9 : i32
      %18 = arith.select %16, %arg9, %17 : i32
      %19 = arith.index_cast %18 : i32 to index
      %c0_19 = arith.constant 0 : index
      %c0_20 = arith.constant 0 : index
      %20 = vector.load %arg8[%19, %c0_19, %c0_20] : memref<16x2x256xf32, #tpu.memory_space<vmem>>, vector<1x2x256xf32>
      %21 = vector.shape_cast %20 : vector<1x2x256xf32> to vector<2x256xf32>
      %c0_21 = arith.constant 0 : index
      %c0_22 = arith.constant 0 : index
      %22 = vector.load %arg6[%c0_21, %c0_22] : memref<2x64xf32, #tpu.memory_space<vmem>>, vector<2x64xf32>
      %c0_23 = arith.constant 0 : index
      %c0_24 = arith.constant 0 : index
      %c0_25 = arith.constant 0 : index
      %23 = vector.load %arg3[%c0_23, %c0_24, %c0_25] : memref<1x64x256xf32, #tpu.memory_space<vmem>>, vector<1x64x256xf32>
      %24 = vector.shape_cast %23 : vector<1x64x256xf32> to vector<64x256xf32>
      %cst_26 = arith.constant dense<0.000000e+00> : vector<2x256xf32>
      %25 = tpu.matmul %22, %24, %cst_26 {dimension_numbers = #tpu.dot_dimension_numbers<[1], [0], [0], [1], [0, 0, 1, 1], [], []>} : vector<2x64xf32>, vector<64x256xf32>, vector<2x256xf32> -> vector<2x256xf32>
      %26 = arith.addf %21, %25 : vector<2x256xf32>
      %27 = vector.extract_strided_slice %26 {offsets = [0, 0], sizes = [2, 64], strides = [1, 1]} : vector<2x256xf32> to vector<2x64xf32>
      %28 = arith.negf %27 : vector<2x64xf32>
      %29 = math.exp %28 : vector<2x64xf32>
      %cst_27 = arith.constant 1.000000e+00 : f32
      %30 = vector.broadcast %cst_27 : f32 to vector<2x64xf32>
      %31 = arith.addf %30, %29 : vector<2x64xf32>
      %32 = arith.divf %30, %31 : vector<2x64xf32>
      %33 = vector.extract_strided_slice %26 {offsets = [0, 64], sizes = [2, 64], strides = [1, 1]} : vector<2x256xf32> to vector<2x64xf32>
      %34 = arith.negf %33 : vector<2x64xf32>
      %35 = math.exp %34 : vector<2x64xf32>
      %cst_28 = arith.constant 1.000000e+00 : f32
      %36 = vector.broadcast %cst_28 : f32 to vector<2x64xf32>
      %37 = arith.addf %36, %35 : vector<2x64xf32>
      %38 = arith.divf %36, %37 : vector<2x64xf32>
      %39 = vector.extract_strided_slice %26 {offsets = [0, 128], sizes = [2, 64], strides = [1, 1]} : vector<2x256xf32> to vector<2x64xf32>
      %40 = math.tanh %39 : vector<2x64xf32>
      %41 = vector.extract_strided_slice %26 {offsets = [0, 192], sizes = [2, 64], strides = [1, 1]} : vector<2x256xf32> to vector<2x64xf32>
      %42 = arith.negf %41 : vector<2x64xf32>
      %43 = math.exp %42 : vector<2x64xf32>
      %cst_29 = arith.constant 1.000000e+00 : f32
      %44 = vector.broadcast %cst_29 : f32 to vector<2x64xf32>
      %45 = arith.addf %44, %43 : vector<2x64xf32>
      %46 = arith.divf %44, %45 : vector<2x64xf32>
      %c0_30 = arith.constant 0 : index
      %c0_31 = arith.constant 0 : index
      %47 = vector.load %arg7[%c0_30, %c0_31] : memref<2x64xf32, #tpu.memory_space<vmem>>, vector<2x64xf32>
      %48 = arith.mulf %38, %47 : vector<2x64xf32>
      %49 = arith.mulf %32, %40 : vector<2x64xf32>
      %50 = arith.addf %48, %49 : vector<2x64xf32>
      %51 = math.tanh %50 : vector<2x64xf32>
      %52 = arith.mulf %46, %51 : vector<2x64xf32>
      %c0_32 = arith.constant 0 : index
      %c0_33 = arith.constant 0 : index
      %53 = vector.load %arg7[%c0_32, %c0_33] : memref<2x64xf32, #tpu.memory_space<vmem>>, vector<2x64xf32>
      tpu.vector_store %arg7[%c0_32, %c0_33], %50 {strides = array<i32>} : memref<2x64xf32, #tpu.memory_space<vmem>>, vector<2x64xf32>,
      %c0_34 = arith.constant 0 : index
      %c0_35 = arith.constant 0 : index
      %54 = vector.load %arg6[%c0_34, %c0_35] : memref<2x64xf32, #tpu.memory_space<vmem>>, vector<2x64xf32>
      tpu.vector_store %arg6[%c0_34, %c0_35], %52 {strides = array<i32>} : memref<2x64xf32, #tpu.memory_space<vmem>>, vector<2x64xf32>,
      %c0_36 = arith.constant 0 : index
      %55 = arith.index_cast %18 : i32 to index
      %c0_37 = arith.constant 0 : index
      %c0_38 = arith.constant 0 : index
      %56 = vector.load %arg5[%c0_36, %55, %c0_37, %c0_38] : memref<1x16x2x64xf32, #tpu.memory_space<vmem>>, vector<1x1x2x64xf32>
      %57 = vector.shape_cast %56 : vector<1x1x2x64xf32> to vector<2x64xf32>
      %58 = vector.shape_cast %52 : vector<2x64xf32> to vector<1x1x2x64xf32>
      tpu.vector_store %arg5[%c0_36, %55, %c0_37, %c0_38], %58 {strides = array<i32>} : memref<1x16x2x64xf32, #tpu.memory_space<vmem>>, vector<1x1x2x64xf32>,
    }
    %c16_i32_17 = arith.constant 16 : i32
    return
  }
  func.func @transform_0(%arg0: i32) -> (i32, i32, i32) {
    %c0_i32 = arith.constant 0 : i32
    %c0_i32_0 = arith.constant 0 : i32
    %c0_i32_1 = arith.constant 0 : i32
    %c0_i32_2 = arith.constant 0 : i32
    return %c0_i32, %c0_i32_0, %c0_i32_1 : i32, i32, i32
  }
  func.func @transform_1(%arg0: i32) -> (i32, i32, i32) {
    %c0_i32 = arith.constant 0 : i32
    %c0_i32_0 = arith.constant 0 : i32
    %c0_i32_1 = arith.constant 0 : i32
    return %arg0, %c0_i32, %c0_i32_0 : i32, i32, i32
  }
  func.func @transform_2(%arg0: i32) -> (i32, i32, i32) {
    %c0_i32 = arith.constant 0 : i32
    %c0_i32_0 = arith.constant 0 : i32
    %c0_i32_1 = arith.constant 0 : i32
    return %arg0, %c0_i32, %c0_i32_0 : i32, i32, i32
  }
  func.func @transform_3(%arg0: i32) -> (i32, i32, i32) {
    %c0_i32 = arith.constant 0 : i32
    %c0_i32_0 = arith.constant 0 : i32
    %c0_i32_1 = arith.constant 0 : i32
    return %arg0, %c0_i32, %c0_i32_0 : i32, i32, i32
  }
  func.func @transform_4(%arg0: i32) -> (i32, i32, i32, i32) {
    %c0_i32 = arith.constant 0 : i32
    %c0_i32_0 = arith.constant 0 : i32
    %c0_i32_1 = arith.constant 0 : i32
    %c0_i32_2 = arith.constant 0 : i32
    return %arg0, %c0_i32, %c0_i32_0, %c0_i32_1 : i32, i32, i32, i32
  }
}

module attributes {stable_mosaic.version = 11 : i64} {
  func.func @_top_lstm_cls_kernel(%arg0: memref<16x2x128xf32, #tpu.memory_space<vmem>>, %arg1: memref<2x128x256xf32, #tpu.memory_space<vmem>>, %arg2: memref<2x64x256xf32, #tpu.memory_space<vmem>>, %arg3: memref<2x1x256xf32, #tpu.memory_space<vmem>>, %arg4: memref<128x64xf32, #tpu.memory_space<vmem>>, %arg5: memref<1x64xf32, #tpu.memory_space<vmem>>, %arg6: memref<64x3xf32, #tpu.memory_space<vmem>>, %arg7: memref<1x3xf32, #tpu.memory_space<vmem>>, %arg8: memref<2x3xf32, #tpu.memory_space<vmem>>, %arg9: memref<2x64xf32, #tpu.memory_space<vmem>>, %arg10: memref<2x64xf32, #tpu.memory_space<vmem>>, %arg11: memref<16x2x256xf32, #tpu.memory_space<vmem>>) attributes {dimension_semantics = [], scalar_prefetch = 0 : i64, scratch_operands = 3 : i64, tpu.core_type = #tpu.core_type<tc>} {
    %c0 = arith.constant 0 : index
    %c0_0 = arith.constant 0 : index
    %c0_1 = arith.constant 0 : index
    %0 = vector.load %arg0[%c0, %c0_0, %c0_1] : memref<16x2x128xf32, #tpu.memory_space<vmem>>, vector<16x2x128xf32>
    %1 = vector.shape_cast %0 : vector<16x2x128xf32> to vector<32x128xf32>
    %c0_2 = arith.constant 0 : index
    %c0_3 = arith.constant 0 : index
    %c0_4 = arith.constant 0 : index
    %2 = vector.load %arg1[%c0_2, %c0_3, %c0_4] : memref<2x128x256xf32, #tpu.memory_space<vmem>>, vector<1x128x256xf32>
    %3 = vector.shape_cast %2 : vector<1x128x256xf32> to vector<128x256xf32>
    %cst = arith.constant dense<0.000000e+00> : vector<32x256xf32>
    %4 = tpu.matmul %1, %3, %cst {dimension_numbers = #tpu.dot_dimension_numbers<[1], [0], [0], [1], [0, 0, 1, 1], [], []>} : vector<32x128xf32>, vector<128x256xf32>, vector<32x256xf32> -> vector<32x256xf32>
    %c0_5 = arith.constant 0 : index
    %c0_6 = arith.constant 0 : index
    %c0_7 = arith.constant 0 : index
    %5 = vector.load %arg3[%c0_5, %c0_6, %c0_7] : memref<2x1x256xf32, #tpu.memory_space<vmem>>, vector<1x1x256xf32>
    %6 = vector.shape_cast %5 : vector<1x1x256xf32> to vector<1x256xf32>
    %7 = vector.broadcast %6 : vector<1x256xf32> to vector<32x256xf32>
    %8 = arith.addf %4, %7 : vector<32x256xf32>
    %9 = vector.shape_cast %8 : vector<32x256xf32> to vector<16x2x256xf32>
    %c0_8 = arith.constant 0 : index
    %c0_9 = arith.constant 0 : index
    %c0_10 = arith.constant 0 : index
    %10 = vector.load %arg11[%c0_8, %c0_9, %c0_10] : memref<16x2x256xf32, #tpu.memory_space<vmem>>, vector<16x2x256xf32>
    tpu.vector_store %arg11[%c0_8, %c0_9, %c0_10], %9 {strides = array<i32>} : memref<16x2x256xf32, #tpu.memory_space<vmem>>, vector<16x2x256xf32>,
    %cst_11 = arith.constant 0.000000e+00 : f32
    %11 = vector.broadcast %cst_11 : f32 to vector<2x64xf32>
    %c0_12 = arith.constant 0 : index
    %c0_13 = arith.constant 0 : index
    %12 = vector.load %arg9[%c0_12, %c0_13] : memref<2x64xf32, #tpu.memory_space<vmem>>, vector<2x64xf32>
    tpu.vector_store %arg9[%c0_12, %c0_13], %11 {strides = array<i32>} : memref<2x64xf32, #tpu.memory_space<vmem>>, vector<2x64xf32>,
    %cst_14 = arith.constant 0.000000e+00 : f32
    %13 = vector.broadcast %cst_14 : f32 to vector<2x64xf32>
    %c0_15 = arith.constant 0 : index
    %c0_16 = arith.constant 0 : index
    %14 = vector.load %arg10[%c0_15, %c0_16] : memref<2x64xf32, #tpu.memory_space<vmem>>, vector<2x64xf32>
    tpu.vector_store %arg10[%c0_15, %c0_16], %13 {strides = array<i32>} : memref<2x64xf32, #tpu.memory_space<vmem>>, vector<2x64xf32>,
    %c0_i32 = arith.constant 0 : i32
    %c16_i32 = arith.constant 16 : i32
    %15 = arith.addi %c0_i32, %c16_i32 : i32
    %c1_i32 = arith.constant 1 : i32
    scf.for %arg12 = %c0_i32 to %15 step %c1_i32  : i32 {
      %57 = arith.index_cast %arg12 : i32 to index
      %c0_43 = arith.constant 0 : index
      %c0_44 = arith.constant 0 : index
      %58 = vector.load %arg11[%57, %c0_43, %c0_44] : memref<16x2x256xf32, #tpu.memory_space<vmem>>, vector<1x2x256xf32>
      %59 = vector.shape_cast %58 : vector<1x2x256xf32> to vector<2x256xf32>
      %c0_45 = arith.constant 0 : index
      %c0_46 = arith.constant 0 : index
      %60 = vector.load %arg9[%c0_45, %c0_46] : memref<2x64xf32, #tpu.memory_space<vmem>>, vector<2x64xf32>
      %c0_47 = arith.constant 0 : index
      %c0_48 = arith.constant 0 : index
      %c0_49 = arith.constant 0 : index
      %61 = vector.load %arg2[%c0_47, %c0_48, %c0_49] : memref<2x64x256xf32, #tpu.memory_space<vmem>>, vector<1x64x256xf32>
      %62 = vector.shape_cast %61 : vector<1x64x256xf32> to vector<64x256xf32>
      %cst_50 = arith.constant dense<0.000000e+00> : vector<2x256xf32>
      %63 = tpu.matmul %60, %62, %cst_50 {dimension_numbers = #tpu.dot_dimension_numbers<[1], [0], [0], [1], [0, 0, 1, 1], [], []>} : vector<2x64xf32>, vector<64x256xf32>, vector<2x256xf32> -> vector<2x256xf32>
      %64 = arith.addf %59, %63 : vector<2x256xf32>
      %65 = vector.extract_strided_slice %64 {offsets = [0, 0], sizes = [2, 64], strides = [1, 1]} : vector<2x256xf32> to vector<2x64xf32>
      %66 = arith.negf %65 : vector<2x64xf32>
      %67 = math.exp %66 : vector<2x64xf32>
      %cst_51 = arith.constant 1.000000e+00 : f32
      %68 = vector.broadcast %cst_51 : f32 to vector<2x64xf32>
      %69 = arith.addf %68, %67 : vector<2x64xf32>
      %70 = arith.divf %68, %69 : vector<2x64xf32>
      %71 = vector.extract_strided_slice %64 {offsets = [0, 64], sizes = [2, 64], strides = [1, 1]} : vector<2x256xf32> to vector<2x64xf32>
      %72 = arith.negf %71 : vector<2x64xf32>
      %73 = math.exp %72 : vector<2x64xf32>
      %cst_52 = arith.constant 1.000000e+00 : f32
      %74 = vector.broadcast %cst_52 : f32 to vector<2x64xf32>
      %75 = arith.addf %74, %73 : vector<2x64xf32>
      %76 = arith.divf %74, %75 : vector<2x64xf32>
      %77 = vector.extract_strided_slice %64 {offsets = [0, 128], sizes = [2, 64], strides = [1, 1]} : vector<2x256xf32> to vector<2x64xf32>
      %78 = math.tanh %77 : vector<2x64xf32>
      %79 = vector.extract_strided_slice %64 {offsets = [0, 192], sizes = [2, 64], strides = [1, 1]} : vector<2x256xf32> to vector<2x64xf32>
      %80 = arith.negf %79 : vector<2x64xf32>
      %81 = math.exp %80 : vector<2x64xf32>
      %cst_53 = arith.constant 1.000000e+00 : f32
      %82 = vector.broadcast %cst_53 : f32 to vector<2x64xf32>
      %83 = arith.addf %82, %81 : vector<2x64xf32>
      %84 = arith.divf %82, %83 : vector<2x64xf32>
      %c0_54 = arith.constant 0 : index
      %c0_55 = arith.constant 0 : index
      %85 = vector.load %arg10[%c0_54, %c0_55] : memref<2x64xf32, #tpu.memory_space<vmem>>, vector<2x64xf32>
      %86 = arith.mulf %76, %85 : vector<2x64xf32>
      %87 = arith.mulf %70, %78 : vector<2x64xf32>
      %88 = arith.addf %86, %87 : vector<2x64xf32>
      %c0_56 = arith.constant 0 : index
      %c0_57 = arith.constant 0 : index
      %89 = vector.load %arg10[%c0_56, %c0_57] : memref<2x64xf32, #tpu.memory_space<vmem>>, vector<2x64xf32>
      tpu.vector_store %arg10[%c0_56, %c0_57], %88 {strides = array<i32>} : memref<2x64xf32, #tpu.memory_space<vmem>>, vector<2x64xf32>,
      %90 = math.tanh %88 : vector<2x64xf32>
      %91 = arith.mulf %84, %90 : vector<2x64xf32>
      %c0_58 = arith.constant 0 : index
      %c0_59 = arith.constant 0 : index
      %92 = vector.load %arg9[%c0_58, %c0_59] : memref<2x64xf32, #tpu.memory_space<vmem>>, vector<2x64xf32>
      tpu.vector_store %arg9[%c0_58, %c0_59], %91 {strides = array<i32>} : memref<2x64xf32, #tpu.memory_space<vmem>>, vector<2x64xf32>,
    }
    %c16_i32_17 = arith.constant 16 : i32
    %c0_18 = arith.constant 0 : index
    %c0_19 = arith.constant 0 : index
    %16 = vector.load %arg9[%c0_18, %c0_19] : memref<2x64xf32, #tpu.memory_space<vmem>>, vector<2x64xf32>
    %c15 = arith.constant 15 : index
    %c0_20 = arith.constant 0 : index
    %c0_21 = arith.constant 0 : index
    %17 = vector.load %arg0[%c15, %c0_20, %c0_21] : memref<16x2x128xf32, #tpu.memory_space<vmem>>, vector<1x2x128xf32>
    %18 = vector.shape_cast %17 : vector<1x2x128xf32> to vector<2x128xf32>
    %c1 = arith.constant 1 : index
    %c0_22 = arith.constant 0 : index
    %c0_23 = arith.constant 0 : index
    %19 = vector.load %arg1[%c1, %c0_22, %c0_23] : memref<2x128x256xf32, #tpu.memory_space<vmem>>, vector<1x128x256xf32>
    %20 = vector.shape_cast %19 : vector<1x128x256xf32> to vector<128x256xf32>
    %cst_24 = arith.constant dense<0.000000e+00> : vector<2x256xf32>
    %21 = tpu.matmul %18, %20, %cst_24 {dimension_numbers = #tpu.dot_dimension_numbers<[1], [0], [0], [1], [0, 0, 1, 1], [], []>} : vector<2x128xf32>, vector<128x256xf32>, vector<2x256xf32> -> vector<2x256xf32>
    %c1_25 = arith.constant 1 : index
    %c0_26 = arith.constant 0 : index
    %c0_27 = arith.constant 0 : index
    %22 = vector.load %arg3[%c1_25, %c0_26, %c0_27] : memref<2x1x256xf32, #tpu.memory_space<vmem>>, vector<1x1x256xf32>
    %23 = vector.shape_cast %22 : vector<1x1x256xf32> to vector<1x256xf32>
    %24 = vector.broadcast %23 : vector<1x256xf32> to vector<2x256xf32>
    %25 = arith.addf %21, %24 : vector<2x256xf32>
    %26 = vector.extract_strided_slice %25 {offsets = [0, 0], sizes = [2, 64], strides = [1, 1]} : vector<2x256xf32> to vector<2x64xf32>
    %27 = arith.negf %26 : vector<2x64xf32>
    %28 = math.exp %27 : vector<2x64xf32>
    %cst_28 = arith.constant 1.000000e+00 : f32
    %29 = vector.broadcast %cst_28 : f32 to vector<2x64xf32>
    %30 = arith.addf %29, %28 : vector<2x64xf32>
    %31 = arith.divf %29, %30 : vector<2x64xf32>
    %32 = vector.extract_strided_slice %25 {offsets = [0, 128], sizes = [2, 64], strides = [1, 1]} : vector<2x256xf32> to vector<2x64xf32>
    %33 = math.tanh %32 : vector<2x64xf32>
    %34 = vector.extract_strided_slice %25 {offsets = [0, 192], sizes = [2, 64], strides = [1, 1]} : vector<2x256xf32> to vector<2x64xf32>
    %35 = arith.negf %34 : vector<2x64xf32>
    %36 = math.exp %35 : vector<2x64xf32>
    %cst_29 = arith.constant 1.000000e+00 : f32
    %37 = vector.broadcast %cst_29 : f32 to vector<2x64xf32>
    %38 = arith.addf %37, %36 : vector<2x64xf32>
    %39 = arith.divf %37, %38 : vector<2x64xf32>
    %40 = arith.mulf %31, %33 : vector<2x64xf32>
    %41 = math.tanh %40 : vector<2x64xf32>
    %42 = arith.mulf %39, %41 : vector<2x64xf32>
    %43 = tpu.concatenate %16, %42 in 1 : vector<2x64xf32>, vector<2x64xf32> -> vector<2x128xf32>
    %c0_30 = arith.constant 0 : index
    %c0_31 = arith.constant 0 : index
    %44 = vector.load %arg4[%c0_30, %c0_31] : memref<128x64xf32, #tpu.memory_space<vmem>>, vector<128x64xf32>
    %cst_32 = arith.constant dense<0.000000e+00> : vector<2x64xf32>
    %45 = tpu.matmul %43, %44, %cst_32 {dimension_numbers = #tpu.dot_dimension_numbers<[1], [0], [0], [1], [0, 0, 1, 1], [], []>} : vector<2x128xf32>, vector<128x64xf32>, vector<2x64xf32> -> vector<2x64xf32>
    %c0_33 = arith.constant 0 : index
    %c0_34 = arith.constant 0 : index
    %46 = vector.load %arg5[%c0_33, %c0_34] : memref<1x64xf32, #tpu.memory_space<vmem>>, vector<1x64xf32>
    %47 = vector.broadcast %46 : vector<1x64xf32> to vector<2x64xf32>
    %48 = arith.addf %45, %47 : vector<2x64xf32>
    %cst_35 = arith.constant 0.000000e+00 : f32
    %49 = vector.broadcast %cst_35 : f32 to vector<2x64xf32>
    %50 = arith.maximumf %48, %49 : vector<2x64xf32>
    %c0_36 = arith.constant 0 : index
    %c0_37 = arith.constant 0 : index
    %51 = vector.load %arg6[%c0_36, %c0_37] : memref<64x3xf32, #tpu.memory_space<vmem>>, vector<64x3xf32>
    %cst_38 = arith.constant dense<0.000000e+00> : vector<2x3xf32>
    %52 = tpu.matmul %50, %51, %cst_38 {dimension_numbers = #tpu.dot_dimension_numbers<[1], [0], [0], [1], [0, 0, 1, 1], [], []>} : vector<2x64xf32>, vector<64x3xf32>, vector<2x3xf32> -> vector<2x3xf32>
    %c0_39 = arith.constant 0 : index
    %c0_40 = arith.constant 0 : index
    %53 = vector.load %arg7[%c0_39, %c0_40] : memref<1x3xf32, #tpu.memory_space<vmem>>, vector<1x3xf32>
    %54 = vector.broadcast %53 : vector<1x3xf32> to vector<2x3xf32>
    %55 = arith.addf %52, %54 : vector<2x3xf32>
    %c0_41 = arith.constant 0 : index
    %c0_42 = arith.constant 0 : index
    %56 = vector.load %arg8[%c0_41, %c0_42] : memref<2x3xf32, #tpu.memory_space<vmem>>, vector<2x3xf32>
    tpu.vector_store %arg8[%c0_41, %c0_42], %55 {strides = array<i32>} : memref<2x3xf32, #tpu.memory_space<vmem>>, vector<2x3xf32>,
    return
  }
}

</mosaic_0001>

<llo_original>
// kernel: crypto_stst_forward.7
$region0: #{crypto_stst_forward.7}
  #allocation0 [shape = 'u32[]', space=smem, size = 0x4, offset = 0x4, fixed_abs, tag = 'smem constant byte address 0x4 - core index']
  #allocation1 [shape = 'u32[72,128]{1,0:T(1,128)}', space=vmem, size = 0x9000, scoped, tag = 'internal scratch']
  %s0 = inlined_call_operand.vmem [shape: f32[2,16,24], index: 0, kind: input, shape index: {}]
  %s1 = inlined_call_operand.vmem [shape: f32[24,64], index: 1, kind: input, shape index: {}]
  %s2 = inlined_call_operand.vmem [shape: f32[1,64], index: 2, kind: input, shape index: {}]
  %s3 = inlined_call_operand.vmem [shape: f32[1,16,64], index: 3, kind: input, shape index: {}]
  %s4 = inlined_call_operand.vmem [shape: f32[2,16,64], index: 4, kind: output, shape index: {}]
  %s5 = sld [smem:[#allocation0]]
  $region26: #{crypto_stst_forward.7} parent=0
    _
  %s7 = ssub.s32 1, %s5
  %s8 = scalar_select 0, %s7, %s5
  // Predicated region
  $region2: #{crypto_stst_forward.7} parent=0 // pred_check
    _
  $region3: #{crypto_stst_forward.7} parent=0 // pred_check_branch
    %10 = sbr.rel (0) target = $region5
  $region4: #{crypto_stst_forward.7} parent=0 // pred_region
    _
  $region5: #{crypto_stst_forward.7} parent=0 // pred_fallthru
    _
  // Predicated region
  $region6: #{crypto_stst_forward.7} parent=0 // pred_check
    _
  $region7: #{crypto_stst_forward.7} parent=0 // pred_check_branch
    %12 = sbr.rel (0) target = $region9
  $region8: #{crypto_stst_forward.7} parent=0 // pred_region
    _
  $region9: #{crypto_stst_forward.7} parent=0 // pred_fallthru
    _
  // Predicated region
  $region10: #{crypto_stst_forward.7} parent=0 // pred_check
    _
  $region11: #{crypto_stst_forward.7} parent=0 // pred_check_branch
    %14 = sbr.rel (0) target = $region13
  $region12: #{crypto_stst_forward.7} parent=0 // pred_region
    _
  $region13: #{crypto_stst_forward.7} parent=0 // pred_fallthru
    _
  // Predicated region
  $region14: #{crypto_stst_forward.7} parent=0 // pred_check
    _
  $region15: #{crypto_stst_forward.7} parent=0 // pred_check_branch
    %16 = sbr.rel (0) target = $region17
  $region16: #{crypto_stst_forward.7} parent=0 // pred_region
    _
  $region17: #{crypto_stst_forward.7} parent=0 // pred_fallthru
    _
  %v17 = vld [vmem:[%s0] sm:$0xff]
  %v18 = vld [vmem:[%s0 + $0x8] sm:$0xff]
  %v19 = vld [vmem:[%s0 + $0x10] sm:$0xff]
  %v20 = vld [vmem:[%s0 + $0x18] sm:$0xff]
  %v21 = vld [vmem:[%s1] sm:$0xff]
  %v22 = vld [vmem:[%s1 + $0x8] sm:$0xff]
  %v23 = vld [vmem:[%s1 + $0x10] sm:$0xff]
  %v24 = vld [vmem:[%s2] sm:$0x1]
  %v26 = vperm.slane %v24, 0
  %vm28 = vcmask 195584
  %v30 = vsel %vm28, %v17, 0
  %v33 = vsel %vm28, %v18, 0
  %v36 = vsel %vm28, %v19, 0
  %v39 = vsel %vm28, %v20, 0
  %41 = vmatpush.msra.mxu0 0.0
  %42 = vmatpush.msra.mxu0 0.0
  %43 = vmatpush.msra.mxu0 0.0
  %44 = vmatpush.msra.mxu0 0.0
  %45 = vmatpush.msra.mxu0 0.0
  %46 = vmatpush.msra.mxu0 0.0
  %47 = vmatpush.msra.mxu0 0.0
  %48 = vmatpush.msra.mxu0 0.0
  %49 = vmatpush.msra.mxu0 0.0
  %50 = vmatpush.msra.mxu0 0.0
  %51 = vmatpush.msra.mxu0 0.0
  %52 = vmatpush.msra.mxu0 0.0
  %53 = vmatpush.msra.mxu0 0.0
  %54 = vmatpush.msra.mxu0 %v23
  %55 = vmatpush.msra.mxu0 %v22
  %56 = vmatpush.msra.mxu0 %v21
  %57 = vmatmul.f32.gmra.mxu0 %v30
  %v58 = vpop.f32.mrf.mxu0
  %v59 = vadd.f32 %v26, %v58
  %60 = vmatmul.f32.gmra.mxu0 %v33
  %v61 = vpop.f32.mrf.mxu0
  %v62 = vadd.f32 %v26, %v61
  %63 = vmatmul.f32.gmra.mxu0 %v36
  %v64 = vpop.f32.mrf.mxu0
  %v65 = vadd.f32 %v26, %v64
  %66 = vmatmul.f32.gmra.mxu0 %v39
  %v67 = vpop.f32.mrf.mxu0
  %v68 = vadd.f32 %v26, %v67
  %69 = vdwg.mxu0
  %v70 = vld [vmem:[%s3] sm:$0xff]
  %v71 = vld [vmem:[%s3 + $0x8] sm:$0xff]
  %v72 = vadd.f32 %v59, %v70
  %v73 = vadd.f32 %v62, %v71
  %v74 = vadd.f32 %v65, %v70
  %v75 = vadd.f32 %v68, %v71
  %vm76 = vcmask 523264
  %77 = vst.msk [vmem:[%s4] sm:$0xff] %vm76, %v72
  %78 = vst.msk [vmem:[%s4 + $0x8] sm:$0xff] %vm76, %v73
  %79 = vst.msk [vmem:[%s4 + $0x10] sm:$0xff] %vm76, %v74
  %80 = vst.msk [vmem:[%s4 + $0x18] sm:$0xff] %vm76, %v75
  // Predicated region
  $region18: #{crypto_stst_forward.7} parent=0 // pred_check
    _
  $region19: #{crypto_stst_forward.7} parent=0 // pred_check_branch
    %82 = sbr.rel (0) target = $region21
  $region20: #{crypto_stst_forward.7} parent=0 // pred_region
    _
  $region21: #{crypto_stst_forward.7} parent=0 // pred_fallthru
    _
  // Predicated region
  $region22: #{crypto_stst_forward.7} parent=0 // pred_check
    _
  $region23: #{crypto_stst_forward.7} parent=0 // pred_check_branch
    %84 = sbr.rel (0) target = $region25
  $region24: #{crypto_stst_forward.7} parent=0 // pred_region
    _
  $region25: #{crypto_stst_forward.7} parent=0 // pred_fallthru
    _

// kernel: crypto_stst_forward.8
$region0: #{crypto_stst_forward.8}
  #allocation0 [shape = 'u32[]', space=smem, size = 0x4, offset = 0x4, fixed_abs, tag = 'smem constant byte address 0x4 - core index']
  #allocation1 [shape = 'u32[72,128]{1,0:T(1,128)}', space=vmem, size = 0x9000, scoped, tag = 'internal scratch']
  %s0 = inlined_call_operand.vmem [shape: f32[2,16,64], index: 0, kind: input, shape index: {}]
  %s1 = inlined_call_operand.vmem [shape: f32[64,192], index: 1, kind: input, shape index: {}]
  %s2 = inlined_call_operand.vmem [shape: f32[1,192], index: 2, kind: input, shape index: {}]
  %s3 = inlined_call_operand.hbm [shape: f32[64,64], index: 3, kind: input, shape index: {}]
  %s4 = inlined_call_operand.hbm [shape: f32[1,64], index: 4, kind: input, shape index: {}]
  %s5 = inlined_call_operand.vmem [shape: f32[1,64], index: 5, kind: input, shape index: {}]
  %s6 = inlined_call_operand.vmem [shape: f32[1,64], index: 6, kind: input, shape index: {}]
  %s7 = inlined_call_operand.vmem [shape: f32[64,256], index: 7, kind: input, shape index: {}]
  %s8 = inlined_call_operand.vmem [shape: f32[1,256], index: 8, kind: input, shape index: {}]
  %s9 = inlined_call_operand.vmem [shape: f32[256,64], index: 9, kind: input, shape index: {}]
  %s10 = inlined_call_operand.vmem [shape: f32[1,64], index: 10, kind: input, shape index: {}]
  %s11 = inlined_call_operand.hbm [shape: f32[1,64], index: 11, kind: input, shape index: {}]
  %s12 = inlined_call_operand.hbm [shape: f32[1,64], index: 12, kind: input, shape index: {}]
  %s13 = inlined_call_operand.vmem [shape: f32[2,16,64], index: 13, kind: output, shape index: {}]
  %s14 = sld [smem:[#allocation0]]
  $region78: #{crypto_stst_forward.8} parent=0
    _
  %s16 = ssub.s32 1, %s14
  %s17 = scalar_select 0, %s16, %s14
  $region1: #{crypto_stst_forward.8} parent=0
    #allocation2 [shape = 'u8[32768]{0}', space=vmem, size = 0x8000, scoped, tag = 'input window, operand 3, single buffered']
    #allocation3 [shape = 's32[1]{0}', space=sflag, size = 0x4, scoped, tag = 'scoped memory for crypto_stst_forward.8']
    #allocation4 [shape = 'u8[512]{0}', space=vmem, size = 0x400, scoped, tag = 'input window, operand 4, single buffered']
    #allocation5 [shape = 's32[1]{0}', space=sflag, size = 0x4, scoped, tag = 'scoped memory for crypto_stst_forward.8']
    #allocation6 [shape = 'u8[512]{0}', space=vmem, size = 0x400, scoped, tag = 'input window, operand 11, single buffered']
    #allocation7 [shape = 'u8[512]{0}', space=vmem, size = 0x400, scoped, tag = 'input window, operand 12, single buffered']
    #allocation8 [shape = 's32[1]{0}', space=sflag, size = 0x4, scoped, tag = 'scoped memory for crypto_stst_forward.8']
    %18 = vsyncpa [#allocation3], 0
    %19 = vsyncpa [#allocation5], 0
    %20 = vsyncpa [#allocation8], 0
    // Predicated region
    $region2: #{crypto_stst_forward.8} parent=1 // pred_check
      _
    $region3: #{crypto_stst_forward.8} parent=1 // pred_check_branch
      %22 = sbr.rel (0) target = $region5
    $region4: #{crypto_stst_forward.8} parent=1 // pred_region
      _
    $region5: #{crypto_stst_forward.8} parent=1 // pred_fallthru
      _
    // Predicated region
    $region6: #{crypto_stst_forward.8} parent=1 // pred_check
      _
    $region7: #{crypto_stst_forward.8} parent=1 // pred_check_branch
      %24 = sbr.rel (0) target = $region9
    $region8: #{crypto_stst_forward.8} parent=1 // pred_region
      _
    $region9: #{crypto_stst_forward.8} parent=1 // pred_fallthru
      _
    // Predicated region
    $region10: #{crypto_stst_forward.8} parent=1 // pred_check
      _
    $region11: #{crypto_stst_forward.8} parent=1 // pred_check_branch
      %26 = sbr.rel (0) target = $region13
    $region12: #{crypto_stst_forward.8} parent=1 // pred_region
      _
    $region13: #{crypto_stst_forward.8} parent=1 // pred_fallthru
      _
    // Predicated region
    $region14: #{crypto_stst_forward.8} parent=1 // pred_check
      _
    $region15: #{crypto_stst_forward.8} parent=1 // pred_check_branch
      %28 = sbr.rel (0) target = $region17
    $region16: #{crypto_stst_forward.8} parent=1 // pred_region
      %30 = vsyncadd [#allocation3], 0
      %s31 = sshll.u32 %s3, 4
      %s32 = int_to_ptr.hbm [resolvable:$true] %s31
      %s33 = sshll.u32 [#allocation2], 4
      %s34 = int_to_ptr.vmem [resolvable:$true] %s33
      %39 = dma.hbm_to_vmem [thread:$0]  %s32, 1024, %s34, [#allocation3], 128, 128, 8
    $region17: #{crypto_stst_forward.8} parent=1 // pred_fallthru
      _
    // Predicated region
    $region18: #{crypto_stst_forward.8} parent=1 // pred_check
      _
    $region19: #{crypto_stst_forward.8} parent=1 // pred_check_branch
      %41 = sbr.rel (0) target = $region21
    $region20: #{crypto_stst_forward.8} parent=1 // pred_region
      %43 = vsyncadd [#allocation5], 0
      %s45 = sshll.u32 %s4, 4
      %s46 = int_to_ptr.hbm [resolvable:$true] %s45
      %s47 = sshll.u32 [#allocation4], 4
      %s48 = int_to_ptr.vmem [resolvable:$true] %s47
      %50 = dma.hbm_to_vmem [thread:$0]  %s46, 16, %s48, [#allocation5]
    $region21: #{crypto_stst_forward.8} parent=1 // pred_fallthru
      _
    // Predicated region
    $region22: #{crypto_stst_forward.8} parent=1 // pred_check
      _
    $region23: #{crypto_stst_forward.8} parent=1 // pred_check_branch
      %52 = sbr.rel (0) target = $region25
    $region24: #{crypto_stst_forward.8} parent=1 // pred_region
      _
    $region25: #{crypto_stst_forward.8} parent=1 // pred_fallthru
      _
    // Predicated region
    $region26: #{crypto_stst_forward.8} parent=1 // pred_check
      _
    $region27: #{crypto_stst_forward.8} parent=1 // pred_check_branch
      %54 = sbr.rel (0) target = $region29
    $region28: #{crypto_stst_forward.8} parent=1 // pred_region
      _
    $region29: #{crypto_stst_forward.8} parent=1 // pred_fallthru
      _
    // Predicated region
    $region30: #{crypto_stst_forward.8} parent=1 // pred_check
      _
    $region31: #{crypto_stst_forward.8} parent=1 // pred_check_branch
      %56 = sbr.rel (0) target = $region33
    $region32: #{crypto_stst_forward.8} parent=1 // pred_region
      _
    $region33: #{crypto_stst_forward.8} parent=1 // pred_fallthru
      _
    // Predicated region
    $region34: #{crypto_stst_forward.8} parent=1 // pred_check
      _
    $region35: #{crypto_stst_forward.8} parent=1 // pred_check_branch
      %58 = sbr.rel (0) target = $region37
    $region36: #{crypto_stst_forward.8} parent=1 // pred_region
      _
    $region37: #{crypto_stst_forward.8} parent=1 // pred_fallthru
      _
    // Predicated region
    $region38: #{crypto_stst_forward.8} parent=1 // pred_check
      _
    $region39: #{crypto_stst_forward.8} parent=1 // pred_check_branch
      %60 = sbr.rel (0) target = $region41
    $region40: #{crypto_stst_forward.8} parent=1 // pred_region
      _
    $region41: #{crypto_stst_forward.8} parent=1 // pred_fallthru
      _
    // Predicated region
    $region42: #{crypto_stst_forward.8} parent=1 // pred_check
      _
    $region43: #{crypto_stst_forward.8} parent=1 // pred_check_branch
      %62 = sbr.rel (0) target = $region45
    $region44: #{crypto_stst_forward.8} parent=1 // pred_region
      _
    $region45: #{crypto_stst_forward.8} parent=1 // pred_fallthru
      _
    // Predicated region
    $region46: #{crypto_stst_forward.8} parent=1 // pred_check
      _
    $region47: #{crypto_stst_forward.8} parent=1 // pred_check_branch
      %64 = sbr.rel (0) target = $region49
    $region48: #{crypto_stst_forward.8} parent=1 // pred_region
      %66 = vsyncadd [#allocation5], 0
      %s68 = sshll.u32 %s11, 4
      %s69 = int_to_ptr.hbm [resolvable:$true] %s68
      %s70 = sshll.u32 [#allocation6], 4
      %s71 = int_to_ptr.vmem [resolvable:$true] %s70
      %73 = dma.hbm_to_vmem [thread:$0]  %s69, 16, %s71, [#allocation5]
    $region49: #{crypto_stst_forward.8} parent=1 // pred_fallthru
      _
    // Predicated region
    $region50: #{crypto_stst_forward.8} parent=1 // pred_check
      _
    $region51: #{crypto_stst_forward.8} parent=1 // pred_check_branch
      %75 = sbr.rel (0) target = $region53
    $region52: #{crypto_stst_forward.8} parent=1 // pred_region
      %77 = vsyncadd [#allocation8], 0
      %s79 = sshll.u32 %s12, 4
      %s80 = int_to_ptr.hbm [resolvable:$true] %s79
      %s81 = sshll.u32 [#allocation7], 4
      %s82 = int_to_ptr.vmem [resolvable:$true] %s81
      %84 = dma.hbm_to_vmem [thread:$0]  %s80, 16, %s82, [#allocation8]
    $region53: #{crypto_stst_forward.8} parent=1 // pred_fallthru
      _
    // Predicated region
    $region54: #{crypto_stst_forward.8} parent=1 // pred_check
      _
    $region55: #{crypto_stst_forward.8} parent=1 // pred_check_branch
      %86 = sbr.rel (0) target = $region57
    $region56: #{crypto_stst_forward.8} parent=1 // pred_region
      %88 = dma.done [#allocation3], 1024
    $region57: #{crypto_stst_forward.8} parent=1 // pred_fallthru
      _
    // Predicated region
    $region58: #{crypto_stst_forward.8} parent=1 // pred_check
      _
    $region59: #{crypto_stst_forward.8} parent=1 // pred_check_branch
      %90 = sbr.rel (0) target = $region61
    $region60: #{crypto_stst_forward.8} parent=1 // pred_region
      %92 = dma.done [#allocation5], 16
    $region61: #{crypto_stst_forward.8} parent=1 // pred_fallthru
      _
    // Predicated region
    $region62: #{crypto_stst_forward.8} parent=1 // pred_check
      _
    $region63: #{crypto_stst_forward.8} parent=1 // pred_check_branch
      %94 = sbr.rel (0) target = $region65
    $region64: #{crypto_stst_forward.8} parent=1 // pred_region
      %96 = dma.done [#allocation5], 16
    $region65: #{crypto_stst_forward.8} parent=1 // pred_fallthru
      _
    // Predicated region
    $region66: #{crypto_stst_forward.8} parent=1 // pred_check
      _
    $region67: #{crypto_stst_forward.8} parent=1 // pred_check_branch
      %98 = sbr.rel (0) target = $region69
    $region68: #{crypto_stst_forward.8} parent=1 // pred_region
      %100 = dma.done [#allocation8], 16
    $region69: #{crypto_stst_forward.8} parent=1 // pred_fallthru
      _
    %v101 = vld [vmem:[%s0] sm:$0xff]
    %v102 = vld [vmem:[%s0 + $0x8] sm:$0xff]
    %v103 = vld [vmem:[%s0 + $0x10] sm:$0xff]
    %v104 = vld [vmem:[%s0 + $0x18] sm:$0xff]
    %v105 = vld [vmem:[%s1] sm:$0xff]
    %v106 = vld [vmem:[%s1 + $0x8] sm:$0xff]
    %v107 = vld [vmem:[%s1 + $0x10] sm:$0xff]
    %v108 = vld [vmem:[%s1 + $0x18] sm:$0xff]
    %v109 = vld [vmem:[%s1 + $0x20] sm:$0xff]
    %v110 = vld [vmem:[%s1 + $0x28] sm:$0xff]
    %v111 = vld [vmem:[%s1 + $0x30] sm:$0xff]
    %v112 = vld [vmem:[%s1 + $0x38] sm:$0xff]
    %v113 = vld [vmem:[%s1 + $0x40] sm:$0xff]
    %v114 = vld [vmem:[%s1 + $0x48] sm:$0xff]
    %v115 = vld [vmem:[%s1 + $0x50] sm:$0xff]
    %v116 = vld [vmem:[%s1 + $0x58] sm:$0xff]
    %v117 = vld [vmem:[%s1 + $0x60] sm:$0xff]
    %v118 = vld [vmem:[%s1 + $0x68] sm:$0xff]
    %v119 = vld [vmem:[%s1 + $0x70] sm:$0xff]
    %v120 = vld [vmem:[%s1 + $0x78] sm:$0xff]
    %v121 = vld [vmem:[%s2] sm:$0x3]
    %v123 = vperm.slane %v121, 0
    %v124 = vperm.slane %v121, 1
    %vm127 = vcmask 523264
    %v129 = vsel %vm127, %v101, 0
    %v132 = vsel %vm127, %v102, 0
    %v135 = vsel %vm127, %v103, 0
    %v138 = vsel %vm127, %v104, 0
    %140 = vmatpush.msra.mxu0 0.0
    %141 = vmatpush.msra.mxu0 0.0
    %142 = vmatpush.msra.mxu0 0.0
    %143 = vmatpush.msra.mxu0 0.0
    %144 = vmatpush.msra.mxu0 0.0
    %145 = vmatpush.msra.mxu0 0.0
    %146 = vmatpush.msra.mxu0 0.0
    %147 = vmatpush.msra.mxu0 0.0
    %148 = vmatpush.msra.mxu0 %v119
    %149 = vmatpush.msra.mxu0 %v117
    %150 = vmatpush.msra.mxu0 %v115
    %151 = vmatpush.msra.mxu0 %v113
    %152 = vmatpush.msra.mxu0 %v111
    %153 = vmatpush.msra.mxu0 %v109
    %154 = vmatpush.msra.mxu0 %v107
    %155 = vmatpush.msra.mxu0 %v105
    %156 = vmatmul.f32.gmra.mxu0 %v129
    %v157 = vpop.f32.mrf.mxu0
    %v158 = vadd.f32 %v123, %v157
    %159 = vmatmul.f32.gmra.mxu0 %v132
    %v160 = vpop.f32.mrf.mxu0
    %v161 = vadd.f32 %v123, %v160
    %162 = vmatmul.f32.gmra.mxu0 %v135
    %v163 = vpop.f32.mrf.mxu0
    %v164 = vadd.f32 %v123, %v163
    %165 = vmatmul.f32.gmra.mxu0 %v138
    %v166 = vpop.f32.mrf.mxu0
    %v167 = vadd.f32 %v123, %v166
    %168 = vdwg.mxu0
    %169 = vmatpush.msra.mxu0 0.0
    %170 = vmatpush.msra.mxu0 0.0
    %171 = vmatpush.msra.mxu0 0.0
    %172 = vmatpush.msra.mxu0 0.0
    %173 = vmatpush.msra.mxu0 0.0
    %174 = vmatpush.msra.mxu0 0.0
    %175 = vmatpush.msra.mxu0 0.0
    %176 = vmatpush.msra.mxu0 0.0
    %177 = vmatpush.msra.mxu0 %v120
    %178 = vmatpush.msra.mxu0 %v118
    %179 = vmatpush.msra.mxu0 %v116
    %180 = vmatpush.msra.mxu0 %v114
    %181 = vmatpush.msra.mxu0 %v112
    %182 = vmatpush.msra.mxu0 %v110
    %183 = vmatpush.msra.mxu0 %v108
    %184 = vmatpush.msra.mxu0 %v106
    %185 = vmatmul.f32.gmra.mxu0 %v129
    %v186 = vpop.f32.mrf.mxu0
    %v187 = vadd.f32 %v124, %v186
    %188 = vmatmul.f32.gmra.mxu0 %v132
    %v189 = vpop.f32.mrf.mxu0
    %v190 = vadd.f32 %v124, %v189
    %191 = vmatmul.f32.gmra.mxu0 %v135
    %v192 = vpop.f32.mrf.mxu0
    %v193 = vadd.f32 %v124, %v192
    %194 = vmatmul.f32.gmra.mxu0 %v138
    %v195 = vpop.f32.mrf.mxu0
    %v196 = vadd.f32 %v124, %v195
    %197 = vdwg.mxu0
    %200 = vrot.lane.b32.xlu0 %v158, 64
    %v201 = vpop.permute.xlu0 %200
    %202 = vrot.lane.b32.xlu0 %v161, 64
    %v203 = vpop.permute.xlu0 %202
    %vm204 = vcmask 130048
    %v205 = vsel %vm204, %v158, 0
    %v207 = vsel %vm204, %v161, 0
    %v209 = vsel %vm204, %v201, 0
    %v211 = vsel %vm204, %v203, 0
    %213 = vmatpush.xpose.msra.mxu0 0.0
    %214 = vmatpush.xpose.msra.mxu0 0.0
    %215 = vmatpush.xpose.msra.mxu0 0.0
    %216 = vmatpush.xpose.msra.mxu0 0.0
    %217 = vmatpush.xpose.msra.mxu0 0.0
    %218 = vmatpush.xpose.msra.mxu0 0.0
    %219 = vmatpush.xpose.msra.mxu0 0.0
    %220 = vmatpush.xpose.msra.mxu0 0.0
    %221 = vmatpush.xpose.msra.mxu0 0.0
    %222 = vmatpush.xpose.msra.mxu0 0.0
    %223 = vmatpush.xpose.msra.mxu0 0.0
    %224 = vmatpush.xpose.msra.mxu0 0.0
    %225 = vmatpush.xpose.msra.mxu0 0.0
    %226 = vmatpush.xpose.msra.mxu0 0.0
    %227 = vmatpush.xpose.msra.mxu0 %v211
    %228 = vmatpush.xpose.msra.mxu0 %v209
    %229 = vmatmul.f32.gmra.mxu0 %v205
    %v230 = vpop.f32.mrf.mxu0
    %v231 = vadd.f32 0.0, %v230
    %232 = vmatmul.f32.gmra.mxu0 %v207
    %v233 = vpop.f32.mrf.mxu0
    %v234 = vadd.f32 0.0, %v233
    %235 = vdwg.mxu0
    %238 = vrot.lane.b32.xlu0 %v164, 64
    %v239 = vpop.permute.xlu0 %238
    %240 = vrot.lane.b32.xlu0 %v167, 64
    %v241 = vpop.permute.xlu0 %240
    %v242 = vsel %vm204, %v164, 0
    %v244 = vsel %vm204, %v167, 0
    %v246 = vsel %vm204, %v239, 0
    %v248 = vsel %vm204, %v241, 0
    %250 = vmatpush.xpose.msra.mxu0 0.0
    %251 = vmatpush.xpose.msra.mxu0 0.0
    %252 = vmatpush.xpose.msra.mxu0 0.0
    %253 = vmatpush.xpose.msra.mxu0 0.0
    %254 = vmatpush.xpose.msra.mxu0 0.0
    %255 = vmatpush.xpose.msra.mxu0 0.0
    %256 = vmatpush.xpose.msra.mxu0 0.0
    %257 = vmatpush.xpose.msra.mxu0 0.0
    %258 = vmatpush.xpose.msra.mxu0 0.0
    %259 = vmatpush.xpose.msra.mxu0 0.0
    %260 = vmatpush.xpose.msra.mxu0 0.0
    %261 = vmatpush.xpose.msra.mxu0 0.0
    %262 = vmatpush.xpose.msra.mxu0 0.0
    %263 = vmatpush.xpose.msra.mxu0 0.0
    %264 = vmatpush.xpose.msra.mxu0 %v248
    %265 = vmatpush.xpose.msra.mxu0 %v246
    %266 = vmatmul.f32.gmra.mxu0 %v242
    %v267 = vpop.f32.mrf.mxu0
    %v268 = vadd.f32 0.0, %v267
    %269 = vmatmul.f32.gmra.mxu0 %v244
    %v270 = vpop.f32.mrf.mxu0
    %v271 = vadd.f32 0.0, %v270
    %272 = vdwg.mxu0
    %v273 = vmul.f32 %v231, 0.25
    %v274 = vmul.f32 %v234, 0.25
    %v275 = vmul.f32 %v268, 0.25
    %v276 = vmul.f32 %v271, 0.25
    %v277 = vsel %vm204, %v273, -inf
    %278 = vmax.xlane.f32.xlu0 %v277
    %v279 = vpop.xlane.xlu0 %278
    %v280 = vsel %vm204, %v274, -inf
    %281 = vmax.xlane.f32.xlu0 %v280
    %v282 = vpop.xlane.xlu0 %281
    %v283 = vsel %vm204, %v275, -inf
    %284 = vmax.xlane.f32.xlu0 %v283
    %v285 = vpop.xlane.xlu0 %284
    %v286 = vsel %vm204, %v276, -inf
    %287 = vmax.xlane.f32.xlu0 %v286
    %v288 = vpop.xlane.xlu0 %287
    %v289 = vsub.f32 %v273, %v279
    %v290 = vsub.f32 %v274, %v282
    %v291 = vsub.f32 %v275, %v285
    %v292 = vsub.f32 %v276, %v288
    %v293 = vmul.f32 %v289, 1.442695
    %v294 = vpow.pop %v293
    %v295 = vmul.f32 %v290, 1.442695
    %v296 = vpow.pop %v295
    %v297 = vmul.f32 %v291, 1.442695
    %v298 = vpow.pop %v297
    %v299 = vmul.f32 %v292, 1.442695
    %v300 = vpow.pop %v299
    %v301 = vsel %vm204, %v294, 0.0
    %302 = vadd.xlane.f32.xlu0 %v301
    %v303 = vpop.xlane.xlu0 %302
    %v304 = vsel %vm204, %v296, 0.0
    %305 = vadd.xlane.f32.xlu0 %v304
    %v306 = vpop.xlane.xlu0 %305
    %v307 = vsel %vm204, %v298, 0.0
    %308 = vadd.xlane.f32.xlu0 %v307
    %v309 = vpop.xlane.xlu0 %308
    %v310 = vsel %vm204, %v300, 0.0
    %311 = vadd.xlane.f32.xlu0 %v310
    %v312 = vpop.xlane.xlu0 %311
    %v313 = vrcp.pop %v303
    %v314 = vrcp.pop %v306
    %v315 = vrcp.pop %v309
    %v316 = vrcp.pop %v312
    %v317 = vmul.f32 %v294, %v313
    %v318 = vmul.f32 %v296, %v314
    %v319 = vmul.f32 %v298, %v315
    %v320 = vmul.f32 %v300, %v316
    %v322 = vsel %vm204, %v317, 0
    %v325 = vsel %vm204, %v318, 0
    %327 = vmatpush.msra.mxu0 0.0
    %328 = vmatpush.msra.mxu0 0.0
    %329 = vmatpush.msra.mxu0 0.0
    %330 = vmatpush.msra.mxu0 0.0
    %331 = vmatpush.msra.mxu0 0.0
    %332 = vmatpush.msra.mxu0 0.0
    %333 = vmatpush.msra.mxu0 0.0
    %334 = vmatpush.msra.mxu0 0.0
    %335 = vmatpush.msra.mxu0 0.0
    %336 = vmatpush.msra.mxu0 0.0
    %337 = vmatpush.msra.mxu0 0.0
    %338 = vmatpush.msra.mxu0 0.0
    %339 = vmatpush.msra.mxu0 0.0
    %340 = vmatpush.msra.mxu0 0.0
    %341 = vmatpush.msra.mxu0 %v190
    %342 = vmatpush.msra.mxu0 %v187
    %343 = vmatmul.f32.gmra.mxu0 %v322
    %v344 = vpop.f32.mrf.mxu0
    %v345 = vadd.f32 0.0, %v344
    %346 = vmatmul.f32.gmra.mxu0 %v325
    %v347 = vpop.f32.mrf.mxu0
    %v348 = vadd.f32 0.0, %v347
    %349 = vdwg.mxu0
    %v351 = vsel %vm204, %v319, 0
    %v354 = vsel %vm204, %v320, 0
    %356 = vmatpush.msra.mxu0 0.0
    %357 = vmatpush.msra.mxu0 0.0
    %358 = vmatpush.msra.mxu0 0.0
    %359 = vmatpush.msra.mxu0 0.0
    %360 = vmatpush.msra.mxu0 0.0
    %361 = vmatpush.msra.mxu0 0.0
    %362 = vmatpush.msra.mxu0 0.0
    %363 = vmatpush.msra.mxu0 0.0
    %364 = vmatpush.msra.mxu0 0.0
    %365 = vmatpush.msra.mxu0 0.0
    %366 = vmatpush.msra.mxu0 0.0
    %367 = vmatpush.msra.mxu0 0.0
    %368 = vmatpush.msra.mxu0 0.0
    %369 = vmatpush.msra.mxu0 0.0
    %370 = vmatpush.msra.mxu0 %v196
    %371 = vmatpush.msra.mxu0 %v193
    %372 = vmatmul.f32.gmra.mxu0 %v351
    %v373 = vpop.f32.mrf.mxu0
    %v374 = vadd.f32 0.0, %v373
    %375 = vmatmul.f32.gmra.mxu0 %v354
    %v376 = vpop.f32.mrf.mxu0
    %v377 = vadd.f32 0.0, %v376
    %378 = vdwg.mxu0
    %379 = vrot.lane.b32.xlu0 %v158, 112
    %v380 = vpop.permute.xlu0 %379
    %381 = vrot.lane.b32.xlu0 %v161, 112
    %v382 = vpop.permute.xlu0 %381
    %383 = vrot.lane.b32.xlu0 %v158, 48
    %v384 = vpop.permute.xlu0 %383
    %385 = vrot.lane.b32.xlu0 %v161, 48
    %v386 = vpop.permute.xlu0 %385
    %v387 = vsel %vm204, %v380, 0
    %v389 = vsel %vm204, %v382, 0
    %v391 = vsel %vm204, %v384, 0
    %v393 = vsel %vm204, %v386, 0
    %395 = vmatpush.xpose.msra.mxu0 0.0
    %396 = vmatpush.xpose.msra.mxu0 0.0
    %397 = vmatpush.xpose.msra.mxu0 0.0
    %398 = vmatpush.xpose.msra.mxu0 0.0
    %399 = vmatpush.xpose.msra.mxu0 0.0
    %400 = vmatpush.xpose.msra.mxu0 0.0
    %401 = vmatpush.xpose.msra.mxu0 0.0
    %402 = vmatpush.xpose.msra.mxu0 0.0
    %403 = vmatpush.xpose.msra.mxu0 0.0
    %404 = vmatpush.xpose.msra.mxu0 0.0
    %405 = vmatpush.xpose.msra.mxu0 0.0
    %406 = vmatpush.xpose.msra.mxu0 0.0
    %407 = vmatpush.xpose.msra.mxu0 0.0
    %408 = vmatpush.xpose.msra.mxu0 0.0
    %409 = vmatpush.xpose.msra.mxu0 %v393
    %410 = vmatpush.xpose.msra.mxu0 %v391
    %411 = vmatmul.f32.gmra.mxu0 %v387
    %v412 = vpop.f32.mrf.mxu0
    %v413 = vadd.f32 0.0, %v412
    %414 = vmatmul.f32.gmra.mxu0 %v389
    %v415 = vpop.f32.mrf.mxu0
    %v416 = vadd.f32 0.0, %v415
    %417 = vdwg.mxu0
    %418 = vrot.lane.b32.xlu0 %v164, 112
    %v419 = vpop.permute.xlu0 %418
    %420 = vrot.lane.b32.xlu0 %v167, 112
    %v421 = vpop.permute.xlu0 %420
    %422 = vrot.lane.b32.xlu0 %v164, 48
    %v423 = vpop.permute.xlu0 %422
    %424 = vrot.lane.b32.xlu0 %v167, 48
    %v425 = vpop.permute.xlu0 %424
    %v426 = vsel %vm204, %v419, 0
    %v428 = vsel %vm204, %v421, 0
    %v430 = vsel %vm204, %v423, 0
    %v432 = vsel %vm204, %v425, 0
    %434 = vmatpush.xpose.msra.mxu0 0.0
    %435 = vmatpush.xpose.msra.mxu0 0.0
    %436 = vmatpush.xpose.msra.mxu0 0.0
    %437 = vmatpush.xpose.msra.mxu0 0.0
    %438 = vmatpush.xpose.msra.mxu0 0.0
    %439 = vmatpush.xpose.msra.mxu0 0.0
    %440 = vmatpush.xpose.msra.mxu0 0.0
    %441 = vmatpush.xpose.msra.mxu0 0.0
    %442 = vmatpush.xpose.msra.mxu0 0.0
    %443 = vmatpush.xpose.msra.mxu0 0.0
    %444 = vmatpush.xpose.msra.mxu0 0.0
    %445 = vmatpush.xpose.msra.mxu0 0.0
    %446 = vmatpush.xpose.msra.mxu0 0.0
    %447 = vmatpush.xpose.msra.mxu0 0.0
    %448 = vmatpush.xpose.msra.mxu0 %v432
    %449 = vmatpush.xpose.msra.mxu0 %v430
    %450 = vmatmul.f32.gmra.mxu0 %v426
    %v451 = vpop.f32.mrf.mxu0
    %v452 = vadd.f32 0.0, %v451
    %453 = vmatmul.f32.gmra.mxu0 %v428
    %v454 = vpop.f32.mrf.mxu0
    %v455 = vadd.f32 0.0, %v454
    %456 = vdwg.mxu0
    %v457 = vmul.f32 %v413, 0.25
    %v458 = vmul.f32 %v416, 0.25
    %v459 = vmul.f32 %v452, 0.25
    %v460 = vmul.f32 %v455, 0.25
    %v461 = vsel %vm204, %v457, -inf
    %462 = vmax.xlane.f32.xlu0 %v461
    %v463 = vpop.xlane.xlu0 %462
    %v464 = vsel %vm204, %v458, -inf
    %465 = vmax.xlane.f32.xlu0 %v464
    %v466 = vpop.xlane.xlu0 %465
    %v467 = vsel %vm204, %v459, -inf
    %468 = vmax.xlane.f32.xlu0 %v467
    %v469 = vpop.xlane.xlu0 %468
    %v470 = vsel %vm204, %v460, -inf
    %471 = vmax.xlane.f32.xlu0 %v470
    %v472 = vpop.xlane.xlu0 %471
    %v473 = vsub.f32 %v457, %v463
    %v474 = vsub.f32 %v458, %v466
    %v475 = vsub.f32 %v459, %v469
    %v476 = vsub.f32 %v460, %v472
    %v477 = vmul.f32 %v473, 1.442695
    %v478 = vpow.pop %v477
    %v479 = vmul.f32 %v474, 1.442695
    %v480 = vpow.pop %v479
    %v481 = vmul.f32 %v475, 1.442695
    %v482 = vpow.pop %v481
    %v483 = vmul.f32 %v476, 1.442695
    %v484 = vpow.pop %v483
    %v485 = vsel %vm204, %v478, 0.0
    %486 = vadd.xlane.f32.xlu0 %v485
    %v487 = vpop.xlane.xlu0 %486
    %v488 = vsel %vm204, %v480, 0.0
    %489 = vadd.xlane.f32.xlu0 %v488
    %v490 = vpop.xlane.xlu0 %489
    %v491 = vsel %vm204, %v482, 0.0
    %492 = vadd.xlane.f32.xlu0 %v491
    %v493 = vpop.xlane.xlu0 %492
    %v494 = vsel %vm204, %v484, 0.0
    %495 = vadd.xlane.f32.xlu0 %v494
    %v496 = vpop.xlane.xlu0 %495
    %v497 = vrcp.pop %v487
    %v498 = vrcp.pop %v490
    %v499 = vrcp.pop %v493
    %v500 = vrcp.pop %v496
    %v501 = vmul.f32 %v478, %v497
    %v502 = vmul.f32 %v480, %v498
    %v503 = vmul.f32 %v482, %v499
    %v504 = vmul.f32 %v484, %v500
    %507 = vrot.lane.b32.xlu0 %v187, 112
    %v508 = vpop.permute.xlu0 %507
    %509 = vrot.lane.b32.xlu0 %v190, 112
    %v510 = vpop.permute.xlu0 %509
    %v514 = vsel %vm204, %v501, 0
    %v517 = vsel %vm204, %v502, 0
    %519 = vmatpush.msra.mxu0 0.0
    %520 = vmatpush.msra.mxu0 0.0
    %521 = vmatpush.msra.mxu0 0.0
    %522 = vmatpush.msra.mxu0 0.0
    %523 = vmatpush.msra.mxu0 0.0
    %524 = vmatpush.msra.mxu0 0.0
    %525 = vmatpush.msra.mxu0 0.0
    %526 = vmatpush.msra.mxu0 0.0
    %527 = vmatpush.msra.mxu0 0.0
    %528 = vmatpush.msra.mxu0 0.0
    %529 = vmatpush.msra.mxu0 0.0
    %530 = vmatpush.msra.mxu0 0.0
    %531 = vmatpush.msra.mxu0 0.0
    %532 = vmatpush.msra.mxu0 0.0
    %533 = vmatpush.msra.mxu0 %v510
    %534 = vmatpush.msra.mxu0 %v508
    %535 = vmatmul.f32.gmra.mxu0 %v514
    %v536 = vpop.f32.mrf.mxu0
    %v537 = vadd.f32 0.0, %v536
    %538 = vmatmul.f32.gmra.mxu0 %v517
    %v539 = vpop.f32.mrf.mxu0
    %v540 = vadd.f32 0.0, %v539
    %541 = vdwg.mxu0
    %544 = vrot.lane.b32.xlu0 %v193, 112
    %v545 = vpop.permute.xlu0 %544
    %546 = vrot.lane.b32.xlu0 %v196, 112
    %v547 = vpop.permute.xlu0 %546
    %v551 = vsel %vm204, %v503, 0
    %v554 = vsel %vm204, %v504, 0
    %556 = vmatpush.msra.mxu0 0.0
    %557 = vmatpush.msra.mxu0 0.0
    %558 = vmatpush.msra.mxu0 0.0
    %559 = vmatpush.msra.mxu0 0.0
    %560 = vmatpush.msra.mxu0 0.0
    %561 = vmatpush.msra.mxu0 0.0
    %562 = vmatpush.msra.mxu0 0.0
    %563 = vmatpush.msra.mxu0 0.0
    %564 = vmatpush.msra.mxu0 0.0
    %565 = vmatpush.msra.mxu0 0.0
    %566 = vmatpush.msra.mxu0 0.0
    %567 = vmatpush.msra.mxu0 0.0
    %568 = vmatpush.msra.mxu0 0.0
    %569 = vmatpush.msra.mxu0 0.0
    %570 = vmatpush.msra.mxu0 %v547
    %571 = vmatpush.msra.mxu0 %v545
    %572 = vmatmul.f32.gmra.mxu0 %v551
    %v573 = vpop.f32.mrf.mxu0
    %v574 = vadd.f32 0.0, %v573
    %575 = vmatmul.f32.gmra.mxu0 %v554
    %v576 = vpop.f32.mrf.mxu0
    %v577 = vadd.f32 0.0, %v576
    %578 = vdwg.mxu0
    %579 = vrot.lane.b32.xlu0 %v158, 96
    %v580 = vpop.permute.xlu0 %579
    %581 = vrot.lane.b32.xlu0 %v161, 96
    %v582 = vpop.permute.xlu0 %581
    %583 = vrot.lane.b32.xlu0 %v158, 32
    %v584 = vpop.permute.xlu0 %583
    %585 = vrot.lane.b32.xlu0 %v161, 32
    %v586 = vpop.permute.xlu0 %585
    %v587 = vsel %vm204, %v580, 0
    %v589 = vsel %vm204, %v582, 0
    %v591 = vsel %vm204, %v584, 0
    %v593 = vsel %vm204, %v586, 0
    %595 = vmatpush.xpose.msra.mxu0 0.0
    %596 = vmatpush.xpose.msra.mxu0 0.0
    %597 = vmatpush.xpose.msra.mxu0 0.0
    %598 = vmatpush.xpose.msra.mxu0 0.0
    %599 = vmatpush.xpose.msra.mxu0 0.0
    %600 = vmatpush.xpose.msra.mxu0 0.0
    %601 = vmatpush.xpose.msra.mxu0 0.0
    %602 = vmatpush.xpose.msra.mxu0 0.0
    %603 = vmatpush.xpose.msra.mxu0 0.0
    %604 = vmatpush.xpose.msra.mxu0 0.0
    %605 = vmatpush.xpose.msra.mxu0 0.0
    %606 = vmatpush.xpose.msra.mxu0 0.0
    %607 = vmatpush.xpose.msra.mxu0 0.0
    %608 = vmatpush.xpose.msra.mxu0 0.0
    %609 = vmatpush.xpose.msra.mxu0 %v593
    %610 = vmatpush.xpose.msra.mxu0 %v591
    %611 = vmatmul.f32.gmra.mxu0 %v587
    %v612 = vpop.f32.mrf.mxu0
    %v613 = vadd.f32 0.0, %v612
    %614 = vmatmul.f32.gmra.mxu0 %v589
    %v615 = vpop.f32.mrf.mxu0
    %v616 = vadd.f32 0.0, %v615
    %617 = vdwg.mxu0
    %618 = vrot.lane.b32.xlu0 %v164, 96
    %v619 = vpop.permute.xlu0 %618
    %620 = vrot.lane.b32.xlu0 %v167, 96
    %v621 = vpop.permute.xlu0 %620
    %622 = vrot.lane.b32.xlu0 %v164, 32
    %v623 = vpop.permute.xlu0 %622
    %624 = vrot.lane.b32.xlu0 %v167, 32
    %v625 = vpop.permute.xlu0 %624
    %v626 = vsel %vm204, %v619, 0
    %v628 = vsel %vm204, %v621, 0
    %v630 = vsel %vm204, %v623, 0
    %v632 = vsel %vm204, %v625, 0
    %634 = vmatpush.xpose.msra.mxu0 0.0
    %635 = vmatpush.xpose.msra.mxu0 0.0
    %636 = vmatpush.xpose.msra.mxu0 0.0
    %637 = vmatpush.xpose.msra.mxu0 0.0
    %638 = vmatpush.xpose.msra.mxu0 0.0
    %639 = vmatpush.xpose.msra.mxu0 0.0
    %640 = vmatpush.xpose.msra.mxu0 0.0
    %641 = vmatpush.xpose.msra.mxu0 0.0
    %642 = vmatpush.xpose.msra.mxu0 0.0
    %643 = vmatpush.xpose.msra.mxu0 0.0
    %644 = vmatpush.xpose.msra.mxu0 0.0
    %645 = vmatpush.xpose.msra.mxu0 0.0
    %646 = vmatpush.xpose.msra.mxu0 0.0
    %647 = vmatpush.xpose.msra.mxu0 0.0
    %648 = vmatpush.xpose.msra.mxu0 %v632
    %649 = vmatpush.xpose.msra.mxu0 %v630
    %650 = vmatmul.f32.gmra.mxu0 %v626
    %v651 = vpop.f32.mrf.mxu0
    %v652 = vadd.f32 0.0, %v651
    %653 = vmatmul.f32.gmra.mxu0 %v628
    %v654 = vpop.f32.mrf.mxu0
    %v655 = vadd.f32 0.0, %v654
    %656 = vdwg.mxu0
    %v657 = vmul.f32 %v613, 0.25
    %v658 = vmul.f32 %v616, 0.25
    %v659 = vmul.f32 %v652, 0.25
    %v660 = vmul.f32 %v655, 0.25
    %v661 = vsel %vm204, %v657, -inf
    %662 = vmax.xlane.f32.xlu0 %v661
    %v663 = vpop.xlane.xlu0 %662
    %v664 = vsel %vm204, %v658, -inf
    %665 = vmax.xlane.f32.xlu0 %v664
    %v666 = vpop.xlane.xlu0 %665
    %v667 = vsel %vm204, %v659, -inf
    %668 = vmax.xlane.f32.xlu0 %v667
    %v669 = vpop.xlane.xlu0 %668
    %v670 = vsel %vm204, %v660, -inf
    %671 = vmax.xlane.f32.xlu0 %v670
    %v672 = vpop.xlane.xlu0 %671
    %v673 = vsub.f32 %v657, %v663
    %v674 = vsub.f32 %v658, %v666
    %v675 = vsub.f32 %v659, %v669
    %v676 = vsub.f32 %v660, %v672
    %v677 = vmul.f32 %v673, 1.442695
    %v678 = vpow.pop %v677
    %v679 = vmul.f32 %v674, 1.442695
    %v680 = vpow.pop %v679
    %v681 = vmul.f32 %v675, 1.442695
    %v682 = vpow.pop %v681
    %v683 = vmul.f32 %v676, 1.442695
    %v684 = vpow.pop %v683
    %v685 = vsel %vm204, %v678, 0.0
    %686 = vadd.xlane.f32.xlu0 %v685
    %v687 = vpop.xlane.xlu0 %686
    %v688 = vsel %vm204, %v680, 0.0
    %689 = vadd.xlane.f32.xlu0 %v688
    %v690 = vpop.xlane.xlu0 %689
    %v691 = vsel %vm204, %v682, 0.0
    %692 = vadd.xlane.f32.xlu0 %v691
    %v693 = vpop.xlane.xlu0 %692
    %v694 = vsel %vm204, %v684, 0.0
    %695 = vadd.xlane.f32.xlu0 %v694
    %v696 = vpop.xlane.xlu0 %695
    %v697 = vrcp.pop %v687
    %v698 = vrcp.pop %v690
    %v699 = vrcp.pop %v693
    %v700 = vrcp.pop %v696
    %v701 = vmul.f32 %v678, %v697
    %v702 = vmul.f32 %v680, %v698
    %v703 = vmul.f32 %v682, %v699
    %v704 = vmul.f32 %v684, %v700
    %705 = vrot.lane.b32.xlu0 %v187, 96
    %v706 = vpop.permute.xlu0 %705
    %707 = vrot.lane.b32.xlu0 %v190, 96
    %v708 = vpop.permute.xlu0 %707
    %v712 = vsel %vm204, %v701, 0
    %v715 = vsel %vm204, %v702, 0
    %717 = vmatpush.msra.mxu0 0.0
    %718 = vmatpush.msra.mxu0 0.0
    %719 = vmatpush.msra.mxu0 0.0
    %720 = vmatpush.msra.mxu0 0.0
    %721 = vmatpush.msra.mxu0 0.0
    %722 = vmatpush.msra.mxu0 0.0
    %723 = vmatpush.msra.mxu0 0.0
    %724 = vmatpush.msra.mxu0 0.0
    %725 = vmatpush.msra.mxu0 0.0
    %726 = vmatpush.msra.mxu0 0.0
    %727 = vmatpush.msra.mxu0 0.0
    %728 = vmatpush.msra.mxu0 0.0
    %729 = vmatpush.msra.mxu0 0.0
    %730 = vmatpush.msra.mxu0 0.0
    %731 = vmatpush.msra.mxu0 %v708
    %732 = vmatpush.msra.mxu0 %v706
    %733 = vmatmul.f32.gmra.mxu0 %v712
    %v734 = vpop.f32.mrf.mxu0
    %v735 = vadd.f32 0.0, %v734
    %736 = vmatmul.f32.gmra.mxu0 %v715
    %v737 = vpop.f32.mrf.mxu0
    %v738 = vadd.f32 0.0, %v737
    %739 = vdwg.mxu0
    %740 = vrot.lane.b32.xlu0 %v193, 96
    %v741 = vpop.permute.xlu0 %740
    %742 = vrot.lane.b32.xlu0 %v196, 96
    %v743 = vpop.permute.xlu0 %742
    %v747 = vsel %vm204, %v703, 0
    %v750 = vsel %vm204, %v704, 0
    %752 = vmatpush.msra.mxu0 0.0
    %753 = vmatpush.msra.mxu0 0.0
    %754 = vmatpush.msra.mxu0 0.0
    %755 = vmatpush.msra.mxu0 0.0
    %756 = vmatpush.msra.mxu0 0.0
    %757 = vmatpush.msra.mxu0 0.0
    %758 = vmatpush.msra.mxu0 0.0
    %759 = vmatpush.msra.mxu0 0.0
    %760 = vmatpush.msra.mxu0 0.0
    %761 = vmatpush.msra.mxu0 0.0
    %762 = vmatpush.msra.mxu0 0.0
    %763 = vmatpush.msra.mxu0 0.0
    %764 = vmatpush.msra.mxu0 0.0
    %765 = vmatpush.msra.mxu0 0.0
    %766 = vmatpush.msra.mxu0 %v743
    %767 = vmatpush.msra.mxu0 %v741
    %768 = vmatmul.f32.gmra.mxu0 %v747
    %v769 = vpop.f32.mrf.mxu0
    %v770 = vadd.f32 0.0, %v769
    %771 = vmatmul.f32.gmra.mxu0 %v750
    %v772 = vpop.f32.mrf.mxu0
    %v773 = vadd.f32 0.0, %v772
    %774 = vdwg.mxu0
    %775 = vrot.lane.b32.xlu0 %v158, 80
    %v776 = vpop.permute.xlu0 %775
    %777 = vrot.lane.b32.xlu0 %v161, 80
    %v778 = vpop.permute.xlu0 %777
    %779 = vrot.lane.b32.xlu0 %v158, 16
    %v780 = vpop.permute.xlu0 %779
    %781 = vrot.lane.b32.xlu0 %v161, 16
    %v782 = vpop.permute.xlu0 %781
    %v783 = vsel %vm204, %v776, 0
    %v785 = vsel %vm204, %v778, 0
    %v787 = vsel %vm204, %v780, 0
    %v789 = vsel %vm204, %v782, 0
    %791 = vmatpush.xpose.msra.mxu0 0.0
    %792 = vmatpush.xpose.msra.mxu0 0.0
    %793 = vmatpush.xpose.msra.mxu0 0.0
    %794 = vmatpush.xpose.msra.mxu0 0.0
    %795 = vmatpush.xpose.msra.mxu0 0.0
    %796 = vmatpush.xpose.msra.mxu0 0.0
    %797 = vmatpush.xpose.msra.mxu0 0.0
    %798 = vmatpush.xpose.msra.mxu0 0.0
    %799 = vmatpush.xpose.msra.mxu0 0.0
    %800 = vmatpush.xpose.msra.mxu0 0.0
    %801 = vmatpush.xpose.msra.mxu0 0.0
    %802 = vmatpush.xpose.msra.mxu0 0.0
    %803 = vmatpush.xpose.msra.mxu0 0.0
    %804 = vmatpush.xpose.msra.mxu0 0.0
    %805 = vmatpush.xpose.msra.mxu0 %v789
    %806 = vmatpush.xpose.msra.mxu0 %v787
    %807 = vmatmul.f32.gmra.mxu0 %v783
    %v808 = vpop.f32.mrf.mxu0
    %v809 = vadd.f32 0.0, %v808
    %810 = vmatmul.f32.gmra.mxu0 %v785
    %v811 = vpop.f32.mrf.mxu0
    %v812 = vadd.f32 0.0, %v811
    %813 = vdwg.mxu0
    %814 = vrot.lane.b32.xlu0 %v164, 80
    %v815 = vpop.permute.xlu0 %814
    %816 = vrot.lane.b32.xlu0 %v167, 80
    %v817 = vpop.permute.xlu0 %816
    %818 = vrot.lane.b32.xlu0 %v164, 16
    %v819 = vpop.permute.xlu0 %818
    %820 = vrot.lane.b32.xlu0 %v167, 16
    %v821 = vpop.permute.xlu0 %820
    %v822 = vsel %vm204, %v815, 0
    %v824 = vsel %vm204, %v817, 0
    %v826 = vsel %vm204, %v819, 0
    %v828 = vsel %vm204, %v821, 0
    %830 = vmatpush.xpose.msra.mxu0 0.0
    %831 = vmatpush.xpose.msra.mxu0 0.0
    %832 = vmatpush.xpose.msra.mxu0 0.0
    %833 = vmatpush.xpose.msra.mxu0 0.0
    %834 = vmatpush.xpose.msra.mxu0 0.0
    %835 = vmatpush.xpose.msra.mxu0 0.0
    %836 = vmatpush.xpose.msra.mxu0 0.0
    %837 = vmatpush.xpose.msra.mxu0 0.0
    %838 = vmatpush.xpose.msra.mxu0 0.0
    %839 = vmatpush.xpose.msra.mxu0 0.0
    %840 = vmatpush.xpose.msra.mxu0 0.0
    %841 = vmatpush.xpose.msra.mxu0 0.0
    %842 = vmatpush.xpose.msra.mxu0 0.0
    %843 = vmatpush.xpose.msra.mxu0 0.0
    %844 = vmatpush.xpose.msra.mxu0 %v828
    %845 = vmatpush.xpose.msra.mxu0 %v826
    %846 = vmatmul.f32.gmra.mxu0 %v822
    %v847 = vpop.f32.mrf.mxu0
    %v848 = vadd.f32 0.0, %v847
    %849 = vmatmul.f32.gmra.mxu0 %v824
    %v850 = vpop.f32.mrf.mxu0
    %v851 = vadd.f32 0.0, %v850
    %852 = vdwg.mxu0
    %v853 = vmul.f32 %v809, 0.25
    %v854 = vmul.f32 %v812, 0.25
    %v855 = vmul.f32 %v848, 0.25
    %v856 = vmul.f32 %v851, 0.25
    %v857 = vsel %vm204, %v853, -inf
    %858 = vmax.xlane.f32.xlu0 %v857
    %v859 = vpop.xlane.xlu0 %858
    %v860 = vsel %vm204, %v854, -inf
    %861 = vmax.xlane.f32.xlu0 %v860
    %v862 = vpop.xlane.xlu0 %861
    %v863 = vsel %vm204, %v855, -inf
    %864 = vmax.xlane.f32.xlu0 %v863
    %v865 = vpop.xlane.xlu0 %864
    %v866 = vsel %vm204, %v856, -inf
    %867 = vmax.xlane.f32.xlu0 %v866
    %v868 = vpop.xlane.xlu0 %867
    %v869 = vsub.f32 %v853, %v859
    %v870 = vsub.f32 %v854, %v862
    %v871 = vsub.f32 %v855, %v865
    %v872 = vsub.f32 %v856, %v868
    %v873 = vmul.f32 %v869, 1.442695
    %v874 = vpow.pop %v873
    %v875 = vmul.f32 %v870, 1.442695
    %v876 = vpow.pop %v875
    %v877 = vmul.f32 %v871, 1.442695
    %v878 = vpow.pop %v877
    %v879 = vmul.f32 %v872, 1.442695
    %v880 = vpow.pop %v879
    %v881 = vsel %vm204, %v874, 0.0
    %882 = vadd.xlane.f32.xlu0 %v881
    %v883 = vpop.xlane.xlu0 %882
    %v884 = vsel %vm204, %v876, 0.0
    %885 = vadd.xlane.f32.xlu0 %v884
    %v886 = vpop.xlane.xlu0 %885
    %v887 = vsel %vm204, %v878, 0.0
    %888 = vadd.xlane.f32.xlu0 %v887
    %v889 = vpop.xlane.xlu0 %888
    %v890 = vsel %vm204, %v880, 0.0
    %891 = vadd.xlane.f32.xlu0 %v890
    %v892 = vpop.xlane.xlu0 %891
    %v893 = vrcp.pop %v883
    %v894 = vrcp.pop %v886
    %v895 = vrcp.pop %v889
    %v896 = vrcp.pop %v892
    %v897 = vmul.f32 %v874, %v893
    %v898 = vmul.f32 %v876, %v894
    %v899 = vmul.f32 %v878, %v895
    %v900 = vmul.f32 %v880, %v896
    %901 = vrot.lane.b32.xlu0 %v187, 80
    %v902 = vpop.permute.xlu0 %901
    %903 = vrot.lane.b32.xlu0 %v190, 80
    %v904 = vpop.permute.xlu0 %903
    %v908 = vsel %vm204, %v897, 0
    %v911 = vsel %vm204, %v898, 0
    %913 = vmatpush.msra.mxu0 0.0
    %914 = vmatpush.msra.mxu0 0.0
    %915 = vmatpush.msra.mxu0 0.0
    %916 = vmatpush.msra.mxu0 0.0
    %917 = vmatpush.msra.mxu0 0.0
    %918 = vmatpush.msra.mxu0 0.0
    %919 = vmatpush.msra.mxu0 0.0
    %920 = vmatpush.msra.mxu0 0.0
    %921 = vmatpush.msra.mxu0 0.0
    %922 = vmatpush.msra.mxu0 0.0
    %923 = vmatpush.msra.mxu0 0.0
    %924 = vmatpush.msra.mxu0 0.0
    %925 = vmatpush.msra.mxu0 0.0
    %926 = vmatpush.msra.mxu0 0.0
    %927 = vmatpush.msra.mxu0 %v904
    %928 = vmatpush.msra.mxu0 %v902
    %929 = vmatmul.f32.gmra.mxu0 %v908
    %v930 = vpop.f32.mrf.mxu0
    %v931 = vadd.f32 0.0, %v930
    %932 = vmatmul.f32.gmra.mxu0 %v911
    %v933 = vpop.f32.mrf.mxu0
    %v934 = vadd.f32 0.0, %v933
    %935 = vdwg.mxu0
    %936 = vrot.lane.b32.xlu0 %v193, 80
    %v937 = vpop.permute.xlu0 %936
    %938 = vrot.lane.b32.xlu0 %v196, 80
    %v939 = vpop.permute.xlu0 %938
    %v943 = vsel %vm204, %v899, 0
    %v946 = vsel %vm204, %v900, 0
    %948 = vmatpush.msra.mxu0 0.0
    %949 = vmatpush.msra.mxu0 0.0
    %950 = vmatpush.msra.mxu0 0.0
    %951 = vmatpush.msra.mxu0 0.0
    %952 = vmatpush.msra.mxu0 0.0
    %953 = vmatpush.msra.mxu0 0.0
    %954 = vmatpush.msra.mxu0 0.0
    %955 = vmatpush.msra.mxu0 0.0
    %956 = vmatpush.msra.mxu0 0.0
    %957 = vmatpush.msra.mxu0 0.0
    %958 = vmatpush.msra.mxu0 0.0
    %959 = vmatpush.msra.mxu0 0.0
    %960 = vmatpush.msra.mxu0 0.0
    %961 = vmatpush.msra.mxu0 0.0
    %962 = vmatpush.msra.mxu0 %v939
    %963 = vmatpush.msra.mxu0 %v937
    %964 = vmatmul.f32.gmra.mxu0 %v943
    %v965 = vpop.f32.mrf.mxu0
    %v966 = vadd.f32 0.0, %v965
    %967 = vmatmul.f32.gmra.mxu0 %v946
    %v968 = vpop.f32.mrf.mxu0
    %v969 = vadd.f32 0.0, %v968
    %970 = vdwg.mxu0
    %975 = vrot.lane.b32.xlu0 %v537, 16
    %v976 = vpop.permute.xlu0 %975
    %977 = vrot.lane.b32.xlu0 %v540, 16
    %v978 = vpop.permute.xlu0 %977
    %979 = vrot.lane.b32.xlu0 %v574, 16
    %v980 = vpop.permute.xlu0 %979
    %981 = vrot.lane.b32.xlu0 %v577, 16
    %v982 = vpop.permute.xlu0 %981
    %991 = vrot.lane.b32.xlu0 %v735, 32
    %v992 = vpop.permute.xlu0 %991
    %993 = vrot.lane.b32.xlu0 %v738, 32
    %v994 = vpop.permute.xlu0 %993
    %995 = vrot.lane.b32.xlu0 %v770, 32
    %v996 = vpop.permute.xlu0 %995
    %997 = vrot.lane.b32.xlu0 %v773, 32
    %v998 = vpop.permute.xlu0 %997
    %1007 = vrot.lane.b32.xlu0 %v931, 48
    %v1008 = vpop.permute.xlu0 %1007
    %1009 = vrot.lane.b32.xlu0 %v934, 48
    %v1010 = vpop.permute.xlu0 %1009
    %1011 = vrot.lane.b32.xlu0 %v966, 48
    %v1012 = vpop.permute.xlu0 %1011
    %1013 = vrot.lane.b32.xlu0 %v969, 48
    %v1014 = vpop.permute.xlu0 %1013
    %v1019 = vsel %vm204, %v345, %v976
    %v1020 = vsel %vm204, %v348, %v978
    %v1021 = vsel %vm204, %v374, %v980
    %v1022 = vsel %vm204, %v377, %v982
    %vm1023 = vcmask 261120
    %v1024 = vsel %vm1023, %v1019, %v992
    %v1025 = vsel %vm1023, %v1020, %v994
    %v1026 = vsel %vm1023, %v1021, %v996
    %v1027 = vsel %vm1023, %v1022, %v998
    %vm1028 = vcmask 392192
    %v1029 = vsel %vm1028, %v1024, %v1008
    %v1030 = vsel %vm1028, %v1025, %v1010
    %v1031 = vsel %vm1028, %v1026, %v1012
    %v1032 = vsel %vm1028, %v1027, %v1014
    %v1033 = vld [vmem:[#allocation2] sm:$0xff]
    %v1034 = vld [vmem:[#allocation2 + $0x8] sm:$0xff]
    %v1035 = vld [vmem:[#allocation2 + $0x10] sm:$0xff]
    %v1036 = vld [vmem:[#allocation2 + $0x18] sm:$0xff]
    %v1037 = vld [vmem:[#allocation2 + $0x20] sm:$0xff]
    %v1038 = vld [vmem:[#allocation2 + $0x28] sm:$0xff]
    %v1039 = vld [vmem:[#allocation2 + $0x30] sm:$0xff]
    %v1040 = vld [vmem:[#allocation2 + $0x38] sm:$0xff]
    %v1041 = vld [vmem:[#allocation4] sm:$0x1]
    %v1043 = vperm.slane %v1041, 0
    %v1046 = vsel %vm127, %v1029, 0
    %v1049 = vsel %vm127, %v1030, 0
    %v1052 = vsel %vm127, %v1031, 0
    %v1055 = vsel %vm127, %v1032, 0
    %1057 = vmatpush.msra.mxu0 0.0
    %1058 = vmatpush.msra.mxu0 0.0
    %1059 = vmatpush.msra.mxu0 0.0
    %1060 = vmatpush.msra.mxu0 0.0
    %1061 = vmatpush.msra.mxu0 0.0
    %1062 = vmatpush.msra.mxu0 0.0
    %1063 = vmatpush.msra.mxu0 0.0
    %1064 = vmatpush.msra.mxu0 0.0
    %1065 = vmatpush.msra.mxu0 %v1040
    %1066 = vmatpush.msra.mxu0 %v1039
    %1067 = vmatpush.msra.mxu0 %v1038
    %1068 = vmatpush.msra.mxu0 %v1037
    %1069 = vmatpush.msra.mxu0 %v1036
    %1070 = vmatpush.msra.mxu0 %v1035
    %1071 = vmatpush.msra.mxu0 %v1034
    %1072 = vmatpush.msra.mxu0 %v1033
    %1073 = vmatmul.f32.gmra.mxu0 %v1046
    %v1074 = vpop.f32.mrf.mxu0
    %v1075 = vadd.f32 %v1043, %v1074
    %1076 = vmatmul.f32.gmra.mxu0 %v1049
    %v1077 = vpop.f32.mrf.mxu0
    %v1078 = vadd.f32 %v1043, %v1077
    %1079 = vmatmul.f32.gmra.mxu0 %v1052
    %v1080 = vpop.f32.mrf.mxu0
    %v1081 = vadd.f32 %v1043, %v1080
    %1082 = vmatmul.f32.gmra.mxu0 %v1055
    %v1083 = vpop.f32.mrf.mxu0
    %v1084 = vadd.f32 %v1043, %v1083
    %1085 = vdwg.mxu0
    %v1086 = vadd.f32 %v101, %v1075
    %v1087 = vadd.f32 %v102, %v1078
    %v1088 = vadd.f32 %v103, %v1081
    %v1089 = vadd.f32 %v104, %v1084
    %v1090 = vld [vmem:[%s5] sm:$0x1]
    %v1091 = vld [vmem:[%s6] sm:$0x1]
    %v1092 = vsel %vm127, %v1086, 0.0
    %1093 = vadd.xlane.f32.xlu0 %v1092
    %v1094 = vpop.xlane.xlu0 %1093
    %v1095 = vsel %vm127, %v1087, 0.0
    %1096 = vadd.xlane.f32.xlu0 %v1095
    %v1097 = vpop.xlane.xlu0 %1096
    %v1098 = vsel %vm127, %v1088, 0.0
    %1099 = vadd.xlane.f32.xlu0 %v1098
    %v1100 = vpop.xlane.xlu0 %1099
    %v1101 = vsel %vm127, %v1089, 0.0
    %1102 = vadd.xlane.f32.xlu0 %v1101
    %v1103 = vpop.xlane.xlu0 %1102
    %v1104 = vrcp.pop 64.0
    %v1105 = vmul.f32 64.0, %v1104
    %v1106 = vsub.f32 1.0, %v1105
    %v1107 = vmul.f32 %v1104, %v1106
    %v1108 = vadd.f32 %v1104, %v1107
    %vm1109 = vweird.f32 %v1104
    %v1110 = vsel %vm1109, %v1104, %v1108
    %v1111 = vmul.f32 %v1094, %v1110
    %v1112 = vmul.f32 %v1097, %v1110
    %v1113 = vmul.f32 %v1100, %v1110
    %v1114 = vmul.f32 %v1103, %v1110
    %v1115 = vsub.f32 %v1086, %v1111
    %v1116 = vsub.f32 %v1087, %v1112
    %v1117 = vsub.f32 %v1088, %v1113
    %v1118 = vsub.f32 %v1089, %v1114
    %v1119 = vmul.f32 %v1115, %v1115
    %v1120 = vmul.f32 %v1116, %v1116
    %v1121 = vmul.f32 %v1117, %v1117
    %v1122 = vmul.f32 %v1118, %v1118
    %v1123 = vsel %vm127, %v1119, 0.0
    %1124 = vadd.xlane.f32.xlu0 %v1123
    %v1125 = vpop.xlane.xlu0 %1124
    %v1126 = vsel %vm127, %v1120, 0.0
    %1127 = vadd.xlane.f32.xlu0 %v1126
    %v1128 = vpop.xlane.xlu0 %1127
    %v1129 = vsel %vm127, %v1121, 0.0
    %1130 = vadd.xlane.f32.xlu0 %v1129
    %v1131 = vpop.xlane.xlu0 %1130
    %v1132 = vsel %vm127, %v1122, 0.0
    %1133 = vadd.xlane.f32.xlu0 %v1132
    %v1134 = vpop.xlane.xlu0 %1133
    %v1135 = vmul.f32 %v1125, %v1110
    %v1136 = vmul.f32 %v1128, %v1110
    %v1137 = vmul.f32 %v1131, %v1110
    %v1138 = vmul.f32 %v1134, %v1110
    %v1139 = vadd.f32 %v1135, 1e-05
    %v1140 = vadd.f32 %v1136, 1e-05
    %v1141 = vadd.f32 %v1137, 1e-05
    %v1142 = vadd.f32 %v1138, 1e-05
    %v1143 = vrsqrt.pop %v1139
    %v1144 = vmul.f32 %v1143, %v1139
    %v1145 = vmul.f32 %v1144, %v1143
    %v1146 = vmul.f32 0.5, %v1145
    %v1147 = vsub.f32 1.5, %v1146
    %v1148 = vmul.f32 %v1143, %v1147
    %vm1149 = vweird.f32 %v1139
    %vm1150 = vweird.f32 %v1143
    %vm1151 = vmor %vm1149, %vm1150
    %v1152 = vsel %vm1151, %v1143, %v1148
    %v1153 = vrsqrt.pop %v1140
    %v1154 = vmul.f32 %v1153, %v1140
    %v1155 = vmul.f32 %v1154, %v1153
    %v1156 = vmul.f32 0.5, %v1155
    %v1157 = vsub.f32 1.5, %v1156
    %v1158 = vmul.f32 %v1153, %v1157
    %vm1159 = vweird.f32 %v1140
    %vm1160 = vweird.f32 %v1153
    %vm1161 = vmor %vm1159, %vm1160
    %v1162 = vsel %vm1161, %v1153, %v1158
    %v1163 = vrsqrt.pop %v1141
    %v1164 = vmul.f32 %v1163, %v1141
    %v1165 = vmul.f32 %v1164, %v1163
    %v1166 = vmul.f32 0.5, %v1165
    %v1167 = vsub.f32 1.5, %v1166
    %v1168 = vmul.f32 %v1163, %v1167
    %vm1169 = vweird.f32 %v1141
    %vm1170 = vweird.f32 %v1163
    %vm1171 = vmor %vm1169, %vm1170
    %v1172 = vsel %vm1171, %v1163, %v1168
    %v1173 = vrsqrt.pop %v1142
    %v1174 = vmul.f32 %v1173, %v1142
    %v1175 = vmul.f32 %v1174, %v1173
    %v1176 = vmul.f32 0.5, %v1175
    %v1177 = vsub.f32 1.5, %v1176
    %v1178 = vmul.f32 %v1173, %v1177
    %vm1179 = vweird.f32 %v1142
    %vm1180 = vweird.f32 %v1173
    %vm1181 = vmor %vm1179, %vm1180
    %v1182 = vsel %vm1181, %v1173, %v1178
    %v1183 = vmul.f32 %v1115, %v1152
    %v1184 = vmul.f32 %v1116, %v1162
    %v1185 = vmul.f32 %v1117, %v1172
    %v1186 = vmul.f32 %v1118, %v1182
    %v1188 = vperm.slane %v1090, 0
    %v1190 = vmul.f32 %v1183, %v1188
    %v1191 = vmul.f32 %v1184, %v1188
    %v1192 = vmul.f32 %v1185, %v1188
    %v1193 = vmul.f32 %v1186, %v1188
    %v1195 = vperm.slane %v1091, 0
    %v1197 = vadd.f32 %v1190, %v1195
    %v1198 = vadd.f32 %v1191, %v1195
    %v1199 = vadd.f32 %v1192, %v1195
    %v1200 = vadd.f32 %v1193, %v1195
    %v1201 = vld [vmem:[%s7] sm:$0xff]
    %v1202 = vld [vmem:[%s7 + $0x8] sm:$0xff]
    %v1203 = vld [vmem:[%s7 + $0x10] sm:$0xff]
    %v1204 = vld [vmem:[%s7 + $0x18] sm:$0xff]
    %v1205 = vld [vmem:[%s7 + $0x20] sm:$0xff]
    %v1206 = vld [vmem:[%s7 + $0x28] sm:$0xff]
    %v1207 = vld [vmem:[%s7 + $0x30] sm:$0xff]
    %v1208 = vld [vmem:[%s7 + $0x38] sm:$0xff]
    %v1209 = vld [vmem:[%s7 + $0x40] sm:$0xff]
    %v1210 = vld [vmem:[%s7 + $0x48] sm:$0xff]
    %v1211 = vld [vmem:[%s7 + $0x50] sm:$0xff]
    %v1212 = vld [vmem:[%s7 + $0x58] sm:$0xff]
    %v1213 = vld [vmem:[%s7 + $0x60] sm:$0xff]
    %v1214 = vld [vmem:[%s7 + $0x68] sm:$0xff]
    %v1215 = vld [vmem:[%s7 + $0x70] sm:$0xff]
    %v1216 = vld [vmem:[%s7 + $0x78] sm:$0xff]
    %v1217 = vld [vmem:[%s8] sm:$0x3]
    %v1219 = vperm.slane %v1217, 0
    %v1220 = vperm.slane %v1217, 1
    %v1224 = vsel %vm127, %v1197, 0
    %v1227 = vsel %vm127, %v1198, 0
    %v1230 = vsel %vm127, %v1199, 0
    %v1233 = vsel %vm127, %v1200, 0
    %1235 = vmatpush.msra.mxu0 0.0
    %1236 = vmatpush.msra.mxu0 0.0
    %1237 = vmatpush.msra.mxu0 0.0
    %1238 = vmatpush.msra.mxu0 0.0
    %1239 = vmatpush.msra.mxu0 0.0
    %1240 = vmatpush.msra.mxu0 0.0
    %1241 = vmatpush.msra.mxu0 0.0
    %1242 = vmatpush.msra.mxu0 0.0
    %1243 = vmatpush.msra.mxu0 %v1215
    %1244 = vmatpush.msra.mxu0 %v1213
    %1245 = vmatpush.msra.mxu0 %v1211
    %1246 = vmatpush.msra.mxu0 %v1209
    %1247 = vmatpush.msra.mxu0 %v1207
    %1248 = vmatpush.msra.mxu0 %v1205
    %1249 = vmatpush.msra.mxu0 %v1203
    %1250 = vmatpush.msra.mxu0 %v1201
    %1251 = vmatmul.f32.gmra.mxu0 %v1224
    %v1252 = vpop.f32.mrf.mxu0
    %v1253 = vadd.f32 %v1219, %v1252
    %1254 = vmatmul.f32.gmra.mxu0 %v1227
    %v1255 = vpop.f32.mrf.mxu0
    %v1256 = vadd.f32 %v1219, %v1255
    %1257 = vmatmul.f32.gmra.mxu0 %v1230
    %v1258 = vpop.f32.mrf.mxu0
    %v1259 = vadd.f32 %v1219, %v1258
    %1260 = vmatmul.f32.gmra.mxu0 %v1233
    %v1261 = vpop.f32.mrf.mxu0
    %v1262 = vadd.f32 %v1219, %v1261
    %1263 = vdwg.mxu0
    %1264 = vmatpush.msra.mxu0 0.0
    %1265 = vmatpush.msra.mxu0 0.0
    %1266 = vmatpush.msra.mxu0 0.0
    %1267 = vmatpush.msra.mxu0 0.0
    %1268 = vmatpush.msra.mxu0 0.0
    %1269 = vmatpush.msra.mxu0 0.0
    %1270 = vmatpush.msra.mxu0 0.0
    %1271 = vmatpush.msra.mxu0 0.0
    %1272 = vmatpush.msra.mxu0 %v1216
    %1273 = vmatpush.msra.mxu0 %v1214
    %1274 = vmatpush.msra.mxu0 %v1212
    %1275 = vmatpush.msra.mxu0 %v1210
    %1276 = vmatpush.msra.mxu0 %v1208
    %1277 = vmatpush.msra.mxu0 %v1206
    %1278 = vmatpush.msra.mxu0 %v1204
    %1279 = vmatpush.msra.mxu0 %v1202
    %1280 = vmatmul.f32.gmra.mxu0 %v1224
    %v1281 = vpop.f32.mrf.mxu0
    %v1282 = vadd.f32 %v1220, %v1281
    %1283 = vmatmul.f32.gmra.mxu0 %v1227
    %v1284 = vpop.f32.mrf.mxu0
    %v1285 = vadd.f32 %v1220, %v1284
    %1286 = vmatmul.f32.gmra.mxu0 %v1230
    %v1287 = vpop.f32.mrf.mxu0
    %v1288 = vadd.f32 %v1220, %v1287
    %1289 = vmatmul.f32.gmra.mxu0 %v1233
    %v1290 = vpop.f32.mrf.mxu0
    %v1291 = vadd.f32 %v1220, %v1290
    %1292 = vdwg.mxu0
    %v1293 = vmax.f32 %v1253, 0.0
    %v1294 = vmax.f32 %v1282, 0.0
    %v1295 = vmax.f32 %v1256, 0.0
    %v1296 = vmax.f32 %v1285, 0.0
    %v1297 = vmax.f32 %v1259, 0.0
    %v1298 = vmax.f32 %v1288, 0.0
    %v1299 = vmax.f32 %v1262, 0.0
    %v1300 = vmax.f32 %v1291, 0.0
    %v1301 = vld [vmem:[%s9] sm:$0xff]
    %v1302 = vld [vmem:[%s9 + $0x8] sm:$0xff]
    %v1303 = vld [vmem:[%s9 + $0x10] sm:$0xff]
    %v1304 = vld [vmem:[%s9 + $0x18] sm:$0xff]
    %v1305 = vld [vmem:[%s9 + $0x20] sm:$0xff]
    %v1306 = vld [vmem:[%s9 + $0x28] sm:$0xff]
    %v1307 = vld [vmem:[%s9 + $0x30] sm:$0xff]
    %v1308 = vld [vmem:[%s9 + $0x38] sm:$0xff]
    %v1309 = vld [vmem:[%s9 + $0x40] sm:$0xff]
    %v1310 = vld [vmem:[%s9 + $0x48] sm:$0xff]
    %v1311 = vld [vmem:[%s9 + $0x50] sm:$0xff]
    %v1312 = vld [vmem:[%s9 + $0x58] sm:$0xff]
    %v1313 = vld [vmem:[%s9 + $0x60] sm:$0xff]
    %v1314 = vld [vmem:[%s9 + $0x68] sm:$0xff]
    %v1315 = vld [vmem:[%s9 + $0x70] sm:$0xff]
    %v1316 = vld [vmem:[%s9 + $0x78] sm:$0xff]
    %v1317 = vld [vmem:[%s9 + $0x80] sm:$0xff]
    %v1318 = vld [vmem:[%s9 + $0x88] sm:$0xff]
    %v1319 = vld [vmem:[%s9 + $0x90] sm:$0xff]
    %v1320 = vld [vmem:[%s9 + $0x98] sm:$0xff]
    %v1321 = vld [vmem:[%s9 + $0xa0] sm:$0xff]
    %v1322 = vld [vmem:[%s9 + $0xa8] sm:$0xff]
    %v1323 = vld [vmem:[%s9 + $0xb0] sm:$0xff]
    %v1324 = vld [vmem:[%s9 + $0xb8] sm:$0xff]
    %v1325 = vld [vmem:[%s9 + $0xc0] sm:$0xff]
    %v1326 = vld [vmem:[%s9 + $0xc8] sm:$0xff]
    %v1327 = vld [vmem:[%s9 + $0xd0] sm:$0xff]
    %v1328 = vld [vmem:[%s9 + $0xd8] sm:$0xff]
    %v1329 = vld [vmem:[%s9 + $0xe0] sm:$0xff]
    %v1330 = vld [vmem:[%s9 + $0xe8] sm:$0xff]
    %v1331 = vld [vmem:[%s9 + $0xf0] sm:$0xff]
    %v1332 = vld [vmem:[%s9 + $0xf8] sm:$0xff]
    %v1333 = vld [vmem:[%s10] sm:$0x1]
    %v1335 = vperm.slane %v1333, 0
    %1337 = vmatpush.msra.mxu0 %v1316
    %1338 = vmatpush.msra.mxu0 %v1315
    %1339 = vmatpush.msra.mxu0 %v1314
    %1340 = vmatpush.msra.mxu0 %v1313
    %1341 = vmatpush.msra.mxu0 %v1312
    %1342 = vmatpush.msra.mxu0 %v1311
    %1343 = vmatpush.msra.mxu0 %v1310
    %1344 = vmatpush.msra.mxu0 %v1309
    %1345 = vmatpush.msra.mxu0 %v1308
    %1346 = vmatpush.msra.mxu0 %v1307
    %1347 = vmatpush.msra.mxu0 %v1306
    %1348 = vmatpush.msra.mxu0 %v1305
    %1349 = vmatpush.msra.mxu0 %v1304
    %1350 = vmatpush.msra.mxu0 %v1303
    %1351 = vmatpush.msra.mxu0 %v1302
    %1352 = vmatpush.msra.mxu0 %v1301
    %1353 = vmatmul.f32.gmra.mxu0 %v1293
    %v1354 = vpop.f32.mrf.mxu0
    %v1355 = vadd.f32 %v1335, %v1354
    %1356 = vmatmul.f32.gmra.mxu0 %v1295
    %v1357 = vpop.f32.mrf.mxu0
    %v1358 = vadd.f32 %v1335, %v1357
    %1359 = vmatmul.f32.gmra.mxu0 %v1297
    %v1360 = vpop.f32.mrf.mxu0
    %v1361 = vadd.f32 %v1335, %v1360
    %1362 = vmatmul.f32.gmra.mxu0 %v1299
    %v1363 = vpop.f32.mrf.mxu0
    %v1364 = vadd.f32 %v1335, %v1363
    %1365 = vdwg.mxu0
    %1366 = vmatpush.msra.mxu0 %v1332
    %1367 = vmatpush.msra.mxu0 %v1331
    %1368 = vmatpush.msra.mxu0 %v1330
    %1369 = vmatpush.msra.mxu0 %v1329
    %1370 = vmatpush.msra.mxu0 %v1328
    %1371 = vmatpush.msra.mxu0 %v1327
    %1372 = vmatpush.msra.mxu0 %v1326
    %1373 = vmatpush.msra.mxu0 %v1325
    %1374 = vmatpush.msra.mxu0 %v1324
    %1375 = vmatpush.msra.mxu0 %v1323
    %1376 = vmatpush.msra.mxu0 %v1322
    %1377 = vmatpush.msra.mxu0 %v1321
    %1378 = vmatpush.msra.mxu0 %v1320
    %1379 = vmatpush.msra.mxu0 %v1319
    %1380 = vmatpush.msra.mxu0 %v1318
    %1381 = vmatpush.msra.mxu0 %v1317
    %1382 = vmatmul.f32.gmra.mxu0 %v1294
    %v1383 = vpop.f32.mrf.mxu0
    %v1384 = vadd.f32 %v1355, %v1383
    %1385 = vmatmul.f32.gmra.mxu0 %v1296
    %v1386 = vpop.f32.mrf.mxu0
    %v1387 = vadd.f32 %v1358, %v1386
    %1388 = vmatmul.f32.gmra.mxu0 %v1298
    %v1389 = vpop.f32.mrf.mxu0
    %v1390 = vadd.f32 %v1361, %v1389
    %1391 = vmatmul.f32.gmra.mxu0 %v1300
    %v1392 = vpop.f32.mrf.mxu0
    %v1393 = vadd.f32 %v1364, %v1392
    %1394 = vdwg.mxu0
    %v1395 = vadd.f32 %v1197, %v1384
    %v1396 = vadd.f32 %v1198, %v1387
    %v1397 = vadd.f32 %v1199, %v1390
    %v1398 = vadd.f32 %v1200, %v1393
    %v1399 = vld [vmem:[#allocation6] sm:$0x1]
    %v1400 = vld [vmem:[#allocation7] sm:$0x1]
    %v1401 = vsel %vm127, %v1395, 0.0
    %1402 = vadd.xlane.f32.xlu0 %v1401
    %v1403 = vpop.xlane.xlu0 %1402
    %v1404 = vsel %vm127, %v1396, 0.0
    %1405 = vadd.xlane.f32.xlu0 %v1404
    %v1406 = vpop.xlane.xlu0 %1405
    %v1407 = vsel %vm127, %v1397, 0.0
    %1408 = vadd.xlane.f32.xlu0 %v1407
    %v1409 = vpop.xlane.xlu0 %1408
    %v1410 = vsel %vm127, %v1398, 0.0
    %1411 = vadd.xlane.f32.xlu0 %v1410
    %v1412 = vpop.xlane.xlu0 %1411
    %v1413 = vmul.f32 %v1403, %v1110
    %v1414 = vmul.f32 %v1406, %v1110
    %v1415 = vmul.f32 %v1409, %v1110
    %v1416 = vmul.f32 %v1412, %v1110
    %v1417 = vsub.f32 %v1395, %v1413
    %v1418 = vsub.f32 %v1396, %v1414
    %v1419 = vsub.f32 %v1397, %v1415
    %v1420 = vsub.f32 %v1398, %v1416
    %v1421 = vmul.f32 %v1417, %v1417
    %v1422 = vmul.f32 %v1418, %v1418
    %v1423 = vmul.f32 %v1419, %v1419
    %v1424 = vmul.f32 %v1420, %v1420
    %v1425 = vsel %vm127, %v1421, 0.0
    %1426 = vadd.xlane.f32.xlu0 %v1425
    %v1427 = vpop.xlane.xlu0 %1426
    %v1428 = vsel %vm127, %v1422, 0.0
    %1429 = vadd.xlane.f32.xlu0 %v1428
    %v1430 = vpop.xlane.xlu0 %1429
    %v1431 = vsel %vm127, %v1423, 0.0
    %1432 = vadd.xlane.f32.xlu0 %v1431
    %v1433 = vpop.xlane.xlu0 %1432
    %v1434 = vsel %vm127, %v1424, 0.0
    %1435 = vadd.xlane.f32.xlu0 %v1434
    %v1436 = vpop.xlane.xlu0 %1435
    %v1437 = vmul.f32 %v1427, %v1110
    %v1438 = vmul.f32 %v1430, %v1110
    %v1439 = vmul.f32 %v1433, %v1110
    %v1440 = vmul.f32 %v1436, %v1110
    %v1441 = vadd.f32 %v1437, 1e-05
    %v1442 = vadd.f32 %v1438, 1e-05
    %v1443 = vadd.f32 %v1439, 1e-05
    %v1444 = vadd.f32 %v1440, 1e-05
    %v1445 = vrsqrt.pop %v1441
    %v1446 = vmul.f32 %v1445, %v1441
    %v1447 = vmul.f32 %v1446, %v1445
    %v1448 = vmul.f32 0.5, %v1447
    %v1449 = vsub.f32 1.5, %v1448
    %v1450 = vmul.f32 %v1445, %v1449
    %vm1451 = vweird.f32 %v1441
    %vm1452 = vweird.f32 %v1445
    %vm1453 = vmor %vm1451, %vm1452
    %v1454 = vsel %vm1453, %v1445, %v1450
    %v1455 = vrsqrt.pop %v1442
    %v1456 = vmul.f32 %v1455, %v1442
    %v1457 = vmul.f32 %v1456, %v1455
    %v1458 = vmul.f32 0.5, %v1457
    %v1459 = vsub.f32 1.5, %v1458
    %v1460 = vmul.f32 %v1455, %v1459
    %vm1461 = vweird.f32 %v1442
    %vm1462 = vweird.f32 %v1455
    %vm1463 = vmor %vm1461, %vm1462
    %v1464 = vsel %vm1463, %v1455, %v1460
    %v1465 = vrsqrt.pop %v1443
    %v1466 = vmul.f32 %v1465, %v1443
    %v1467 = vmul.f32 %v1466, %v1465
    %v1468 = vmul.f32 0.5, %v1467
    %v1469 = vsub.f32 1.5, %v1468
    %v1470 = vmul.f32 %v1465, %v1469
    %vm1471 = vweird.f32 %v1443
    %vm1472 = vweird.f32 %v1465
    %vm1473 = vmor %vm1471, %vm1472
    %v1474 = vsel %vm1473, %v1465, %v1470
    %v1475 = vrsqrt.pop %v1444
    %v1476 = vmul.f32 %v1475, %v1444
    %v1477 = vmul.f32 %v1476, %v1475
    %v1478 = vmul.f32 0.5, %v1477
    %v1479 = vsub.f32 1.5, %v1478
    %v1480 = vmul.f32 %v1475, %v1479
    %vm1481 = vweird.f32 %v1444
    %vm1482 = vweird.f32 %v1475
    %vm1483 = vmor %vm1481, %vm1482
    %v1484 = vsel %vm1483, %v1475, %v1480
    %v1485 = vmul.f32 %v1417, %v1454
    %v1486 = vmul.f32 %v1418, %v1464
    %v1487 = vmul.f32 %v1419, %v1474
    %v1488 = vmul.f32 %v1420, %v1484
    %v1490 = vperm.slane %v1399, 0
    %v1492 = vmul.f32 %v1485, %v1490
    %v1493 = vmul.f32 %v1486, %v1490
    %v1494 = vmul.f32 %v1487, %v1490
    %v1495 = vmul.f32 %v1488, %v1490
    %v1497 = vperm.slane %v1400, 0
    %v1499 = vadd.f32 %v1492, %v1497
    %v1500 = vadd.f32 %v1493, %v1497
    %v1501 = vadd.f32 %v1494, %v1497
    %v1502 = vadd.f32 %v1495, %v1497
    %1503 = vst.msk [vmem:[%s13] sm:$0xff] %vm127, %v1499
    %1504 = vst.msk [vmem:[%s13 + $0x8] sm:$0xff] %vm127, %v1500
    %1505 = vst.msk [vmem:[%s13 + $0x10] sm:$0xff] %vm127, %v1501
    %1506 = vst.msk [vmem:[%s13 + $0x18] sm:$0xff] %vm127, %v1502
    // Predicated region
    $region70: #{crypto_stst_forward.8} parent=1 // pred_check
      _
    $region71: #{crypto_stst_forward.8} parent=1 // pred_check_branch
      %1508 = sbr.rel (0) target = $region73
    $region72: #{crypto_stst_forward.8} parent=1 // pred_region
      _
    $region73: #{crypto_stst_forward.8} parent=1 // pred_fallthru
      _
    // Predicated region
    $region74: #{crypto_stst_forward.8} parent=1 // pred_check
      _
    $region75: #{crypto_stst_forward.8} parent=1 // pred_check_branch
      %1510 = sbr.rel (0) target = $region77
    $region76: #{crypto_stst_forward.8} parent=1 // pred_region
      _
    $region77: #{crypto_stst_forward.8} parent=1 // pred_fallthru
      _
    %1511 = vsyncpa [#allocation3], 1
    %1512 = vsyncpa [#allocation5], 1
    %1513 = vsyncpa [#allocation8], 1

// kernel: crypto_stst_forward.9
$region0: #{crypto_stst_forward.9}
  #allocation0 [shape = 'u32[]', space=smem, size = 0x4, offset = 0x4, fixed_abs, tag = 'smem constant byte address 0x4 - core index']
  #allocation1 [shape = 'u32[72,128]{1,0:T(1,128)}', space=vmem, size = 0x9000, scoped, tag = 'internal scratch']
  %s0 = inlined_call_operand.vmem [shape: f32[2,16,64], index: 0, kind: input, shape index: {}]
  %s1 = inlined_call_operand.hbm [shape: f32[64,192], index: 1, kind: input, shape index: {}]
  %s2 = inlined_call_operand.vmem [shape: f32[1,192], index: 2, kind: input, shape index: {}]
  %s3 = inlined_call_operand.vmem [shape: f32[64,64], index: 3, kind: input, shape index: {}]
  %s4 = inlined_call_operand.vmem [shape: f32[1,64], index: 4, kind: input, shape index: {}]
  %s5 = inlined_call_operand.vmem [shape: f32[1,64], index: 5, kind: input, shape index: {}]
  %s6 = inlined_call_operand.vmem [shape: f32[1,64], index: 6, kind: input, shape index: {}]
  %s7 = inlined_call_operand.hbm [shape: f32[64,256], index: 7, kind: input, shape index: {}]
  %s8 = inlined_call_operand.vmem [shape: f32[1,256], index: 8, kind: input, shape index: {}]
  %s9 = inlined_call_operand.vmem [shape: f32[256,64], index: 9, kind: input, shape index: {}]
  %s10 = inlined_call_operand.vmem [shape: f32[1,64], index: 10, kind: input, shape index: {}]
  %s11 = inlined_call_operand.vmem [shape: f32[1,64], index: 11, kind: input, shape index: {}]
  %s12 = inlined_call_operand.vmem [shape: f32[1,64], index: 12, kind: input, shape index: {}]
  %s13 = inlined_call_operand.vmem [shape: f32[2,16,64], index: 13, kind: output, shape index: {}]
  %s14 = sld [smem:[#allocation0]]
  $region70: #{crypto_stst_forward.9} parent=0
    _
  %s16 = ssub.s32 1, %s14
  %s17 = scalar_select 0, %s16, %s14
  $region1: #{crypto_stst_forward.9} parent=0
    #allocation2 [shape = 'u8[65536]{0}', space=vmem, size = 0x10000, scoped, tag = 'input window, operand 1, single buffered']
    #allocation3 [shape = 's32[1]{0}', space=sflag, size = 0x4, scoped, tag = 'scoped memory for crypto_stst_forward.9']
    #allocation4 [shape = 'u8[65536]{0}', space=vmem, size = 0x10000, scoped, tag = 'input window, operand 7, single buffered']
    #allocation5 [shape = 's32[1]{0}', space=sflag, size = 0x4, scoped, tag = 'scoped memory for crypto_stst_forward.9']
    %18 = vsyncpa [#allocation3], 0
    %19 = vsyncpa [#allocation5], 0
    // Predicated region
    $region2: #{crypto_stst_forward.9} parent=1 // pred_check
      _
    $region3: #{crypto_stst_forward.9} parent=1 // pred_check_branch
      %21 = sbr.rel (0) target = $region5
    $region4: #{crypto_stst_forward.9} parent=1 // pred_region
      _
    $region5: #{crypto_stst_forward.9} parent=1 // pred_fallthru
      _
    // Predicated region
    $region6: #{crypto_stst_forward.9} parent=1 // pred_check
      _
    $region7: #{crypto_stst_forward.9} parent=1 // pred_check_branch
      %23 = sbr.rel (0) target = $region9
    $region8: #{crypto_stst_forward.9} parent=1 // pred_region
      %25 = vsyncadd [#allocation3], 0
      %s26 = sshll.u32 %s1, 4
      %s27 = int_to_ptr.hbm [resolvable:$true] %s26
      %s28 = sshll.u32 [#allocation2], 4
      %s29 = int_to_ptr.vmem [resolvable:$true] %s28
      %34 = dma.hbm_to_vmem [thread:$0]  %s27, 2048, %s29, [#allocation3], 256, 256, 16
    $region9: #{crypto_stst_forward.9} parent=1 // pred_fallthru
      _
    // Predicated region
    $region10: #{crypto_stst_forward.9} parent=1 // pred_check
      _
    $region11: #{crypto_stst_forward.9} parent=1 // pred_check_branch
      %36 = sbr.rel (0) target = $region13
    $region12: #{crypto_stst_forward.9} parent=1 // pred_region
      _
    $region13: #{crypto_stst_forward.9} parent=1 // pred_fallthru
      _
    // Predicated region
    $region14: #{crypto_stst_forward.9} parent=1 // pred_check
      _
    $region15: #{crypto_stst_forward.9} parent=1 // pred_check_branch
      %38 = sbr.rel (0) target = $region17
    $region16: #{crypto_stst_forward.9} parent=1 // pred_region
      _
    $region17: #{crypto_stst_forward.9} parent=1 // pred_fallthru
      _
    // Predicated region
    $region18: #{crypto_stst_forward.9} parent=1 // pred_check
      _
    $region19: #{crypto_stst_forward.9} parent=1 // pred_check_branch
      %40 = sbr.rel (0) target = $region21
    $region20: #{crypto_stst_forward.9} parent=1 // pred_region
      _
    $region21: #{crypto_stst_forward.9} parent=1 // pred_fallthru
      _
    // Predicated region
    $region22: #{crypto_stst_forward.9} parent=1 // pred_check
      _
    $region23: #{crypto_stst_forward.9} parent=1 // pred_check_branch
      %42 = sbr.rel (0) target = $region25
    $region24: #{crypto_stst_forward.9} parent=1 // pred_region
      _
    $region25: #{crypto_stst_forward.9} parent=1 // pred_fallthru
      _
    // Predicated region
    $region26: #{crypto_stst_forward.9} parent=1 // pred_check
      _
    $region27: #{crypto_stst_forward.9} parent=1 // pred_check_branch
      %44 = sbr.rel (0) target = $region29
    $region28: #{crypto_stst_forward.9} parent=1 // pred_region
      _
    $region29: #{crypto_stst_forward.9} parent=1 // pred_fallthru
      _
    // Predicated region
    $region30: #{crypto_stst_forward.9} parent=1 // pred_check
      _
    $region31: #{crypto_stst_forward.9} parent=1 // pred_check_branch
      %46 = sbr.rel (0) target = $region33
    $region32: #{crypto_stst_forward.9} parent=1 // pred_region
      %48 = vsyncadd [#allocation5], 0
      %s49 = sshll.u32 %s7, 4
      %s50 = int_to_ptr.hbm [resolvable:$true] %s49
      %s51 = sshll.u32 [#allocation4], 4
      %s52 = int_to_ptr.vmem [resolvable:$true] %s51
      %57 = dma.hbm_to_vmem [thread:$0]  %s50, 2048, %s52, [#allocation5], 256, 256, 16
    $region33: #{crypto_stst_forward.9} parent=1 // pred_fallthru
      _
    // Predicated region
    $region34: #{crypto_stst_forward.9} parent=1 // pred_check
      _
    $region35: #{crypto_stst_forward.9} parent=1 // pred_check_branch
      %59 = sbr.rel (0) target = $region37
    $region36: #{crypto_stst_forward.9} parent=1 // pred_region
      _
    $region37: #{crypto_stst_forward.9} parent=1 // pred_fallthru
      _
    // Predicated region
    $region38: #{crypto_stst_forward.9} parent=1 // pred_check
      _
    $region39: #{crypto_stst_forward.9} parent=1 // pred_check_branch
      %61 = sbr.rel (0) target = $region41
    $region40: #{crypto_stst_forward.9} parent=1 // pred_region
      _
    $region41: #{crypto_stst_forward.9} parent=1 // pred_fallthru
      _
    // Predicated region
    $region42: #{crypto_stst_forward.9} parent=1 // pred_check
      _
    $region43: #{crypto_stst_forward.9} parent=1 // pred_check_branch
      %63 = sbr.rel (0) target = $region45
    $region44: #{crypto_stst_forward.9} parent=1 // pred_region
      _
    $region45: #{crypto_stst_forward.9} parent=1 // pred_fallthru
      _
    // Predicated region
    $region46: #{crypto_stst_forward.9} parent=1 // pred_check
      _
    $region47: #{crypto_stst_forward.9} parent=1 // pred_check_branch
      %65 = sbr.rel (0) target = $region49
    $region48: #{crypto_stst_forward.9} parent=1 // pred_region
      _
    $region49: #{crypto_stst_forward.9} parent=1 // pred_fallthru
      _
    // Predicated region
    $region50: #{crypto_stst_forward.9} parent=1 // pred_check
      _
    $region51: #{crypto_stst_forward.9} parent=1 // pred_check_branch
      %67 = sbr.rel (0) target = $region53
    $region52: #{crypto_stst_forward.9} parent=1 // pred_region
      _
    $region53: #{crypto_stst_forward.9} parent=1 // pred_fallthru
      _
    // Predicated region
    $region54: #{crypto_stst_forward.9} parent=1 // pred_check
      _
    $region55: #{crypto_stst_forward.9} parent=1 // pred_check_branch
      %69 = sbr.rel (0) target = $region57
    $region56: #{crypto_stst_forward.9} parent=1 // pred_region
      %71 = dma.done [#allocation3], 2048
    $region57: #{crypto_stst_forward.9} parent=1 // pred_fallthru
      _
    // Predicated region
    $region58: #{crypto_stst_forward.9} parent=1 // pred_check
      _
    $region59: #{crypto_stst_forward.9} parent=1 // pred_check_branch
      %73 = sbr.rel (0) target = $region61
    $region60: #{crypto_stst_forward.9} parent=1 // pred_region
      %75 = dma.done [#allocation5], 2048
    $region61: #{crypto_stst_forward.9} parent=1 // pred_fallthru
      _
    %v76 = vld [vmem:[%s0] sm:$0xff]
    %v77 = vld [vmem:[%s0 + $0x8] sm:$0xff]
    %v78 = vld [vmem:[%s0 + $0x10] sm:$0xff]
    %v79 = vld [vmem:[%s0 + $0x18] sm:$0xff]
    %v80 = vld [vmem:[#allocation2] sm:$0xff]
    %v81 = vld [vmem:[#allocation2 + $0x8] sm:$0xff]
    %v82 = vld [vmem:[#allocation2 + $0x10] sm:$0xff]
    %v83 = vld [vmem:[#allocation2 + $0x18] sm:$0xff]
    %v84 = vld [vmem:[#allocation2 + $0x20] sm:$0xff]
    %v85 = vld [vmem:[#allocation2 + $0x28] sm:$0xff]
    %v86 = vld [vmem:[#allocation2 + $0x30] sm:$0xff]
    %v87 = vld [vmem:[#allocation2 + $0x38] sm:$0xff]
    %v88 = vld [vmem:[#allocation2 + $0x40] sm:$0xff]
    %v89 = vld [vmem:[#allocation2 + $0x48] sm:$0xff]
    %v90 = vld [vmem:[#allocation2 + $0x50] sm:$0xff]
    %v91 = vld [vmem:[#allocation2 + $0x58] sm:$0xff]
    %v92 = vld [vmem:[#allocation2 + $0x60] sm:$0xff]
    %v93 = vld [vmem:[#allocation2 + $0x68] sm:$0xff]
    %v94 = vld [vmem:[#allocation2 + $0x70] sm:$0xff]
    %v95 = vld [vmem:[#allocation2 + $0x78] sm:$0xff]
    %v96 = vld [vmem:[%s2] sm:$0x3]
    %v98 = vperm.slane %v96, 0
    %v99 = vperm.slane %v96, 1
    %vm102 = vcmask 523264
    %v104 = vsel %vm102, %v76, 0
    %v107 = vsel %vm102, %v77, 0
    %v110 = vsel %vm102, %v78, 0
    %v113 = vsel %vm102, %v79, 0
    %115 = vmatpush.msra.mxu0 0.0
    %116 = vmatpush.msra.mxu0 0.0
    %117 = vmatpush.msra.mxu0 0.0
    %118 = vmatpush.msra.mxu0 0.0
    %119 = vmatpush.msra.mxu0 0.0
    %120 = vmatpush.msra.mxu0 0.0
    %121 = vmatpush.msra.mxu0 0.0
    %122 = vmatpush.msra.mxu0 0.0
    %123 = vmatpush.msra.mxu0 %v94
    %124 = vmatpush.msra.mxu0 %v92
    %125 = vmatpush.msra.mxu0 %v90
    %126 = vmatpush.msra.mxu0 %v88
    %127 = vmatpush.msra.mxu0 %v86
    %128 = vmatpush.msra.mxu0 %v84
    %129 = vmatpush.msra.mxu0 %v82
    %130 = vmatpush.msra.mxu0 %v80
    %131 = vmatmul.f32.gmra.mxu0 %v104
    %v132 = vpop.f32.mrf.mxu0
    %v133 = vadd.f32 %v98, %v132
    %134 = vmatmul.f32.gmra.mxu0 %v107
    %v135 = vpop.f32.mrf.mxu0
    %v136 = vadd.f32 %v98, %v135
    %137 = vmatmul.f32.gmra.mxu0 %v110
    %v138 = vpop.f32.mrf.mxu0
    %v139 = vadd.f32 %v98, %v138
    %140 = vmatmul.f32.gmra.mxu0 %v113
    %v141 = vpop.f32.mrf.mxu0
    %v142 = vadd.f32 %v98, %v141
    %143 = vdwg.mxu0
    %144 = vmatpush.msra.mxu0 0.0
    %145 = vmatpush.msra.mxu0 0.0
    %146 = vmatpush.msra.mxu0 0.0
    %147 = vmatpush.msra.mxu0 0.0
    %148 = vmatpush.msra.mxu0 0.0
    %149 = vmatpush.msra.mxu0 0.0
    %150 = vmatpush.msra.mxu0 0.0
    %151 = vmatpush.msra.mxu0 0.0
    %152 = vmatpush.msra.mxu0 %v95
    %153 = vmatpush.msra.mxu0 %v93
    %154 = vmatpush.msra.mxu0 %v91
    %155 = vmatpush.msra.mxu0 %v89
    %156 = vmatpush.msra.mxu0 %v87
    %157 = vmatpush.msra.mxu0 %v85
    %158 = vmatpush.msra.mxu0 %v83
    %159 = vmatpush.msra.mxu0 %v81
    %160 = vmatmul.f32.gmra.mxu0 %v104
    %v161 = vpop.f32.mrf.mxu0
    %v162 = vadd.f32 %v99, %v161
    %163 = vmatmul.f32.gmra.mxu0 %v107
    %v164 = vpop.f32.mrf.mxu0
    %v165 = vadd.f32 %v99, %v164
    %166 = vmatmul.f32.gmra.mxu0 %v110
    %v167 = vpop.f32.mrf.mxu0
    %v168 = vadd.f32 %v99, %v167
    %169 = vmatmul.f32.gmra.mxu0 %v113
    %v170 = vpop.f32.mrf.mxu0
    %v171 = vadd.f32 %v99, %v170
    %172 = vdwg.mxu0
    %175 = vrot.lane.b32.xlu0 %v133, 64
    %v176 = vpop.permute.xlu0 %175
    %177 = vrot.lane.b32.xlu0 %v136, 64
    %v178 = vpop.permute.xlu0 %177
    %vm179 = vcmask 130048
    %v180 = vsel %vm179, %v133, 0
    %v182 = vsel %vm179, %v136, 0
    %v184 = vsel %vm179, %v176, 0
    %v186 = vsel %vm179, %v178, 0
    %188 = vmatpush.xpose.msra.mxu0 0.0
    %189 = vmatpush.xpose.msra.mxu0 0.0
    %190 = vmatpush.xpose.msra.mxu0 0.0
    %191 = vmatpush.xpose.msra.mxu0 0.0
    %192 = vmatpush.xpose.msra.mxu0 0.0
    %193 = vmatpush.xpose.msra.mxu0 0.0
    %194 = vmatpush.xpose.msra.mxu0 0.0
    %195 = vmatpush.xpose.msra.mxu0 0.0
    %196 = vmatpush.xpose.msra.mxu0 0.0
    %197 = vmatpush.xpose.msra.mxu0 0.0
    %198 = vmatpush.xpose.msra.mxu0 0.0
    %199 = vmatpush.xpose.msra.mxu0 0.0
    %200 = vmatpush.xpose.msra.mxu0 0.0
    %201 = vmatpush.xpose.msra.mxu0 0.0
    %202 = vmatpush.xpose.msra.mxu0 %v186
    %203 = vmatpush.xpose.msra.mxu0 %v184
    %204 = vmatmul.f32.gmra.mxu0 %v180
    %v205 = vpop.f32.mrf.mxu0
    %v206 = vadd.f32 0.0, %v205
    %207 = vmatmul.f32.gmra.mxu0 %v182
    %v208 = vpop.f32.mrf.mxu0
    %v209 = vadd.f32 0.0, %v208
    %210 = vdwg.mxu0
    %213 = vrot.lane.b32.xlu0 %v139, 64
    %v214 = vpop.permute.xlu0 %213
    %215 = vrot.lane.b32.xlu0 %v142, 64
    %v216 = vpop.permute.xlu0 %215
    %v217 = vsel %vm179, %v139, 0
    %v219 = vsel %vm179, %v142, 0
    %v221 = vsel %vm179, %v214, 0
    %v223 = vsel %vm179, %v216, 0
    %225 = vmatpush.xpose.msra.mxu0 0.0
    %226 = vmatpush.xpose.msra.mxu0 0.0
    %227 = vmatpush.xpose.msra.mxu0 0.0
    %228 = vmatpush.xpose.msra.mxu0 0.0
    %229 = vmatpush.xpose.msra.mxu0 0.0
    %230 = vmatpush.xpose.msra.mxu0 0.0
    %231 = vmatpush.xpose.msra.mxu0 0.0
    %232 = vmatpush.xpose.msra.mxu0 0.0
    %233 = vmatpush.xpose.msra.mxu0 0.0
    %234 = vmatpush.xpose.msra.mxu0 0.0
    %235 = vmatpush.xpose.msra.mxu0 0.0
    %236 = vmatpush.xpose.msra.mxu0 0.0
    %237 = vmatpush.xpose.msra.mxu0 0.0
    %238 = vmatpush.xpose.msra.mxu0 0.0
    %239 = vmatpush.xpose.msra.mxu0 %v223
    %240 = vmatpush.xpose.msra.mxu0 %v221
    %241 = vmatmul.f32.gmra.mxu0 %v217
    %v242 = vpop.f32.mrf.mxu0
    %v243 = vadd.f32 0.0, %v242
    %244 = vmatmul.f32.gmra.mxu0 %v219
    %v245 = vpop.f32.mrf.mxu0
    %v246 = vadd.f32 0.0, %v245
    %247 = vdwg.mxu0
    %v248 = vmul.f32 %v206, 0.25
    %v249 = vmul.f32 %v209, 0.25
    %v250 = vmul.f32 %v243, 0.25
    %v251 = vmul.f32 %v246, 0.25
    %v252 = vsel %vm179, %v248, -inf
    %253 = vmax.xlane.f32.xlu0 %v252
    %v254 = vpop.xlane.xlu0 %253
    %v255 = vsel %vm179, %v249, -inf
    %256 = vmax.xlane.f32.xlu0 %v255
    %v257 = vpop.xlane.xlu0 %256
    %v258 = vsel %vm179, %v250, -inf
    %259 = vmax.xlane.f32.xlu0 %v258
    %v260 = vpop.xlane.xlu0 %259
    %v261 = vsel %vm179, %v251, -inf
    %262 = vmax.xlane.f32.xlu0 %v261
    %v263 = vpop.xlane.xlu0 %262
    %v264 = vsub.f32 %v248, %v254
    %v265 = vsub.f32 %v249, %v257
    %v266 = vsub.f32 %v250, %v260
    %v267 = vsub.f32 %v251, %v263
    %v268 = vmul.f32 %v264, 1.442695
    %v269 = vpow.pop %v268
    %v270 = vmul.f32 %v265, 1.442695
    %v271 = vpow.pop %v270
    %v272 = vmul.f32 %v266, 1.442695
    %v273 = vpow.pop %v272
    %v274 = vmul.f32 %v267, 1.442695
    %v275 = vpow.pop %v274
    %v276 = vsel %vm179, %v269, 0.0
    %277 = vadd.xlane.f32.xlu0 %v276
    %v278 = vpop.xlane.xlu0 %277
    %v279 = vsel %vm179, %v271, 0.0
    %280 = vadd.xlane.f32.xlu0 %v279
    %v281 = vpop.xlane.xlu0 %280
    %v282 = vsel %vm179, %v273, 0.0
    %283 = vadd.xlane.f32.xlu0 %v282
    %v284 = vpop.xlane.xlu0 %283
    %v285 = vsel %vm179, %v275, 0.0
    %286 = vadd.xlane.f32.xlu0 %v285
    %v287 = vpop.xlane.xlu0 %286
    %v288 = vrcp.pop %v278
    %v289 = vrcp.pop %v281
    %v290 = vrcp.pop %v284
    %v291 = vrcp.pop %v287
    %v292 = vmul.f32 %v269, %v288
    %v293 = vmul.f32 %v271, %v289
    %v294 = vmul.f32 %v273, %v290
    %v295 = vmul.f32 %v275, %v291
    %v297 = vsel %vm179, %v292, 0
    %v300 = vsel %vm179, %v293, 0
    %302 = vmatpush.msra.mxu0 0.0
    %303 = vmatpush.msra.mxu0 0.0
    %304 = vmatpush.msra.mxu0 0.0
    %305 = vmatpush.msra.mxu0 0.0
    %306 = vmatpush.msra.mxu0 0.0
    %307 = vmatpush.msra.mxu0 0.0
    %308 = vmatpush.msra.mxu0 0.0
    %309 = vmatpush.msra.mxu0 0.0
    %310 = vmatpush.msra.mxu0 0.0
    %311 = vmatpush.msra.mxu0 0.0
    %312 = vmatpush.msra.mxu0 0.0
    %313 = vmatpush.msra.mxu0 0.0
    %314 = vmatpush.msra.mxu0 0.0
    %315 = vmatpush.msra.mxu0 0.0
    %316 = vmatpush.msra.mxu0 %v165
    %317 = vmatpush.msra.mxu0 %v162
    %318 = vmatmul.f32.gmra.mxu0 %v297
    %v319 = vpop.f32.mrf.mxu0
    %v320 = vadd.f32 0.0, %v319
    %321 = vmatmul.f32.gmra.mxu0 %v300
    %v322 = vpop.f32.mrf.mxu0
    %v323 = vadd.f32 0.0, %v322
    %324 = vdwg.mxu0
    %v326 = vsel %vm179, %v294, 0
    %v329 = vsel %vm179, %v295, 0
    %331 = vmatpush.msra.mxu0 0.0
    %332 = vmatpush.msra.mxu0 0.0
    %333 = vmatpush.msra.mxu0 0.0
    %334 = vmatpush.msra.mxu0 0.0
    %335 = vmatpush.msra.mxu0 0.0
    %336 = vmatpush.msra.mxu0 0.0
    %337 = vmatpush.msra.mxu0 0.0
    %338 = vmatpush.msra.mxu0 0.0
    %339 = vmatpush.msra.mxu0 0.0
    %340 = vmatpush.msra.mxu0 0.0
    %341 = vmatpush.msra.mxu0 0.0
    %342 = vmatpush.msra.mxu0 0.0
    %343 = vmatpush.msra.mxu0 0.0
    %344 = vmatpush.msra.mxu0 0.0
    %345 = vmatpush.msra.mxu0 %v171
    %346 = vmatpush.msra.mxu0 %v168
    %347 = vmatmul.f32.gmra.mxu0 %v326
    %v348 = vpop.f32.mrf.mxu0
    %v349 = vadd.f32 0.0, %v348
    %350 = vmatmul.f32.gmra.mxu0 %v329
    %v351 = vpop.f32.mrf.mxu0
    %v352 = vadd.f32 0.0, %v351
    %353 = vdwg.mxu0
    %354 = vrot.lane.b32.xlu0 %v133, 112
    %v355 = vpop.permute.xlu0 %354
    %356 = vrot.lane.b32.xlu0 %v136, 112
    %v357 = vpop.permute.xlu0 %356
    %358 = vrot.lane.b32.xlu0 %v133, 48
    %v359 = vpop.permute.xlu0 %358
    %360 = vrot.lane.b32.xlu0 %v136, 48
    %v361 = vpop.permute.xlu0 %360
    %v362 = vsel %vm179, %v355, 0
    %v364 = vsel %vm179, %v357, 0
    %v366 = vsel %vm179, %v359, 0
    %v368 = vsel %vm179, %v361, 0
    %370 = vmatpush.xpose.msra.mxu0 0.0
    %371 = vmatpush.xpose.msra.mxu0 0.0
    %372 = vmatpush.xpose.msra.mxu0 0.0
    %373 = vmatpush.xpose.msra.mxu0 0.0
    %374 = vmatpush.xpose.msra.mxu0 0.0
    %375 = vmatpush.xpose.msra.mxu0 0.0
    %376 = vmatpush.xpose.msra.mxu0 0.0
    %377 = vmatpush.xpose.msra.mxu0 0.0
    %378 = vmatpush.xpose.msra.mxu0 0.0
    %379 = vmatpush.xpose.msra.mxu0 0.0
    %380 = vmatpush.xpose.msra.mxu0 0.0
    %381 = vmatpush.xpose.msra.mxu0 0.0
    %382 = vmatpush.xpose.msra.mxu0 0.0
    %383 = vmatpush.xpose.msra.mxu0 0.0
    %384 = vmatpush.xpose.msra.mxu0 %v368
    %385 = vmatpush.xpose.msra.mxu0 %v366
    %386 = vmatmul.f32.gmra.mxu0 %v362
    %v387 = vpop.f32.mrf.mxu0
    %v388 = vadd.f32 0.0, %v387
    %389 = vmatmul.f32.gmra.mxu0 %v364
    %v390 = vpop.f32.mrf.mxu0
    %v391 = vadd.f32 0.0, %v390
    %392 = vdwg.mxu0
    %393 = vrot.lane.b32.xlu0 %v139, 112
    %v394 = vpop.permute.xlu0 %393
    %395 = vrot.lane.b32.xlu0 %v142, 112
    %v396 = vpop.permute.xlu0 %395
    %397 = vrot.lane.b32.xlu0 %v139, 48
    %v398 = vpop.permute.xlu0 %397
    %399 = vrot.lane.b32.xlu0 %v142, 48
    %v400 = vpop.permute.xlu0 %399
    %v401 = vsel %vm179, %v394, 0
    %v403 = vsel %vm179, %v396, 0
    %v405 = vsel %vm179, %v398, 0
    %v407 = vsel %vm179, %v400, 0
    %409 = vmatpush.xpose.msra.mxu0 0.0
    %410 = vmatpush.xpose.msra.mxu0 0.0
    %411 = vmatpush.xpose.msra.mxu0 0.0
    %412 = vmatpush.xpose.msra.mxu0 0.0
    %413 = vmatpush.xpose.msra.mxu0 0.0
    %414 = vmatpush.xpose.msra.mxu0 0.0
    %415 = vmatpush.xpose.msra.mxu0 0.0
    %416 = vmatpush.xpose.msra.mxu0 0.0
    %417 = vmatpush.xpose.msra.mxu0 0.0
    %418 = vmatpush.xpose.msra.mxu0 0.0
    %419 = vmatpush.xpose.msra.mxu0 0.0
    %420 = vmatpush.xpose.msra.mxu0 0.0
    %421 = vmatpush.xpose.msra.mxu0 0.0
    %422 = vmatpush.xpose.msra.mxu0 0.0
    %423 = vmatpush.xpose.msra.mxu0 %v407
    %424 = vmatpush.xpose.msra.mxu0 %v405
    %425 = vmatmul.f32.gmra.mxu0 %v401
    %v426 = vpop.f32.mrf.mxu0
    %v427 = vadd.f32 0.0, %v426
    %428 = vmatmul.f32.gmra.mxu0 %v403
    %v429 = vpop.f32.mrf.mxu0
    %v430 = vadd.f32 0.0, %v429
    %431 = vdwg.mxu0
    %v432 = vmul.f32 %v388, 0.25
    %v433 = vmul.f32 %v391, 0.25
    %v434 = vmul.f32 %v427, 0.25
    %v435 = vmul.f32 %v430, 0.25
    %v436 = vsel %vm179, %v432, -inf
    %437 = vmax.xlane.f32.xlu0 %v436
    %v438 = vpop.xlane.xlu0 %437
    %v439 = vsel %vm179, %v433, -inf
    %440 = vmax.xlane.f32.xlu0 %v439
    %v441 = vpop.xlane.xlu0 %440
    %v442 = vsel %vm179, %v434, -inf
    %443 = vmax.xlane.f32.xlu0 %v442
    %v444 = vpop.xlane.xlu0 %443
    %v445 = vsel %vm179, %v435, -inf
    %446 = vmax.xlane.f32.xlu0 %v445
    %v447 = vpop.xlane.xlu0 %446
    %v448 = vsub.f32 %v432, %v438
    %v449 = vsub.f32 %v433, %v441
    %v450 = vsub.f32 %v434, %v444
    %v451 = vsub.f32 %v435, %v447
    %v452 = vmul.f32 %v448, 1.442695
    %v453 = vpow.pop %v452
    %v454 = vmul.f32 %v449, 1.442695
    %v455 = vpow.pop %v454
    %v456 = vmul.f32 %v450, 1.442695
    %v457 = vpow.pop %v456
    %v458 = vmul.f32 %v451, 1.442695
    %v459 = vpow.pop %v458
    %v460 = vsel %vm179, %v453, 0.0
    %461 = vadd.xlane.f32.xlu0 %v460
    %v462 = vpop.xlane.xlu0 %461
    %v463 = vsel %vm179, %v455, 0.0
    %464 = vadd.xlane.f32.xlu0 %v463
    %v465 = vpop.xlane.xlu0 %464
    %v466 = vsel %vm179, %v457, 0.0
    %467 = vadd.xlane.f32.xlu0 %v466
    %v468 = vpop.xlane.xlu0 %467
    %v469 = vsel %vm179, %v459, 0.0
    %470 = vadd.xlane.f32.xlu0 %v469
    %v471 = vpop.xlane.xlu0 %470
    %v472 = vrcp.pop %v462
    %v473 = vrcp.pop %v465
    %v474 = vrcp.pop %v468
    %v475 = vrcp.pop %v471
    %v476 = vmul.f32 %v453, %v472
    %v477 = vmul.f32 %v455, %v473
    %v478 = vmul.f32 %v457, %v474
    %v479 = vmul.f32 %v459, %v475
    %482 = vrot.lane.b32.xlu0 %v162, 112
    %v483 = vpop.permute.xlu0 %482
    %484 = vrot.lane.b32.xlu0 %v165, 112
    %v485 = vpop.permute.xlu0 %484
    %v489 = vsel %vm179, %v476, 0
    %v492 = vsel %vm179, %v477, 0
    %494 = vmatpush.msra.mxu0 0.0
    %495 = vmatpush.msra.mxu0 0.0
    %496 = vmatpush.msra.mxu0 0.0
    %497 = vmatpush.msra.mxu0 0.0
    %498 = vmatpush.msra.mxu0 0.0
    %499 = vmatpush.msra.mxu0 0.0
    %500 = vmatpush.msra.mxu0 0.0
    %501 = vmatpush.msra.mxu0 0.0
    %502 = vmatpush.msra.mxu0 0.0
    %503 = vmatpush.msra.mxu0 0.0
    %504 = vmatpush.msra.mxu0 0.0
    %505 = vmatpush.msra.mxu0 0.0
    %506 = vmatpush.msra.mxu0 0.0
    %507 = vmatpush.msra.mxu0 0.0
    %508 = vmatpush.msra.mxu0 %v485
    %509 = vmatpush.msra.mxu0 %v483
    %510 = vmatmul.f32.gmra.mxu0 %v489
    %v511 = vpop.f32.mrf.mxu0
    %v512 = vadd.f32 0.0, %v511
    %513 = vmatmul.f32.gmra.mxu0 %v492
    %v514 = vpop.f32.mrf.mxu0
    %v515 = vadd.f32 0.0, %v514
    %516 = vdwg.mxu0
    %519 = vrot.lane.b32.xlu0 %v168, 112
    %v520 = vpop.permute.xlu0 %519
    %521 = vrot.lane.b32.xlu0 %v171, 112
    %v522 = vpop.permute.xlu0 %521
    %v526 = vsel %vm179, %v478, 0
    %v529 = vsel %vm179, %v479, 0
    %531 = vmatpush.msra.mxu0 0.0
    %532 = vmatpush.msra.mxu0 0.0
    %533 = vmatpush.msra.mxu0 0.0
    %534 = vmatpush.msra.mxu0 0.0
    %535 = vmatpush.msra.mxu0 0.0
    %536 = vmatpush.msra.mxu0 0.0
    %537 = vmatpush.msra.mxu0 0.0
    %538 = vmatpush.msra.mxu0 0.0
    %539 = vmatpush.msra.mxu0 0.0
    %540 = vmatpush.msra.mxu0 0.0
    %541 = vmatpush.msra.mxu0 0.0
    %542 = vmatpush.msra.mxu0 0.0
    %543 = vmatpush.msra.mxu0 0.0
    %544 = vmatpush.msra.mxu0 0.0
    %545 = vmatpush.msra.mxu0 %v522
    %546 = vmatpush.msra.mxu0 %v520
    %547 = vmatmul.f32.gmra.mxu0 %v526
    %v548 = vpop.f32.mrf.mxu0
    %v549 = vadd.f32 0.0, %v548
    %550 = vmatmul.f32.gmra.mxu0 %v529
    %v551 = vpop.f32.mrf.mxu0
    %v552 = vadd.f32 0.0, %v551
    %553 = vdwg.mxu0
    %554 = vrot.lane.b32.xlu0 %v133, 96
    %v555 = vpop.permute.xlu0 %554
    %556 = vrot.lane.b32.xlu0 %v136, 96
    %v557 = vpop.permute.xlu0 %556
    %558 = vrot.lane.b32.xlu0 %v133, 32
    %v559 = vpop.permute.xlu0 %558
    %560 = vrot.lane.b32.xlu0 %v136, 32
    %v561 = vpop.permute.xlu0 %560
    %v562 = vsel %vm179, %v555, 0
    %v564 = vsel %vm179, %v557, 0
    %v566 = vsel %vm179, %v559, 0
    %v568 = vsel %vm179, %v561, 0
    %570 = vmatpush.xpose.msra.mxu0 0.0
    %571 = vmatpush.xpose.msra.mxu0 0.0
    %572 = vmatpush.xpose.msra.mxu0 0.0
    %573 = vmatpush.xpose.msra.mxu0 0.0
    %574 = vmatpush.xpose.msra.mxu0 0.0
    %575 = vmatpush.xpose.msra.mxu0 0.0
    %576 = vmatpush.xpose.msra.mxu0 0.0
    %577 = vmatpush.xpose.msra.mxu0 0.0
    %578 = vmatpush.xpose.msra.mxu0 0.0
    %579 = vmatpush.xpose.msra.mxu0 0.0
    %580 = vmatpush.xpose.msra.mxu0 0.0
    %581 = vmatpush.xpose.msra.mxu0 0.0
    %582 = vmatpush.xpose.msra.mxu0 0.0
    %583 = vmatpush.xpose.msra.mxu0 0.0
    %584 = vmatpush.xpose.msra.mxu0 %v568
    %585 = vmatpush.xpose.msra.mxu0 %v566
    %586 = vmatmul.f32.gmra.mxu0 %v562
    %v587 = vpop.f32.mrf.mxu0
    %v588 = vadd.f32 0.0, %v587
    %589 = vmatmul.f32.gmra.mxu0 %v564
    %v590 = vpop.f32.mrf.mxu0
    %v591 = vadd.f32 0.0, %v590
    %592 = vdwg.mxu0
    %593 = vrot.lane.b32.xlu0 %v139, 96
    %v594 = vpop.permute.xlu0 %593
    %595 = vrot.lane.b32.xlu0 %v142, 96
    %v596 = vpop.permute.xlu0 %595
    %597 = vrot.lane.b32.xlu0 %v139, 32
    %v598 = vpop.permute.xlu0 %597
    %599 = vrot.lane.b32.xlu0 %v142, 32
    %v600 = vpop.permute.xlu0 %599
    %v601 = vsel %vm179, %v594, 0
    %v603 = vsel %vm179, %v596, 0
    %v605 = vsel %vm179, %v598, 0
    %v607 = vsel %vm179, %v600, 0
    %609 = vmatpush.xpose.msra.mxu0 0.0
    %610 = vmatpush.xpose.msra.mxu0 0.0
    %611 = vmatpush.xpose.msra.mxu0 0.0
    %612 = vmatpush.xpose.msra.mxu0 0.0
    %613 = vmatpush.xpose.msra.mxu0 0.0
    %614 = vmatpush.xpose.msra.mxu0 0.0
    %615 = vmatpush.xpose.msra.mxu0 0.0
    %616 = vmatpush.xpose.msra.mxu0 0.0
    %617 = vmatpush.xpose.msra.mxu0 0.0
    %618 = vmatpush.xpose.msra.mxu0 0.0
    %619 = vmatpush.xpose.msra.mxu0 0.0
    %620 = vmatpush.xpose.msra.mxu0 0.0
    %621 = vmatpush.xpose.msra.mxu0 0.0
    %622 = vmatpush.xpose.msra.mxu0 0.0
    %623 = vmatpush.xpose.msra.mxu0 %v607
    %624 = vmatpush.xpose.msra.mxu0 %v605
    %625 = vmatmul.f32.gmra.mxu0 %v601
    %v626 = vpop.f32.mrf.mxu0
    %v627 = vadd.f32 0.0, %v626
    %628 = vmatmul.f32.gmra.mxu0 %v603
    %v629 = vpop.f32.mrf.mxu0
    %v630 = vadd.f32 0.0, %v629
    %631 = vdwg.mxu0
    %v632 = vmul.f32 %v588, 0.25
    %v633 = vmul.f32 %v591, 0.25
    %v634 = vmul.f32 %v627, 0.25
    %v635 = vmul.f32 %v630, 0.25
    %v636 = vsel %vm179, %v632, -inf
    %637 = vmax.xlane.f32.xlu0 %v636
    %v638 = vpop.xlane.xlu0 %637
    %v639 = vsel %vm179, %v633, -inf
    %640 = vmax.xlane.f32.xlu0 %v639
    %v641 = vpop.xlane.xlu0 %640
    %v642 = vsel %vm179, %v634, -inf
    %643 = vmax.xlane.f32.xlu0 %v642
    %v644 = vpop.xlane.xlu0 %643
    %v645 = vsel %vm179, %v635, -inf
    %646 = vmax.xlane.f32.xlu0 %v645
    %v647 = vpop.xlane.xlu0 %646
    %v648 = vsub.f32 %v632, %v638
    %v649 = vsub.f32 %v633, %v641
    %v650 = vsub.f32 %v634, %v644
    %v651 = vsub.f32 %v635, %v647
    %v652 = vmul.f32 %v648, 1.442695
    %v653 = vpow.pop %v652
    %v654 = vmul.f32 %v649, 1.442695
    %v655 = vpow.pop %v654
    %v656 = vmul.f32 %v650, 1.442695
    %v657 = vpow.pop %v656
    %v658 = vmul.f32 %v651, 1.442695
    %v659 = vpow.pop %v658
    %v660 = vsel %vm179, %v653, 0.0
    %661 = vadd.xlane.f32.xlu0 %v660
    %v662 = vpop.xlane.xlu0 %661
    %v663 = vsel %vm179, %v655, 0.0
    %664 = vadd.xlane.f32.xlu0 %v663
    %v665 = vpop.xlane.xlu0 %664
    %v666 = vsel %vm179, %v657, 0.0
    %667 = vadd.xlane.f32.xlu0 %v666
    %v668 = vpop.xlane.xlu0 %667
    %v669 = vsel %vm179, %v659, 0.0
    %670 = vadd.xlane.f32.xlu0 %v669
    %v671 = vpop.xlane.xlu0 %670
    %v672 = vrcp.pop %v662
    %v673 = vrcp.pop %v665
    %v674 = vrcp.pop %v668
    %v675 = vrcp.pop %v671
    %v676 = vmul.f32 %v653, %v672
    %v677 = vmul.f32 %v655, %v673
    %v678 = vmul.f32 %v657, %v674
    %v679 = vmul.f32 %v659, %v675
    %680 = vrot.lane.b32.xlu0 %v162, 96
    %v681 = vpop.permute.xlu0 %680
    %682 = vrot.lane.b32.xlu0 %v165, 96
    %v683 = vpop.permute.xlu0 %682
    %v687 = vsel %vm179, %v676, 0
    %v690 = vsel %vm179, %v677, 0
    %692 = vmatpush.msra.mxu0 0.0
    %693 = vmatpush.msra.mxu0 0.0
    %694 = vmatpush.msra.mxu0 0.0
    %695 = vmatpush.msra.mxu0 0.0
    %696 = vmatpush.msra.mxu0 0.0
    %697 = vmatpush.msra.mxu0 0.0
    %698 = vmatpush.msra.mxu0 0.0
    %699 = vmatpush.msra.mxu0 0.0
    %700 = vmatpush.msra.mxu0 0.0
    %701 = vmatpush.msra.mxu0 0.0
    %702 = vmatpush.msra.mxu0 0.0
    %703 = vmatpush.msra.mxu0 0.0
    %704 = vmatpush.msra.mxu0 0.0
    %705 = vmatpush.msra.mxu0 0.0
    %706 = vmatpush.msra.mxu0 %v683
    %707 = vmatpush.msra.mxu0 %v681
    %708 = vmatmul.f32.gmra.mxu0 %v687
    %v709 = vpop.f32.mrf.mxu0
    %v710 = vadd.f32 0.0, %v709
    %711 = vmatmul.f32.gmra.mxu0 %v690
    %v712 = vpop.f32.mrf.mxu0
    %v713 = vadd.f32 0.0, %v712
    %714 = vdwg.mxu0
    %715 = vrot.lane.b32.xlu0 %v168, 96
    %v716 = vpop.permute.xlu0 %715
    %717 = vrot.lane.b32.xlu0 %v171, 96
    %v718 = vpop.permute.xlu0 %717
    %v722 = vsel %vm179, %v678, 0
    %v725 = vsel %vm179, %v679, 0
    %727 = vmatpush.msra.mxu0 0.0
    %728 = vmatpush.msra.mxu0 0.0
    %729 = vmatpush.msra.mxu0 0.0
    %730 = vmatpush.msra.mxu0 0.0
    %731 = vmatpush.msra.mxu0 0.0
    %732 = vmatpush.msra.mxu0 0.0
    %733 = vmatpush.msra.mxu0 0.0
    %734 = vmatpush.msra.mxu0 0.0
    %735 = vmatpush.msra.mxu0 0.0
    %736 = vmatpush.msra.mxu0 0.0
    %737 = vmatpush.msra.mxu0 0.0
    %738 = vmatpush.msra.mxu0 0.0
    %739 = vmatpush.msra.mxu0 0.0
    %740 = vmatpush.msra.mxu0 0.0
    %741 = vmatpush.msra.mxu0 %v718
    %742 = vmatpush.msra.mxu0 %v716
    %743 = vmatmul.f32.gmra.mxu0 %v722
    %v744 = vpop.f32.mrf.mxu0
    %v745 = vadd.f32 0.0, %v744
    %746 = vmatmul.f32.gmra.mxu0 %v725
    %v747 = vpop.f32.mrf.mxu0
    %v748 = vadd.f32 0.0, %v747
    %749 = vdwg.mxu0
    %750 = vrot.lane.b32.xlu0 %v133, 80
    %v751 = vpop.permute.xlu0 %750
    %752 = vrot.lane.b32.xlu0 %v136, 80
    %v753 = vpop.permute.xlu0 %752
    %754 = vrot.lane.b32.xlu0 %v133, 16
    %v755 = vpop.permute.xlu0 %754
    %756 = vrot.lane.b32.xlu0 %v136, 16
    %v757 = vpop.permute.xlu0 %756
    %v758 = vsel %vm179, %v751, 0
    %v760 = vsel %vm179, %v753, 0
    %v762 = vsel %vm179, %v755, 0
    %v764 = vsel %vm179, %v757, 0
    %766 = vmatpush.xpose.msra.mxu0 0.0
    %767 = vmatpush.xpose.msra.mxu0 0.0
    %768 = vmatpush.xpose.msra.mxu0 0.0
    %769 = vmatpush.xpose.msra.mxu0 0.0
    %770 = vmatpush.xpose.msra.mxu0 0.0
    %771 = vmatpush.xpose.msra.mxu0 0.0
    %772 = vmatpush.xpose.msra.mxu0 0.0
    %773 = vmatpush.xpose.msra.mxu0 0.0
    %774 = vmatpush.xpose.msra.mxu0 0.0
    %775 = vmatpush.xpose.msra.mxu0 0.0
    %776 = vmatpush.xpose.msra.mxu0 0.0
    %777 = vmatpush.xpose.msra.mxu0 0.0
    %778 = vmatpush.xpose.msra.mxu0 0.0
    %779 = vmatpush.xpose.msra.mxu0 0.0
    %780 = vmatpush.xpose.msra.mxu0 %v764
    %781 = vmatpush.xpose.msra.mxu0 %v762
    %782 = vmatmul.f32.gmra.mxu0 %v758
    %v783 = vpop.f32.mrf.mxu0
    %v784 = vadd.f32 0.0, %v783
    %785 = vmatmul.f32.gmra.mxu0 %v760
    %v786 = vpop.f32.mrf.mxu0
    %v787 = vadd.f32 0.0, %v786
    %788 = vdwg.mxu0
    %789 = vrot.lane.b32.xlu0 %v139, 80
    %v790 = vpop.permute.xlu0 %789
    %791 = vrot.lane.b32.xlu0 %v142, 80
    %v792 = vpop.permute.xlu0 %791
    %793 = vrot.lane.b32.xlu0 %v139, 16
    %v794 = vpop.permute.xlu0 %793
    %795 = vrot.lane.b32.xlu0 %v142, 16
    %v796 = vpop.permute.xlu0 %795
    %v797 = vsel %vm179, %v790, 0
    %v799 = vsel %vm179, %v792, 0
    %v801 = vsel %vm179, %v794, 0
    %v803 = vsel %vm179, %v796, 0
    %805 = vmatpush.xpose.msra.mxu0 0.0
    %806 = vmatpush.xpose.msra.mxu0 0.0
    %807 = vmatpush.xpose.msra.mxu0 0.0
    %808 = vmatpush.xpose.msra.mxu0 0.0
    %809 = vmatpush.xpose.msra.mxu0 0.0
    %810 = vmatpush.xpose.msra.mxu0 0.0
    %811 = vmatpush.xpose.msra.mxu0 0.0
    %812 = vmatpush.xpose.msra.mxu0 0.0
    %813 = vmatpush.xpose.msra.mxu0 0.0
    %814 = vmatpush.xpose.msra.mxu0 0.0
    %815 = vmatpush.xpose.msra.mxu0 0.0
    %816 = vmatpush.xpose.msra.mxu0 0.0
    %817 = vmatpush.xpose.msra.mxu0 0.0
    %818 = vmatpush.xpose.msra.mxu0 0.0
    %819 = vmatpush.xpose.msra.mxu0 %v803
    %820 = vmatpush.xpose.msra.mxu0 %v801
    %821 = vmatmul.f32.gmra.mxu0 %v797
    %v822 = vpop.f32.mrf.mxu0
    %v823 = vadd.f32 0.0, %v822
    %824 = vmatmul.f32.gmra.mxu0 %v799
    %v825 = vpop.f32.mrf.mxu0
    %v826 = vadd.f32 0.0, %v825
    %827 = vdwg.mxu0
    %v828 = vmul.f32 %v784, 0.25
    %v829 = vmul.f32 %v787, 0.25
    %v830 = vmul.f32 %v823, 0.25
    %v831 = vmul.f32 %v826, 0.25
    %v832 = vsel %vm179, %v828, -inf
    %833 = vmax.xlane.f32.xlu0 %v832
    %v834 = vpop.xlane.xlu0 %833
    %v835 = vsel %vm179, %v829, -inf
    %836 = vmax.xlane.f32.xlu0 %v835
    %v837 = vpop.xlane.xlu0 %836
    %v838 = vsel %vm179, %v830, -inf
    %839 = vmax.xlane.f32.xlu0 %v838
    %v840 = vpop.xlane.xlu0 %839
    %v841 = vsel %vm179, %v831, -inf
    %842 = vmax.xlane.f32.xlu0 %v841
    %v843 = vpop.xlane.xlu0 %842
    %v844 = vsub.f32 %v828, %v834
    %v845 = vsub.f32 %v829, %v837
    %v846 = vsub.f32 %v830, %v840
    %v847 = vsub.f32 %v831, %v843
    %v848 = vmul.f32 %v844, 1.442695
    %v849 = vpow.pop %v848
    %v850 = vmul.f32 %v845, 1.442695
    %v851 = vpow.pop %v850
    %v852 = vmul.f32 %v846, 1.442695
    %v853 = vpow.pop %v852
    %v854 = vmul.f32 %v847, 1.442695
    %v855 = vpow.pop %v854
    %v856 = vsel %vm179, %v849, 0.0
    %857 = vadd.xlane.f32.xlu0 %v856
    %v858 = vpop.xlane.xlu0 %857
    %v859 = vsel %vm179, %v851, 0.0
    %860 = vadd.xlane.f32.xlu0 %v859
    %v861 = vpop.xlane.xlu0 %860
    %v862 = vsel %vm179, %v853, 0.0
    %863 = vadd.xlane.f32.xlu0 %v862
    %v864 = vpop.xlane.xlu0 %863
    %v865 = vsel %vm179, %v855, 0.0
    %866 = vadd.xlane.f32.xlu0 %v865
    %v867 = vpop.xlane.xlu0 %866
    %v868 = vrcp.pop %v858
    %v869 = vrcp.pop %v861
    %v870 = vrcp.pop %v864
    %v871 = vrcp.pop %v867
    %v872 = vmul.f32 %v849, %v868
    %v873 = vmul.f32 %v851, %v869
    %v874 = vmul.f32 %v853, %v870
    %v875 = vmul.f32 %v855, %v871
    %876 = vrot.lane.b32.xlu0 %v162, 80
    %v877 = vpop.permute.xlu0 %876
    %878 = vrot.lane.b32.xlu0 %v165, 80
    %v879 = vpop.permute.xlu0 %878
    %v883 = vsel %vm179, %v872, 0
    %v886 = vsel %vm179, %v873, 0
    %888 = vmatpush.msra.mxu0 0.0
    %889 = vmatpush.msra.mxu0 0.0
    %890 = vmatpush.msra.mxu0 0.0
    %891 = vmatpush.msra.mxu0 0.0
    %892 = vmatpush.msra.mxu0 0.0
    %893 = vmatpush.msra.mxu0 0.0
    %894 = vmatpush.msra.mxu0 0.0
    %895 = vmatpush.msra.mxu0 0.0
    %896 = vmatpush.msra.mxu0 0.0
    %897 = vmatpush.msra.mxu0 0.0
    %898 = vmatpush.msra.mxu0 0.0
    %899 = vmatpush.msra.mxu0 0.0
    %900 = vmatpush.msra.mxu0 0.0
    %901 = vmatpush.msra.mxu0 0.0
    %902 = vmatpush.msra.mxu0 %v879
    %903 = vmatpush.msra.mxu0 %v877
    %904 = vmatmul.f32.gmra.mxu0 %v883
    %v905 = vpop.f32.mrf.mxu0
    %v906 = vadd.f32 0.0, %v905
    %907 = vmatmul.f32.gmra.mxu0 %v886
    %v908 = vpop.f32.mrf.mxu0
    %v909 = vadd.f32 0.0, %v908
    %910 = vdwg.mxu0
    %911 = vrot.lane.b32.xlu0 %v168, 80
    %v912 = vpop.permute.xlu0 %911
    %913 = vrot.lane.b32.xlu0 %v171, 80
    %v914 = vpop.permute.xlu0 %913
    %v918 = vsel %vm179, %v874, 0
    %v921 = vsel %vm179, %v875, 0
    %923 = vmatpush.msra.mxu0 0.0
    %924 = vmatpush.msra.mxu0 0.0
    %925 = vmatpush.msra.mxu0 0.0
    %926 = vmatpush.msra.mxu0 0.0
    %927 = vmatpush.msra.mxu0 0.0
    %928 = vmatpush.msra.mxu0 0.0
    %929 = vmatpush.msra.mxu0 0.0
    %930 = vmatpush.msra.mxu0 0.0
    %931 = vmatpush.msra.mxu0 0.0
    %932 = vmatpush.msra.mxu0 0.0
    %933 = vmatpush.msra.mxu0 0.0
    %934 = vmatpush.msra.mxu0 0.0
    %935 = vmatpush.msra.mxu0 0.0
    %936 = vmatpush.msra.mxu0 0.0
    %937 = vmatpush.msra.mxu0 %v914
    %938 = vmatpush.msra.mxu0 %v912
    %939 = vmatmul.f32.gmra.mxu0 %v918
    %v940 = vpop.f32.mrf.mxu0
    %v941 = vadd.f32 0.0, %v940
    %942 = vmatmul.f32.gmra.mxu0 %v921
    %v943 = vpop.f32.mrf.mxu0
    %v944 = vadd.f32 0.0, %v943
    %945 = vdwg.mxu0
    %950 = vrot.lane.b32.xlu0 %v512, 16
    %v951 = vpop.permute.xlu0 %950
    %952 = vrot.lane.b32.xlu0 %v515, 16
    %v953 = vpop.permute.xlu0 %952
    %954 = vrot.lane.b32.xlu0 %v549, 16
    %v955 = vpop.permute.xlu0 %954
    %956 = vrot.lane.b32.xlu0 %v552, 16
    %v957 = vpop.permute.xlu0 %956
    %966 = vrot.lane.b32.xlu0 %v710, 32
    %v967 = vpop.permute.xlu0 %966
    %968 = vrot.lane.b32.xlu0 %v713, 32
    %v969 = vpop.permute.xlu0 %968
    %970 = vrot.lane.b32.xlu0 %v745, 32
    %v971 = vpop.permute.xlu0 %970
    %972 = vrot.lane.b32.xlu0 %v748, 32
    %v973 = vpop.permute.xlu0 %972
    %982 = vrot.lane.b32.xlu0 %v906, 48
    %v983 = vpop.permute.xlu0 %982
    %984 = vrot.lane.b32.xlu0 %v909, 48
    %v985 = vpop.permute.xlu0 %984
    %986 = vrot.lane.b32.xlu0 %v941, 48
    %v987 = vpop.permute.xlu0 %986
    %988 = vrot.lane.b32.xlu0 %v944, 48
    %v989 = vpop.permute.xlu0 %988
    %v994 = vsel %vm179, %v320, %v951
    %v995 = vsel %vm179, %v323, %v953
    %v996 = vsel %vm179, %v349, %v955
    %v997 = vsel %vm179, %v352, %v957
    %vm998 = vcmask 261120
    %v999 = vsel %vm998, %v994, %v967
    %v1000 = vsel %vm998, %v995, %v969
    %v1001 = vsel %vm998, %v996, %v971
    %v1002 = vsel %vm998, %v997, %v973
    %vm1003 = vcmask 392192
    %v1004 = vsel %vm1003, %v999, %v983
    %v1005 = vsel %vm1003, %v1000, %v985
    %v1006 = vsel %vm1003, %v1001, %v987
    %v1007 = vsel %vm1003, %v1002, %v989
    %v1008 = vld [vmem:[%s3] sm:$0xff]
    %v1009 = vld [vmem:[%s3 + $0x8] sm:$0xff]
    %v1010 = vld [vmem:[%s3 + $0x10] sm:$0xff]
    %v1011 = vld [vmem:[%s3 + $0x18] sm:$0xff]
    %v1012 = vld [vmem:[%s3 + $0x20] sm:$0xff]
    %v1013 = vld [vmem:[%s3 + $0x28] sm:$0xff]
    %v1014 = vld [vmem:[%s3 + $0x30] sm:$0xff]
    %v1015 = vld [vmem:[%s3 + $0x38] sm:$0xff]
    %v1016 = vld [vmem:[%s4] sm:$0x1]
    %v1018 = vperm.slane %v1016, 0
    %v1021 = vsel %vm102, %v1004, 0
    %v1024 = vsel %vm102, %v1005, 0
    %v1027 = vsel %vm102, %v1006, 0
    %v1030 = vsel %vm102, %v1007, 0
    %1032 = vmatpush.msra.mxu0 0.0
    %1033 = vmatpush.msra.mxu0 0.0
    %1034 = vmatpush.msra.mxu0 0.0
    %1035 = vmatpush.msra.mxu0 0.0
    %1036 = vmatpush.msra.mxu0 0.0
    %1037 = vmatpush.msra.mxu0 0.0
    %1038 = vmatpush.msra.mxu0 0.0
    %1039 = vmatpush.msra.mxu0 0.0
    %1040 = vmatpush.msra.mxu0 %v1015
    %1041 = vmatpush.msra.mxu0 %v1014
    %1042 = vmatpush.msra.mxu0 %v1013
    %1043 = vmatpush.msra.mxu0 %v1012
    %1044 = vmatpush.msra.mxu0 %v1011
    %1045 = vmatpush.msra.mxu0 %v1010
    %1046 = vmatpush.msra.mxu0 %v1009
    %1047 = vmatpush.msra.mxu0 %v1008
    %1048 = vmatmul.f32.gmra.mxu0 %v1021
    %v1049 = vpop.f32.mrf.mxu0
    %v1050 = vadd.f32 %v1018, %v1049
    %1051 = vmatmul.f32.gmra.mxu0 %v1024
    %v1052 = vpop.f32.mrf.mxu0
    %v1053 = vadd.f32 %v1018, %v1052
    %1054 = vmatmul.f32.gmra.mxu0 %v1027
    %v1055 = vpop.f32.mrf.mxu0
    %v1056 = vadd.f32 %v1018, %v1055
    %1057 = vmatmul.f32.gmra.mxu0 %v1030
    %v1058 = vpop.f32.mrf.mxu0
    %v1059 = vadd.f32 %v1018, %v1058
    %1060 = vdwg.mxu0
    %v1061 = vadd.f32 %v76, %v1050
    %v1062 = vadd.f32 %v77, %v1053
    %v1063 = vadd.f32 %v78, %v1056
    %v1064 = vadd.f32 %v79, %v1059
    %v1065 = vld [vmem:[%s5] sm:$0x1]
    %v1066 = vld [vmem:[%s6] sm:$0x1]
    %v1067 = vsel %vm102, %v1061, 0.0
    %1068 = vadd.xlane.f32.xlu0 %v1067
    %v1069 = vpop.xlane.xlu0 %1068
    %v1070 = vsel %vm102, %v1062, 0.0
    %1071 = vadd.xlane.f32.xlu0 %v1070
    %v1072 = vpop.xlane.xlu0 %1071
    %v1073 = vsel %vm102, %v1063, 0.0
    %1074 = vadd.xlane.f32.xlu0 %v1073
    %v1075 = vpop.xlane.xlu0 %1074
    %v1076 = vsel %vm102, %v1064, 0.0
    %1077 = vadd.xlane.f32.xlu0 %v1076
    %v1078 = vpop.xlane.xlu0 %1077
    %v1079 = vrcp.pop 64.0
    %v1080 = vmul.f32 64.0, %v1079
    %v1081 = vsub.f32 1.0, %v1080
    %v1082 = vmul.f32 %v1079, %v1081
    %v1083 = vadd.f32 %v1079, %v1082
    %vm1084 = vweird.f32 %v1079
    %v1085 = vsel %vm1084, %v1079, %v1083
    %v1086 = vmul.f32 %v1069, %v1085
    %v1087 = vmul.f32 %v1072, %v1085
    %v1088 = vmul.f32 %v1075, %v1085
    %v1089 = vmul.f32 %v1078, %v1085
    %v1090 = vsub.f32 %v1061, %v1086
    %v1091 = vsub.f32 %v1062, %v1087
    %v1092 = vsub.f32 %v1063, %v1088
    %v1093 = vsub.f32 %v1064, %v1089
    %v1094 = vmul.f32 %v1090, %v1090
    %v1095 = vmul.f32 %v1091, %v1091
    %v1096 = vmul.f32 %v1092, %v1092
    %v1097 = vmul.f32 %v1093, %v1093
    %v1098 = vsel %vm102, %v1094, 0.0
    %1099 = vadd.xlane.f32.xlu0 %v1098
    %v1100 = vpop.xlane.xlu0 %1099
    %v1101 = vsel %vm102, %v1095, 0.0
    %1102 = vadd.xlane.f32.xlu0 %v1101
    %v1103 = vpop.xlane.xlu0 %1102
    %v1104 = vsel %vm102, %v1096, 0.0
    %1105 = vadd.xlane.f32.xlu0 %v1104
    %v1106 = vpop.xlane.xlu0 %1105
    %v1107 = vsel %vm102, %v1097, 0.0
    %1108 = vadd.xlane.f32.xlu0 %v1107
    %v1109 = vpop.xlane.xlu0 %1108
    %v1110 = vmul.f32 %v1100, %v1085
    %v1111 = vmul.f32 %v1103, %v1085
    %v1112 = vmul.f32 %v1106, %v1085
    %v1113 = vmul.f32 %v1109, %v1085
    %v1114 = vadd.f32 %v1110, 1e-05
    %v1115 = vadd.f32 %v1111, 1e-05
    %v1116 = vadd.f32 %v1112, 1e-05
    %v1117 = vadd.f32 %v1113, 1e-05
    %v1118 = vrsqrt.pop %v1114
    %v1119 = vmul.f32 %v1118, %v1114
    %v1120 = vmul.f32 %v1119, %v1118
    %v1121 = vmul.f32 0.5, %v1120
    %v1122 = vsub.f32 1.5, %v1121
    %v1123 = vmul.f32 %v1118, %v1122
    %vm1124 = vweird.f32 %v1114
    %vm1125 = vweird.f32 %v1118
    %vm1126 = vmor %vm1124, %vm1125
    %v1127 = vsel %vm1126, %v1118, %v1123
    %v1128 = vrsqrt.pop %v1115
    %v1129 = vmul.f32 %v1128, %v1115
    %v1130 = vmul.f32 %v1129, %v1128
    %v1131 = vmul.f32 0.5, %v1130
    %v1132 = vsub.f32 1.5, %v1131
    %v1133 = vmul.f32 %v1128, %v1132
    %vm1134 = vweird.f32 %v1115
    %vm1135 = vweird.f32 %v1128
    %vm1136 = vmor %vm1134, %vm1135
    %v1137 = vsel %vm1136, %v1128, %v1133
    %v1138 = vrsqrt.pop %v1116
    %v1139 = vmul.f32 %v1138, %v1116
    %v1140 = vmul.f32 %v1139, %v1138
    %v1141 = vmul.f32 0.5, %v1140
    %v1142 = vsub.f32 1.5, %v1141
    %v1143 = vmul.f32 %v1138, %v1142
    %vm1144 = vweird.f32 %v1116
    %vm1145 = vweird.f32 %v1138
    %vm1146 = vmor %vm1144, %vm1145
    %v1147 = vsel %vm1146, %v1138, %v1143
    %v1148 = vrsqrt.pop %v1117
    %v1149 = vmul.f32 %v1148, %v1117
    %v1150 = vmul.f32 %v1149, %v1148
    %v1151 = vmul.f32 0.5, %v1150
    %v1152 = vsub.f32 1.5, %v1151
    %v1153 = vmul.f32 %v1148, %v1152
    %vm1154 = vweird.f32 %v1117
    %vm1155 = vweird.f32 %v1148
    %vm1156 = vmor %vm1154, %vm1155
    %v1157 = vsel %vm1156, %v1148, %v1153
    %v1158 = vmul.f32 %v1090, %v1127
    %v1159 = vmul.f32 %v1091, %v1137
    %v1160 = vmul.f32 %v1092, %v1147
    %v1161 = vmul.f32 %v1093, %v1157
    %v1163 = vperm.slane %v1065, 0
    %v1165 = vmul.f32 %v1158, %v1163
    %v1166 = vmul.f32 %v1159, %v1163
    %v1167 = vmul.f32 %v1160, %v1163
    %v1168 = vmul.f32 %v1161, %v1163
    %v1170 = vperm.slane %v1066, 0
    %v1172 = vadd.f32 %v1165, %v1170
    %v1173 = vadd.f32 %v1166, %v1170
    %v1174 = vadd.f32 %v1167, %v1170
    %v1175 = vadd.f32 %v1168, %v1170
    %v1176 = vld [vmem:[#allocation4] sm:$0xff]
    %v1177 = vld [vmem:[#allocation4 + $0x8] sm:$0xff]
    %v1178 = vld [vmem:[#allocation4 + $0x10] sm:$0xff]
    %v1179 = vld [vmem:[#allocation4 + $0x18] sm:$0xff]
    %v1180 = vld [vmem:[#allocation4 + $0x20] sm:$0xff]
    %v1181 = vld [vmem:[#allocation4 + $0x28] sm:$0xff]
    %v1182 = vld [vmem:[#allocation4 + $0x30] sm:$0xff]
    %v1183 = vld [vmem:[#allocation4 + $0x38] sm:$0xff]
    %v1184 = vld [vmem:[#allocation4 + $0x40] sm:$0xff]
    %v1185 = vld [vmem:[#allocation4 + $0x48] sm:$0xff]
    %v1186 = vld [vmem:[#allocation4 + $0x50] sm:$0xff]
    %v1187 = vld [vmem:[#allocation4 + $0x58] sm:$0xff]
    %v1188 = vld [vmem:[#allocation4 + $0x60] sm:$0xff]
    %v1189 = vld [vmem:[#allocation4 + $0x68] sm:$0xff]
    %v1190 = vld [vmem:[#allocation4 + $0x70] sm:$0xff]
    %v1191 = vld [vmem:[#allocation4 + $0x78] sm:$0xff]
    %v1192 = vld [vmem:[%s8] sm:$0x3]
    %v1194 = vperm.slane %v1192, 0
    %v1195 = vperm.slane %v1192, 1
    %v1199 = vsel %vm102, %v1172, 0
    %v1202 = vsel %vm102, %v1173, 0
    %v1205 = vsel %vm102, %v1174, 0
    %v1208 = vsel %vm102, %v1175, 0
    %1210 = vmatpush.msra.mxu0 0.0
    %1211 = vmatpush.msra.mxu0 0.0
    %1212 = vmatpush.msra.mxu0 0.0
    %1213 = vmatpush.msra.mxu0 0.0
    %1214 = vmatpush.msra.mxu0 0.0
    %1215 = vmatpush.msra.mxu0 0.0
    %1216 = vmatpush.msra.mxu0 0.0
    %1217 = vmatpush.msra.mxu0 0.0
    %1218 = vmatpush.msra.mxu0 %v1190
    %1219 = vmatpush.msra.mxu0 %v1188
    %1220 = vmatpush.msra.mxu0 %v1186
    %1221 = vmatpush.msra.mxu0 %v1184
    %1222 = vmatpush.msra.mxu0 %v1182
    %1223 = vmatpush.msra.mxu0 %v1180
    %1224 = vmatpush.msra.mxu0 %v1178
    %1225 = vmatpush.msra.mxu0 %v1176
    %1226 = vmatmul.f32.gmra.mxu0 %v1199
    %v1227 = vpop.f32.mrf.mxu0
    %v1228 = vadd.f32 %v1194, %v1227
    %1229 = vmatmul.f32.gmra.mxu0 %v1202
    %v1230 = vpop.f32.mrf.mxu0
    %v1231 = vadd.f32 %v1194, %v1230
    %1232 = vmatmul.f32.gmra.mxu0 %v1205
    %v1233 = vpop.f32.mrf.mxu0
    %v1234 = vadd.f32 %v1194, %v1233
    %1235 = vmatmul.f32.gmra.mxu0 %v1208
    %v1236 = vpop.f32.mrf.mxu0
    %v1237 = vadd.f32 %v1194, %v1236
    %1238 = vdwg.mxu0
    %1239 = vmatpush.msra.mxu0 0.0
    %1240 = vmatpush.msra.mxu0 0.0
    %1241 = vmatpush.msra.mxu0 0.0
    %1242 = vmatpush.msra.mxu0 0.0
    %1243 = vmatpush.msra.mxu0 0.0
    %1244 = vmatpush.msra.mxu0 0.0
    %1245 = vmatpush.msra.mxu0 0.0
    %1246 = vmatpush.msra.mxu0 0.0
    %1247 = vmatpush.msra.mxu0 %v1191
    %1248 = vmatpush.msra.mxu0 %v1189
    %1249 = vmatpush.msra.mxu0 %v1187
    %1250 = vmatpush.msra.mxu0 %v1185
    %1251 = vmatpush.msra.mxu0 %v1183
    %1252 = vmatpush.msra.mxu0 %v1181
    %1253 = vmatpush.msra.mxu0 %v1179
    %1254 = vmatpush.msra.mxu0 %v1177
    %1255 = vmatmul.f32.gmra.mxu0 %v1199
    %v1256 = vpop.f32.mrf.mxu0
    %v1257 = vadd.f32 %v1195, %v1256
    %1258 = vmatmul.f32.gmra.mxu0 %v1202
    %v1259 = vpop.f32.mrf.mxu0
    %v1260 = vadd.f32 %v1195, %v1259
    %1261 = vmatmul.f32.gmra.mxu0 %v1205
    %v1262 = vpop.f32.mrf.mxu0
    %v1263 = vadd.f32 %v1195, %v1262
    %1264 = vmatmul.f32.gmra.mxu0 %v1208
    %v1265 = vpop.f32.mrf.mxu0
    %v1266 = vadd.f32 %v1195, %v1265
    %1267 = vdwg.mxu0
    %v1268 = vmax.f32 %v1228, 0.0
    %v1269 = vmax.f32 %v1257, 0.0
    %v1270 = vmax.f32 %v1231, 0.0
    %v1271 = vmax.f32 %v1260, 0.0
    %v1272 = vmax.f32 %v1234, 0.0
    %v1273 = vmax.f32 %v1263, 0.0
    %v1274 = vmax.f32 %v1237, 0.0
    %v1275 = vmax.f32 %v1266, 0.0
    %v1276 = vld [vmem:[%s9] sm:$0xff]
    %v1277 = vld [vmem:[%s9 + $0x8] sm:$0xff]
    %v1278 = vld [vmem:[%s9 + $0x10] sm:$0xff]
    %v1279 = vld [vmem:[%s9 + $0x18] sm:$0xff]
    %v1280 = vld [vmem:[%s9 + $0x20] sm:$0xff]
    %v1281 = vld [vmem:[%s9 + $0x28] sm:$0xff]
    %v1282 = vld [vmem:[%s9 + $0x30] sm:$0xff]
    %v1283 = vld [vmem:[%s9 + $0x38] sm:$0xff]
    %v1284 = vld [vmem:[%s9 + $0x40] sm:$0xff]
    %v1285 = vld [vmem:[%s9 + $0x48] sm:$0xff]
    %v1286 = vld [vmem:[%s9 + $0x50] sm:$0xff]
    %v1287 = vld [vmem:[%s9 + $0x58] sm:$0xff]
    %v1288 = vld [vmem:[%s9 + $0x60] sm:$0xff]
    %v1289 = vld [vmem:[%s9 + $0x68] sm:$0xff]
    %v1290 = vld [vmem:[%s9 + $0x70] sm:$0xff]
    %v1291 = vld [vmem:[%s9 + $0x78] sm:$0xff]
    %v1292 = vld [vmem:[%s9 + $0x80] sm:$0xff]
    %v1293 = vld [vmem:[%s9 + $0x88] sm:$0xff]
    %v1294 = vld [vmem:[%s9 + $0x90] sm:$0xff]
    %v1295 = vld [vmem:[%s9 + $0x98] sm:$0xff]
    %v1296 = vld [vmem:[%s9 + $0xa0] sm:$0xff]
    %v1297 = vld [vmem:[%s9 + $0xa8] sm:$0xff]
    %v1298 = vld [vmem:[%s9 + $0xb0] sm:$0xff]
    %v1299 = vld [vmem:[%s9 + $0xb8] sm:$0xff]
    %v1300 = vld [vmem:[%s9 + $0xc0] sm:$0xff]
    %v1301 = vld [vmem:[%s9 + $0xc8] sm:$0xff]
    %v1302 = vld [vmem:[%s9 + $0xd0] sm:$0xff]
    %v1303 = vld [vmem:[%s9 + $0xd8] sm:$0xff]
    %v1304 = vld [vmem:[%s9 + $0xe0] sm:$0xff]
    %v1305 = vld [vmem:[%s9 + $0xe8] sm:$0xff]
    %v1306 = vld [vmem:[%s9 + $0xf0] sm:$0xff]
    %v1307 = vld [vmem:[%s9 + $0xf8] sm:$0xff]
    %v1308 = vld [vmem:[%s10] sm:$0x1]
    %v1310 = vperm.slane %v1308, 0
    %1312 = vmatpush.msra.mxu0 %v1291
    %1313 = vmatpush.msra.mxu0 %v1290
    %1314 = vmatpush.msra.mxu0 %v1289
    %1315 = vmatpush.msra.mxu0 %v1288
    %1316 = vmatpush.msra.mxu0 %v1287
    %1317 = vmatpush.msra.mxu0 %v1286
    %1318 = vmatpush.msra.mxu0 %v1285
    %1319 = vmatpush.msra.mxu0 %v1284
    %1320 = vmatpush.msra.mxu0 %v1283
    %1321 = vmatpush.msra.mxu0 %v1282
    %1322 = vmatpush.msra.mxu0 %v1281
    %1323 = vmatpush.msra.mxu0 %v1280
    %1324 = vmatpush.msra.mxu0 %v1279
    %1325 = vmatpush.msra.mxu0 %v1278
    %1326 = vmatpush.msra.mxu0 %v1277
    %1327 = vmatpush.msra.mxu0 %v1276
    %1328 = vmatmul.f32.gmra.mxu0 %v1268
    %v1329 = vpop.f32.mrf.mxu0
    %v1330 = vadd.f32 %v1310, %v1329
    %1331 = vmatmul.f32.gmra.mxu0 %v1270
    %v1332 = vpop.f32.mrf.mxu0
    %v1333 = vadd.f32 %v1310, %v1332
    %1334 = vmatmul.f32.gmra.mxu0 %v1272
    %v1335 = vpop.f32.mrf.mxu0
    %v1336 = vadd.f32 %v1310, %v1335
    %1337 = vmatmul.f32.gmra.mxu0 %v1274
    %v1338 = vpop.f32.mrf.mxu0
    %v1339 = vadd.f32 %v1310, %v1338
    %1340 = vdwg.mxu0
    %1341 = vmatpush.msra.mxu0 %v1307
    %1342 = vmatpush.msra.mxu0 %v1306
    %1343 = vmatpush.msra.mxu0 %v1305
    %1344 = vmatpush.msra.mxu0 %v1304
    %1345 = vmatpush.msra.mxu0 %v1303
    %1346 = vmatpush.msra.mxu0 %v1302
    %1347 = vmatpush.msra.mxu0 %v1301
    %1348 = vmatpush.msra.mxu0 %v1300
    %1349 = vmatpush.msra.mxu0 %v1299
    %1350 = vmatpush.msra.mxu0 %v1298
    %1351 = vmatpush.msra.mxu0 %v1297
    %1352 = vmatpush.msra.mxu0 %v1296
    %1353 = vmatpush.msra.mxu0 %v1295
    %1354 = vmatpush.msra.mxu0 %v1294
    %1355 = vmatpush.msra.mxu0 %v1293
    %1356 = vmatpush.msra.mxu0 %v1292
    %1357 = vmatmul.f32.gmra.mxu0 %v1269
    %v1358 = vpop.f32.mrf.mxu0
    %v1359 = vadd.f32 %v1330, %v1358
    %1360 = vmatmul.f32.gmra.mxu0 %v1271
    %v1361 = vpop.f32.mrf.mxu0
    %v1362 = vadd.f32 %v1333, %v1361
    %1363 = vmatmul.f32.gmra.mxu0 %v1273
    %v1364 = vpop.f32.mrf.mxu0
    %v1365 = vadd.f32 %v1336, %v1364
    %1366 = vmatmul.f32.gmra.mxu0 %v1275
    %v1367 = vpop.f32.mrf.mxu0
    %v1368 = vadd.f32 %v1339, %v1367
    %1369 = vdwg.mxu0
    %v1370 = vadd.f32 %v1172, %v1359
    %v1371 = vadd.f32 %v1173, %v1362
    %v1372 = vadd.f32 %v1174, %v1365
    %v1373 = vadd.f32 %v1175, %v1368
    %v1374 = vld [vmem:[%s11] sm:$0x1]
    %v1375 = vld [vmem:[%s12] sm:$0x1]
    %v1376 = vsel %vm102, %v1370, 0.0
    %1377 = vadd.xlane.f32.xlu0 %v1376
    %v1378 = vpop.xlane.xlu0 %1377
    %v1379 = vsel %vm102, %v1371, 0.0
    %1380 = vadd.xlane.f32.xlu0 %v1379
    %v1381 = vpop.xlane.xlu0 %1380
    %v1382 = vsel %vm102, %v1372, 0.0
    %1383 = vadd.xlane.f32.xlu0 %v1382
    %v1384 = vpop.xlane.xlu0 %1383
    %v1385 = vsel %vm102, %v1373, 0.0
    %1386 = vadd.xlane.f32.xlu0 %v1385
    %v1387 = vpop.xlane.xlu0 %1386
    %v1388 = vmul.f32 %v1378, %v1085
    %v1389 = vmul.f32 %v1381, %v1085
    %v1390 = vmul.f32 %v1384, %v1085
    %v1391 = vmul.f32 %v1387, %v1085
    %v1392 = vsub.f32 %v1370, %v1388
    %v1393 = vsub.f32 %v1371, %v1389
    %v1394 = vsub.f32 %v1372, %v1390
    %v1395 = vsub.f32 %v1373, %v1391
    %v1396 = vmul.f32 %v1392, %v1392
    %v1397 = vmul.f32 %v1393, %v1393
    %v1398 = vmul.f32 %v1394, %v1394
    %v1399 = vmul.f32 %v1395, %v1395
    %v1400 = vsel %vm102, %v1396, 0.0
    %1401 = vadd.xlane.f32.xlu0 %v1400
    %v1402 = vpop.xlane.xlu0 %1401
    %v1403 = vsel %vm102, %v1397, 0.0
    %1404 = vadd.xlane.f32.xlu0 %v1403
    %v1405 = vpop.xlane.xlu0 %1404
    %v1406 = vsel %vm102, %v1398, 0.0
    %1407 = vadd.xlane.f32.xlu0 %v1406
    %v1408 = vpop.xlane.xlu0 %1407
    %v1409 = vsel %vm102, %v1399, 0.0
    %1410 = vadd.xlane.f32.xlu0 %v1409
    %v1411 = vpop.xlane.xlu0 %1410
    %v1412 = vmul.f32 %v1402, %v1085
    %v1413 = vmul.f32 %v1405, %v1085
    %v1414 = vmul.f32 %v1408, %v1085
    %v1415 = vmul.f32 %v1411, %v1085
    %v1416 = vadd.f32 %v1412, 1e-05
    %v1417 = vadd.f32 %v1413, 1e-05
    %v1418 = vadd.f32 %v1414, 1e-05
    %v1419 = vadd.f32 %v1415, 1e-05
    %v1420 = vrsqrt.pop %v1416
    %v1421 = vmul.f32 %v1420, %v1416
    %v1422 = vmul.f32 %v1421, %v1420
    %v1423 = vmul.f32 0.5, %v1422
    %v1424 = vsub.f32 1.5, %v1423
    %v1425 = vmul.f32 %v1420, %v1424
    %vm1426 = vweird.f32 %v1416
    %vm1427 = vweird.f32 %v1420
    %vm1428 = vmor %vm1426, %vm1427
    %v1429 = vsel %vm1428, %v1420, %v1425
    %v1430 = vrsqrt.pop %v1417
    %v1431 = vmul.f32 %v1430, %v1417
    %v1432 = vmul.f32 %v1431, %v1430
    %v1433 = vmul.f32 0.5, %v1432
    %v1434 = vsub.f32 1.5, %v1433
    %v1435 = vmul.f32 %v1430, %v1434
    %vm1436 = vweird.f32 %v1417
    %vm1437 = vweird.f32 %v1430
    %vm1438 = vmor %vm1436, %vm1437
    %v1439 = vsel %vm1438, %v1430, %v1435
    %v1440 = vrsqrt.pop %v1418
    %v1441 = vmul.f32 %v1440, %v1418
    %v1442 = vmul.f32 %v1441, %v1440
    %v1443 = vmul.f32 0.5, %v1442
    %v1444 = vsub.f32 1.5, %v1443
    %v1445 = vmul.f32 %v1440, %v1444
    %vm1446 = vweird.f32 %v1418
    %vm1447 = vweird.f32 %v1440
    %vm1448 = vmor %vm1446, %vm1447
    %v1449 = vsel %vm1448, %v1440, %v1445
    %v1450 = vrsqrt.pop %v1419
    %v1451 = vmul.f32 %v1450, %v1419
    %v1452 = vmul.f32 %v1451, %v1450
    %v1453 = vmul.f32 0.5, %v1452
    %v1454 = vsub.f32 1.5, %v1453
    %v1455 = vmul.f32 %v1450, %v1454
    %vm1456 = vweird.f32 %v1419
    %vm1457 = vweird.f32 %v1450
    %vm1458 = vmor %vm1456, %vm1457
    %v1459 = vsel %vm1458, %v1450, %v1455
    %v1460 = vmul.f32 %v1392, %v1429
    %v1461 = vmul.f32 %v1393, %v1439
    %v1462 = vmul.f32 %v1394, %v1449
    %v1463 = vmul.f32 %v1395, %v1459
    %v1465 = vperm.slane %v1374, 0
    %v1467 = vmul.f32 %v1460, %v1465
    %v1468 = vmul.f32 %v1461, %v1465
    %v1469 = vmul.f32 %v1462, %v1465
    %v1470 = vmul.f32 %v1463, %v1465
    %v1472 = vperm.slane %v1375, 0
    %v1474 = vadd.f32 %v1467, %v1472
    %v1475 = vadd.f32 %v1468, %v1472
    %v1476 = vadd.f32 %v1469, %v1472
    %v1477 = vadd.f32 %v1470, %v1472
    %1478 = vst.msk [vmem:[%s13] sm:$0xff] %vm102, %v1474
    %1479 = vst.msk [vmem:[%s13 + $0x8] sm:$0xff] %vm102, %v1475
    %1480 = vst.msk [vmem:[%s13 + $0x10] sm:$0xff] %vm102, %v1476
    %1481 = vst.msk [vmem:[%s13 + $0x18] sm:$0xff] %vm102, %v1477
    // Predicated region
    $region62: #{crypto_stst_forward.9} parent=1 // pred_check
      _
    $region63: #{crypto_stst_forward.9} parent=1 // pred_check_branch
      %1483 = sbr.rel (0) target = $region65
    $region64: #{crypto_stst_forward.9} parent=1 // pred_region
      _
    $region65: #{crypto_stst_forward.9} parent=1 // pred_fallthru
      _
    // Predicated region
    $region66: #{crypto_stst_forward.9} parent=1 // pred_check
      _
    $region67: #{crypto_stst_forward.9} parent=1 // pred_check_branch
      %1485 = sbr.rel (0) target = $region69
    $region68: #{crypto_stst_forward.9} parent=1 // pred_region
      _
    $region69: #{crypto_stst_forward.9} parent=1 // pred_fallthru
      _
    %1486 = vsyncpa [#allocation3], 1
    %1487 = vsyncpa [#allocation5], 1

// kernel: crypto_stst_forward.12
$region0: #{crypto_stst_forward.12}
  #allocation0 [shape = 'u32[]', space=smem, size = 0x4, offset = 0x4, fixed_abs, tag = 'smem constant byte address 0x4 - core index']
  #allocation1 [shape = 'u32[72,128]{1,0:T(1,128)}', space=vmem, size = 0x9000, scoped, tag = 'internal scratch']
  #allocation2 [shape = 'f32[2,64]{1,0:T(2,128)}', space=vmem, size = 0x400, scoped, tag = 'scratch operand']
  #allocation3 [shape = 'f32[2,64]{1,0:T(2,128)}', space=vmem, size = 0x400, scoped, tag = 'scratch operand']
  #allocation4 [shape = 'f32[16,2,256]{2,1,0:T(2,128)}', space=vmem, size = 0x8000, scoped, tag = 'scratch operand']
  %s0 = inlined_call_operand.vmem [shape: f32[16,2,64], index: 0, kind: input, shape index: {}]
  %s1 = inlined_call_operand.vmem [shape: f32[2,64,256], index: 1, kind: input, shape index: {}]
  %s2 = inlined_call_operand.vmem [shape: f32[2,64,256], index: 2, kind: input, shape index: {}]
  %s3 = inlined_call_operand.vmem [shape: f32[2,1,256], index: 3, kind: input, shape index: {}]
  %s4 = inlined_call_operand.vmem [shape: f32[2,16,2,64], index: 4, kind: output, shape index: {}]
  %s5 = sld [smem:[#allocation0]]
  $region56: #{crypto_stst_forward.12} parent=0
    _
  %s7 = ssub.s32 1, %s5
  %s8 = scalar_select 0, %s7, %s5
  loop: start=0, step=1, limit=4
  $region2: #{crypto_stst_forward.12} parent=0 // loop_pre_header
    _
  $region3: #{crypto_stst_forward.12} parent=0 // loop_header
    %s10 = sphi 0, %s14
    %p11 = scmp.ge.s32.totalorder %s10, 4
    %s18 = sphi 0, %s18
    %s20 = sphi 0, %s18
    %s21 = sphi 0, %s20
    %s35 = sphi 0, %s21
    %s41 = sphi 0, %s43
    %s44 = sphi 0, %s41
    %s45 = sphi 0, %s44
    %s61 = sphi 0, %s45
    %s67 = sphi 0, %s69
    %s70 = sphi 0, %s67
    %s71 = sphi 0, %s70
    %s87 = sphi 0, %s71
    %s93 = sphi 0, %s95
    %s96 = sphi 0, %s93
    %s97 = sphi 0, %s96
    %s113 = sphi 0, %s97
    %s119 = sphi 0, %s121
    %s122 = sphi 0, %s119
    %s123 = sphi 0, %s122
    %s139 = sphi 0, %s123
  $region4: #{crypto_stst_forward.12} parent=0 // loop_header_branch
    %13 = sbr.rel (%p11) target = $region8
  $region5: #{crypto_stst_forward.12} parent=0 // loop_body
    %s15 = ssub.s32 %s10, 1
    %s16 = ssub.s32 %s10, 2
    %s17 = sadd.s32 %s10, 1
    %s19 = sadd.s32 %s18, 1
    %p22 = scmp.eq.s32.totalorder %s10, 1
    %p23 = scmp.ne.s32.totalorder %s18, %s20
    %p24 = scmp.eq.s32.totalorder %s10, 0
    %p25 = por %p23, %p24
    %p26 = scmp.ne.s32.totalorder %s18, %s20
    %p27 = scmp.eq.s32.totalorder %s15, 1
    %p28 = por %p26, %p27
    %p29 = scmp.ne.s32.totalorder %s20, %s21
    %p30 = scmp.eq.s32.totalorder %s15, 0
    %p31 = por %p29, %p30
    %p32 = scmp.ne.s32.totalorder %s20, %s21
    %p33 = scmp.eq.s32.totalorder %s16, 1
    %p34 = por %p32, %p33
    %p36 = scmp.ne.s32.totalorder %s21, %s35
    %p37 = scmp.eq.s32.totalorder %s16, 0
    %p38 = por %p36, %p37
    %s39 = ssub.s32 %s10, %s17
    %p40 = scmp.eq.s32.totalorder %s39, 0
    %s42 = sadd.s32 %s41, 1
    %s43 = scalar_select %p40, %s41, %s42
    %p46 = pneg %p40
    %p47 = scmp.eq.s32.totalorder %s10, 1
    %p48 = por %p46, %p47
    %p49 = scmp.ne.s32.totalorder %s41, %s44
    %p50 = scmp.eq.s32.totalorder %s10, 0
    %p51 = por %p49, %p50
    %p52 = scmp.ne.s32.totalorder %s41, %s44
    %p53 = scmp.eq.s32.totalorder %s15, 1
    %p54 = por %p52, %p53
    %p55 = scmp.ne.s32.totalorder %s44, %s45
    %p56 = scmp.eq.s32.totalorder %s15, 0
    %p57 = por %p55, %p56
    %p58 = scmp.ne.s32.totalorder %s44, %s45
    %p59 = scmp.eq.s32.totalorder %s16, 1
    %p60 = por %p58, %p59
    %p62 = scmp.ne.s32.totalorder %s45, %s61
    %p63 = scmp.eq.s32.totalorder %s16, 0
    %p64 = por %p62, %p63
    %s65 = ssub.s32 %s10, %s17
    %p66 = scmp.eq.s32.totalorder %s65, 0
    %s68 = sadd.s32 %s67, 1
    %s69 = scalar_select %p66, %s67, %s68
    %p72 = pneg %p66
    %p73 = scmp.eq.s32.totalorder %s10, 1
    %p74 = por %p72, %p73
    %p75 = scmp.ne.s32.totalorder %s67, %s70
    %p76 = scmp.eq.s32.totalorder %s10, 0
    %p77 = por %p75, %p76
    %p78 = scmp.ne.s32.totalorder %s67, %s70
    %p79 = scmp.eq.s32.totalorder %s15, 1
    %p80 = por %p78, %p79
    %p81 = scmp.ne.s32.totalorder %s70, %s71
    %p82 = scmp.eq.s32.totalorder %s15, 0
    %p83 = por %p81, %p82
    %p84 = scmp.ne.s32.totalorder %s70, %s71
    %p85 = scmp.eq.s32.totalorder %s16, 1
    %p86 = por %p84, %p85
    %p88 = scmp.ne.s32.totalorder %s71, %s87
    %p89 = scmp.eq.s32.totalorder %s16, 0
    %p90 = por %p88, %p89
    %s91 = ssub.s32 %s10, %s17
    %p92 = scmp.eq.s32.totalorder %s91, 0
    %s94 = sadd.s32 %s93, 1
    %s95 = scalar_select %p92, %s93, %s94
    %p98 = pneg %p92
    %p99 = scmp.eq.s32.totalorder %s10, 1
    %p100 = por %p98, %p99
    %p101 = scmp.ne.s32.totalorder %s93, %s96
    %p102 = scmp.eq.s32.totalorder %s10, 0
    %p103 = por %p101, %p102
    %p104 = scmp.ne.s32.totalorder %s93, %s96
    %p105 = scmp.eq.s32.totalorder %s15, 1
    %p106 = por %p104, %p105
    %p107 = scmp.ne.s32.totalorder %s96, %s97
    %p108 = scmp.eq.s32.totalorder %s15, 0
    %p109 = por %p107, %p108
    %p110 = scmp.ne.s32.totalorder %s96, %s97
    %p111 = scmp.eq.s32.totalorder %s16, 1
    %p112 = por %p110, %p111
    %p114 = scmp.ne.s32.totalorder %s97, %s113
    %p115 = scmp.eq.s32.totalorder %s16, 0
    %p116 = por %p114, %p115
    %s117 = ssub.s32 %s10, %s17
    %p118 = scmp.eq.s32.totalorder %s117, 0
    %s120 = sadd.s32 %s119, 1
    %s121 = scalar_select %p118, %s119, %s120
    %p124 = pneg %p118
    %p125 = scmp.eq.s32.totalorder %s10, 1
    %p126 = por %p124, %p125
    %p127 = scmp.ne.s32.totalorder %s119, %s122
    %p128 = scmp.eq.s32.totalorder %s10, 0
    %p129 = por %p127, %p128
    %p130 = scmp.ne.s32.totalorder %s119, %s122
    %p131 = scmp.eq.s32.totalorder %s15, 1
    %p132 = por %p130, %p131
    %p133 = scmp.ne.s32.totalorder %s122, %s123
    %p134 = scmp.eq.s32.totalorder %s15, 0
    %p135 = por %p133, %p134
    %p136 = scmp.ne.s32.totalorder %s122, %s123
    %p137 = scmp.eq.s32.totalorder %s16, 1
    %p138 = por %p136, %p137
    %p140 = scmp.ne.s32.totalorder %s123, %s139
    %p141 = scmp.eq.s32.totalorder %s16, 0
    %p142 = por %p140, %p141
    %p143 = scmp.le.s32.totalorder 1, %s10
    %p144 = scmp.lt.s32.totalorder %s10, 3
    %p145 = pnand %p143, %p144
    %p146 = pneg %p145
    // Predicated region
    $region9: #{crypto_stst_forward.12} parent=5 // pred_check
      _
    $region10: #{crypto_stst_forward.12} parent=5 // pred_check_branch
      %148 = sbr.rel (%p145) target = $region12
    $region11: #{crypto_stst_forward.12} parent=5 // pred_region
      %s149 = ssub.s32 %s10, 1
      // Predicated region
      $region13: #{crypto_stst_forward.12} parent=11 // pred_check
        %p150 = pneg %p31
      $region14: #{crypto_stst_forward.12} parent=11 // pred_check_branch
        %152 = sbr.rel (%p150) target = $region16
      $region15: #{crypto_stst_forward.12} parent=11 // pred_region
        _
      $region16: #{crypto_stst_forward.12} parent=11 // pred_fallthru
        _
    $region12: #{crypto_stst_forward.12} parent=5 // pred_fallthru
      _
    %p153 = scmp.lt.s32.totalorder %s10, 2
    // Predicated region
    $region17: #{crypto_stst_forward.12} parent=5 // pred_check
      %p154 = pneg %p153
    $region18: #{crypto_stst_forward.12} parent=5 // pred_check_branch
      %156 = sbr.rel (%p154) target = $region20
    $region19: #{crypto_stst_forward.12} parent=5 // pred_region
      // Predicated region
      $region21: #{crypto_stst_forward.12} parent=19 // pred_check
        %p157 = pneg %p51
      $region22: #{crypto_stst_forward.12} parent=19 // pred_check_branch
        %159 = sbr.rel (%p157) target = $region24
      $region23: #{crypto_stst_forward.12} parent=19 // pred_region
        %p160 = scmp.lt.s32.totalorder %s10, 1
        %s161 = scalar_select %p160, %s10, 1
        %s162 = smul.addr %s161, 16
        %s163 = smul.addr %s162, 8
        %s164 = scalar_lea.vmem %s1, %s163
      $region24: #{crypto_stst_forward.12} parent=19 // pred_fallthru
        _
      // Predicated region
      $region25: #{crypto_stst_forward.12} parent=19 // pred_check
        %p165 = pneg %p77
      $region26: #{crypto_stst_forward.12} parent=19 // pred_check_branch
        %167 = sbr.rel (%p165) target = $region28
      $region27: #{crypto_stst_forward.12} parent=19 // pred_region
        %p168 = scmp.lt.s32.totalorder %s10, 1
        %s169 = scalar_select %p168, %s10, 1
        %s170 = smul.addr %s169, 16
        %s171 = smul.addr %s170, 8
        %s172 = scalar_lea.vmem %s2, %s171
      $region28: #{crypto_stst_forward.12} parent=19 // pred_fallthru
        _
      // Predicated region
      $region29: #{crypto_stst_forward.12} parent=19 // pred_check
        %p173 = pneg %p103
      $region30: #{crypto_stst_forward.12} parent=19 // pred_check_branch
        %175 = sbr.rel (%p173) target = $region32
      $region31: #{crypto_stst_forward.12} parent=19 // pred_region
        %p176 = scmp.lt.s32.totalorder %s10, 1
        %s177 = scalar_select %p176, %s10, 1
        %s178 = smul.addr %s177, 2
        %s179 = scalar_lea.vmem %s3, %s178
      $region32: #{crypto_stst_forward.12} parent=19 // pred_fallthru
        _
    $region20: #{crypto_stst_forward.12} parent=5 // pred_fallthru
      _
    %p180 = scmp.le.s32.totalorder 1, %s10
    %p181 = scmp.lt.s32.totalorder %s10, 3
    %p182 = pnand %p180, %p181
    %p183 = pneg %p182
    // Predicated region
    $region33: #{crypto_stst_forward.12} parent=5 // pred_check
      _
    $region34: #{crypto_stst_forward.12} parent=5 // pred_check_branch
      %185 = sbr.rel (%p182) target = $region36
    $region35: #{crypto_stst_forward.12} parent=5 // pred_region
      %s186 = ssub.s32 %s10, 1
      %p187 = pneg %p31
      %p188 = pneg %p28
      %p189 = scmp.lt.s32.totalorder %s15, 1
      %s190 = scalar_select %p189, %s15, 1
      %s191 = smul.addr %s190, 16
      %s192 = smul.addr %s191, 8
      %s193 = scalar_lea.vmem %s1, %s192
      %p194 = pneg %p57
      %p195 = pneg %p54
      %p196 = scmp.lt.s32.totalorder %s15, 1
      %s197 = scalar_select %p196, %s15, 1
      %s198 = smul.addr %s197, 16
      %s199 = smul.addr %s198, 8
      %s200 = scalar_lea.vmem %s2, %s199
      %p201 = pneg %p83
      %p202 = pneg %p80
      %p203 = scmp.lt.s32.totalorder %s15, 1
      %s204 = scalar_select %p203, %s15, 1
      %s205 = smul.addr %s204, 2
      %s206 = scalar_lea.vmem %s3, %s205
      %p207 = pneg %p109
      %p208 = pneg %p106
      %p209 = pneg %p135
      %p210 = pneg %p132
      %p211 = scmp.lt.s32.totalorder %s15, 1
      %s212 = scalar_select %p211, %s15, 1
      %s213 = smul.addr %s212, 16
      %s214 = smul.addr %s213, 2
      %s215 = scalar_lea.vmem %s4, %s214
      %p216 = scmp.lt.s32.totalorder %s15, 1
      %s217 = scalar_select %p216, %s15, 1
      %s218 = smul.addr %s217, 16
      %s219 = smul.addr %s218, 8
      %s220 = scalar_lea.vmem %s1, %s219
      %p221 = scmp.lt.s32.totalorder %s15, 1
      %s222 = scalar_select %p221, %s15, 1
      %s223 = smul.addr %s222, 16
      %s224 = smul.addr %s223, 8
      %s225 = scalar_lea.vmem %s2, %s224
      %p226 = scmp.lt.s32.totalorder %s15, 1
      %s227 = scalar_select %p226, %s15, 1
      %s228 = smul.addr %s227, 2
      %s229 = scalar_lea.vmem %s3, %s228
      %p230 = scmp.lt.s32.totalorder %s15, 1
      %s231 = scalar_select %p230, %s15, 1
      %s232 = smul.addr %s231, 16
      %s233 = smul.addr %s232, 2
      %s234 = scalar_lea.vmem %s4, %s233
      %v235 = vld [vmem:[%s0] sm:$0x3]
      %v236 = vld [vmem:[%s0 + $0x2] sm:$0x3]
      %v237 = vld [vmem:[%s0 + $0x4] sm:$0x3]
      %v238 = vld [vmem:[%s0 + $0x6] sm:$0x3]
      %v239 = vld [vmem:[%s0 + $0x8] sm:$0x3]
      %v240 = vld [vmem:[%s0 + $0xa] sm:$0x3]
      %v241 = vld [vmem:[%s0 + $0xc] sm:$0x3]
      %v242 = vld [vmem:[%s0 + $0xe] sm:$0x3]
      %v243 = vld [vmem:[%s0 + $0x10] sm:$0x3]
      %v244 = vld [vmem:[%s0 + $0x12] sm:$0x3]
      %v245 = vld [vmem:[%s0 + $0x14] sm:$0x3]
      %v246 = vld [vmem:[%s0 + $0x16] sm:$0x3]
      %v247 = vld [vmem:[%s0 + $0x18] sm:$0x3]
      %v248 = vld [vmem:[%s0 + $0x1a] sm:$0x3]
      %v249 = vld [vmem:[%s0 + $0x1c] sm:$0x3]
      %v250 = vld [vmem:[%s0 + $0x1e] sm:$0x3]
      %v251 = vld [vmem:[%s220] sm:$0xff]
      %v252 = vld [vmem:[%s220 + $0x8] sm:$0xff]
      %v253 = vld [vmem:[%s220 + $0x10] sm:$0xff]
      %v254 = vld [vmem:[%s220 + $0x18] sm:$0xff]
      %v255 = vld [vmem:[%s220 + $0x20] sm:$0xff]
      %v256 = vld [vmem:[%s220 + $0x28] sm:$0xff]
      %v257 = vld [vmem:[%s220 + $0x30] sm:$0xff]
      %v258 = vld [vmem:[%s220 + $0x38] sm:$0xff]
      %v259 = vld [vmem:[%s220 + $0x40] sm:$0xff]
      %v260 = vld [vmem:[%s220 + $0x48] sm:$0xff]
      %v261 = vld [vmem:[%s220 + $0x50] sm:$0xff]
      %v262 = vld [vmem:[%s220 + $0x58] sm:$0xff]
      %v263 = vld [vmem:[%s220 + $0x60] sm:$0xff]
      %v264 = vld [vmem:[%s220 + $0x68] sm:$0xff]
      %v265 = vld [vmem:[%s220 + $0x70] sm:$0xff]
      %v266 = vld [vmem:[%s220 + $0x78] sm:$0xff]
      %v267 = vld [vmem:[%s229] sm:$0x3]
      %v269 = vperm.slane %v267, 0
      %v270 = vperm.slane %v267, 1
      %289 = vst [vmem:[#allocation1] ss:$4 sm:$0xff] %v235
      %s290 = scalar_lea.vmem [#allocation1], 1
      %291 = vst [vmem:[%s290] ss:$4 sm:$0xff] %v236
      %s292 = scalar_lea.vmem [#allocation1], 2
      %293 = vst [vmem:[%s292] ss:$4 sm:$0xff] %v237
      %s294 = scalar_lea.vmem [#allocation1], 3
      %295 = vst [vmem:[%s294] ss:$4 sm:$0xff] %v238
      %s296 = scalar_lea.vmem [#allocation1], 32
      %297 = vst [vmem:[%s296] ss:$4 sm:$0xff] %v239
      %s298 = scalar_lea.vmem [#allocation1], 33
      %299 = vst [vmem:[%s298] ss:$4 sm:$0xff] %v240
      %s300 = scalar_lea.vmem [#allocation1], 34
      %301 = vst [vmem:[%s300] ss:$4 sm:$0xff] %v241
      %s302 = scalar_lea.vmem [#allocation1], 35
      %303 = vst [vmem:[%s302] ss:$4 sm:$0xff] %v242
      %v304 = vld.sshfl [vmem:[#allocation1] sm:$0xff pattern:$0x73625140]
      %v305 = vld.sshfl [vmem:[#allocation1 + $0x20] sm:$0xff pattern:$0x73625140]
      %306 = vst [vmem:[#allocation1] ss:$4 sm:$0xff] %v243
      %307 = vst [vmem:[%s290] ss:$4 sm:$0xff] %v244
      %308 = vst [vmem:[%s292] ss:$4 sm:$0xff] %v245
      %309 = vst [vmem:[%s294] ss:$4 sm:$0xff] %v246
      %310 = vst [vmem:[%s296] ss:$4 sm:$0xff] %v247
      %311 = vst [vmem:[%s298] ss:$4 sm:$0xff] %v248
      %312 = vst [vmem:[%s300] ss:$4 sm:$0xff] %v249
      %313 = vst [vmem:[%s302] ss:$4 sm:$0xff] %v250
      %v314 = vld.sshfl [vmem:[#allocation1] sm:$0xff pattern:$0x73625140]
      %v315 = vld.sshfl [vmem:[#allocation1 + $0x20] sm:$0xff pattern:$0x73625140]
      %vm316 = vcmask 523264
      %v317 = vsel %vm316, %v304, 0
      %v319 = vsel %vm316, %v305, 0
      %v321 = vsel %vm316, %v314, 0
      %v323 = vsel %vm316, %v315, 0
      %325 = vmatpush.msra.mxu0 0.0
      %326 = vmatpush.msra.mxu0 0.0
      %327 = vmatpush.msra.mxu0 0.0
      %328 = vmatpush.msra.mxu0 0.0
      %329 = vmatpush.msra.mxu0 0.0
      %330 = vmatpush.msra.mxu0 0.0
      %331 = vmatpush.msra.mxu0 0.0
      %332 = vmatpush.msra.mxu0 0.0
      %333 = vmatpush.msra.mxu0 %v265
      %334 = vmatpush.msra.mxu0 %v263
      %335 = vmatpush.msra.mxu0 %v261
      %336 = vmatpush.msra.mxu0 %v259
      %337 = vmatpush.msra.mxu0 %v257
      %338 = vmatpush.msra.mxu0 %v255
      %339 = vmatpush.msra.mxu0 %v253
      %340 = vmatpush.msra.mxu0 %v251
      %341 = vmatmul.f32.gmra.mxu0 %v317
      %v342 = vpop.f32.mrf.mxu0
      %v343 = vadd.f32 %v269, %v342
      %344 = vmatmul.f32.gmra.mxu0 %v319
      %v345 = vpop.f32.mrf.mxu0
      %v346 = vadd.f32 %v269, %v345
      %347 = vmatmul.f32.gmra.mxu0 %v321
      %v348 = vpop.f32.mrf.mxu0
      %v349 = vadd.f32 %v269, %v348
      %350 = vmatmul.f32.gmra.mxu0 %v323
      %v351 = vpop.f32.mrf.mxu0
      %v352 = vadd.f32 %v269, %v351
      %353 = vdwg.mxu0
      %354 = vmatpush.msra.mxu0 0.0
      %355 = vmatpush.msra.mxu0 0.0
      %356 = vmatpush.msra.mxu0 0.0
      %357 = vmatpush.msra.mxu0 0.0
      %358 = vmatpush.msra.mxu0 0.0
      %359 = vmatpush.msra.mxu0 0.0
      %360 = vmatpush.msra.mxu0 0.0
      %361 = vmatpush.msra.mxu0 0.0
      %362 = vmatpush.msra.mxu0 %v266
      %363 = vmatpush.msra.mxu0 %v264
      %364 = vmatpush.msra.mxu0 %v262
      %365 = vmatpush.msra.mxu0 %v260
      %366 = vmatpush.msra.mxu0 %v258
      %367 = vmatpush.msra.mxu0 %v256
      %368 = vmatpush.msra.mxu0 %v254
      %369 = vmatpush.msra.mxu0 %v252
      %370 = vmatmul.f32.gmra.mxu0 %v317
      %v371 = vpop.f32.mrf.mxu0
      %v372 = vadd.f32 %v270, %v371
      %373 = vmatmul.f32.gmra.mxu0 %v319
      %v374 = vpop.f32.mrf.mxu0
      %v375 = vadd.f32 %v270, %v374
      %376 = vmatmul.f32.gmra.mxu0 %v321
      %v377 = vpop.f32.mrf.mxu0
      %v378 = vadd.f32 %v270, %v377
      %379 = vmatmul.f32.gmra.mxu0 %v323
      %v380 = vpop.f32.mrf.mxu0
      %v381 = vadd.f32 %v270, %v380
      %382 = vdwg.mxu0
      %v391 = vrot.slane %v372, 6
      %v392 = vrot.slane %v375, 6
      %v393 = vrot.slane %v378, 6
      %v394 = vrot.slane %v381, 6
      %vm395 = vcmask 1041408
      %v396 = vsel %vm395, %v343, %v391
      %vm397 = vcmask 1043458
      %v398 = vsel %vm397, %v343, %v391
      %v399 = vrot.slane %v398, 2
      %vm400 = vcmask 1045508
      %v401 = vsel %vm400, %v343, %v391
      %v402 = vrot.slane %v401, 4
      %vm403 = vcmask 1045504
      %v404 = vsel %vm403, %v391, %v343
      %v405 = vrot.slane %v404, 6
      %v406 = vsel %vm395, %v346, %v392
      %v407 = vsel %vm397, %v346, %v392
      %v408 = vrot.slane %v407, 2
      %v409 = vsel %vm400, %v346, %v392
      %v410 = vrot.slane %v409, 4
      %v411 = vsel %vm403, %v392, %v346
      %v412 = vrot.slane %v411, 6
      %v413 = vsel %vm395, %v349, %v393
      %v414 = vsel %vm397, %v349, %v393
      %v415 = vrot.slane %v414, 2
      %v416 = vsel %vm400, %v349, %v393
      %v417 = vrot.slane %v416, 4
      %v418 = vsel %vm403, %v393, %v349
      %v419 = vrot.slane %v418, 6
      %v420 = vsel %vm395, %v352, %v394
      %v421 = vsel %vm397, %v352, %v394
      %v422 = vrot.slane %v421, 2
      %v423 = vsel %vm400, %v352, %v394
      %v424 = vrot.slane %v423, 4
      %v425 = vsel %vm403, %v394, %v352
      %v426 = vrot.slane %v425, 6
      %443 = vst [vmem:[#allocation4] sm:$0xf] %v396
      %444 = vst [vmem:[#allocation4 + $0x4] sm:$0xf] %v399
      %445 = vst [vmem:[#allocation4 + $0x8] sm:$0xf] %v402
      %446 = vst [vmem:[#allocation4 + $0xc] sm:$0xf] %v405
      %447 = vst [vmem:[#allocation4 + $0x10] sm:$0xf] %v406
      %448 = vst [vmem:[#allocation4 + $0x14] sm:$0xf] %v408
      %449 = vst [vmem:[#allocation4 + $0x18] sm:$0xf] %v410
      %450 = vst [vmem:[#allocation4 + $0x1c] sm:$0xf] %v412
      %451 = vst [vmem:[#allocation4 + $0x20] sm:$0xf] %v413
      %452 = vst [vmem:[#allocation4 + $0x24] sm:$0xf] %v415
      %453 = vst [vmem:[#allocation4 + $0x28] sm:$0xf] %v417
      %454 = vst [vmem:[#allocation4 + $0x2c] sm:$0xf] %v419
      %455 = vst [vmem:[#allocation4 + $0x30] sm:$0xf] %v420
      %456 = vst [vmem:[#allocation4 + $0x34] sm:$0xf] %v422
      %457 = vst [vmem:[#allocation4 + $0x38] sm:$0xf] %v424
      %458 = vst [vmem:[#allocation4 + $0x3c] sm:$0xf] %v426
      %vm459 = vcmask 517120
      %460 = vst.msk [vmem:[#allocation2] sm:$0x3] %vm459, 0.0
      %461 = vst.msk [vmem:[#allocation3] sm:$0x3] %vm459, 0.0
      loop: start=0, step=1, limit=16
      $region37: #{crypto_stst_forward.12} parent=35 // loop_pre_header
        _
      $region38: #{crypto_stst_forward.12} parent=35 // loop_header
        %s463 = sphi 0, %s467
        %p464 = scmp.ge.s32.totalorder %s463, 16
      $region39: #{crypto_stst_forward.12} parent=35 // loop_header_branch
        %466 = sbr.rel (%p464) target = $region43
      $region40: #{crypto_stst_forward.12} parent=35 // loop_body
        %p468 = scmp.eq.s32.totalorder %s15, 0
        %s469 = ssub.s32 15, %s463
        %s470 = scalar_select %p468, %s463, %s469
        %s471 = smul.u32 %s470, 2
        %s472 = smul.addr %s471, 2
        %s473 = scalar_lea.vmem [#allocation4], %s472
        %v474 = vld [vmem:[%s473] sm:$0xf]
        %v475 = vld [vmem:[#allocation2] sm:$0x3]
        %v476 = vld [vmem:[%s225] sm:$0xff]
        %v477 = vld [vmem:[%s225 + $0x8] sm:$0xff]
        %v478 = vld [vmem:[%s225 + $0x10] sm:$0xff]
        %v479 = vld [vmem:[%s225 + $0x18] sm:$0xff]
        %v480 = vld [vmem:[%s225 + $0x20] sm:$0xff]
        %v481 = vld [vmem:[%s225 + $0x28] sm:$0xff]
        %v482 = vld [vmem:[%s225 + $0x30] sm:$0xff]
        %v483 = vld [vmem:[%s225 + $0x38] sm:$0xff]
        %v484 = vld [vmem:[%s225 + $0x40] sm:$0xff]
        %v485 = vld [vmem:[%s225 + $0x48] sm:$0xff]
        %v486 = vld [vmem:[%s225 + $0x50] sm:$0xff]
        %v487 = vld [vmem:[%s225 + $0x58] sm:$0xff]
        %v488 = vld [vmem:[%s225 + $0x60] sm:$0xff]
        %v489 = vld [vmem:[%s225 + $0x68] sm:$0xff]
        %v490 = vld [vmem:[%s225 + $0x70] sm:$0xff]
        %v491 = vld [vmem:[%s225 + $0x78] sm:$0xff]
        %v493 = vsel %vm316, %v475, 0
        %495 = vmatpush.msra.mxu0 0.0
        %496 = vmatpush.msra.mxu0 0.0
        %497 = vmatpush.msra.mxu0 0.0
        %498 = vmatpush.msra.mxu0 0.0
        %499 = vmatpush.msra.mxu0 0.0
        %500 = vmatpush.msra.mxu0 0.0
        %501 = vmatpush.msra.mxu0 0.0
        %502 = vmatpush.msra.mxu0 0.0
        %503 = vmatpush.msra.mxu0 %v490
        %504 = vmatpush.msra.mxu0 %v488
        %505 = vmatpush.msra.mxu0 %v486
        %506 = vmatpush.msra.mxu0 %v484
        %507 = vmatpush.msra.mxu0 %v482
        %508 = vmatpush.msra.mxu0 %v480
        %509 = vmatpush.msra.mxu0 %v478
        %510 = vmatpush.msra.mxu0 %v476
        %511 = vmatmul.f32.gmra.mxu0 %v493
        %v512 = vpop.f32.mrf.mxu0
        %v513 = vadd.f32 0.0, %v512
        %514 = vdwg.mxu0
        %515 = vmatpush.msra.mxu0 0.0
        %516 = vmatpush.msra.mxu0 0.0
        %517 = vmatpush.msra.mxu0 0.0
        %518 = vmatpush.msra.mxu0 0.0
        %519 = vmatpush.msra.mxu0 0.0
        %520 = vmatpush.msra.mxu0 0.0
        %521 = vmatpush.msra.mxu0 0.0
        %522 = vmatpush.msra.mxu0 0.0
        %523 = vmatpush.msra.mxu0 %v491
        %524 = vmatpush.msra.mxu0 %v489
        %525 = vmatpush.msra.mxu0 %v487
        %526 = vmatpush.msra.mxu0 %v485
        %527 = vmatpush.msra.mxu0 %v483
        %528 = vmatpush.msra.mxu0 %v481
        %529 = vmatpush.msra.mxu0 %v479
        %530 = vmatpush.msra.mxu0 %v477
        %531 = vmatmul.f32.gmra.mxu0 %v493
        %v532 = vpop.f32.mrf.mxu0
        %v533 = vadd.f32 0.0, %v532
        %534 = vdwg.mxu0
        %v537 = vrot.slane %v533, 6
        %v538 = vsel %vm395, %v513, %v537
        %v540 = vadd.f32 %v474, %v538
        %v541 = vxor.u32 %v540, 2147483648
        %v542 = vmul.f32 %v541, 1.442695
        %v543 = vpow.pop %v542
        %v544 = vadd.f32 %v543, 1.0
        %v545 = vrcp.pop %v544
        %v546 = vmul.f32 %v544, %v545
        %v547 = vsub.f32 1.0, %v546
        %v548 = vmul.f32 %v545, %v547
        %v549 = vadd.f32 %v545, %v548
        %vm550 = vweird.f32 %v544
        %vm551 = vweird.f32 %v545
        %vm552 = vmor %vm550, %vm551
        %v553 = vsel %vm552, %v545, %v549
        %v554 = vand.u32 2147483647, %v544
        %vm555 = vcmp.eq.f32.partialorder %v554, 8.507059e+37
        %v556 = vand.u32 %v544, 2147483648
        %v557 = vor.u32 1.1754944e-38, %v556
        %v558 = vsel %vm555, %v557, %v553
        %v559 = vmul.f32 1.0, %v558
        %v561 = vrot.slane %v540, 2
        %v563 = vtanh.pop %v561
        %564 = vrot.lane.b32.xlu0 %v540, 64
        %v565 = vpop.permute.xlu0 %564
        %v566 = vrot.slane %v565, 2
        %v568 = vxor.u32 %v566, 2147483648
        %v569 = vmul.f32 %v568, 1.442695
        %v570 = vpow.pop %v569
        %v571 = vadd.f32 %v570, 1.0
        %v572 = vrcp.pop %v571
        %v573 = vmul.f32 %v571, %v572
        %v574 = vsub.f32 1.0, %v573
        %v575 = vmul.f32 %v572, %v574
        %v576 = vadd.f32 %v572, %v575
        %vm577 = vweird.f32 %v571
        %vm578 = vweird.f32 %v572
        %vm579 = vmor %vm577, %vm578
        %v580 = vsel %vm579, %v572, %v576
        %v581 = vand.u32 2147483647, %v571
        %vm582 = vcmp.eq.f32.partialorder %v581, 8.507059e+37
        %v583 = vand.u32 %v571, 2147483648
        %v584 = vor.u32 1.1754944e-38, %v583
        %v585 = vsel %vm582, %v584, %v580
        %v586 = vmul.f32 1.0, %v585
        %v587 = vld [vmem:[#allocation3] sm:$0x3]
        %589 = vrot.lane.b32.xlu0 %v587, 64
        %v590 = vpop.permute.xlu0 %589
        %v592 = vmul.f32 %v559, %v590
        %v593 = vmul.f32 %v559, %v563
        %595 = vrot.lane.b32.xlu0 %v593, 64
        %v596 = vpop.permute.xlu0 %595
        %v598 = vadd.f32 %v592, %v596
        %v599 = vtanh.pop %v598
        %601 = vrot.lane.b32.xlu0 %v599, 64
        %v602 = vpop.permute.xlu0 %601
        %v604 = vmul.f32 %v586, %v602
        %606 = vst [vmem:[#allocation1] ss:$4 sm:$0xff] %v598
        %v607 = vld.sshfl [vmem:[#allocation1] sm:$0xff pattern:$0x73625140]
        %608 = vrot.lane.b32.xlu0 %v607, 64
        %v609 = vpop.permute.xlu0 %608
        %611 = vst.msk [vmem:[#allocation3] sm:$0x3] %vm459, %v609
        %612 = vst.msk [vmem:[#allocation2] sm:$0x3] %vm459, %v604
        %s613 = scalar_lea.vmem %s234, %s471
        %614 = vst.msk [vmem:[%s613] sm:$0x3] %vm459, %v604
      $region41: #{crypto_stst_forward.12} parent=35 // loop_footer
        %s467 = sadd.s32 1, %s463
      $region42: #{crypto_stst_forward.12} parent=35 // loop_footer_branch
        %462 = sbr.rel target = $region38
      $region43: #{crypto_stst_forward.12} parent=35 // loop_exit
        _
      %p615 = scmp.lt.s32.totalorder %s15, 1
      %s616 = scalar_select %p615, %s15, 1
      %s617 = smul.addr %s616, 16
      %s618 = smul.addr %s617, 2
      %s619 = scalar_lea.vmem %s4, %s618
      // Predicated region
      $region44: #{crypto_stst_forward.12} parent=35 // pred_check
        %p620 = pneg %p132
      $region45: #{crypto_stst_forward.12} parent=35 // pred_check_branch
        %622 = sbr.rel (%p620) target = $region47
      $region46: #{crypto_stst_forward.12} parent=35 // pred_region
        _
      $region47: #{crypto_stst_forward.12} parent=35 // pred_fallthru
        _
    $region36: #{crypto_stst_forward.12} parent=5 // pred_fallthru
      _
    %p623 = scmp.le.s32.totalorder 2, %s10
    // Predicated region
    $region48: #{crypto_stst_forward.12} parent=5 // pred_check
      %p624 = pneg %p623
    $region49: #{crypto_stst_forward.12} parent=5 // pred_check_branch
      %626 = sbr.rel (%p624) target = $region51
    $region50: #{crypto_stst_forward.12} parent=5 // pred_region
      %s627 = ssub.s32 %s10, 2
      // Predicated region
      $region52: #{crypto_stst_forward.12} parent=50 // pred_check
        %p628 = pneg %p138
      $region53: #{crypto_stst_forward.12} parent=50 // pred_check_branch
        %630 = sbr.rel (%p628) target = $region55
      $region54: #{crypto_stst_forward.12} parent=50 // pred_region
        %p631 = scmp.lt.s32.totalorder %s16, 1
        %s632 = scalar_select %p631, %s16, 1
        %s633 = smul.addr %s632, 16
        %s634 = smul.addr %s633, 2
        %s635 = scalar_lea.vmem %s4, %s634
      $region55: #{crypto_stst_forward.12} parent=50 // pred_fallthru
        _
    $region51: #{crypto_stst_forward.12} parent=5 // pred_fallthru
      _
  $region6: #{crypto_stst_forward.12} parent=0 // loop_footer
    %s14 = sadd.s32 1, %s10
  $region7: #{crypto_stst_forward.12} parent=0 // loop_footer_branch
    %9 = sbr.rel target = $region3
  $region8: #{crypto_stst_forward.12} parent=0 // loop_exit
    _

// kernel: crypto_stst_forward.10
$region0: #{crypto_stst_forward.10}
  #allocation0 [shape = 'u32[]', space=smem, size = 0x4, offset = 0x4, fixed_abs, tag = 'smem constant byte address 0x4 - core index']
  #allocation1 [shape = 'u32[72,128]{1,0:T(1,128)}', space=vmem, size = 0x9000, scoped, tag = 'internal scratch']
  %s0 = inlined_call_operand.vmem [shape: f32[2,16,64], index: 0, kind: input, shape index: {}]
  %s1 = inlined_call_operand.hbm [shape: f32[64,192], index: 1, kind: input, shape index: {}]
  %s2 = inlined_call_operand.vmem [shape: f32[1,192], index: 2, kind: input, shape index: {}]
  %s3 = inlined_call_operand.hbm [shape: f32[64,64], index: 3, kind: input, shape index: {}]
  %s4 = inlined_call_operand.vmem [shape: f32[1,64], index: 4, kind: input, shape index: {}]
  %s5 = inlined_call_operand.vmem [shape: f32[1,64], index: 5, kind: input, shape index: {}]
  %s6 = inlined_call_operand.vmem [shape: f32[1,64], index: 6, kind: input, shape index: {}]
  %s7 = inlined_call_operand.hbm [shape: f32[64,256], index: 7, kind: input, shape index: {}]
  %s8 = inlined_call_operand.vmem [shape: f32[1,256], index: 8, kind: input, shape index: {}]
  %s9 = inlined_call_operand.vmem [shape: f32[256,64], index: 9, kind: input, shape index: {}]
  %s10 = inlined_call_operand.vmem [shape: f32[1,64], index: 10, kind: input, shape index: {}]
  %s11 = inlined_call_operand.vmem [shape: f32[1,64], index: 11, kind: input, shape index: {}]
  %s12 = inlined_call_operand.vmem [shape: f32[1,64], index: 12, kind: input, shape index: {}]
  %s13 = inlined_call_operand.vmem [shape: f32[2,16,64], index: 13, kind: output, shape index: {}]
  %s14 = sld [smem:[#allocation0]]
  $region74: #{crypto_stst_forward.10} parent=0
    _
  %s16 = ssub.s32 1, %s14
  %s17 = scalar_select 0, %s16, %s14
  $region1: #{crypto_stst_forward.10} parent=0
    #allocation2 [shape = 'u8[65536]{0}', space=vmem, size = 0x10000, scoped, tag = 'input window, operand 1, single buffered']
    #allocation3 [shape = 's32[1]{0}', space=sflag, size = 0x4, scoped, tag = 'scoped memory for crypto_stst_forward.10']
    #allocation4 [shape = 'u8[32768]{0}', space=vmem, size = 0x8000, scoped, tag = 'input window, operand 3, single buffered']
    #allocation5 [shape = 's32[1]{0}', space=sflag, size = 0x4, scoped, tag = 'scoped memory for crypto_stst_forward.10']
    #allocation6 [shape = 'u8[65536]{0}', space=vmem, size = 0x10000, scoped, tag = 'input window, operand 7, single buffered']
    %18 = vsyncpa [#allocation3], 0
    %19 = vsyncpa [#allocation5], 0
    // Predicated region
    $region2: #{crypto_stst_forward.10} parent=1 // pred_check
      _
    $region3: #{crypto_stst_forward.10} parent=1 // pred_check_branch
      %21 = sbr.rel (0) target = $region5
    $region4: #{crypto_stst_forward.10} parent=1 // pred_region
      _
    $region5: #{crypto_stst_forward.10} parent=1 // pred_fallthru
      _
    // Predicated region
    $region6: #{crypto_stst_forward.10} parent=1 // pred_check
      _
    $region7: #{crypto_stst_forward.10} parent=1 // pred_check_branch
      %23 = sbr.rel (0) target = $region9
    $region8: #{crypto_stst_forward.10} parent=1 // pred_region
      %25 = vsyncadd [#allocation3], 0
      %s26 = sshll.u32 %s1, 4
      %s27 = int_to_ptr.hbm [resolvable:$true] %s26
      %s28 = sshll.u32 [#allocation2], 4
      %s29 = int_to_ptr.vmem [resolvable:$true] %s28
      %34 = dma.hbm_to_vmem [thread:$0]  %s27, 2048, %s29, [#allocation3], 256, 256, 16
    $region9: #{crypto_stst_forward.10} parent=1 // pred_fallthru
      _
    // Predicated region
    $region10: #{crypto_stst_forward.10} parent=1 // pred_check
      _
    $region11: #{crypto_stst_forward.10} parent=1 // pred_check_branch
      %36 = sbr.rel (0) target = $region13
    $region12: #{crypto_stst_forward.10} parent=1 // pred_region
      _
    $region13: #{crypto_stst_forward.10} parent=1 // pred_fallthru
      _
    // Predicated region
    $region14: #{crypto_stst_forward.10} parent=1 // pred_check
      _
    $region15: #{crypto_stst_forward.10} parent=1 // pred_check_branch
      %38 = sbr.rel (0) target = $region17
    $region16: #{crypto_stst_forward.10} parent=1 // pred_region
      %40 = vsyncadd [#allocation5], 0
      %s41 = sshll.u32 %s3, 4
      %s42 = int_to_ptr.hbm [resolvable:$true] %s41
      %s43 = sshll.u32 [#allocation4], 4
      %s44 = int_to_ptr.vmem [resolvable:$true] %s43
      %49 = dma.hbm_to_vmem [thread:$0]  %s42, 1024, %s44, [#allocation5], 128, 128, 8
    $region17: #{crypto_stst_forward.10} parent=1 // pred_fallthru
      _
    // Predicated region
    $region18: #{crypto_stst_forward.10} parent=1 // pred_check
      _
    $region19: #{crypto_stst_forward.10} parent=1 // pred_check_branch
      %51 = sbr.rel (0) target = $region21
    $region20: #{crypto_stst_forward.10} parent=1 // pred_region
      _
    $region21: #{crypto_stst_forward.10} parent=1 // pred_fallthru
      _
    // Predicated region
    $region22: #{crypto_stst_forward.10} parent=1 // pred_check
      _
    $region23: #{crypto_stst_forward.10} parent=1 // pred_check_branch
      %53 = sbr.rel (0) target = $region25
    $region24: #{crypto_stst_forward.10} parent=1 // pred_region
      _
    $region25: #{crypto_stst_forward.10} parent=1 // pred_fallthru
      _
    // Predicated region
    $region26: #{crypto_stst_forward.10} parent=1 // pred_check
      _
    $region27: #{crypto_stst_forward.10} parent=1 // pred_check_branch
      %55 = sbr.rel (0) target = $region29
    $region28: #{crypto_stst_forward.10} parent=1 // pred_region
      _
    $region29: #{crypto_stst_forward.10} parent=1 // pred_fallthru
      _
    // Predicated region
    $region30: #{crypto_stst_forward.10} parent=1 // pred_check
      _
    $region31: #{crypto_stst_forward.10} parent=1 // pred_check_branch
      %57 = sbr.rel (0) target = $region33
    $region32: #{crypto_stst_forward.10} parent=1 // pred_region
      %59 = vsyncadd [#allocation5], 0
      %s60 = sshll.u32 %s7, 4
      %s61 = int_to_ptr.hbm [resolvable:$true] %s60
      %s62 = sshll.u32 [#allocation6], 4
      %s63 = int_to_ptr.vmem [resolvable:$true] %s62
      %68 = dma.hbm_to_vmem [thread:$0]  %s61, 2048, %s63, [#allocation5], 256, 256, 16
    $region33: #{crypto_stst_forward.10} parent=1 // pred_fallthru
      _
    // Predicated region
    $region34: #{crypto_stst_forward.10} parent=1 // pred_check
      _
    $region35: #{crypto_stst_forward.10} parent=1 // pred_check_branch
      %70 = sbr.rel (0) target = $region37
    $region36: #{crypto_stst_forward.10} parent=1 // pred_region
      _
    $region37: #{crypto_stst_forward.10} parent=1 // pred_fallthru
      _
    // Predicated region
    $region38: #{crypto_stst_forward.10} parent=1 // pred_check
      _
    $region39: #{crypto_stst_forward.10} parent=1 // pred_check_branch
      %72 = sbr.rel (0) target = $region41
    $region40: #{crypto_stst_forward.10} parent=1 // pred_region
      _
    $region41: #{crypto_stst_forward.10} parent=1 // pred_fallthru
      _
    // Predicated region
    $region42: #{crypto_stst_forward.10} parent=1 // pred_check
      _
    $region43: #{crypto_stst_forward.10} parent=1 // pred_check_branch
      %74 = sbr.rel (0) target = $region45
    $region44: #{crypto_stst_forward.10} parent=1 // pred_region
      _
    $region45: #{crypto_stst_forward.10} parent=1 // pred_fallthru
      _
    // Predicated region
    $region46: #{crypto_stst_forward.10} parent=1 // pred_check
      _
    $region47: #{crypto_stst_forward.10} parent=1 // pred_check_branch
      %76 = sbr.rel (0) target = $region49
    $region48: #{crypto_stst_forward.10} parent=1 // pred_region
      _
    $region49: #{crypto_stst_forward.10} parent=1 // pred_fallthru
      _
    // Predicated region
    $region50: #{crypto_stst_forward.10} parent=1 // pred_check
      _
    $region51: #{crypto_stst_forward.10} parent=1 // pred_check_branch
      %78 = sbr.rel (0) target = $region53
    $region52: #{crypto_stst_forward.10} parent=1 // pred_region
      _
    $region53: #{crypto_stst_forward.10} parent=1 // pred_fallthru
      _
    // Predicated region
    $region54: #{crypto_stst_forward.10} parent=1 // pred_check
      _
    $region55: #{crypto_stst_forward.10} parent=1 // pred_check_branch
      %80 = sbr.rel (0) target = $region57
    $region56: #{crypto_stst_forward.10} parent=1 // pred_region
      %82 = dma.done [#allocation3], 2048
    $region57: #{crypto_stst_forward.10} parent=1 // pred_fallthru
      _
    // Predicated region
    $region58: #{crypto_stst_forward.10} parent=1 // pred_check
      _
    $region59: #{crypto_stst_forward.10} parent=1 // pred_check_branch
      %84 = sbr.rel (0) target = $region61
    $region60: #{crypto_stst_forward.10} parent=1 // pred_region
      %86 = dma.done [#allocation5], 1024
    $region61: #{crypto_stst_forward.10} parent=1 // pred_fallthru
      _
    // Predicated region
    $region62: #{crypto_stst_forward.10} parent=1 // pred_check
      _
    $region63: #{crypto_stst_forward.10} parent=1 // pred_check_branch
      %88 = sbr.rel (0) target = $region65
    $region64: #{crypto_stst_forward.10} parent=1 // pred_region
      %90 = dma.done [#allocation5], 2048
    $region65: #{crypto_stst_forward.10} parent=1 // pred_fallthru
      _
    %v91 = vld [vmem:[%s0] sm:$0xff]
    %v92 = vld [vmem:[%s0 + $0x8] sm:$0xff]
    %v93 = vld [vmem:[%s0 + $0x10] sm:$0xff]
    %v94 = vld [vmem:[%s0 + $0x18] sm:$0xff]
    %v95 = vld [vmem:[#allocation2] sm:$0xff]
    %v96 = vld [vmem:[#allocation2 + $0x8] sm:$0xff]
    %v97 = vld [vmem:[#allocation2 + $0x10] sm:$0xff]
    %v98 = vld [vmem:[#allocation2 + $0x18] sm:$0xff]
    %v99 = vld [vmem:[#allocation2 + $0x20] sm:$0xff]
    %v100 = vld [vmem:[#allocation2 + $0x28] sm:$0xff]
    %v101 = vld [vmem:[#allocation2 + $0x30] sm:$0xff]
    %v102 = vld [vmem:[#allocation2 + $0x38] sm:$0xff]
    %v103 = vld [vmem:[#allocation2 + $0x40] sm:$0xff]
    %v104 = vld [vmem:[#allocation2 + $0x48] sm:$0xff]
    %v105 = vld [vmem:[#allocation2 + $0x50] sm:$0xff]
    %v106 = vld [vmem:[#allocation2 + $0x58] sm:$0xff]
    %v107 = vld [vmem:[#allocation2 + $0x60] sm:$0xff]
    %v108 = vld [vmem:[#allocation2 + $0x68] sm:$0xff]
    %v109 = vld [vmem:[#allocation2 + $0x70] sm:$0xff]
    %v110 = vld [vmem:[#allocation2 + $0x78] sm:$0xff]
    %v111 = vld [vmem:[%s2] sm:$0x3]
    %v113 = vperm.slane %v111, 0
    %v114 = vperm.slane %v111, 1
    %vm117 = vcmask 523264
    %v119 = vsel %vm117, %v91, 0
    %v122 = vsel %vm117, %v92, 0
    %v125 = vsel %vm117, %v93, 0
    %v128 = vsel %vm117, %v94, 0
    %130 = vmatpush.msra.mxu0 0.0
    %131 = vmatpush.msra.mxu0 0.0
    %132 = vmatpush.msra.mxu0 0.0
    %133 = vmatpush.msra.mxu0 0.0
    %134 = vmatpush.msra.mxu0 0.0
    %135 = vmatpush.msra.mxu0 0.0
    %136 = vmatpush.msra.mxu0 0.0
    %137 = vmatpush.msra.mxu0 0.0
    %138 = vmatpush.msra.mxu0 %v109
    %139 = vmatpush.msra.mxu0 %v107
    %140 = vmatpush.msra.mxu0 %v105
    %141 = vmatpush.msra.mxu0 %v103
    %142 = vmatpush.msra.mxu0 %v101
    %143 = vmatpush.msra.mxu0 %v99
    %144 = vmatpush.msra.mxu0 %v97
    %145 = vmatpush.msra.mxu0 %v95
    %146 = vmatmul.f32.gmra.mxu0 %v119
    %v147 = vpop.f32.mrf.mxu0
    %v148 = vadd.f32 %v113, %v147
    %149 = vmatmul.f32.gmra.mxu0 %v122
    %v150 = vpop.f32.mrf.mxu0
    %v151 = vadd.f32 %v113, %v150
    %152 = vmatmul.f32.gmra.mxu0 %v125
    %v153 = vpop.f32.mrf.mxu0
    %v154 = vadd.f32 %v113, %v153
    %155 = vmatmul.f32.gmra.mxu0 %v128
    %v156 = vpop.f32.mrf.mxu0
    %v157 = vadd.f32 %v113, %v156
    %158 = vdwg.mxu0
    %159 = vmatpush.msra.mxu0 0.0
    %160 = vmatpush.msra.mxu0 0.0
    %161 = vmatpush.msra.mxu0 0.0
    %162 = vmatpush.msra.mxu0 0.0
    %163 = vmatpush.msra.mxu0 0.0
    %164 = vmatpush.msra.mxu0 0.0
    %165 = vmatpush.msra.mxu0 0.0
    %166 = vmatpush.msra.mxu0 0.0
    %167 = vmatpush.msra.mxu0 %v110
    %168 = vmatpush.msra.mxu0 %v108
    %169 = vmatpush.msra.mxu0 %v106
    %170 = vmatpush.msra.mxu0 %v104
    %171 = vmatpush.msra.mxu0 %v102
    %172 = vmatpush.msra.mxu0 %v100
    %173 = vmatpush.msra.mxu0 %v98
    %174 = vmatpush.msra.mxu0 %v96
    %175 = vmatmul.f32.gmra.mxu0 %v119
    %v176 = vpop.f32.mrf.mxu0
    %v177 = vadd.f32 %v114, %v176
    %178 = vmatmul.f32.gmra.mxu0 %v122
    %v179 = vpop.f32.mrf.mxu0
    %v180 = vadd.f32 %v114, %v179
    %181 = vmatmul.f32.gmra.mxu0 %v125
    %v182 = vpop.f32.mrf.mxu0
    %v183 = vadd.f32 %v114, %v182
    %184 = vmatmul.f32.gmra.mxu0 %v128
    %v185 = vpop.f32.mrf.mxu0
    %v186 = vadd.f32 %v114, %v185
    %187 = vdwg.mxu0
    %190 = vrot.lane.b32.xlu0 %v148, 64
    %v191 = vpop.permute.xlu0 %190
    %192 = vrot.lane.b32.xlu0 %v151, 64
    %v193 = vpop.permute.xlu0 %192
    %vm194 = vcmask 130048
    %v195 = vsel %vm194, %v148, 0
    %v197 = vsel %vm194, %v151, 0
    %v199 = vsel %vm194, %v191, 0
    %v201 = vsel %vm194, %v193, 0
    %203 = vmatpush.xpose.msra.mxu0 0.0
    %204 = vmatpush.xpose.msra.mxu0 0.0
    %205 = vmatpush.xpose.msra.mxu0 0.0
    %206 = vmatpush.xpose.msra.mxu0 0.0
    %207 = vmatpush.xpose.msra.mxu0 0.0
    %208 = vmatpush.xpose.msra.mxu0 0.0
    %209 = vmatpush.xpose.msra.mxu0 0.0
    %210 = vmatpush.xpose.msra.mxu0 0.0
    %211 = vmatpush.xpose.msra.mxu0 0.0
    %212 = vmatpush.xpose.msra.mxu0 0.0
    %213 = vmatpush.xpose.msra.mxu0 0.0
    %214 = vmatpush.xpose.msra.mxu0 0.0
    %215 = vmatpush.xpose.msra.mxu0 0.0
    %216 = vmatpush.xpose.msra.mxu0 0.0
    %217 = vmatpush.xpose.msra.mxu0 %v201
    %218 = vmatpush.xpose.msra.mxu0 %v199
    %219 = vmatmul.f32.gmra.mxu0 %v195
    %v220 = vpop.f32.mrf.mxu0
    %v221 = vadd.f32 0.0, %v220
    %222 = vmatmul.f32.gmra.mxu0 %v197
    %v223 = vpop.f32.mrf.mxu0
    %v224 = vadd.f32 0.0, %v223
    %225 = vdwg.mxu0
    %228 = vrot.lane.b32.xlu0 %v154, 64
    %v229 = vpop.permute.xlu0 %228
    %230 = vrot.lane.b32.xlu0 %v157, 64
    %v231 = vpop.permute.xlu0 %230
    %v232 = vsel %vm194, %v154, 0
    %v234 = vsel %vm194, %v157, 0
    %v236 = vsel %vm194, %v229, 0
    %v238 = vsel %vm194, %v231, 0
    %240 = vmatpush.xpose.msra.mxu0 0.0
    %241 = vmatpush.xpose.msra.mxu0 0.0
    %242 = vmatpush.xpose.msra.mxu0 0.0
    %243 = vmatpush.xpose.msra.mxu0 0.0
    %244 = vmatpush.xpose.msra.mxu0 0.0
    %245 = vmatpush.xpose.msra.mxu0 0.0
    %246 = vmatpush.xpose.msra.mxu0 0.0
    %247 = vmatpush.xpose.msra.mxu0 0.0
    %248 = vmatpush.xpose.msra.mxu0 0.0
    %249 = vmatpush.xpose.msra.mxu0 0.0
    %250 = vmatpush.xpose.msra.mxu0 0.0
    %251 = vmatpush.xpose.msra.mxu0 0.0
    %252 = vmatpush.xpose.msra.mxu0 0.0
    %253 = vmatpush.xpose.msra.mxu0 0.0
    %254 = vmatpush.xpose.msra.mxu0 %v238
    %255 = vmatpush.xpose.msra.mxu0 %v236
    %256 = vmatmul.f32.gmra.mxu0 %v232
    %v257 = vpop.f32.mrf.mxu0
    %v258 = vadd.f32 0.0, %v257
    %259 = vmatmul.f32.gmra.mxu0 %v234
    %v260 = vpop.f32.mrf.mxu0
    %v261 = vadd.f32 0.0, %v260
    %262 = vdwg.mxu0
    %v263 = vmul.f32 %v221, 0.25
    %v264 = vmul.f32 %v224, 0.25
    %v265 = vmul.f32 %v258, 0.25
    %v266 = vmul.f32 %v261, 0.25
    %v267 = vsel %vm194, %v263, -inf
    %268 = vmax.xlane.f32.xlu0 %v267
    %v269 = vpop.xlane.xlu0 %268
    %v270 = vsel %vm194, %v264, -inf
    %271 = vmax.xlane.f32.xlu0 %v270
    %v272 = vpop.xlane.xlu0 %271
    %v273 = vsel %vm194, %v265, -inf
    %274 = vmax.xlane.f32.xlu0 %v273
    %v275 = vpop.xlane.xlu0 %274
    %v276 = vsel %vm194, %v266, -inf
    %277 = vmax.xlane.f32.xlu0 %v276
    %v278 = vpop.xlane.xlu0 %277
    %v279 = vsub.f32 %v263, %v269
    %v280 = vsub.f32 %v264, %v272
    %v281 = vsub.f32 %v265, %v275
    %v282 = vsub.f32 %v266, %v278
    %v283 = vmul.f32 %v279, 1.442695
    %v284 = vpow.pop %v283
    %v285 = vmul.f32 %v280, 1.442695
    %v286 = vpow.pop %v285
    %v287 = vmul.f32 %v281, 1.442695
    %v288 = vpow.pop %v287
    %v289 = vmul.f32 %v282, 1.442695
    %v290 = vpow.pop %v289
    %v291 = vsel %vm194, %v284, 0.0
    %292 = vadd.xlane.f32.xlu0 %v291
    %v293 = vpop.xlane.xlu0 %292
    %v294 = vsel %vm194, %v286, 0.0
    %295 = vadd.xlane.f32.xlu0 %v294
    %v296 = vpop.xlane.xlu0 %295
    %v297 = vsel %vm194, %v288, 0.0
    %298 = vadd.xlane.f32.xlu0 %v297
    %v299 = vpop.xlane.xlu0 %298
    %v300 = vsel %vm194, %v290, 0.0
    %301 = vadd.xlane.f32.xlu0 %v300
    %v302 = vpop.xlane.xlu0 %301
    %v303 = vrcp.pop %v293
    %v304 = vrcp.pop %v296
    %v305 = vrcp.pop %v299
    %v306 = vrcp.pop %v302
    %v307 = vmul.f32 %v284, %v303
    %v308 = vmul.f32 %v286, %v304
    %v309 = vmul.f32 %v288, %v305
    %v310 = vmul.f32 %v290, %v306
    %v312 = vsel %vm194, %v307, 0
    %v315 = vsel %vm194, %v308, 0
    %317 = vmatpush.msra.mxu0 0.0
    %318 = vmatpush.msra.mxu0 0.0
    %319 = vmatpush.msra.mxu0 0.0
    %320 = vmatpush.msra.mxu0 0.0
    %321 = vmatpush.msra.mxu0 0.0
    %322 = vmatpush.msra.mxu0 0.0
    %323 = vmatpush.msra.mxu0 0.0
    %324 = vmatpush.msra.mxu0 0.0
    %325 = vmatpush.msra.mxu0 0.0
    %326 = vmatpush.msra.mxu0 0.0
    %327 = vmatpush.msra.mxu0 0.0
    %328 = vmatpush.msra.mxu0 0.0
    %329 = vmatpush.msra.mxu0 0.0
    %330 = vmatpush.msra.mxu0 0.0
    %331 = vmatpush.msra.mxu0 %v180
    %332 = vmatpush.msra.mxu0 %v177
    %333 = vmatmul.f32.gmra.mxu0 %v312
    %v334 = vpop.f32.mrf.mxu0
    %v335 = vadd.f32 0.0, %v334
    %336 = vmatmul.f32.gmra.mxu0 %v315
    %v337 = vpop.f32.mrf.mxu0
    %v338 = vadd.f32 0.0, %v337
    %339 = vdwg.mxu0
    %v341 = vsel %vm194, %v309, 0
    %v344 = vsel %vm194, %v310, 0
    %346 = vmatpush.msra.mxu0 0.0
    %347 = vmatpush.msra.mxu0 0.0
    %348 = vmatpush.msra.mxu0 0.0
    %349 = vmatpush.msra.mxu0 0.0
    %350 = vmatpush.msra.mxu0 0.0
    %351 = vmatpush.msra.mxu0 0.0
    %352 = vmatpush.msra.mxu0 0.0
    %353 = vmatpush.msra.mxu0 0.0
    %354 = vmatpush.msra.mxu0 0.0
    %355 = vmatpush.msra.mxu0 0.0
    %356 = vmatpush.msra.mxu0 0.0
    %357 = vmatpush.msra.mxu0 0.0
    %358 = vmatpush.msra.mxu0 0.0
    %359 = vmatpush.msra.mxu0 0.0
    %360 = vmatpush.msra.mxu0 %v186
    %361 = vmatpush.msra.mxu0 %v183
    %362 = vmatmul.f32.gmra.mxu0 %v341
    %v363 = vpop.f32.mrf.mxu0
    %v364 = vadd.f32 0.0, %v363
    %365 = vmatmul.f32.gmra.mxu0 %v344
    %v366 = vpop.f32.mrf.mxu0
    %v367 = vadd.f32 0.0, %v366
    %368 = vdwg.mxu0
    %369 = vrot.lane.b32.xlu0 %v148, 112
    %v370 = vpop.permute.xlu0 %369
    %371 = vrot.lane.b32.xlu0 %v151, 112
    %v372 = vpop.permute.xlu0 %371
    %373 = vrot.lane.b32.xlu0 %v148, 48
    %v374 = vpop.permute.xlu0 %373
    %375 = vrot.lane.b32.xlu0 %v151, 48
    %v376 = vpop.permute.xlu0 %375
    %v377 = vsel %vm194, %v370, 0
    %v379 = vsel %vm194, %v372, 0
    %v381 = vsel %vm194, %v374, 0
    %v383 = vsel %vm194, %v376, 0
    %385 = vmatpush.xpose.msra.mxu0 0.0
    %386 = vmatpush.xpose.msra.mxu0 0.0
    %387 = vmatpush.xpose.msra.mxu0 0.0
    %388 = vmatpush.xpose.msra.mxu0 0.0
    %389 = vmatpush.xpose.msra.mxu0 0.0
    %390 = vmatpush.xpose.msra.mxu0 0.0
    %391 = vmatpush.xpose.msra.mxu0 0.0
    %392 = vmatpush.xpose.msra.mxu0 0.0
    %393 = vmatpush.xpose.msra.mxu0 0.0
    %394 = vmatpush.xpose.msra.mxu0 0.0
    %395 = vmatpush.xpose.msra.mxu0 0.0
    %396 = vmatpush.xpose.msra.mxu0 0.0
    %397 = vmatpush.xpose.msra.mxu0 0.0
    %398 = vmatpush.xpose.msra.mxu0 0.0
    %399 = vmatpush.xpose.msra.mxu0 %v383
    %400 = vmatpush.xpose.msra.mxu0 %v381
    %401 = vmatmul.f32.gmra.mxu0 %v377
    %v402 = vpop.f32.mrf.mxu0
    %v403 = vadd.f32 0.0, %v402
    %404 = vmatmul.f32.gmra.mxu0 %v379
    %v405 = vpop.f32.mrf.mxu0
    %v406 = vadd.f32 0.0, %v405
    %407 = vdwg.mxu0
    %408 = vrot.lane.b32.xlu0 %v154, 112
    %v409 = vpop.permute.xlu0 %408
    %410 = vrot.lane.b32.xlu0 %v157, 112
    %v411 = vpop.permute.xlu0 %410
    %412 = vrot.lane.b32.xlu0 %v154, 48
    %v413 = vpop.permute.xlu0 %412
    %414 = vrot.lane.b32.xlu0 %v157, 48
    %v415 = vpop.permute.xlu0 %414
    %v416 = vsel %vm194, %v409, 0
    %v418 = vsel %vm194, %v411, 0
    %v420 = vsel %vm194, %v413, 0
    %v422 = vsel %vm194, %v415, 0
    %424 = vmatpush.xpose.msra.mxu0 0.0
    %425 = vmatpush.xpose.msra.mxu0 0.0
    %426 = vmatpush.xpose.msra.mxu0 0.0
    %427 = vmatpush.xpose.msra.mxu0 0.0
    %428 = vmatpush.xpose.msra.mxu0 0.0
    %429 = vmatpush.xpose.msra.mxu0 0.0
    %430 = vmatpush.xpose.msra.mxu0 0.0
    %431 = vmatpush.xpose.msra.mxu0 0.0
    %432 = vmatpush.xpose.msra.mxu0 0.0
    %433 = vmatpush.xpose.msra.mxu0 0.0
    %434 = vmatpush.xpose.msra.mxu0 0.0
    %435 = vmatpush.xpose.msra.mxu0 0.0
    %436 = vmatpush.xpose.msra.mxu0 0.0
    %437 = vmatpush.xpose.msra.mxu0 0.0
    %438 = vmatpush.xpose.msra.mxu0 %v422
    %439 = vmatpush.xpose.msra.mxu0 %v420
    %440 = vmatmul.f32.gmra.mxu0 %v416
    %v441 = vpop.f32.mrf.mxu0
    %v442 = vadd.f32 0.0, %v441
    %443 = vmatmul.f32.gmra.mxu0 %v418
    %v444 = vpop.f32.mrf.mxu0
    %v445 = vadd.f32 0.0, %v444
    %446 = vdwg.mxu0
    %v447 = vmul.f32 %v403, 0.25
    %v448 = vmul.f32 %v406, 0.25
    %v449 = vmul.f32 %v442, 0.25
    %v450 = vmul.f32 %v445, 0.25
    %v451 = vsel %vm194, %v447, -inf
    %452 = vmax.xlane.f32.xlu0 %v451
    %v453 = vpop.xlane.xlu0 %452
    %v454 = vsel %vm194, %v448, -inf
    %455 = vmax.xlane.f32.xlu0 %v454
    %v456 = vpop.xlane.xlu0 %455
    %v457 = vsel %vm194, %v449, -inf
    %458 = vmax.xlane.f32.xlu0 %v457
    %v459 = vpop.xlane.xlu0 %458
    %v460 = vsel %vm194, %v450, -inf
    %461 = vmax.xlane.f32.xlu0 %v460
    %v462 = vpop.xlane.xlu0 %461
    %v463 = vsub.f32 %v447, %v453
    %v464 = vsub.f32 %v448, %v456
    %v465 = vsub.f32 %v449, %v459
    %v466 = vsub.f32 %v450, %v462
    %v467 = vmul.f32 %v463, 1.442695
    %v468 = vpow.pop %v467
    %v469 = vmul.f32 %v464, 1.442695
    %v470 = vpow.pop %v469
    %v471 = vmul.f32 %v465, 1.442695
    %v472 = vpow.pop %v471
    %v473 = vmul.f32 %v466, 1.442695
    %v474 = vpow.pop %v473
    %v475 = vsel %vm194, %v468, 0.0
    %476 = vadd.xlane.f32.xlu0 %v475
    %v477 = vpop.xlane.xlu0 %476
    %v478 = vsel %vm194, %v470, 0.0
    %479 = vadd.xlane.f32.xlu0 %v478
    %v480 = vpop.xlane.xlu0 %479
    %v481 = vsel %vm194, %v472, 0.0
    %482 = vadd.xlane.f32.xlu0 %v481
    %v483 = vpop.xlane.xlu0 %482
    %v484 = vsel %vm194, %v474, 0.0
    %485 = vadd.xlane.f32.xlu0 %v484
    %v486 = vpop.xlane.xlu0 %485
    %v487 = vrcp.pop %v477
    %v488 = vrcp.pop %v480
    %v489 = vrcp.pop %v483
    %v490 = vrcp.pop %v486
    %v491 = vmul.f32 %v468, %v487
    %v492 = vmul.f32 %v470, %v488
    %v493 = vmul.f32 %v472, %v489
    %v494 = vmul.f32 %v474, %v490
    %497 = vrot.lane.b32.xlu0 %v177, 112
    %v498 = vpop.permute.xlu0 %497
    %499 = vrot.lane.b32.xlu0 %v180, 112
    %v500 = vpop.permute.xlu0 %499
    %v504 = vsel %vm194, %v491, 0
    %v507 = vsel %vm194, %v492, 0
    %509 = vmatpush.msra.mxu0 0.0
    %510 = vmatpush.msra.mxu0 0.0
    %511 = vmatpush.msra.mxu0 0.0
    %512 = vmatpush.msra.mxu0 0.0
    %513 = vmatpush.msra.mxu0 0.0
    %514 = vmatpush.msra.mxu0 0.0
    %515 = vmatpush.msra.mxu0 0.0
    %516 = vmatpush.msra.mxu0 0.0
    %517 = vmatpush.msra.mxu0 0.0
    %518 = vmatpush.msra.mxu0 0.0
    %519 = vmatpush.msra.mxu0 0.0
    %520 = vmatpush.msra.mxu0 0.0
    %521 = vmatpush.msra.mxu0 0.0
    %522 = vmatpush.msra.mxu0 0.0
    %523 = vmatpush.msra.mxu0 %v500
    %524 = vmatpush.msra.mxu0 %v498
    %525 = vmatmul.f32.gmra.mxu0 %v504
    %v526 = vpop.f32.mrf.mxu0
    %v527 = vadd.f32 0.0, %v526
    %528 = vmatmul.f32.gmra.mxu0 %v507
    %v529 = vpop.f32.mrf.mxu0
    %v530 = vadd.f32 0.0, %v529
    %531 = vdwg.mxu0
    %534 = vrot.lane.b32.xlu0 %v183, 112
    %v535 = vpop.permute.xlu0 %534
    %536 = vrot.lane.b32.xlu0 %v186, 112
    %v537 = vpop.permute.xlu0 %536
    %v541 = vsel %vm194, %v493, 0
    %v544 = vsel %vm194, %v494, 0
    %546 = vmatpush.msra.mxu0 0.0
    %547 = vmatpush.msra.mxu0 0.0
    %548 = vmatpush.msra.mxu0 0.0
    %549 = vmatpush.msra.mxu0 0.0
    %550 = vmatpush.msra.mxu0 0.0
    %551 = vmatpush.msra.mxu0 0.0
    %552 = vmatpush.msra.mxu0 0.0
    %553 = vmatpush.msra.mxu0 0.0
    %554 = vmatpush.msra.mxu0 0.0
    %555 = vmatpush.msra.mxu0 0.0
    %556 = vmatpush.msra.mxu0 0.0
    %557 = vmatpush.msra.mxu0 0.0
    %558 = vmatpush.msra.mxu0 0.0
    %559 = vmatpush.msra.mxu0 0.0
    %560 = vmatpush.msra.mxu0 %v537
    %561 = vmatpush.msra.mxu0 %v535
    %562 = vmatmul.f32.gmra.mxu0 %v541
    %v563 = vpop.f32.mrf.mxu0
    %v564 = vadd.f32 0.0, %v563
    %565 = vmatmul.f32.gmra.mxu0 %v544
    %v566 = vpop.f32.mrf.mxu0
    %v567 = vadd.f32 0.0, %v566
    %568 = vdwg.mxu0
    %569 = vrot.lane.b32.xlu0 %v148, 96
    %v570 = vpop.permute.xlu0 %569
    %571 = vrot.lane.b32.xlu0 %v151, 96
    %v572 = vpop.permute.xlu0 %571
    %573 = vrot.lane.b32.xlu0 %v148, 32
    %v574 = vpop.permute.xlu0 %573
    %575 = vrot.lane.b32.xlu0 %v151, 32
    %v576 = vpop.permute.xlu0 %575
    %v577 = vsel %vm194, %v570, 0
    %v579 = vsel %vm194, %v572, 0
    %v581 = vsel %vm194, %v574, 0
    %v583 = vsel %vm194, %v576, 0
    %585 = vmatpush.xpose.msra.mxu0 0.0
    %586 = vmatpush.xpose.msra.mxu0 0.0
    %587 = vmatpush.xpose.msra.mxu0 0.0
    %588 = vmatpush.xpose.msra.mxu0 0.0
    %589 = vmatpush.xpose.msra.mxu0 0.0
    %590 = vmatpush.xpose.msra.mxu0 0.0
    %591 = vmatpush.xpose.msra.mxu0 0.0
    %592 = vmatpush.xpose.msra.mxu0 0.0
    %593 = vmatpush.xpose.msra.mxu0 0.0
    %594 = vmatpush.xpose.msra.mxu0 0.0
    %595 = vmatpush.xpose.msra.mxu0 0.0
    %596 = vmatpush.xpose.msra.mxu0 0.0
    %597 = vmatpush.xpose.msra.mxu0 0.0
    %598 = vmatpush.xpose.msra.mxu0 0.0
    %599 = vmatpush.xpose.msra.mxu0 %v583
    %600 = vmatpush.xpose.msra.mxu0 %v581
    %601 = vmatmul.f32.gmra.mxu0 %v577
    %v602 = vpop.f32.mrf.mxu0
    %v603 = vadd.f32 0.0, %v602
    %604 = vmatmul.f32.gmra.mxu0 %v579
    %v605 = vpop.f32.mrf.mxu0
    %v606 = vadd.f32 0.0, %v605
    %607 = vdwg.mxu0
    %608 = vrot.lane.b32.xlu0 %v154, 96
    %v609 = vpop.permute.xlu0 %608
    %610 = vrot.lane.b32.xlu0 %v157, 96
    %v611 = vpop.permute.xlu0 %610
    %612 = vrot.lane.b32.xlu0 %v154, 32
    %v613 = vpop.permute.xlu0 %612
    %614 = vrot.lane.b32.xlu0 %v157, 32
    %v615 = vpop.permute.xlu0 %614
    %v616 = vsel %vm194, %v609, 0
    %v618 = vsel %vm194, %v611, 0
    %v620 = vsel %vm194, %v613, 0
    %v622 = vsel %vm194, %v615, 0
    %624 = vmatpush.xpose.msra.mxu0 0.0
    %625 = vmatpush.xpose.msra.mxu0 0.0
    %626 = vmatpush.xpose.msra.mxu0 0.0
    %627 = vmatpush.xpose.msra.mxu0 0.0
    %628 = vmatpush.xpose.msra.mxu0 0.0
    %629 = vmatpush.xpose.msra.mxu0 0.0
    %630 = vmatpush.xpose.msra.mxu0 0.0
    %631 = vmatpush.xpose.msra.mxu0 0.0
    %632 = vmatpush.xpose.msra.mxu0 0.0
    %633 = vmatpush.xpose.msra.mxu0 0.0
    %634 = vmatpush.xpose.msra.mxu0 0.0
    %635 = vmatpush.xpose.msra.mxu0 0.0
    %636 = vmatpush.xpose.msra.mxu0 0.0
    %637 = vmatpush.xpose.msra.mxu0 0.0
    %638 = vmatpush.xpose.msra.mxu0 %v622
    %639 = vmatpush.xpose.msra.mxu0 %v620
    %640 = vmatmul.f32.gmra.mxu0 %v616
    %v641 = vpop.f32.mrf.mxu0
    %v642 = vadd.f32 0.0, %v641
    %643 = vmatmul.f32.gmra.mxu0 %v618
    %v644 = vpop.f32.mrf.mxu0
    %v645 = vadd.f32 0.0, %v644
    %646 = vdwg.mxu0
    %v647 = vmul.f32 %v603, 0.25
    %v648 = vmul.f32 %v606, 0.25
    %v649 = vmul.f32 %v642, 0.25
    %v650 = vmul.f32 %v645, 0.25
    %v651 = vsel %vm194, %v647, -inf
    %652 = vmax.xlane.f32.xlu0 %v651
    %v653 = vpop.xlane.xlu0 %652
    %v654 = vsel %vm194, %v648, -inf
    %655 = vmax.xlane.f32.xlu0 %v654
    %v656 = vpop.xlane.xlu0 %655
    %v657 = vsel %vm194, %v649, -inf
    %658 = vmax.xlane.f32.xlu0 %v657
    %v659 = vpop.xlane.xlu0 %658
    %v660 = vsel %vm194, %v650, -inf
    %661 = vmax.xlane.f32.xlu0 %v660
    %v662 = vpop.xlane.xlu0 %661
    %v663 = vsub.f32 %v647, %v653
    %v664 = vsub.f32 %v648, %v656
    %v665 = vsub.f32 %v649, %v659
    %v666 = vsub.f32 %v650, %v662
    %v667 = vmul.f32 %v663, 1.442695
    %v668 = vpow.pop %v667
    %v669 = vmul.f32 %v664, 1.442695
    %v670 = vpow.pop %v669
    %v671 = vmul.f32 %v665, 1.442695
    %v672 = vpow.pop %v671
    %v673 = vmul.f32 %v666, 1.442695
    %v674 = vpow.pop %v673
    %v675 = vsel %vm194, %v668, 0.0
    %676 = vadd.xlane.f32.xlu0 %v675
    %v677 = vpop.xlane.xlu0 %676
    %v678 = vsel %vm194, %v670, 0.0
    %679 = vadd.xlane.f32.xlu0 %v678
    %v680 = vpop.xlane.xlu0 %679
    %v681 = vsel %vm194, %v672, 0.0
    %682 = vadd.xlane.f32.xlu0 %v681
    %v683 = vpop.xlane.xlu0 %682
    %v684 = vsel %vm194, %v674, 0.0
    %685 = vadd.xlane.f32.xlu0 %v684
    %v686 = vpop.xlane.xlu0 %685
    %v687 = vrcp.pop %v677
    %v688 = vrcp.pop %v680
    %v689 = vrcp.pop %v683
    %v690 = vrcp.pop %v686
    %v691 = vmul.f32 %v668, %v687
    %v692 = vmul.f32 %v670, %v688
    %v693 = vmul.f32 %v672, %v689
    %v694 = vmul.f32 %v674, %v690
    %695 = vrot.lane.b32.xlu0 %v177, 96
    %v696 = vpop.permute.xlu0 %695
    %697 = vrot.lane.b32.xlu0 %v180, 96
    %v698 = vpop.permute.xlu0 %697
    %v702 = vsel %vm194, %v691, 0
    %v705 = vsel %vm194, %v692, 0
    %707 = vmatpush.msra.mxu0 0.0
    %708 = vmatpush.msra.mxu0 0.0
    %709 = vmatpush.msra.mxu0 0.0
    %710 = vmatpush.msra.mxu0 0.0
    %711 = vmatpush.msra.mxu0 0.0
    %712 = vmatpush.msra.mxu0 0.0
    %713 = vmatpush.msra.mxu0 0.0
    %714 = vmatpush.msra.mxu0 0.0
    %715 = vmatpush.msra.mxu0 0.0
    %716 = vmatpush.msra.mxu0 0.0
    %717 = vmatpush.msra.mxu0 0.0
    %718 = vmatpush.msra.mxu0 0.0
    %719 = vmatpush.msra.mxu0 0.0
    %720 = vmatpush.msra.mxu0 0.0
    %721 = vmatpush.msra.mxu0 %v698
    %722 = vmatpush.msra.mxu0 %v696
    %723 = vmatmul.f32.gmra.mxu0 %v702
    %v724 = vpop.f32.mrf.mxu0
    %v725 = vadd.f32 0.0, %v724
    %726 = vmatmul.f32.gmra.mxu0 %v705
    %v727 = vpop.f32.mrf.mxu0
    %v728 = vadd.f32 0.0, %v727
    %729 = vdwg.mxu0
    %730 = vrot.lane.b32.xlu0 %v183, 96
    %v731 = vpop.permute.xlu0 %730
    %732 = vrot.lane.b32.xlu0 %v186, 96
    %v733 = vpop.permute.xlu0 %732
    %v737 = vsel %vm194, %v693, 0
    %v740 = vsel %vm194, %v694, 0
    %742 = vmatpush.msra.mxu0 0.0
    %743 = vmatpush.msra.mxu0 0.0
    %744 = vmatpush.msra.mxu0 0.0
    %745 = vmatpush.msra.mxu0 0.0
    %746 = vmatpush.msra.mxu0 0.0
    %747 = vmatpush.msra.mxu0 0.0
    %748 = vmatpush.msra.mxu0 0.0
    %749 = vmatpush.msra.mxu0 0.0
    %750 = vmatpush.msra.mxu0 0.0
    %751 = vmatpush.msra.mxu0 0.0
    %752 = vmatpush.msra.mxu0 0.0
    %753 = vmatpush.msra.mxu0 0.0
    %754 = vmatpush.msra.mxu0 0.0
    %755 = vmatpush.msra.mxu0 0.0
    %756 = vmatpush.msra.mxu0 %v733
    %757 = vmatpush.msra.mxu0 %v731
    %758 = vmatmul.f32.gmra.mxu0 %v737
    %v759 = vpop.f32.mrf.mxu0
    %v760 = vadd.f32 0.0, %v759
    %761 = vmatmul.f32.gmra.mxu0 %v740
    %v762 = vpop.f32.mrf.mxu0
    %v763 = vadd.f32 0.0, %v762
    %764 = vdwg.mxu0
    %765 = vrot.lane.b32.xlu0 %v148, 80
    %v766 = vpop.permute.xlu0 %765
    %767 = vrot.lane.b32.xlu0 %v151, 80
    %v768 = vpop.permute.xlu0 %767
    %769 = vrot.lane.b32.xlu0 %v148, 16
    %v770 = vpop.permute.xlu0 %769
    %771 = vrot.lane.b32.xlu0 %v151, 16
    %v772 = vpop.permute.xlu0 %771
    %v773 = vsel %vm194, %v766, 0
    %v775 = vsel %vm194, %v768, 0
    %v777 = vsel %vm194, %v770, 0
    %v779 = vsel %vm194, %v772, 0
    %781 = vmatpush.xpose.msra.mxu0 0.0
    %782 = vmatpush.xpose.msra.mxu0 0.0
    %783 = vmatpush.xpose.msra.mxu0 0.0
    %784 = vmatpush.xpose.msra.mxu0 0.0
    %785 = vmatpush.xpose.msra.mxu0 0.0
    %786 = vmatpush.xpose.msra.mxu0 0.0
    %787 = vmatpush.xpose.msra.mxu0 0.0
    %788 = vmatpush.xpose.msra.mxu0 0.0
    %789 = vmatpush.xpose.msra.mxu0 0.0
    %790 = vmatpush.xpose.msra.mxu0 0.0
    %791 = vmatpush.xpose.msra.mxu0 0.0
    %792 = vmatpush.xpose.msra.mxu0 0.0
    %793 = vmatpush.xpose.msra.mxu0 0.0
    %794 = vmatpush.xpose.msra.mxu0 0.0
    %795 = vmatpush.xpose.msra.mxu0 %v779
    %796 = vmatpush.xpose.msra.mxu0 %v777
    %797 = vmatmul.f32.gmra.mxu0 %v773
    %v798 = vpop.f32.mrf.mxu0
    %v799 = vadd.f32 0.0, %v798
    %800 = vmatmul.f32.gmra.mxu0 %v775
    %v801 = vpop.f32.mrf.mxu0
    %v802 = vadd.f32 0.0, %v801
    %803 = vdwg.mxu0
    %804 = vrot.lane.b32.xlu0 %v154, 80
    %v805 = vpop.permute.xlu0 %804
    %806 = vrot.lane.b32.xlu0 %v157, 80
    %v807 = vpop.permute.xlu0 %806
    %808 = vrot.lane.b32.xlu0 %v154, 16
    %v809 = vpop.permute.xlu0 %808
    %810 = vrot.lane.b32.xlu0 %v157, 16
    %v811 = vpop.permute.xlu0 %810
    %v812 = vsel %vm194, %v805, 0
    %v814 = vsel %vm194, %v807, 0
    %v816 = vsel %vm194, %v809, 0
    %v818 = vsel %vm194, %v811, 0
    %820 = vmatpush.xpose.msra.mxu0 0.0
    %821 = vmatpush.xpose.msra.mxu0 0.0
    %822 = vmatpush.xpose.msra.mxu0 0.0
    %823 = vmatpush.xpose.msra.mxu0 0.0
    %824 = vmatpush.xpose.msra.mxu0 0.0
    %825 = vmatpush.xpose.msra.mxu0 0.0
    %826 = vmatpush.xpose.msra.mxu0 0.0
    %827 = vmatpush.xpose.msra.mxu0 0.0
    %828 = vmatpush.xpose.msra.mxu0 0.0
    %829 = vmatpush.xpose.msra.mxu0 0.0
    %830 = vmatpush.xpose.msra.mxu0 0.0
    %831 = vmatpush.xpose.msra.mxu0 0.0
    %832 = vmatpush.xpose.msra.mxu0 0.0
    %833 = vmatpush.xpose.msra.mxu0 0.0
    %834 = vmatpush.xpose.msra.mxu0 %v818
    %835 = vmatpush.xpose.msra.mxu0 %v816
    %836 = vmatmul.f32.gmra.mxu0 %v812
    %v837 = vpop.f32.mrf.mxu0
    %v838 = vadd.f32 0.0, %v837
    %839 = vmatmul.f32.gmra.mxu0 %v814
    %v840 = vpop.f32.mrf.mxu0
    %v841 = vadd.f32 0.0, %v840
    %842 = vdwg.mxu0
    %v843 = vmul.f32 %v799, 0.25
    %v844 = vmul.f32 %v802, 0.25
    %v845 = vmul.f32 %v838, 0.25
    %v846 = vmul.f32 %v841, 0.25
    %v847 = vsel %vm194, %v843, -inf
    %848 = vmax.xlane.f32.xlu0 %v847
    %v849 = vpop.xlane.xlu0 %848
    %v850 = vsel %vm194, %v844, -inf
    %851 = vmax.xlane.f32.xlu0 %v850
    %v852 = vpop.xlane.xlu0 %851
    %v853 = vsel %vm194, %v845, -inf
    %854 = vmax.xlane.f32.xlu0 %v853
    %v855 = vpop.xlane.xlu0 %854
    %v856 = vsel %vm194, %v846, -inf
    %857 = vmax.xlane.f32.xlu0 %v856
    %v858 = vpop.xlane.xlu0 %857
    %v859 = vsub.f32 %v843, %v849
    %v860 = vsub.f32 %v844, %v852
    %v861 = vsub.f32 %v845, %v855
    %v862 = vsub.f32 %v846, %v858
    %v863 = vmul.f32 %v859, 1.442695
    %v864 = vpow.pop %v863
    %v865 = vmul.f32 %v860, 1.442695
    %v866 = vpow.pop %v865
    %v867 = vmul.f32 %v861, 1.442695
    %v868 = vpow.pop %v867
    %v869 = vmul.f32 %v862, 1.442695
    %v870 = vpow.pop %v869
    %v871 = vsel %vm194, %v864, 0.0
    %872 = vadd.xlane.f32.xlu0 %v871
    %v873 = vpop.xlane.xlu0 %872
    %v874 = vsel %vm194, %v866, 0.0
    %875 = vadd.xlane.f32.xlu0 %v874
    %v876 = vpop.xlane.xlu0 %875
    %v877 = vsel %vm194, %v868, 0.0
    %878 = vadd.xlane.f32.xlu0 %v877
    %v879 = vpop.xlane.xlu0 %878
    %v880 = vsel %vm194, %v870, 0.0
    %881 = vadd.xlane.f32.xlu0 %v880
    %v882 = vpop.xlane.xlu0 %881
    %v883 = vrcp.pop %v873
    %v884 = vrcp.pop %v876
    %v885 = vrcp.pop %v879
    %v886 = vrcp.pop %v882
    %v887 = vmul.f32 %v864, %v883
    %v888 = vmul.f32 %v866, %v884
    %v889 = vmul.f32 %v868, %v885
    %v890 = vmul.f32 %v870, %v886
    %891 = vrot.lane.b32.xlu0 %v177, 80
    %v892 = vpop.permute.xlu0 %891
    %893 = vrot.lane.b32.xlu0 %v180, 80
    %v894 = vpop.permute.xlu0 %893
    %v898 = vsel %vm194, %v887, 0
    %v901 = vsel %vm194, %v888, 0
    %903 = vmatpush.msra.mxu0 0.0
    %904 = vmatpush.msra.mxu0 0.0
    %905 = vmatpush.msra.mxu0 0.0
    %906 = vmatpush.msra.mxu0 0.0
    %907 = vmatpush.msra.mxu0 0.0
    %908 = vmatpush.msra.mxu0 0.0
    %909 = vmatpush.msra.mxu0 0.0
    %910 = vmatpush.msra.mxu0 0.0
    %911 = vmatpush.msra.mxu0 0.0
    %912 = vmatpush.msra.mxu0 0.0
    %913 = vmatpush.msra.mxu0 0.0
    %914 = vmatpush.msra.mxu0 0.0
    %915 = vmatpush.msra.mxu0 0.0
    %916 = vmatpush.msra.mxu0 0.0
    %917 = vmatpush.msra.mxu0 %v894
    %918 = vmatpush.msra.mxu0 %v892
    %919 = vmatmul.f32.gmra.mxu0 %v898
    %v920 = vpop.f32.mrf.mxu0
    %v921 = vadd.f32 0.0, %v920
    %922 = vmatmul.f32.gmra.mxu0 %v901
    %v923 = vpop.f32.mrf.mxu0
    %v924 = vadd.f32 0.0, %v923
    %925 = vdwg.mxu0
    %926 = vrot.lane.b32.xlu0 %v183, 80
    %v927 = vpop.permute.xlu0 %926
    %928 = vrot.lane.b32.xlu0 %v186, 80
    %v929 = vpop.permute.xlu0 %928
    %v933 = vsel %vm194, %v889, 0
    %v936 = vsel %vm194, %v890, 0
    %938 = vmatpush.msra.mxu0 0.0
    %939 = vmatpush.msra.mxu0 0.0
    %940 = vmatpush.msra.mxu0 0.0
    %941 = vmatpush.msra.mxu0 0.0
    %942 = vmatpush.msra.mxu0 0.0
    %943 = vmatpush.msra.mxu0 0.0
    %944 = vmatpush.msra.mxu0 0.0
    %945 = vmatpush.msra.mxu0 0.0
    %946 = vmatpush.msra.mxu0 0.0
    %947 = vmatpush.msra.mxu0 0.0
    %948 = vmatpush.msra.mxu0 0.0
    %949 = vmatpush.msra.mxu0 0.0
    %950 = vmatpush.msra.mxu0 0.0
    %951 = vmatpush.msra.mxu0 0.0
    %952 = vmatpush.msra.mxu0 %v929
    %953 = vmatpush.msra.mxu0 %v927
    %954 = vmatmul.f32.gmra.mxu0 %v933
    %v955 = vpop.f32.mrf.mxu0
    %v956 = vadd.f32 0.0, %v955
    %957 = vmatmul.f32.gmra.mxu0 %v936
    %v958 = vpop.f32.mrf.mxu0
    %v959 = vadd.f32 0.0, %v958
    %960 = vdwg.mxu0
    %965 = vrot.lane.b32.xlu0 %v527, 16
    %v966 = vpop.permute.xlu0 %965
    %967 = vrot.lane.b32.xlu0 %v530, 16
    %v968 = vpop.permute.xlu0 %967
    %969 = vrot.lane.b32.xlu0 %v564, 16
    %v970 = vpop.permute.xlu0 %969
    %971 = vrot.lane.b32.xlu0 %v567, 16
    %v972 = vpop.permute.xlu0 %971
    %981 = vrot.lane.b32.xlu0 %v725, 32
    %v982 = vpop.permute.xlu0 %981
    %983 = vrot.lane.b32.xlu0 %v728, 32
    %v984 = vpop.permute.xlu0 %983
    %985 = vrot.lane.b32.xlu0 %v760, 32
    %v986 = vpop.permute.xlu0 %985
    %987 = vrot.lane.b32.xlu0 %v763, 32
    %v988 = vpop.permute.xlu0 %987
    %997 = vrot.lane.b32.xlu0 %v921, 48
    %v998 = vpop.permute.xlu0 %997
    %999 = vrot.lane.b32.xlu0 %v924, 48
    %v1000 = vpop.permute.xlu0 %999
    %1001 = vrot.lane.b32.xlu0 %v956, 48
    %v1002 = vpop.permute.xlu0 %1001
    %1003 = vrot.lane.b32.xlu0 %v959, 48
    %v1004 = vpop.permute.xlu0 %1003
    %v1009 = vsel %vm194, %v335, %v966
    %v1010 = vsel %vm194, %v338, %v968
    %v1011 = vsel %vm194, %v364, %v970
    %v1012 = vsel %vm194, %v367, %v972
    %vm1013 = vcmask 261120
    %v1014 = vsel %vm1013, %v1009, %v982
    %v1015 = vsel %vm1013, %v1010, %v984
    %v1016 = vsel %vm1013, %v1011, %v986
    %v1017 = vsel %vm1013, %v1012, %v988
    %vm1018 = vcmask 392192
    %v1019 = vsel %vm1018, %v1014, %v998
    %v1020 = vsel %vm1018, %v1015, %v1000
    %v1021 = vsel %vm1018, %v1016, %v1002
    %v1022 = vsel %vm1018, %v1017, %v1004
    %v1023 = vld [vmem:[#allocation4] sm:$0xff]
    %v1024 = vld [vmem:[#allocation4 + $0x8] sm:$0xff]
    %v1025 = vld [vmem:[#allocation4 + $0x10] sm:$0xff]
    %v1026 = vld [vmem:[#allocation4 + $0x18] sm:$0xff]
    %v1027 = vld [vmem:[#allocation4 + $0x20] sm:$0xff]
    %v1028 = vld [vmem:[#allocation4 + $0x28] sm:$0xff]
    %v1029 = vld [vmem:[#allocation4 + $0x30] sm:$0xff]
    %v1030 = vld [vmem:[#allocation4 + $0x38] sm:$0xff]
    %v1031 = vld [vmem:[%s4] sm:$0x1]
    %v1033 = vperm.slane %v1031, 0
    %v1036 = vsel %vm117, %v1019, 0
    %v1039 = vsel %vm117, %v1020, 0
    %v1042 = vsel %vm117, %v1021, 0
    %v1045 = vsel %vm117, %v1022, 0
    %1047 = vmatpush.msra.mxu0 0.0
    %1048 = vmatpush.msra.mxu0 0.0
    %1049 = vmatpush.msra.mxu0 0.0
    %1050 = vmatpush.msra.mxu0 0.0
    %1051 = vmatpush.msra.mxu0 0.0
    %1052 = vmatpush.msra.mxu0 0.0
    %1053 = vmatpush.msra.mxu0 0.0
    %1054 = vmatpush.msra.mxu0 0.0
    %1055 = vmatpush.msra.mxu0 %v1030
    %1056 = vmatpush.msra.mxu0 %v1029
    %1057 = vmatpush.msra.mxu0 %v1028
    %1058 = vmatpush.msra.mxu0 %v1027
    %1059 = vmatpush.msra.mxu0 %v1026
    %1060 = vmatpush.msra.mxu0 %v1025
    %1061 = vmatpush.msra.mxu0 %v1024
    %1062 = vmatpush.msra.mxu0 %v1023
    %1063 = vmatmul.f32.gmra.mxu0 %v1036
    %v1064 = vpop.f32.mrf.mxu0
    %v1065 = vadd.f32 %v1033, %v1064
    %1066 = vmatmul.f32.gmra.mxu0 %v1039
    %v1067 = vpop.f32.mrf.mxu0
    %v1068 = vadd.f32 %v1033, %v1067
    %1069 = vmatmul.f32.gmra.mxu0 %v1042
    %v1070 = vpop.f32.mrf.mxu0
    %v1071 = vadd.f32 %v1033, %v1070
    %1072 = vmatmul.f32.gmra.mxu0 %v1045
    %v1073 = vpop.f32.mrf.mxu0
    %v1074 = vadd.f32 %v1033, %v1073
    %1075 = vdwg.mxu0
    %v1076 = vadd.f32 %v91, %v1065
    %v1077 = vadd.f32 %v92, %v1068
    %v1078 = vadd.f32 %v93, %v1071
    %v1079 = vadd.f32 %v94, %v1074
    %v1080 = vld [vmem:[%s5] sm:$0x1]
    %v1081 = vld [vmem:[%s6] sm:$0x1]
    %v1082 = vsel %vm117, %v1076, 0.0
    %1083 = vadd.xlane.f32.xlu0 %v1082
    %v1084 = vpop.xlane.xlu0 %1083
    %v1085 = vsel %vm117, %v1077, 0.0
    %1086 = vadd.xlane.f32.xlu0 %v1085
    %v1087 = vpop.xlane.xlu0 %1086
    %v1088 = vsel %vm117, %v1078, 0.0
    %1089 = vadd.xlane.f32.xlu0 %v1088
    %v1090 = vpop.xlane.xlu0 %1089
    %v1091 = vsel %vm117, %v1079, 0.0
    %1092 = vadd.xlane.f32.xlu0 %v1091
    %v1093 = vpop.xlane.xlu0 %1092
    %v1094 = vrcp.pop 64.0
    %v1095 = vmul.f32 64.0, %v1094
    %v1096 = vsub.f32 1.0, %v1095
    %v1097 = vmul.f32 %v1094, %v1096
    %v1098 = vadd.f32 %v1094, %v1097
    %vm1099 = vweird.f32 %v1094
    %v1100 = vsel %vm1099, %v1094, %v1098
    %v1101 = vmul.f32 %v1084, %v1100
    %v1102 = vmul.f32 %v1087, %v1100
    %v1103 = vmul.f32 %v1090, %v1100
    %v1104 = vmul.f32 %v1093, %v1100
    %v1105 = vsub.f32 %v1076, %v1101
    %v1106 = vsub.f32 %v1077, %v1102
    %v1107 = vsub.f32 %v1078, %v1103
    %v1108 = vsub.f32 %v1079, %v1104
    %v1109 = vmul.f32 %v1105, %v1105
    %v1110 = vmul.f32 %v1106, %v1106
    %v1111 = vmul.f32 %v1107, %v1107
    %v1112 = vmul.f32 %v1108, %v1108
    %v1113 = vsel %vm117, %v1109, 0.0
    %1114 = vadd.xlane.f32.xlu0 %v1113
    %v1115 = vpop.xlane.xlu0 %1114
    %v1116 = vsel %vm117, %v1110, 0.0
    %1117 = vadd.xlane.f32.xlu0 %v1116
    %v1118 = vpop.xlane.xlu0 %1117
    %v1119 = vsel %vm117, %v1111, 0.0
    %1120 = vadd.xlane.f32.xlu0 %v1119
    %v1121 = vpop.xlane.xlu0 %1120
    %v1122 = vsel %vm117, %v1112, 0.0
    %1123 = vadd.xlane.f32.xlu0 %v1122
    %v1124 = vpop.xlane.xlu0 %1123
    %v1125 = vmul.f32 %v1115, %v1100
    %v1126 = vmul.f32 %v1118, %v1100
    %v1127 = vmul.f32 %v1121, %v1100
    %v1128 = vmul.f32 %v1124, %v1100
    %v1129 = vadd.f32 %v1125, 1e-05
    %v1130 = vadd.f32 %v1126, 1e-05
    %v1131 = vadd.f32 %v1127, 1e-05
    %v1132 = vadd.f32 %v1128, 1e-05
    %v1133 = vrsqrt.pop %v1129
    %v1134 = vmul.f32 %v1133, %v1129
    %v1135 = vmul.f32 %v1134, %v1133
    %v1136 = vmul.f32 0.5, %v1135
    %v1137 = vsub.f32 1.5, %v1136
    %v1138 = vmul.f32 %v1133, %v1137
    %vm1139 = vweird.f32 %v1129
    %vm1140 = vweird.f32 %v1133
    %vm1141 = vmor %vm1139, %vm1140
    %v1142 = vsel %vm1141, %v1133, %v1138
    %v1143 = vrsqrt.pop %v1130
    %v1144 = vmul.f32 %v1143, %v1130
    %v1145 = vmul.f32 %v1144, %v1143
    %v1146 = vmul.f32 0.5, %v1145
    %v1147 = vsub.f32 1.5, %v1146
    %v1148 = vmul.f32 %v1143, %v1147
    %vm1149 = vweird.f32 %v1130
    %vm1150 = vweird.f32 %v1143
    %vm1151 = vmor %vm1149, %vm1150
    %v1152 = vsel %vm1151, %v1143, %v1148
    %v1153 = vrsqrt.pop %v1131
    %v1154 = vmul.f32 %v1153, %v1131
    %v1155 = vmul.f32 %v1154, %v1153
    %v1156 = vmul.f32 0.5, %v1155
    %v1157 = vsub.f32 1.5, %v1156
    %v1158 = vmul.f32 %v1153, %v1157
    %vm1159 = vweird.f32 %v1131
    %vm1160 = vweird.f32 %v1153
    %vm1161 = vmor %vm1159, %vm1160
    %v1162 = vsel %vm1161, %v1153, %v1158
    %v1163 = vrsqrt.pop %v1132
    %v1164 = vmul.f32 %v1163, %v1132
    %v1165 = vmul.f32 %v1164, %v1163
    %v1166 = vmul.f32 0.5, %v1165
    %v1167 = vsub.f32 1.5, %v1166
    %v1168 = vmul.f32 %v1163, %v1167
    %vm1169 = vweird.f32 %v1132
    %vm1170 = vweird.f32 %v1163
    %vm1171 = vmor %vm1169, %vm1170
    %v1172 = vsel %vm1171, %v1163, %v1168
    %v1173 = vmul.f32 %v1105, %v1142
    %v1174 = vmul.f32 %v1106, %v1152
    %v1175 = vmul.f32 %v1107, %v1162
    %v1176 = vmul.f32 %v1108, %v1172
    %v1178 = vperm.slane %v1080, 0
    %v1180 = vmul.f32 %v1173, %v1178
    %v1181 = vmul.f32 %v1174, %v1178
    %v1182 = vmul.f32 %v1175, %v1178
    %v1183 = vmul.f32 %v1176, %v1178
    %v1185 = vperm.slane %v1081, 0
    %v1187 = vadd.f32 %v1180, %v1185
    %v1188 = vadd.f32 %v1181, %v1185
    %v1189 = vadd.f32 %v1182, %v1185
    %v1190 = vadd.f32 %v1183, %v1185
    %v1191 = vld [vmem:[#allocation6] sm:$0xff]
    %v1192 = vld [vmem:[#allocation6 + $0x8] sm:$0xff]
    %v1193 = vld [vmem:[#allocation6 + $0x10] sm:$0xff]
    %v1194 = vld [vmem:[#allocation6 + $0x18] sm:$0xff]
    %v1195 = vld [vmem:[#allocation6 + $0x20] sm:$0xff]
    %v1196 = vld [vmem:[#allocation6 + $0x28] sm:$0xff]
    %v1197 = vld [vmem:[#allocation6 + $0x30] sm:$0xff]
    %v1198 = vld [vmem:[#allocation6 + $0x38] sm:$0xff]
    %v1199 = vld [vmem:[#allocation6 + $0x40] sm:$0xff]
    %v1200 = vld [vmem:[#allocation6 + $0x48] sm:$0xff]
    %v1201 = vld [vmem:[#allocation6 + $0x50] sm:$0xff]
    %v1202 = vld [vmem:[#allocation6 + $0x58] sm:$0xff]
    %v1203 = vld [vmem:[#allocation6 + $0x60] sm:$0xff]
    %v1204 = vld [vmem:[#allocation6 + $0x68] sm:$0xff]
    %v1205 = vld [vmem:[#allocation6 + $0x70] sm:$0xff]
    %v1206 = vld [vmem:[#allocation6 + $0x78] sm:$0xff]
    %v1207 = vld [vmem:[%s8] sm:$0x3]
    %v1209 = vperm.slane %v1207, 0
    %v1210 = vperm.slane %v1207, 1
    %v1214 = vsel %vm117, %v1187, 0
    %v1217 = vsel %vm117, %v1188, 0
    %v1220 = vsel %vm117, %v1189, 0
    %v1223 = vsel %vm117, %v1190, 0
    %1225 = vmatpush.msra.mxu0 0.0
    %1226 = vmatpush.msra.mxu0 0.0
    %1227 = vmatpush.msra.mxu0 0.0
    %1228 = vmatpush.msra.mxu0 0.0
    %1229 = vmatpush.msra.mxu0 0.0
    %1230 = vmatpush.msra.mxu0 0.0
    %1231 = vmatpush.msra.mxu0 0.0
    %1232 = vmatpush.msra.mxu0 0.0
    %1233 = vmatpush.msra.mxu0 %v1205
    %1234 = vmatpush.msra.mxu0 %v1203
    %1235 = vmatpush.msra.mxu0 %v1201
    %1236 = vmatpush.msra.mxu0 %v1199
    %1237 = vmatpush.msra.mxu0 %v1197
    %1238 = vmatpush.msra.mxu0 %v1195
    %1239 = vmatpush.msra.mxu0 %v1193
    %1240 = vmatpush.msra.mxu0 %v1191
    %1241 = vmatmul.f32.gmra.mxu0 %v1214
    %v1242 = vpop.f32.mrf.mxu0
    %v1243 = vadd.f32 %v1209, %v1242
    %1244 = vmatmul.f32.gmra.mxu0 %v1217
    %v1245 = vpop.f32.mrf.mxu0
    %v1246 = vadd.f32 %v1209, %v1245
    %1247 = vmatmul.f32.gmra.mxu0 %v1220
    %v1248 = vpop.f32.mrf.mxu0
    %v1249 = vadd.f32 %v1209, %v1248
    %1250 = vmatmul.f32.gmra.mxu0 %v1223
    %v1251 = vpop.f32.mrf.mxu0
    %v1252 = vadd.f32 %v1209, %v1251
    %1253 = vdwg.mxu0
    %1254 = vmatpush.msra.mxu0 0.0
    %1255 = vmatpush.msra.mxu0 0.0
    %1256 = vmatpush.msra.mxu0 0.0
    %1257 = vmatpush.msra.mxu0 0.0
    %1258 = vmatpush.msra.mxu0 0.0
    %1259 = vmatpush.msra.mxu0 0.0
    %1260 = vmatpush.msra.mxu0 0.0
    %1261 = vmatpush.msra.mxu0 0.0
    %1262 = vmatpush.msra.mxu0 %v1206
    %1263 = vmatpush.msra.mxu0 %v1204
    %1264 = vmatpush.msra.mxu0 %v1202
    %1265 = vmatpush.msra.mxu0 %v1200
    %1266 = vmatpush.msra.mxu0 %v1198
    %1267 = vmatpush.msra.mxu0 %v1196
    %1268 = vmatpush.msra.mxu0 %v1194
    %1269 = vmatpush.msra.mxu0 %v1192
    %1270 = vmatmul.f32.gmra.mxu0 %v1214
    %v1271 = vpop.f32.mrf.mxu0
    %v1272 = vadd.f32 %v1210, %v1271
    %1273 = vmatmul.f32.gmra.mxu0 %v1217
    %v1274 = vpop.f32.mrf.mxu0
    %v1275 = vadd.f32 %v1210, %v1274
    %1276 = vmatmul.f32.gmra.mxu0 %v1220
    %v1277 = vpop.f32.mrf.mxu0
    %v1278 = vadd.f32 %v1210, %v1277
    %1279 = vmatmul.f32.gmra.mxu0 %v1223
    %v1280 = vpop.f32.mrf.mxu0
    %v1281 = vadd.f32 %v1210, %v1280
    %1282 = vdwg.mxu0
    %v1283 = vmax.f32 %v1243, 0.0
    %v1284 = vmax.f32 %v1272, 0.0
    %v1285 = vmax.f32 %v1246, 0.0
    %v1286 = vmax.f32 %v1275, 0.0
    %v1287 = vmax.f32 %v1249, 0.0
    %v1288 = vmax.f32 %v1278, 0.0
    %v1289 = vmax.f32 %v1252, 0.0
    %v1290 = vmax.f32 %v1281, 0.0
    %v1291 = vld [vmem:[%s9] sm:$0xff]
    %v1292 = vld [vmem:[%s9 + $0x8] sm:$0xff]
    %v1293 = vld [vmem:[%s9 + $0x10] sm:$0xff]
    %v1294 = vld [vmem:[%s9 + $0x18] sm:$0xff]
    %v1295 = vld [vmem:[%s9 + $0x20] sm:$0xff]
    %v1296 = vld [vmem:[%s9 + $0x28] sm:$0xff]
    %v1297 = vld [vmem:[%s9 + $0x30] sm:$0xff]
    %v1298 = vld [vmem:[%s9 + $0x38] sm:$0xff]
    %v1299 = vld [vmem:[%s9 + $0x40] sm:$0xff]
    %v1300 = vld [vmem:[%s9 + $0x48] sm:$0xff]
    %v1301 = vld [vmem:[%s9 + $0x50] sm:$0xff]
    %v1302 = vld [vmem:[%s9 + $0x58] sm:$0xff]
    %v1303 = vld [vmem:[%s9 + $0x60] sm:$0xff]
    %v1304 = vld [vmem:[%s9 + $0x68] sm:$0xff]
    %v1305 = vld [vmem:[%s9 + $0x70] sm:$0xff]
    %v1306 = vld [vmem:[%s9 + $0x78] sm:$0xff]
    %v1307 = vld [vmem:[%s9 + $0x80] sm:$0xff]
    %v1308 = vld [vmem:[%s9 + $0x88] sm:$0xff]
    %v1309 = vld [vmem:[%s9 + $0x90] sm:$0xff]
    %v1310 = vld [vmem:[%s9 + $0x98] sm:$0xff]
    %v1311 = vld [vmem:[%s9 + $0xa0] sm:$0xff]
    %v1312 = vld [vmem:[%s9 + $0xa8] sm:$0xff]
    %v1313 = vld [vmem:[%s9 + $0xb0] sm:$0xff]
    %v1314 = vld [vmem:[%s9 + $0xb8] sm:$0xff]
    %v1315 = vld [vmem:[%s9 + $0xc0] sm:$0xff]
    %v1316 = vld [vmem:[%s9 + $0xc8] sm:$0xff]
    %v1317 = vld [vmem:[%s9 + $0xd0] sm:$0xff]
    %v1318 = vld [vmem:[%s9 + $0xd8] sm:$0xff]
    %v1319 = vld [vmem:[%s9 + $0xe0] sm:$0xff]
    %v1320 = vld [vmem:[%s9 + $0xe8] sm:$0xff]
    %v1321 = vld [vmem:[%s9 + $0xf0] sm:$0xff]
    %v1322 = vld [vmem:[%s9 + $0xf8] sm:$0xff]
    %v1323 = vld [vmem:[%s10] sm:$0x1]
    %v1325 = vperm.slane %v1323, 0
    %1327 = vmatpush.msra.mxu0 %v1306
    %1328 = vmatpush.msra.mxu0 %v1305
    %1329 = vmatpush.msra.mxu0 %v1304
    %1330 = vmatpush.msra.mxu0 %v1303
    %1331 = vmatpush.msra.mxu0 %v1302
    %1332 = vmatpush.msra.mxu0 %v1301
    %1333 = vmatpush.msra.mxu0 %v1300
    %1334 = vmatpush.msra.mxu0 %v1299
    %1335 = vmatpush.msra.mxu0 %v1298
    %1336 = vmatpush.msra.mxu0 %v1297
    %1337 = vmatpush.msra.mxu0 %v1296
    %1338 = vmatpush.msra.mxu0 %v1295
    %1339 = vmatpush.msra.mxu0 %v1294
    %1340 = vmatpush.msra.mxu0 %v1293
    %1341 = vmatpush.msra.mxu0 %v1292
    %1342 = vmatpush.msra.mxu0 %v1291
    %1343 = vmatmul.f32.gmra.mxu0 %v1283
    %v1344 = vpop.f32.mrf.mxu0
    %v1345 = vadd.f32 %v1325, %v1344
    %1346 = vmatmul.f32.gmra.mxu0 %v1285
    %v1347 = vpop.f32.mrf.mxu0
    %v1348 = vadd.f32 %v1325, %v1347
    %1349 = vmatmul.f32.gmra.mxu0 %v1287
    %v1350 = vpop.f32.mrf.mxu0
    %v1351 = vadd.f32 %v1325, %v1350
    %1352 = vmatmul.f32.gmra.mxu0 %v1289
    %v1353 = vpop.f32.mrf.mxu0
    %v1354 = vadd.f32 %v1325, %v1353
    %1355 = vdwg.mxu0
    %1356 = vmatpush.msra.mxu0 %v1322
    %1357 = vmatpush.msra.mxu0 %v1321
    %1358 = vmatpush.msra.mxu0 %v1320
    %1359 = vmatpush.msra.mxu0 %v1319
    %1360 = vmatpush.msra.mxu0 %v1318
    %1361 = vmatpush.msra.mxu0 %v1317
    %1362 = vmatpush.msra.mxu0 %v1316
    %1363 = vmatpush.msra.mxu0 %v1315
    %1364 = vmatpush.msra.mxu0 %v1314
    %1365 = vmatpush.msra.mxu0 %v1313
    %1366 = vmatpush.msra.mxu0 %v1312
    %1367 = vmatpush.msra.mxu0 %v1311
    %1368 = vmatpush.msra.mxu0 %v1310
    %1369 = vmatpush.msra.mxu0 %v1309
    %1370 = vmatpush.msra.mxu0 %v1308
    %1371 = vmatpush.msra.mxu0 %v1307
    %1372 = vmatmul.f32.gmra.mxu0 %v1284
    %v1373 = vpop.f32.mrf.mxu0
    %v1374 = vadd.f32 %v1345, %v1373
    %1375 = vmatmul.f32.gmra.mxu0 %v1286
    %v1376 = vpop.f32.mrf.mxu0
    %v1377 = vadd.f32 %v1348, %v1376
    %1378 = vmatmul.f32.gmra.mxu0 %v1288
    %v1379 = vpop.f32.mrf.mxu0
    %v1380 = vadd.f32 %v1351, %v1379
    %1381 = vmatmul.f32.gmra.mxu0 %v1290
    %v1382 = vpop.f32.mrf.mxu0
    %v1383 = vadd.f32 %v1354, %v1382
    %1384 = vdwg.mxu0
    %v1385 = vadd.f32 %v1187, %v1374
    %v1386 = vadd.f32 %v1188, %v1377
    %v1387 = vadd.f32 %v1189, %v1380
    %v1388 = vadd.f32 %v1190, %v1383
    %v1389 = vld [vmem:[%s11] sm:$0x1]
    %v1390 = vld [vmem:[%s12] sm:$0x1]
    %v1391 = vsel %vm117, %v1385, 0.0
    %1392 = vadd.xlane.f32.xlu0 %v1391
    %v1393 = vpop.xlane.xlu0 %1392
    %v1394 = vsel %vm117, %v1386, 0.0
    %1395 = vadd.xlane.f32.xlu0 %v1394
    %v1396 = vpop.xlane.xlu0 %1395
    %v1397 = vsel %vm117, %v1387, 0.0
    %1398 = vadd.xlane.f32.xlu0 %v1397
    %v1399 = vpop.xlane.xlu0 %1398
    %v1400 = vsel %vm117, %v1388, 0.0
    %1401 = vadd.xlane.f32.xlu0 %v1400
    %v1402 = vpop.xlane.xlu0 %1401
    %v1403 = vmul.f32 %v1393, %v1100
    %v1404 = vmul.f32 %v1396, %v1100
    %v1405 = vmul.f32 %v1399, %v1100
    %v1406 = vmul.f32 %v1402, %v1100
    %v1407 = vsub.f32 %v1385, %v1403
    %v1408 = vsub.f32 %v1386, %v1404
    %v1409 = vsub.f32 %v1387, %v1405
    %v1410 = vsub.f32 %v1388, %v1406
    %v1411 = vmul.f32 %v1407, %v1407
    %v1412 = vmul.f32 %v1408, %v1408
    %v1413 = vmul.f32 %v1409, %v1409
    %v1414 = vmul.f32 %v1410, %v1410
    %v1415 = vsel %vm117, %v1411, 0.0
    %1416 = vadd.xlane.f32.xlu0 %v1415
    %v1417 = vpop.xlane.xlu0 %1416
    %v1418 = vsel %vm117, %v1412, 0.0
    %1419 = vadd.xlane.f32.xlu0 %v1418
    %v1420 = vpop.xlane.xlu0 %1419
    %v1421 = vsel %vm117, %v1413, 0.0
    %1422 = vadd.xlane.f32.xlu0 %v1421
    %v1423 = vpop.xlane.xlu0 %1422
    %v1424 = vsel %vm117, %v1414, 0.0
    %1425 = vadd.xlane.f32.xlu0 %v1424
    %v1426 = vpop.xlane.xlu0 %1425
    %v1427 = vmul.f32 %v1417, %v1100
    %v1428 = vmul.f32 %v1420, %v1100
    %v1429 = vmul.f32 %v1423, %v1100
    %v1430 = vmul.f32 %v1426, %v1100
    %v1431 = vadd.f32 %v1427, 1e-05
    %v1432 = vadd.f32 %v1428, 1e-05
    %v1433 = vadd.f32 %v1429, 1e-05
    %v1434 = vadd.f32 %v1430, 1e-05
    %v1435 = vrsqrt.pop %v1431
    %v1436 = vmul.f32 %v1435, %v1431
    %v1437 = vmul.f32 %v1436, %v1435
    %v1438 = vmul.f32 0.5, %v1437
    %v1439 = vsub.f32 1.5, %v1438
    %v1440 = vmul.f32 %v1435, %v1439
    %vm1441 = vweird.f32 %v1431
    %vm1442 = vweird.f32 %v1435
    %vm1443 = vmor %vm1441, %vm1442
    %v1444 = vsel %vm1443, %v1435, %v1440
    %v1445 = vrsqrt.pop %v1432
    %v1446 = vmul.f32 %v1445, %v1432
    %v1447 = vmul.f32 %v1446, %v1445
    %v1448 = vmul.f32 0.5, %v1447
    %v1449 = vsub.f32 1.5, %v1448
    %v1450 = vmul.f32 %v1445, %v1449
    %vm1451 = vweird.f32 %v1432
    %vm1452 = vweird.f32 %v1445
    %vm1453 = vmor %vm1451, %vm1452
    %v1454 = vsel %vm1453, %v1445, %v1450
    %v1455 = vrsqrt.pop %v1433
    %v1456 = vmul.f32 %v1455, %v1433
    %v1457 = vmul.f32 %v1456, %v1455
    %v1458 = vmul.f32 0.5, %v1457
    %v1459 = vsub.f32 1.5, %v1458
    %v1460 = vmul.f32 %v1455, %v1459
    %vm1461 = vweird.f32 %v1433
    %vm1462 = vweird.f32 %v1455
    %vm1463 = vmor %vm1461, %vm1462
    %v1464 = vsel %vm1463, %v1455, %v1460
    %v1465 = vrsqrt.pop %v1434
    %v1466 = vmul.f32 %v1465, %v1434
    %v1467 = vmul.f32 %v1466, %v1465
    %v1468 = vmul.f32 0.5, %v1467
    %v1469 = vsub.f32 1.5, %v1468
    %v1470 = vmul.f32 %v1465, %v1469
    %vm1471 = vweird.f32 %v1434
    %vm1472 = vweird.f32 %v1465
    %vm1473 = vmor %vm1471, %vm1472
    %v1474 = vsel %vm1473, %v1465, %v1470
    %v1475 = vmul.f32 %v1407, %v1444
    %v1476 = vmul.f32 %v1408, %v1454
    %v1477 = vmul.f32 %v1409, %v1464
    %v1478 = vmul.f32 %v1410, %v1474
    %v1480 = vperm.slane %v1389, 0
    %v1482 = vmul.f32 %v1475, %v1480
    %v1483 = vmul.f32 %v1476, %v1480
    %v1484 = vmul.f32 %v1477, %v1480
    %v1485 = vmul.f32 %v1478, %v1480
    %v1487 = vperm.slane %v1390, 0
    %v1489 = vadd.f32 %v1482, %v1487
    %v1490 = vadd.f32 %v1483, %v1487
    %v1491 = vadd.f32 %v1484, %v1487
    %v1492 = vadd.f32 %v1485, %v1487
    %1493 = vst.msk [vmem:[%s13] sm:$0xff] %vm117, %v1489
    %1494 = vst.msk [vmem:[%s13 + $0x8] sm:$0xff] %vm117, %v1490
    %1495 = vst.msk [vmem:[%s13 + $0x10] sm:$0xff] %vm117, %v1491
    %1496 = vst.msk [vmem:[%s13 + $0x18] sm:$0xff] %vm117, %v1492
    // Predicated region
    $region66: #{crypto_stst_forward.10} parent=1 // pred_check
      _
    $region67: #{crypto_stst_forward.10} parent=1 // pred_check_branch
      %1498 = sbr.rel (0) target = $region69
    $region68: #{crypto_stst_forward.10} parent=1 // pred_region
      _
    $region69: #{crypto_stst_forward.10} parent=1 // pred_fallthru
      _
    // Predicated region
    $region70: #{crypto_stst_forward.10} parent=1 // pred_check
      _
    $region71: #{crypto_stst_forward.10} parent=1 // pred_check_branch
      %1500 = sbr.rel (0) target = $region73
    $region72: #{crypto_stst_forward.10} parent=1 // pred_region
      _
    $region73: #{crypto_stst_forward.10} parent=1 // pred_fallthru
      _
    %1501 = vsyncpa [#allocation3], 1
    %1502 = vsyncpa [#allocation5], 1

// kernel: crypto_stst_forward.13
$region0: #{crypto_stst_forward.13}
  #allocation0 [shape = 'u32[]', space=smem, size = 0x4, offset = 0x4, fixed_abs, tag = 'smem constant byte address 0x4 - core index']
  #allocation1 [shape = 'u32[72,128]{1,0:T(1,128)}', space=vmem, size = 0x9000, scoped, tag = 'internal scratch']
  #allocation2 [shape = 'f32[2,64]{1,0:T(2,128)}', space=vmem, size = 0x400, scoped, tag = 'scratch operand']
  #allocation3 [shape = 'f32[2,64]{1,0:T(2,128)}', space=vmem, size = 0x400, scoped, tag = 'scratch operand']
  #allocation4 [shape = 'f32[16,2,256]{2,1,0:T(2,128)}', space=vmem, size = 0x8000, scoped, tag = 'scratch operand']
  %s0 = inlined_call_operand.vmem [shape: f32[16,2,128], index: 0, kind: input, shape index: {}]
  %s1 = inlined_call_operand.vmem [shape: f32[2,128,256], index: 1, kind: input, shape index: {}]
  %s2 = inlined_call_operand.vmem [shape: f32[2,64,256], index: 2, kind: input, shape index: {}]
  %s3 = inlined_call_operand.vmem [shape: f32[2,1,256], index: 3, kind: input, shape index: {}]
  %s4 = inlined_call_operand.vmem [shape: f32[128,64], index: 4, kind: input, shape index: {}]
  %s5 = inlined_call_operand.hbm [shape: f32[1,64], index: 5, kind: input, shape index: {}]
  %s6 = inlined_call_operand.vmem [shape: f32[64,3], index: 6, kind: input, shape index: {}]
  %s7 = inlined_call_operand.hbm [shape: f32[1,3], index: 7, kind: input, shape index: {}]
  %s8 = inlined_call_operand.hbm [shape: f32[2,3], index: 8, kind: output, shape index: {}]
  %s9 = sld [smem:[#allocation0]]
  $region57: #{crypto_stst_forward.13} parent=0
    _
  %s11 = ssub.s32 1, %s9
  %s12 = scalar_select 0, %s11, %s9
  $region1: #{crypto_stst_forward.13} parent=0
    #allocation5 [shape = 'u8[512]{0}', space=vmem, size = 0x400, scoped, tag = 'input window, operand 5, single buffered']
    #allocation6 [shape = 's32[1]{0}', space=sflag, size = 0x4, scoped, tag = 'scoped memory for crypto_stst_forward.13']
    #allocation7 [shape = 's32[1]{0}', space=sflag, size = 0x4, scoped, tag = 'scoped memory for crypto_stst_forward.13']
    #allocation8 [shape = 'u8[512]{0}', space=vmem, size = 0x400, scoped, tag = 'input window, operand 7, single buffered']
    #allocation9 [shape = 's32[1]{0}', space=sflag, size = 0x4, scoped, tag = 'scoped memory for crypto_stst_forward.13']
    #allocation10 [shape = 'u8[1024]{0}', space=vmem, size = 0x400, scoped, tag = 'output window, operand 0, single buffered']
    %13 = vsyncpa [#allocation6], 0
    %14 = vsyncpa [#allocation9], 0
    %15 = vsyncpa [#allocation7], 0
    // Predicated region
    $region2: #{crypto_stst_forward.13} parent=1 // pred_check
      _
    $region3: #{crypto_stst_forward.13} parent=1 // pred_check_branch
      %17 = sbr.rel (0) target = $region5
    $region4: #{crypto_stst_forward.13} parent=1 // pred_region
      _
    $region5: #{crypto_stst_forward.13} parent=1 // pred_fallthru
      _
    // Predicated region
    $region6: #{crypto_stst_forward.13} parent=1 // pred_check
      _
    $region7: #{crypto_stst_forward.13} parent=1 // pred_check_branch
      %19 = sbr.rel (0) target = $region9
    $region8: #{crypto_stst_forward.13} parent=1 // pred_region
      _
    $region9: #{crypto_stst_forward.13} parent=1 // pred_fallthru
      _
    // Predicated region
    $region10: #{crypto_stst_forward.13} parent=1 // pred_check
      _
    $region11: #{crypto_stst_forward.13} parent=1 // pred_check_branch
      %21 = sbr.rel (0) target = $region13
    $region12: #{crypto_stst_forward.13} parent=1 // pred_region
      _
    $region13: #{crypto_stst_forward.13} parent=1 // pred_fallthru
      _
    // Predicated region
    $region14: #{crypto_stst_forward.13} parent=1 // pred_check
      _
    $region15: #{crypto_stst_forward.13} parent=1 // pred_check_branch
      %23 = sbr.rel (0) target = $region17
    $region16: #{crypto_stst_forward.13} parent=1 // pred_region
      _
    $region17: #{crypto_stst_forward.13} parent=1 // pred_fallthru
      _
    // Predicated region
    $region18: #{crypto_stst_forward.13} parent=1 // pred_check
      _
    $region19: #{crypto_stst_forward.13} parent=1 // pred_check_branch
      %25 = sbr.rel (0) target = $region21
    $region20: #{crypto_stst_forward.13} parent=1 // pred_region
      _
    $region21: #{crypto_stst_forward.13} parent=1 // pred_fallthru
      _
    // Predicated region
    $region22: #{crypto_stst_forward.13} parent=1 // pred_check
      _
    $region23: #{crypto_stst_forward.13} parent=1 // pred_check_branch
      %27 = sbr.rel (0) target = $region25
    $region24: #{crypto_stst_forward.13} parent=1 // pred_region
      %29 = vsyncadd [#allocation6], 0
      %s31 = sshll.u32 %s5, 4
      %s32 = int_to_ptr.hbm [resolvable:$true] %s31
      %s33 = sshll.u32 [#allocation5], 4
      %s34 = int_to_ptr.vmem [resolvable:$true] %s33
      %36 = dma.hbm_to_vmem [thread:$0]  %s32, 16, %s34, [#allocation6]
    $region25: #{crypto_stst_forward.13} parent=1 // pred_fallthru
      _
    // Predicated region
    $region26: #{crypto_stst_forward.13} parent=1 // pred_check
      _
    $region27: #{crypto_stst_forward.13} parent=1 // pred_check_branch
      %38 = sbr.rel (0) target = $region29
    $region28: #{crypto_stst_forward.13} parent=1 // pred_region
      _
    $region29: #{crypto_stst_forward.13} parent=1 // pred_fallthru
      _
    // Predicated region
    $region30: #{crypto_stst_forward.13} parent=1 // pred_check
      _
    $region31: #{crypto_stst_forward.13} parent=1 // pred_check_branch
      %40 = sbr.rel (0) target = $region33
    $region32: #{crypto_stst_forward.13} parent=1 // pred_region
      %42 = vsyncadd [#allocation9], 0
      %s44 = sshll.u32 %s7, 4
      %s45 = int_to_ptr.hbm [resolvable:$true] %s44
      %s46 = sshll.u32 [#allocation8], 4
      %s47 = int_to_ptr.vmem [resolvable:$true] %s46
      %49 = dma.hbm_to_vmem [thread:$0]  %s45, 16, %s47, [#allocation9]
    $region33: #{crypto_stst_forward.13} parent=1 // pred_fallthru
      _
    // Predicated region
    $region34: #{crypto_stst_forward.13} parent=1 // pred_check
      _
    $region35: #{crypto_stst_forward.13} parent=1 // pred_check_branch
      %51 = sbr.rel (0) target = $region37
    $region36: #{crypto_stst_forward.13} parent=1 // pred_region
      %53 = dma.done [#allocation6], 16
    $region37: #{crypto_stst_forward.13} parent=1 // pred_fallthru
      _
    // Predicated region
    $region38: #{crypto_stst_forward.13} parent=1 // pred_check
      _
    $region39: #{crypto_stst_forward.13} parent=1 // pred_check_branch
      %55 = sbr.rel (0) target = $region41
    $region40: #{crypto_stst_forward.13} parent=1 // pred_region
      %57 = dma.done [#allocation9], 16
    $region41: #{crypto_stst_forward.13} parent=1 // pred_fallthru
      _
    %v58 = vld [vmem:[%s0] sm:$0x3]
    %v59 = vld [vmem:[%s0 + $0x2] sm:$0x3]
    %v60 = vld [vmem:[%s0 + $0x4] sm:$0x3]
    %v61 = vld [vmem:[%s0 + $0x6] sm:$0x3]
    %v62 = vld [vmem:[%s0 + $0x8] sm:$0x3]
    %v63 = vld [vmem:[%s0 + $0xa] sm:$0x3]
    %v64 = vld [vmem:[%s0 + $0xc] sm:$0x3]
    %v65 = vld [vmem:[%s0 + $0xe] sm:$0x3]
    %v66 = vld [vmem:[%s0 + $0x10] sm:$0x3]
    %v67 = vld [vmem:[%s0 + $0x12] sm:$0x3]
    %v68 = vld [vmem:[%s0 + $0x14] sm:$0x3]
    %v69 = vld [vmem:[%s0 + $0x16] sm:$0x3]
    %v70 = vld [vmem:[%s0 + $0x18] sm:$0x3]
    %v71 = vld [vmem:[%s0 + $0x1a] sm:$0x3]
    %v72 = vld [vmem:[%s0 + $0x1c] sm:$0x3]
    %v73 = vld [vmem:[%s0 + $0x1e] sm:$0x3]
    %v74 = vld [vmem:[%s1] sm:$0xff]
    %v75 = vld [vmem:[%s1 + $0x8] sm:$0xff]
    %v76 = vld [vmem:[%s1 + $0x10] sm:$0xff]
    %v77 = vld [vmem:[%s1 + $0x18] sm:$0xff]
    %v78 = vld [vmem:[%s1 + $0x20] sm:$0xff]
    %v79 = vld [vmem:[%s1 + $0x28] sm:$0xff]
    %v80 = vld [vmem:[%s1 + $0x30] sm:$0xff]
    %v81 = vld [vmem:[%s1 + $0x38] sm:$0xff]
    %v82 = vld [vmem:[%s1 + $0x40] sm:$0xff]
    %v83 = vld [vmem:[%s1 + $0x48] sm:$0xff]
    %v84 = vld [vmem:[%s1 + $0x50] sm:$0xff]
    %v85 = vld [vmem:[%s1 + $0x58] sm:$0xff]
    %v86 = vld [vmem:[%s1 + $0x60] sm:$0xff]
    %v87 = vld [vmem:[%s1 + $0x68] sm:$0xff]
    %v88 = vld [vmem:[%s1 + $0x70] sm:$0xff]
    %v89 = vld [vmem:[%s1 + $0x78] sm:$0xff]
    %v90 = vld [vmem:[%s1 + $0x80] sm:$0xff]
    %v91 = vld [vmem:[%s1 + $0x88] sm:$0xff]
    %v92 = vld [vmem:[%s1 + $0x90] sm:$0xff]
    %v93 = vld [vmem:[%s1 + $0x98] sm:$0xff]
    %v94 = vld [vmem:[%s1 + $0xa0] sm:$0xff]
    %v95 = vld [vmem:[%s1 + $0xa8] sm:$0xff]
    %v96 = vld [vmem:[%s1 + $0xb0] sm:$0xff]
    %v97 = vld [vmem:[%s1 + $0xb8] sm:$0xff]
    %v98 = vld [vmem:[%s1 + $0xc0] sm:$0xff]
    %v99 = vld [vmem:[%s1 + $0xc8] sm:$0xff]
    %v100 = vld [vmem:[%s1 + $0xd0] sm:$0xff]
    %v101 = vld [vmem:[%s1 + $0xd8] sm:$0xff]
    %v102 = vld [vmem:[%s1 + $0xe0] sm:$0xff]
    %v103 = vld [vmem:[%s1 + $0xe8] sm:$0xff]
    %v104 = vld [vmem:[%s1 + $0xf0] sm:$0xff]
    %v105 = vld [vmem:[%s1 + $0xf8] sm:$0xff]
    %v106 = vld [vmem:[%s3] sm:$0x3]
    %v108 = vperm.slane %v106, 0
    %v109 = vperm.slane %v106, 1
    %128 = vst [vmem:[#allocation1] ss:$4 sm:$0xff] %v58
    %s129 = scalar_lea.vmem [#allocation1], 1
    %130 = vst [vmem:[%s129] ss:$4 sm:$0xff] %v59
    %s131 = scalar_lea.vmem [#allocation1], 2
    %132 = vst [vmem:[%s131] ss:$4 sm:$0xff] %v60
    %s133 = scalar_lea.vmem [#allocation1], 3
    %134 = vst [vmem:[%s133] ss:$4 sm:$0xff] %v61
    %s135 = scalar_lea.vmem [#allocation1], 32
    %136 = vst [vmem:[%s135] ss:$4 sm:$0xff] %v62
    %s137 = scalar_lea.vmem [#allocation1], 33
    %138 = vst [vmem:[%s137] ss:$4 sm:$0xff] %v63
    %s139 = scalar_lea.vmem [#allocation1], 34
    %140 = vst [vmem:[%s139] ss:$4 sm:$0xff] %v64
    %s141 = scalar_lea.vmem [#allocation1], 35
    %142 = vst [vmem:[%s141] ss:$4 sm:$0xff] %v65
    %v143 = vld.sshfl [vmem:[#allocation1] sm:$0xff pattern:$0x73625140]
    %v144 = vld.sshfl [vmem:[#allocation1 + $0x20] sm:$0xff pattern:$0x73625140]
    %145 = vst [vmem:[#allocation1] ss:$4 sm:$0xff] %v66
    %146 = vst [vmem:[%s129] ss:$4 sm:$0xff] %v67
    %147 = vst [vmem:[%s131] ss:$4 sm:$0xff] %v68
    %148 = vst [vmem:[%s133] ss:$4 sm:$0xff] %v69
    %149 = vst [vmem:[%s135] ss:$4 sm:$0xff] %v70
    %150 = vst [vmem:[%s137] ss:$4 sm:$0xff] %v71
    %151 = vst [vmem:[%s139] ss:$4 sm:$0xff] %v72
    %152 = vst [vmem:[%s141] ss:$4 sm:$0xff] %v73
    %v153 = vld.sshfl [vmem:[#allocation1] sm:$0xff pattern:$0x73625140]
    %v154 = vld.sshfl [vmem:[#allocation1 + $0x20] sm:$0xff pattern:$0x73625140]
    %159 = vmatpush.msra.mxu0 %v104
    %160 = vmatpush.msra.mxu0 %v102
    %161 = vmatpush.msra.mxu0 %v100
    %162 = vmatpush.msra.mxu0 %v98
    %163 = vmatpush.msra.mxu0 %v96
    %164 = vmatpush.msra.mxu0 %v94
    %165 = vmatpush.msra.mxu0 %v92
    %166 = vmatpush.msra.mxu0 %v90
    %167 = vmatpush.msra.mxu0 %v88
    %168 = vmatpush.msra.mxu0 %v86
    %169 = vmatpush.msra.mxu0 %v84
    %170 = vmatpush.msra.mxu0 %v82
    %171 = vmatpush.msra.mxu0 %v80
    %172 = vmatpush.msra.mxu0 %v78
    %173 = vmatpush.msra.mxu0 %v76
    %174 = vmatpush.msra.mxu0 %v74
    %175 = vmatmul.f32.gmra.mxu0 %v143
    %v176 = vpop.f32.mrf.mxu0
    %v177 = vadd.f32 %v108, %v176
    %178 = vmatmul.f32.gmra.mxu0 %v144
    %v179 = vpop.f32.mrf.mxu0
    %v180 = vadd.f32 %v108, %v179
    %181 = vmatmul.f32.gmra.mxu0 %v153
    %v182 = vpop.f32.mrf.mxu0
    %v183 = vadd.f32 %v108, %v182
    %184 = vmatmul.f32.gmra.mxu0 %v154
    %v185 = vpop.f32.mrf.mxu0
    %v186 = vadd.f32 %v108, %v185
    %187 = vdwg.mxu0
    %188 = vmatpush.msra.mxu0 %v105
    %189 = vmatpush.msra.mxu0 %v103
    %190 = vmatpush.msra.mxu0 %v101
    %191 = vmatpush.msra.mxu0 %v99
    %192 = vmatpush.msra.mxu0 %v97
    %193 = vmatpush.msra.mxu0 %v95
    %194 = vmatpush.msra.mxu0 %v93
    %195 = vmatpush.msra.mxu0 %v91
    %196 = vmatpush.msra.mxu0 %v89
    %197 = vmatpush.msra.mxu0 %v87
    %198 = vmatpush.msra.mxu0 %v85
    %199 = vmatpush.msra.mxu0 %v83
    %200 = vmatpush.msra.mxu0 %v81
    %201 = vmatpush.msra.mxu0 %v79
    %202 = vmatpush.msra.mxu0 %v77
    %203 = vmatpush.msra.mxu0 %v75
    %204 = vmatmul.f32.gmra.mxu0 %v143
    %v205 = vpop.f32.mrf.mxu0
    %v206 = vadd.f32 %v109, %v205
    %207 = vmatmul.f32.gmra.mxu0 %v144
    %v208 = vpop.f32.mrf.mxu0
    %v209 = vadd.f32 %v109, %v208
    %210 = vmatmul.f32.gmra.mxu0 %v153
    %v211 = vpop.f32.mrf.mxu0
    %v212 = vadd.f32 %v109, %v211
    %213 = vmatmul.f32.gmra.mxu0 %v154
    %v214 = vpop.f32.mrf.mxu0
    %v215 = vadd.f32 %v109, %v214
    %216 = vdwg.mxu0
    %v225 = vrot.slane %v206, 6
    %v226 = vrot.slane %v209, 6
    %v227 = vrot.slane %v212, 6
    %v228 = vrot.slane %v215, 6
    %vm229 = vcmask 1041408
    %v230 = vsel %vm229, %v177, %v225
    %vm231 = vcmask 1043458
    %v232 = vsel %vm231, %v177, %v225
    %v233 = vrot.slane %v232, 2
    %vm234 = vcmask 1045508
    %v235 = vsel %vm234, %v177, %v225
    %v236 = vrot.slane %v235, 4
    %vm237 = vcmask 1045504
    %v238 = vsel %vm237, %v225, %v177
    %v239 = vrot.slane %v238, 6
    %v240 = vsel %vm229, %v180, %v226
    %v241 = vsel %vm231, %v180, %v226
    %v242 = vrot.slane %v241, 2
    %v243 = vsel %vm234, %v180, %v226
    %v244 = vrot.slane %v243, 4
    %v245 = vsel %vm237, %v226, %v180
    %v246 = vrot.slane %v245, 6
    %v247 = vsel %vm229, %v183, %v227
    %v248 = vsel %vm231, %v183, %v227
    %v249 = vrot.slane %v248, 2
    %v250 = vsel %vm234, %v183, %v227
    %v251 = vrot.slane %v250, 4
    %v252 = vsel %vm237, %v227, %v183
    %v253 = vrot.slane %v252, 6
    %v254 = vsel %vm229, %v186, %v228
    %v255 = vsel %vm231, %v186, %v228
    %v256 = vrot.slane %v255, 2
    %v257 = vsel %vm234, %v186, %v228
    %v258 = vrot.slane %v257, 4
    %v259 = vsel %vm237, %v228, %v186
    %v260 = vrot.slane %v259, 6
    %277 = vst [vmem:[#allocation4] sm:$0xf] %v230
    %278 = vst [vmem:[#allocation4 + $0x4] sm:$0xf] %v233
    %279 = vst [vmem:[#allocation4 + $0x8] sm:$0xf] %v236
    %280 = vst [vmem:[#allocation4 + $0xc] sm:$0xf] %v239
    %281 = vst [vmem:[#allocation4 + $0x10] sm:$0xf] %v240
    %282 = vst [vmem:[#allocation4 + $0x14] sm:$0xf] %v242
    %283 = vst [vmem:[#allocation4 + $0x18] sm:$0xf] %v244
    %284 = vst [vmem:[#allocation4 + $0x1c] sm:$0xf] %v246
    %285 = vst [vmem:[#allocation4 + $0x20] sm:$0xf] %v247
    %286 = vst [vmem:[#allocation4 + $0x24] sm:$0xf] %v249
    %287 = vst [vmem:[#allocation4 + $0x28] sm:$0xf] %v251
    %288 = vst [vmem:[#allocation4 + $0x2c] sm:$0xf] %v253
    %289 = vst [vmem:[#allocation4 + $0x30] sm:$0xf] %v254
    %290 = vst [vmem:[#allocation4 + $0x34] sm:$0xf] %v256
    %291 = vst [vmem:[#allocation4 + $0x38] sm:$0xf] %v258
    %292 = vst [vmem:[#allocation4 + $0x3c] sm:$0xf] %v260
    %vm293 = vcmask 517120
    %294 = vst.msk [vmem:[#allocation2] sm:$0x3] %vm293, 0.0
    %295 = vst.msk [vmem:[#allocation3] sm:$0x3] %vm293, 0.0
    loop: start=0, step=1, limit=16
    $region42: #{crypto_stst_forward.13} parent=1 // loop_pre_header
      _
    $region43: #{crypto_stst_forward.13} parent=1 // loop_header
      %s297 = sphi 0, %s301
      %p298 = scmp.ge.s32.totalorder %s297, 16
    $region44: #{crypto_stst_forward.13} parent=1 // loop_header_branch
      %300 = sbr.rel (%p298) target = $region48
    $region45: #{crypto_stst_forward.13} parent=1 // loop_body
      %s302 = smul.u32 %s297, 2
      %s303 = smul.addr %s302, 2
      %s304 = scalar_lea.vmem [#allocation4], %s303
      %v305 = vld [vmem:[%s304] sm:$0xf]
      %v306 = vld [vmem:[#allocation2] sm:$0x3]
      %v307 = vld [vmem:[%s2] sm:$0xff]
      %v308 = vld [vmem:[%s2 + $0x8] sm:$0xff]
      %v309 = vld [vmem:[%s2 + $0x10] sm:$0xff]
      %v310 = vld [vmem:[%s2 + $0x18] sm:$0xff]
      %v311 = vld [vmem:[%s2 + $0x20] sm:$0xff]
      %v312 = vld [vmem:[%s2 + $0x28] sm:$0xff]
      %v313 = vld [vmem:[%s2 + $0x30] sm:$0xff]
      %v314 = vld [vmem:[%s2 + $0x38] sm:$0xff]
      %v315 = vld [vmem:[%s2 + $0x40] sm:$0xff]
      %v316 = vld [vmem:[%s2 + $0x48] sm:$0xff]
      %v317 = vld [vmem:[%s2 + $0x50] sm:$0xff]
      %v318 = vld [vmem:[%s2 + $0x58] sm:$0xff]
      %v319 = vld [vmem:[%s2 + $0x60] sm:$0xff]
      %v320 = vld [vmem:[%s2 + $0x68] sm:$0xff]
      %v321 = vld [vmem:[%s2 + $0x70] sm:$0xff]
      %v322 = vld [vmem:[%s2 + $0x78] sm:$0xff]
      %vm323 = vcmask 523264
      %v325 = vsel %vm323, %v306, 0
      %327 = vmatpush.msra.mxu0 0.0
      %328 = vmatpush.msra.mxu0 0.0
      %329 = vmatpush.msra.mxu0 0.0
      %330 = vmatpush.msra.mxu0 0.0
      %331 = vmatpush.msra.mxu0 0.0
      %332 = vmatpush.msra.mxu0 0.0
      %333 = vmatpush.msra.mxu0 0.0
      %334 = vmatpush.msra.mxu0 0.0
      %335 = vmatpush.msra.mxu0 %v321
      %336 = vmatpush.msra.mxu0 %v319
      %337 = vmatpush.msra.mxu0 %v317
      %338 = vmatpush.msra.mxu0 %v315
      %339 = vmatpush.msra.mxu0 %v313
      %340 = vmatpush.msra.mxu0 %v311
      %341 = vmatpush.msra.mxu0 %v309
      %342 = vmatpush.msra.mxu0 %v307
      %343 = vmatmul.f32.gmra.mxu0 %v325
      %v344 = vpop.f32.mrf.mxu0
      %v345 = vadd.f32 0.0, %v344
      %346 = vdwg.mxu0
      %347 = vmatpush.msra.mxu0 0.0
      %348 = vmatpush.msra.mxu0 0.0
      %349 = vmatpush.msra.mxu0 0.0
      %350 = vmatpush.msra.mxu0 0.0
      %351 = vmatpush.msra.mxu0 0.0
      %352 = vmatpush.msra.mxu0 0.0
      %353 = vmatpush.msra.mxu0 0.0
      %354 = vmatpush.msra.mxu0 0.0
      %355 = vmatpush.msra.mxu0 %v322
      %356 = vmatpush.msra.mxu0 %v320
      %357 = vmatpush.msra.mxu0 %v318
      %358 = vmatpush.msra.mxu0 %v316
      %359 = vmatpush.msra.mxu0 %v314
      %360 = vmatpush.msra.mxu0 %v312
      %361 = vmatpush.msra.mxu0 %v310
      %362 = vmatpush.msra.mxu0 %v308
      %363 = vmatmul.f32.gmra.mxu0 %v325
      %v364 = vpop.f32.mrf.mxu0
      %v365 = vadd.f32 0.0, %v364
      %366 = vdwg.mxu0
      %v369 = vrot.slane %v365, 6
      %v370 = vsel %vm229, %v345, %v369
      %v372 = vadd.f32 %v305, %v370
      %v373 = vxor.u32 %v372, 2147483648
      %v374 = vmul.f32 %v373, 1.442695
      %v375 = vpow.pop %v374
      %v376 = vadd.f32 %v375, 1.0
      %v377 = vrcp.pop %v376
      %v378 = vmul.f32 %v376, %v377
      %v379 = vsub.f32 1.0, %v378
      %v380 = vmul.f32 %v377, %v379
      %v381 = vadd.f32 %v377, %v380
      %vm382 = vweird.f32 %v376
      %vm383 = vweird.f32 %v377
      %vm384 = vmor %vm382, %vm383
      %v385 = vsel %vm384, %v377, %v381
      %v386 = vand.u32 2147483647, %v376
      %vm387 = vcmp.eq.f32.partialorder %v386, 8.507059e+37
      %v388 = vand.u32 %v376, 2147483648
      %v389 = vor.u32 1.1754944e-38, %v388
      %v390 = vsel %vm387, %v389, %v385
      %v391 = vmul.f32 1.0, %v390
      %v393 = vrot.slane %v372, 2
      %v395 = vtanh.pop %v393
      %396 = vrot.lane.b32.xlu0 %v372, 64
      %v397 = vpop.permute.xlu0 %396
      %v398 = vrot.slane %v397, 2
      %v400 = vxor.u32 %v398, 2147483648
      %v401 = vmul.f32 %v400, 1.442695
      %v402 = vpow.pop %v401
      %v403 = vadd.f32 %v402, 1.0
      %v404 = vrcp.pop %v403
      %v405 = vmul.f32 %v403, %v404
      %v406 = vsub.f32 1.0, %v405
      %v407 = vmul.f32 %v404, %v406
      %v408 = vadd.f32 %v404, %v407
      %vm409 = vweird.f32 %v403
      %vm410 = vweird.f32 %v404
      %vm411 = vmor %vm409, %vm410
      %v412 = vsel %vm411, %v404, %v408
      %v413 = vand.u32 2147483647, %v403
      %vm414 = vcmp.eq.f32.partialorder %v413, 8.507059e+37
      %v415 = vand.u32 %v403, 2147483648
      %v416 = vor.u32 1.1754944e-38, %v415
      %v417 = vsel %vm414, %v416, %v412
      %v418 = vmul.f32 1.0, %v417
      %v419 = vld [vmem:[#allocation3] sm:$0x3]
      %421 = vrot.lane.b32.xlu0 %v419, 64
      %v422 = vpop.permute.xlu0 %421
      %v424 = vmul.f32 %v391, %v422
      %v425 = vmul.f32 %v391, %v395
      %427 = vrot.lane.b32.xlu0 %v425, 64
      %v428 = vpop.permute.xlu0 %427
      %v430 = vadd.f32 %v424, %v428
      %432 = vst [vmem:[#allocation1] ss:$4 sm:$0xff] %v430
      %v433 = vld.sshfl [vmem:[#allocation1] sm:$0xff pattern:$0x73625140]
      %434 = vrot.lane.b32.xlu0 %v433, 64
      %v435 = vpop.permute.xlu0 %434
      %437 = vst.msk [vmem:[#allocation3] sm:$0x3] %vm293, %v435
      %v438 = vtanh.pop %v430
      %440 = vrot.lane.b32.xlu0 %v438, 64
      %v441 = vpop.permute.xlu0 %440
      %v443 = vmul.f32 %v418, %v441
      %444 = vst.msk [vmem:[#allocation2] sm:$0x3] %vm293, %v443
    $region46: #{crypto_stst_forward.13} parent=1 // loop_footer
      %s301 = sadd.s32 1, %s297
    $region47: #{crypto_stst_forward.13} parent=1 // loop_footer_branch
      %296 = sbr.rel target = $region43
    $region48: #{crypto_stst_forward.13} parent=1 // loop_exit
      _
    %v445 = vld [vmem:[#allocation2] sm:$0x3]
    %s446 = scalar_lea.vmem %s0, 30
    %v447 = vld [vmem:[%s446] sm:$0x3]
    %s448 = scalar_lea.vmem %s1, 256
    %v449 = vld [vmem:[%s448] sm:$0xff]
    %v450 = vld [vmem:[%s448 + $0x8] sm:$0xff]
    %v451 = vld [vmem:[%s448 + $0x10] sm:$0xff]
    %v452 = vld [vmem:[%s448 + $0x18] sm:$0xff]
    %v453 = vld [vmem:[%s448 + $0x20] sm:$0xff]
    %v454 = vld [vmem:[%s448 + $0x28] sm:$0xff]
    %v455 = vld [vmem:[%s448 + $0x30] sm:$0xff]
    %v456 = vld [vmem:[%s448 + $0x38] sm:$0xff]
    %v457 = vld [vmem:[%s448 + $0x40] sm:$0xff]
    %v458 = vld [vmem:[%s448 + $0x48] sm:$0xff]
    %v459 = vld [vmem:[%s448 + $0x50] sm:$0xff]
    %v460 = vld [vmem:[%s448 + $0x58] sm:$0xff]
    %v461 = vld [vmem:[%s448 + $0x60] sm:$0xff]
    %v462 = vld [vmem:[%s448 + $0x68] sm:$0xff]
    %v463 = vld [vmem:[%s448 + $0x70] sm:$0xff]
    %v464 = vld [vmem:[%s448 + $0x78] sm:$0xff]
    %v465 = vld [vmem:[%s448 + $0x80] sm:$0xff]
    %v466 = vld [vmem:[%s448 + $0x88] sm:$0xff]
    %v467 = vld [vmem:[%s448 + $0x90] sm:$0xff]
    %v468 = vld [vmem:[%s448 + $0x98] sm:$0xff]
    %v469 = vld [vmem:[%s448 + $0xa0] sm:$0xff]
    %v470 = vld [vmem:[%s448 + $0xa8] sm:$0xff]
    %v471 = vld [vmem:[%s448 + $0xb0] sm:$0xff]
    %v472 = vld [vmem:[%s448 + $0xb8] sm:$0xff]
    %v473 = vld [vmem:[%s448 + $0xc0] sm:$0xff]
    %v474 = vld [vmem:[%s448 + $0xc8] sm:$0xff]
    %v475 = vld [vmem:[%s448 + $0xd0] sm:$0xff]
    %v476 = vld [vmem:[%s448 + $0xd8] sm:$0xff]
    %v477 = vld [vmem:[%s448 + $0xe0] sm:$0xff]
    %v478 = vld [vmem:[%s448 + $0xe8] sm:$0xff]
    %v479 = vld [vmem:[%s448 + $0xf0] sm:$0xff]
    %v480 = vld [vmem:[%s448 + $0xf8] sm:$0xff]
    %s481 = scalar_lea.vmem %s3, 2
    %v482 = vld [vmem:[%s481] sm:$0x3]
    %v484 = vperm.slane %v482, 0
    %v485 = vperm.slane %v482, 1
    %488 = vmatpush.msra.mxu0 %v479
    %489 = vmatpush.msra.mxu0 %v477
    %490 = vmatpush.msra.mxu0 %v475
    %491 = vmatpush.msra.mxu0 %v473
    %492 = vmatpush.msra.mxu0 %v471
    %493 = vmatpush.msra.mxu0 %v469
    %494 = vmatpush.msra.mxu0 %v467
    %495 = vmatpush.msra.mxu0 %v465
    %496 = vmatpush.msra.mxu0 %v463
    %497 = vmatpush.msra.mxu0 %v461
    %498 = vmatpush.msra.mxu0 %v459
    %499 = vmatpush.msra.mxu0 %v457
    %500 = vmatpush.msra.mxu0 %v455
    %501 = vmatpush.msra.mxu0 %v453
    %502 = vmatpush.msra.mxu0 %v451
    %503 = vmatpush.msra.mxu0 %v449
    %504 = vmatmul.f32.gmra.mxu0 %v447
    %v505 = vpop.f32.mrf.mxu0
    %v506 = vadd.f32 %v484, %v505
    %507 = vdwg.mxu0
    %508 = vmatpush.msra.mxu0 %v480
    %509 = vmatpush.msra.mxu0 %v478
    %510 = vmatpush.msra.mxu0 %v476
    %511 = vmatpush.msra.mxu0 %v474
    %512 = vmatpush.msra.mxu0 %v472
    %513 = vmatpush.msra.mxu0 %v470
    %514 = vmatpush.msra.mxu0 %v468
    %515 = vmatpush.msra.mxu0 %v466
    %516 = vmatpush.msra.mxu0 %v464
    %517 = vmatpush.msra.mxu0 %v462
    %518 = vmatpush.msra.mxu0 %v460
    %519 = vmatpush.msra.mxu0 %v458
    %520 = vmatpush.msra.mxu0 %v456
    %521 = vmatpush.msra.mxu0 %v454
    %522 = vmatpush.msra.mxu0 %v452
    %523 = vmatpush.msra.mxu0 %v450
    %524 = vmatmul.f32.gmra.mxu0 %v447
    %v525 = vpop.f32.mrf.mxu0
    %v526 = vadd.f32 %v485, %v525
    %527 = vdwg.mxu0
    %v528 = vxor.u32 %v506, 2147483648
    %v529 = vmul.f32 %v528, 1.442695
    %v530 = vpow.pop %v529
    %v531 = vadd.f32 %v530, 1.0
    %v532 = vrcp.pop %v531
    %v533 = vmul.f32 %v531, %v532
    %v534 = vsub.f32 1.0, %v533
    %v535 = vmul.f32 %v532, %v534
    %v536 = vadd.f32 %v532, %v535
    %vm537 = vweird.f32 %v531
    %vm538 = vweird.f32 %v532
    %vm539 = vmor %vm537, %vm538
    %v540 = vsel %vm539, %v532, %v536
    %v541 = vand.u32 2147483647, %v531
    %vm542 = vcmp.eq.f32.partialorder %v541, 8.507059e+37
    %v543 = vand.u32 %v531, 2147483648
    %v544 = vor.u32 1.1754944e-38, %v543
    %v545 = vsel %vm542, %v544, %v540
    %v546 = vmul.f32 1.0, %v545
    %v547 = vtanh.pop %v526
    %v548 = vxor.u32 %v526, 2147483648
    %v549 = vmul.f32 %v548, 1.442695
    %v550 = vpow.pop %v549
    %v551 = vadd.f32 %v550, 1.0
    %v552 = vrcp.pop %v551
    %v553 = vmul.f32 %v551, %v552
    %v554 = vsub.f32 1.0, %v553
    %v555 = vmul.f32 %v552, %v554
    %v556 = vadd.f32 %v552, %v555
    %vm557 = vweird.f32 %v551
    %vm558 = vweird.f32 %v552
    %vm559 = vmor %vm557, %vm558
    %v560 = vsel %vm559, %v552, %v556
    %v561 = vand.u32 2147483647, %v551
    %vm562 = vcmp.eq.f32.partialorder %v561, 8.507059e+37
    %v563 = vand.u32 %v551, 2147483648
    %v564 = vor.u32 1.1754944e-38, %v563
    %v565 = vsel %vm562, %v564, %v560
    %v566 = vmul.f32 1.0, %v565
    %v567 = vmul.f32 %v546, %v547
    %v568 = vtanh.pop %v567
    %570 = vrot.lane.b32.xlu0 %v568, 64
    %v571 = vpop.permute.xlu0 %570
    %v573 = vmul.f32 %v566, %v571
    %vm574 = vcmask 523264
    %v575 = vsel %vm574, %v445, %v573
    %v576 = vld [vmem:[%s4] sm:$0xff]
    %v577 = vld [vmem:[%s4 + $0x8] sm:$0xff]
    %v578 = vld [vmem:[%s4 + $0x10] sm:$0xff]
    %v579 = vld [vmem:[%s4 + $0x18] sm:$0xff]
    %v580 = vld [vmem:[%s4 + $0x20] sm:$0xff]
    %v581 = vld [vmem:[%s4 + $0x28] sm:$0xff]
    %v582 = vld [vmem:[%s4 + $0x30] sm:$0xff]
    %v583 = vld [vmem:[%s4 + $0x38] sm:$0xff]
    %v584 = vld [vmem:[%s4 + $0x40] sm:$0xff]
    %v585 = vld [vmem:[%s4 + $0x48] sm:$0xff]
    %v586 = vld [vmem:[%s4 + $0x50] sm:$0xff]
    %v587 = vld [vmem:[%s4 + $0x58] sm:$0xff]
    %v588 = vld [vmem:[%s4 + $0x60] sm:$0xff]
    %v589 = vld [vmem:[%s4 + $0x68] sm:$0xff]
    %v590 = vld [vmem:[%s4 + $0x70] sm:$0xff]
    %v591 = vld [vmem:[%s4 + $0x78] sm:$0xff]
    %v592 = vld [vmem:[#allocation5] sm:$0x1]
    %v594 = vperm.slane %v592, 0
    %596 = vmatpush.msra.mxu0 %v591
    %597 = vmatpush.msra.mxu0 %v590
    %598 = vmatpush.msra.mxu0 %v589
    %599 = vmatpush.msra.mxu0 %v588
    %600 = vmatpush.msra.mxu0 %v587
    %601 = vmatpush.msra.mxu0 %v586
    %602 = vmatpush.msra.mxu0 %v585
    %603 = vmatpush.msra.mxu0 %v584
    %604 = vmatpush.msra.mxu0 %v583
    %605 = vmatpush.msra.mxu0 %v582
    %606 = vmatpush.msra.mxu0 %v581
    %607 = vmatpush.msra.mxu0 %v580
    %608 = vmatpush.msra.mxu0 %v579
    %609 = vmatpush.msra.mxu0 %v578
    %610 = vmatpush.msra.mxu0 %v577
    %611 = vmatpush.msra.mxu0 %v576
    %612 = vmatmul.f32.gmra.mxu0 %v575
    %v613 = vpop.f32.mrf.mxu0
    %v614 = vadd.f32 %v594, %v613
    %615 = vdwg.mxu0
    %v616 = vmax.f32 %v614, 0.0
    %v617 = vld [vmem:[%s6] sm:$0xff]
    %v618 = vld [vmem:[%s6 + $0x8] sm:$0xff]
    %v619 = vld [vmem:[%s6 + $0x10] sm:$0xff]
    %v620 = vld [vmem:[%s6 + $0x18] sm:$0xff]
    %v621 = vld [vmem:[%s6 + $0x20] sm:$0xff]
    %v622 = vld [vmem:[%s6 + $0x28] sm:$0xff]
    %v623 = vld [vmem:[%s6 + $0x30] sm:$0xff]
    %v624 = vld [vmem:[%s6 + $0x38] sm:$0xff]
    %v625 = vld [vmem:[#allocation8] sm:$0x1]
    %v627 = vperm.slane %v625, 0
    %v630 = vsel %vm574, %v616, 0
    %632 = vmatpush.msra.mxu0 0.0
    %633 = vmatpush.msra.mxu0 0.0
    %634 = vmatpush.msra.mxu0 0.0
    %635 = vmatpush.msra.mxu0 0.0
    %636 = vmatpush.msra.mxu0 0.0
    %637 = vmatpush.msra.mxu0 0.0
    %638 = vmatpush.msra.mxu0 0.0
    %639 = vmatpush.msra.mxu0 0.0
    %640 = vmatpush.msra.mxu0 %v624
    %641 = vmatpush.msra.mxu0 %v623
    %642 = vmatpush.msra.mxu0 %v622
    %643 = vmatpush.msra.mxu0 %v621
    %644 = vmatpush.msra.mxu0 %v620
    %645 = vmatpush.msra.mxu0 %v619
    %646 = vmatpush.msra.mxu0 %v618
    %647 = vmatpush.msra.mxu0 %v617
    %648 = vmatmul.f32.gmra.mxu0 %v630
    %v649 = vpop.f32.mrf.mxu0
    %v650 = vadd.f32 %v627, %v649
    %651 = vdwg.mxu0
    %vm652 = vcmask 17408
    %653 = vst.msk [vmem:[#allocation10] sm:$0x3] %vm652, %v650
    // Predicated region
    $region49: #{crypto_stst_forward.13} parent=1 // pred_check
      _
    $region50: #{crypto_stst_forward.13} parent=1 // pred_check_branch
      %655 = sbr.rel (0) target = $region52
    $region51: #{crypto_stst_forward.13} parent=1 // pred_region
      %657 = vsyncadd [#allocation7], 0
      %s659 = sshll.u32 [#allocation10], 4
      %s660 = int_to_ptr.vmem [resolvable:$true] %s659
      %s661 = sshll.u32 %s8, 4
      %s662 = int_to_ptr.hbm [resolvable:$true] %s661
      %664 = dma.vmem_to_hbm [thread:$0]  %s660, 32, %s662, [#allocation7]
    $region52: #{crypto_stst_forward.13} parent=1 // pred_fallthru
      _
    // Predicated region
    $region53: #{crypto_stst_forward.13} parent=1 // pred_check
      _
    $region54: #{crypto_stst_forward.13} parent=1 // pred_check_branch
      %666 = sbr.rel (0) target = $region56
    $region55: #{crypto_stst_forward.13} parent=1 // pred_region
      %668 = dma.done [#allocation7], 32
    $region56: #{crypto_stst_forward.13} parent=1 // pred_fallthru
      _
    %669 = vsyncpa [#allocation6], 1
    %670 = vsyncpa [#allocation9], 1
    %671 = vsyncpa [#allocation7], 1

</llo_original>
